<compile_context>
chip_gen: v7x
topology: tpu7x:2x2x1
jax: 0.10.0
libtpu: 0.0.40
codegen_flags: <defaults>
</compile_context>

<pallas_src>
import math

import numpy as np
import jax
import jax.numpy as jnp
from jax.experimental import pallas as pl
from jax.experimental.pallas import tpu as pltpu

F32 = jnp.float32
VMEM = pltpu.MemorySpace.VMEM


def _vspec():
    # whole-array block resident in VMEM (all operands are tiny)
    return pl.BlockSpec(memory_space=VMEM)


# ----------------------------------------------------------------------------
# Single fused kernel for the whole forward pass.  All static config (sequence
# lengths, skip length, decode masks, combine indices) is baked in via closure,
# so every loop is fully unrolled at trace time.
# ----------------------------------------------------------------------------
def make_rae_mepc_kernel(B, H, ninp, enc_Ts, dec_cfgs, T_pred, lambda_combine):
    H4 = 4 * H
    n_dec = len(dec_cfgs)
    T_last = dec_cfgs[-1]['T']

    def lstm_gate(gates, c):
        # one full-width sigmoid + tanh over the (B, 4H) gate slab, then slice
        sg = jax.nn.sigmoid(gates)
        th = jnp.tanh(gates)
        i_g = sg[:, 0:H]
        f_g = sg[:, H:2 * H]
        g_g = th[:, 2 * H:3 * H]
        o_g = sg[:, 3 * H:4 * H]
        c_new = i_g * g_g if c is None else f_g * c + i_g * g_g
        h_new = o_g * jnp.tanh(c_new)
        return h_new, c_new

    def kernel(*refs):
        it = iter(refs)

        # -------------------- unpack inputs (order = wrapper order) ----------
        enc_refs = [tuple(next(it) for _ in range(4)) for _ in range(3)]  # x, wih, whh, b
        fus_h_refs = [next(it) for _ in range(6)]
        fus_c_refs = [next(it) for _ in range(6)]
        dec_refs = []
        for dcfg in dec_cfgs:
            dp = dict(wxg=next(it), wh2h=next(it), bg=next(it))
            if dcfg['cidx'] is not None:
                dp.update(cw1a=next(it), cw1b=next(it), cb1=next(it),
                          pa=next(it), cw2=next(it), cb2=next(it))
            dec_refs.append(dp)
        wout_ref = next(it)                 # last decoder output projection
        bout_ref = next(it)
        pwih_ref, pwhh_ref, pb_ref, pwout_ref, pbout_ref = (next(it) for _ in range(5))
        tgt_ref = next(it)
        # -------------------- outputs ----------------------------------------
        dec_out_ref = next(it)              # (T_last*B, ninp)
        err_ref = next(it)                  # (T_last*B, ninp)
        loss_ref = next(it)                 # (1, 1)
        sh_ref = next(it)                   # (B, H)  shared hidden (enc_hid[0][0])
        sc_ref = next(it)                   # (B, H)  shared cell   (enc_hid[0][1])
        pred_out_ref = next(it)             # (T_pred*B, ninp)
        # -------------------- scratch -----------------------------------------
        xg_buf = next(it)                   # (max_T*B, 4H) staged input gates
        hbuf_dec = next(it)                 # (T_last*B, H) last-decoder hiddens
        hbuf_pred = next(it)                # (T_pred*B, H) pred-decoder hiddens

        # ---- sequential LSTM; x@W_ih (+bias) hoisted to one batched matmul ----
        def run_lstm(x_ref, wih_ref, whh_ref, b_ref, T, h0=None, c0=None,
                     out_buf=None):
            xg_buf[pl.ds(0, T * B), :] = (
                jnp.dot(x_ref[...], wih_ref[...], preferred_element_type=F32)
                + b_ref[...])
            whh = whh_ref[...]
            h, c = h0, c0
            for t in range(T):                      # T is tiny & static -> unrolled
                g = xg_buf[pl.ds(t * B, B), :]
                if h is not None:                   # h0 == 0 -> skip dead matmul
                    g = g + jnp.dot(h, whh, preferred_element_type=F32)
                h, c = lstm_gate(g, c)
                if out_buf is not None:
                    out_buf[pl.ds(t * B, B), :] = h
            return h, c

        # -------------------- MultiEncoder ------------------------------------
        h1, c1 = run_lstm(*enc_refs[0], enc_Ts[0])
        h2, c2 = run_lstm(*enc_refs[1], enc_Ts[1])
        h3, c3 = run_lstm(*enc_refs[2], enc_Ts[2])

        def fusion_chain(x1v, x2v, x3v, wrefs):     # fc3(fc2(fc1(x1)+x2)+x3)
            w1, b1, w2, b2, w3, b3 = wrefs
            x = jnp.dot(x1v, w1[...], preferred_element_type=F32) + b1[...]
            x = x + x2v
            x = jnp.dot(x, w2[...], preferred_element_type=F32) + b2[...]
            x = x + x3v
            x = jnp.dot(x, w3[...], preferred_element_type=F32) + b3[...]
            return x

        fusion_h = fusion_chain(h1, h2, h3, fus_h_refs)
        fusion_c = fusion_chain(c1, c2, c3, fus_c_refs)

        # -------------------- Decoders ----------------------------------------
        shared_h = fusion_h       # PyTorch's shared `hiddens` list entry (aliased)
        shared_c = fusion_c       # cell entry of the shared list is never rewritten
        prev_allh = None
        for i, (dcfg, dp) in enumerate(zip(dec_cfgs, dec_refs)):
            T = dcfg['T']
            skip = dcfg['skip']
            masks = dcfg['masks']
            cidx = dcfg['cidx']
            is_last = (i == n_dec - 1)

            wxg = dp['wxg'][...]
            wh2h = dp['wh2h'][...]
            bg = jnp.broadcast_to(dp['bg'][...], (B, H4))    # broadcast bias once
            w_sum = wxg + wh2h                               # fast path weight
            if cidx is not None:
                nmid = dp['cb1'].shape[1]
                cw1a = dp['cw1a'][...]
                cw1b = dp['cw1b'][...]
                cb1 = jnp.broadcast_to(dp['cb1'][...], (B, nmid))
                pa = jnp.broadcast_to(dp['pa'][...], (B, nmid))
                cw2 = dp['cw2'][...]
                cb2 = jnp.broadcast_to(dp['cb2'][...], (B, H))

            h = shared_h
            c = shared_c
            all_h = [h]                   # T<=8, H=32: fine to keep live in vregs
            if is_last:
                hbuf_dec[pl.ds(0, B), :] = h

            for t in range(T - 1):
                h_prev = all_h[t]         # hidden feeding the folded input chain
                modified = False
                if t >= skip:             # multi-resolution skip connection
                    w1, w2 = masks[t][0], masks[t][1]
                    if w1 and w2:
                        w1, w2 = 0.5, 0.5
                    h = w1 * h + w2 * all_h[t - skip]
                    modified = True
                if cidx is not None:      # combine with previous-scale hiddens
                    ph = prev_allh[cidx[t]]
                    z = (jnp.dot(h, cw1a, preferred_element_type=F32)
                         + jnp.dot(ph, cw1b, preferred_element_type=F32) + cb1)
                    z = jnp.where(z >= 0.0, z, pa * z)            # PReLU
                    z = jnp.dot(z, cw2, preferred_element_type=F32) + cb2
                    h = lambda_combine * h + (1.0 - lambda_combine) * z
                    modified = True
                if t == 0 and modified:
                    shared_h = h          # in-place mutation of the shared list
                # LSTMCell; output_layer->input_layer->i2h folded into wxg/bg
                if modified:
                    gates = (jnp.dot(h_prev, wxg, preferred_element_type=F32)
                             + jnp.dot(h, wh2h, preferred_element_type=F32) + bg)
                else:
                    gates = jnp.dot(h_prev, w_sum, preferred_element_type=F32) + bg
                h, c = lstm_gate(gates, c)
                all_h.append(h)
                if is_last:
                    hbuf_dec[pl.ds((t + 1) * B, B), :] = h
            prev_allh = all_h

        # ---- last decoder: one batched output projection + one wide store ----
        allh_mat = hbuf_dec[...]                                   # (T_last*B, H)
        dec_out = (jnp.dot(allh_mat, wout_ref[...], preferred_element_type=F32)
                   + bout_ref[...])
        dec_out_ref[...] = dec_out

        # ---- test-mode loss: MSE(last decoder outputs, time-reversed input) ----
        e = dec_out - tgt_ref[...]
        err_ref[...] = e
        s = jnp.sum(e * e, axis=1, keepdims=True)
        s = jnp.sum(s, axis=0, keepdims=True)
        loss_ref[...] = s * (1.0 / float(T_last * B * ninp))

        sh_ref[...] = shared_h
        sc_ref[...] = shared_c

        # -------------------- PredDecoder -------------------------------------
        # seeded with the (decoder-mutated) shared encoder hidden/cell
        run_lstm(enc_refs[2][0], pwih_ref, pwhh_ref, pb_ref, T_pred,
                 h0=shared_h, c0=shared_c, out_buf=hbuf_pred)
        pred_out_ref[...] = (jnp.dot(hbuf_pred[...], pwout_ref[...],
                                     preferred_element_type=F32) + pbout_ref[...])

    return kernel


# ----------------------------------------------------------------------------
# Wrapper: static config extraction, weight folding, single pallas_call.
# ----------------------------------------------------------------------------
def build_forward(args):
    ninp = args['ninp']
    H = args['hidden_size']
    ws = args['window_length']
    tau = args['tau']
    n_dec = args['dec_nlayers']
    decay = 1.0 / tau
    ws1 = int(ws * decay ** 2)
    ws2 = int(ws * decay)
    idx1 = np.linspace(0, ws - 1, ws1, dtype=int)
    idx2 = np.linspace(0, ws - 1, ws2, dtype=int)
    enc_Ts = (ws1, ws2, ws)

    dec_cfgs = []
    for i in range(n_dec):
        T = args['dec_lengths'][i]
        if i == 0:
            cidx = None
        else:
            prev_T = args['dec_lengths'][i - 1]
            cidx = []
            for t in range(T - 1):
                k = int(np.floor(t / tau))
                if k >= prev_T:
                    k = prev_T - 1            # PyTorch index -1 == last element
                cidx.append(k)
        dec_cfgs.append(dict(T=T, skip=args['dec_Ls'][i],
                             masks=args['all_decode_masks'][i], cidx=cidx))
    T_last = dec_cfgs[-1]['T']
    T_pred = ws
    lambda_combine = 0.1
    max_T = max(list(enc_Ts) + [T_pred])

    @jax.jit
    def forward(params, pure_inputs):
        # TODO(synk): train-mode Gaussian noise + dilate_loss not implemented.
        B = pure_inputs.shape[0]
        x_tbi = jnp.transpose(pure_inputs, (1, 0, 2))               # time-major
        x1_flat = jnp.reshape(x_tbi[idx1], (ws1 * B, ninp))
        x2_flat = jnp.reshape(x_tbi[idx2], (ws2 * B, ninp))
        x3_flat = jnp.reshape(x_tbi, (ws * B, ninp))
        target_flat = jnp.reshape(x_tbi[::-1], (ws * B, ninp))      # reversed input

        inputs = []
        for xf, ep in zip((x1_flat, x2_flat, x3_flat),
                          (params['enc1'], params['enc2'], params['enc3'])):
            inputs += [xf, ep[0], ep[1], ep[2]]
        for fp in (params['fusion_h'], params['fusion_c']):
            inputs += [fp['w1'], fp['b1'], fp['w2'], fp['b2'], fp['w3'], fp['b3']]
        for i in range(n_dec):
            p = params['dec'][i]
            # fold output_layer -> input_layer -> i2h into one weight/bias
            w_hi = jnp.dot(p['wout'], p['win'])                     # (H, H)
            b_hi = jnp.dot(p['bout'], p['win']) + p['bin']          # (1, H)
            w_xg = jnp.dot(w_hi, p['wi2h'])                         # (H, 4H)
            b_g = jnp.dot(b_hi, p['wi2h']) + p['bi'] + p['bh']      # (1, 4H)
            inputs += [w_xg, p['wh2h'], b_g]
            if dec_cfgs[i]['cidx'] is not None:
                inputs += [p['cw1'][:H, :], p['cw1'][H:, :], p['cb1'],
                           p['pa'], p['cw2'], p['cb2']]
        p_last = params['dec'][-1]
        inputs += [p_last['wout'], p_last['bout']]
        pp = params['pred']
        inputs += [pp['w_ih'], pp['w_hh'], pp['b'], pp['wout'], pp['bout']]
        inputs += [target_flat]

        kernel = make_rae_mepc_kernel(B, H, ninp, enc_Ts, dec_cfgs, T_pred,
                                      lambda_combine)
        out_shape = (
            jax.ShapeDtypeStruct((T_last * B, ninp), F32),   # dec_out (time-major flat)
            jax.ShapeDtypeStruct((T_last * B, ninp), F32),   # error
            jax.ShapeDtypeStruct((1, 1), F32),               # loss
            jax.ShapeDtypeStruct((B, H), F32),               # shared hidden
            jax.ShapeDtypeStruct((B, H), F32),               # shared cell
            jax.ShapeDtypeStruct((T_pred * B, ninp), F32),   # pred decoder outputs
        )
        dec_out_f, err_f, loss, sh, sc, pred_f = pl.pallas_call(
            kernel,
            out_shape=out_shape,
            in_specs=[_vspec()] * len(inputs),
            out_specs=tuple(_vspec() for _ in out_shape),
            scratch_shapes=[
                pltpu.VMEM((max_T * B, 4 * H), F32),   # staged x@W_ih gates
                pltpu.VMEM((T_last * B, H), F32),      # last-decoder hiddens
                pltpu.VMEM((T_pred * B, H), F32),      # pred-decoder hiddens
            ],
        )(*inputs)

        def to_btf(flat, T):
            return jnp.transpose(jnp.reshape(flat, (T, B, ninp)), (1, 0, 2))

        dec_out = to_btf(dec_out_f, T_last)
        error = to_btf(err_f, T_last)
        pred_outputs = to_btf(pred_f, T_pred)
        enc_hid = [(sh, sc)]
        return loss[0, 0], dec_out, error, enc_hid, pred_outputs

    return forward


# ----------------------------------------------------------------------------
# Parameters (deterministic synthetic init, PyTorch-like uniform bounds)
# ----------------------------------------------------------------------------
def init_params(key, ninp, H, dec_nlayers):
    keys = iter(jax.random.split(key, 64))

    def lin(fan_in, shape):
        k = 1.0 / math.sqrt(fan_in)
        return jax.random.uniform(next(keys), shape, F32, -k, k)

    def lstm_params(in_size):
        return (lin(in_size, (in_size, 4 * H)), lin(H, (H, 4 * H)), lin(H, (1, 4 * H)))

    def fusion_params():
        return dict(w1=lin(H, (H, H)), b1=lin(H, (1, H)),
                    w2=lin(H, (H, H)), b2=lin(H, (1, H)),
                    w3=lin(H, (H, H)), b3=lin(H, (1, H)))

    def dec_params():
        return dict(
            win=lin(ninp, (ninp, H)), bin=lin(ninp, (1, H)),
            wout=lin(H, (H, ninp)), bout=lin(H, (1, ninp)),
            wi2h=lin(H, (H, 4 * H)), bi=lin(H, (1, 4 * H)),
            wh2h=lin(H, (H, 4 * H)), bh=lin(H, (1, 4 * H)),
            cw1=lin(2 * H, (2 * H, 32)), cb1=lin(2 * H, (1, 32)),
            pa=jnp.full((1, 1), 0.25, F32),            # PReLU default weight
            cw2=lin(32, (32, H)), cb2=lin(32, (1, H)),
        )

    return dict(
        enc1=lstm_params(ninp), enc2=lstm_params(ninp), enc3=lstm_params(ninp),
        fusion_h=fusion_params(), fusion_c=fusion_params(),
        dec=[dec_params() for _ in range(dec_nlayers)],
        pred=dict(w_ih=lin(ninp, (ninp, 4 * H)), w_hh=lin(H, (H, 4 * H)),
                  b=lin(H, (1, 4 * H)), wout=lin(H, (H, ninp)), bout=lin(H, (1, ninp))),
    )


if __name__ == "__main__":
    args = dict(
        ninp=8,
        hidden_size=32,
        dec_nlayers=2,
        dec_Ls=[2, 2],
        window_length=8,
        tau=2,
        dec_lengths=[4, 8],
        all_decode_masks=[
            [[1, 0], [0, 1], [1, 1]],
            [[1, 0], [0, 1], [1, 1], [1, 0], [0, 1], [1, 1], [1, 0]],
        ],
    )
    B = 4
    key = jax.random.PRNGKey(0)
    k_in, k_tgt, k_par = jax.random.split(key, 3)
    pure_inputs = jax.random.normal(k_in, (B, args['window_length'], args['ninp']), F32)
    # pred_target is only consumed by the (unimplemented) train-mode loss term.
    pred_target = jax.random.normal(k_tgt, (B, args['window_length'], args['ninp']), F32)
    params = init_params(k_par, args['ninp'], args['hidden_size'], args['dec_nlayers'])

    forward = build_forward(args)
    loss, dec_out, error, enc_hid, pred_outputs = forward(params, pure_inputs)
    jax.block_until_ready((loss, dec_out, error, enc_hid, pred_outputs))

    assert dec_out.shape == (B, args['window_length'], args['ninp'])
    assert error.shape == dec_out.shape
    assert pred_outputs.shape == (B, args['window_length'], args['ninp'])
    assert enc_hid[0][0].shape == (B, args['hidden_size'])
    print("KERNEL_OK")
</pallas_src>

<mosaic_0001>
module attributes {stable_mosaic.version = 11 : i64} {
  func.func @kernel(%arg0: memref<8x8xf32, #tpu.memory_space<vmem>>, %arg1: memref<8x128xf32, #tpu.memory_space<vmem>>, %arg2: memref<32x128xf32, #tpu.memory_space<vmem>>, %arg3: memref<1x128xf32, #tpu.memory_space<vmem>>, %arg4: memref<16x8xf32, #tpu.memory_space<vmem>>, %arg5: memref<8x128xf32, #tpu.memory_space<vmem>>, %arg6: memref<32x128xf32, #tpu.memory_space<vmem>>, %arg7: memref<1x128xf32, #tpu.memory_space<vmem>>, %arg8: memref<32x8xf32, #tpu.memory_space<vmem>>, %arg9: memref<8x128xf32, #tpu.memory_space<vmem>>, %arg10: memref<32x128xf32, #tpu.memory_space<vmem>>, %arg11: memref<1x128xf32, #tpu.memory_space<vmem>>, %arg12: memref<32x32xf32, #tpu.memory_space<vmem>>, %arg13: memref<1x32xf32, #tpu.memory_space<vmem>>, %arg14: memref<32x32xf32, #tpu.memory_space<vmem>>, %arg15: memref<1x32xf32, #tpu.memory_space<vmem>>, %arg16: memref<32x32xf32, #tpu.memory_space<vmem>>, %arg17: memref<1x32xf32, #tpu.memory_space<vmem>>, %arg18: memref<32x32xf32, #tpu.memory_space<vmem>>, %arg19: memref<1x32xf32, #tpu.memory_space<vmem>>, %arg20: memref<32x32xf32, #tpu.memory_space<vmem>>, %arg21: memref<1x32xf32, #tpu.memory_space<vmem>>, %arg22: memref<32x32xf32, #tpu.memory_space<vmem>>, %arg23: memref<1x32xf32, #tpu.memory_space<vmem>>, %arg24: memref<32x128xf32, #tpu.memory_space<vmem>>, %arg25: memref<32x128xf32, #tpu.memory_space<vmem>>, %arg26: memref<1x128xf32, #tpu.memory_space<vmem>>, %arg27: memref<32x128xf32, #tpu.memory_space<vmem>>, %arg28: memref<32x128xf32, #tpu.memory_space<vmem>>, %arg29: memref<1x128xf32, #tpu.memory_space<vmem>>, %arg30: memref<32x32xf32, #tpu.memory_space<vmem>>, %arg31: memref<32x32xf32, #tpu.memory_space<vmem>>, %arg32: memref<1x32xf32, #tpu.memory_space<vmem>>, %arg33: memref<1x1xf32, #tpu.memory_space<vmem>>, %arg34: memref<32x32xf32, #tpu.memory_space<vmem>>, %arg35: memref<1x32xf32, #tpu.memory_space<vmem>>, %arg36: memref<32x8xf32, #tpu.memory_space<vmem>>, %arg37: memref<1x8xf32, #tpu.memory_space<vmem>>, %arg38: memref<8x128xf32, #tpu.memory_space<vmem>>, %arg39: memref<32x128xf32, #tpu.memory_space<vmem>>, %arg40: memref<1x128xf32, #tpu.memory_space<vmem>>, %arg41: memref<32x8xf32, #tpu.memory_space<vmem>>, %arg42: memref<1x8xf32, #tpu.memory_space<vmem>>, %arg43: memref<32x8xf32, #tpu.memory_space<vmem>>, %arg44: memref<32x8xf32, #tpu.memory_space<vmem>>, %arg45: memref<32x8xf32, #tpu.memory_space<vmem>>, %arg46: memref<1x1xf32, #tpu.memory_space<vmem>>, %arg47: memref<4x32xf32, #tpu.memory_space<vmem>>, %arg48: memref<4x32xf32, #tpu.memory_space<vmem>>, %arg49: memref<32x8xf32, #tpu.memory_space<vmem>>, %arg50: memref<32x128xf32, #tpu.memory_space<vmem>>, %arg51: memref<32x32xf32, #tpu.memory_space<vmem>>, %arg52: memref<32x32xf32, #tpu.memory_space<vmem>>) attributes {dimension_semantics = [], scalar_prefetch = 0 : i64, scratch_operands = 3 : i64, tpu.core_type = #tpu.core_type<tc>} {
    %c0 = arith.constant 0 : index
    %c0_0 = arith.constant 0 : index
    %0 = vector.load %arg0[%c0, %c0_0] : memref<8x8xf32, #tpu.memory_space<vmem>>, vector<8x8xf32>
    %c0_1 = arith.constant 0 : index
    %c0_2 = arith.constant 0 : index
    %1 = vector.load %arg1[%c0_1, %c0_2] : memref<8x128xf32, #tpu.memory_space<vmem>>, vector<8x128xf32>
    %cst = arith.constant dense<0.000000e+00> : vector<8x128xf32>
    %2 = tpu.matmul %0, %1, %cst {dimension_numbers = #tpu.dot_dimension_numbers<[1], [0], [0], [1], [0, 0, 1, 1], [], []>} : vector<8x8xf32>, vector<8x128xf32>, vector<8x128xf32> -> vector<8x128xf32>
    %c0_3 = arith.constant 0 : index
    %c0_4 = arith.constant 0 : index
    %3 = vector.load %arg3[%c0_3, %c0_4] : memref<1x128xf32, #tpu.memory_space<vmem>>, vector<1x128xf32>
    %4 = vector.broadcast %3 : vector<1x128xf32> to vector<8x128xf32>
    %5 = arith.addf %2, %4 : vector<8x128xf32>
    %c0_5 = arith.constant 0 : index
    %c0_6 = arith.constant 0 : index
    %6 = vector.load %arg50[%c0_5, %c0_6] : memref<32x128xf32, #tpu.memory_space<vmem>>, vector<8x128xf32>
    tpu.vector_store %arg50[%c0_5, %c0_6], %5 {strides = array<i32>} : memref<32x128xf32, #tpu.memory_space<vmem>>, vector<8x128xf32>,
    %c0_7 = arith.constant 0 : index
    %c0_8 = arith.constant 0 : index
    %7 = vector.load %arg2[%c0_7, %c0_8] : memref<32x128xf32, #tpu.memory_space<vmem>>, vector<32x128xf32>
    %c0_9 = arith.constant 0 : index
    %c0_10 = arith.constant 0 : index
    %8 = vector.load %arg50[%c0_9, %c0_10] : memref<32x128xf32, #tpu.memory_space<vmem>>, vector<4x128xf32>
    %9 = arith.negf %8 : vector<4x128xf32>
    %10 = math.exp %9 : vector<4x128xf32>
    %cst_11 = arith.constant 1.000000e+00 : f32
    %11 = vector.broadcast %cst_11 : f32 to vector<4x128xf32>
    %12 = arith.addf %11, %10 : vector<4x128xf32>
    %13 = arith.divf %11, %12 : vector<4x128xf32>
    %14 = math.tanh %8 : vector<4x128xf32>
    %15 = vector.extract_strided_slice %13 {offsets = [0, 0], sizes = [4, 32], strides = [1, 1]} : vector<4x128xf32> to vector<4x32xf32>
    %16 = vector.extract_strided_slice %14 {offsets = [0, 64], sizes = [4, 32], strides = [1, 1]} : vector<4x128xf32> to vector<4x32xf32>
    %17 = vector.extract_strided_slice %13 {offsets = [0, 96], sizes = [4, 32], strides = [1, 1]} : vector<4x128xf32> to vector<4x32xf32>
    %18 = arith.mulf %15, %16 : vector<4x32xf32>
    %19 = math.tanh %18 : vector<4x32xf32>
    %20 = arith.mulf %17, %19 : vector<4x32xf32>
    %c4 = arith.constant 4 : index
    %c0_12 = arith.constant 0 : index
    %21 = vector.load %arg50[%c4, %c0_12] : memref<32x128xf32, #tpu.memory_space<vmem>>, vector<4x128xf32>
    %cst_13 = arith.constant dense<0.000000e+00> : vector<4x128xf32>
    %22 = tpu.matmul %20, %7, %cst_13 {dimension_numbers = #tpu.dot_dimension_numbers<[1], [0], [0], [1], [0, 0, 1, 1], [], []>} : vector<4x32xf32>, vector<32x128xf32>, vector<4x128xf32> -> vector<4x128xf32>
    %23 = arith.addf %21, %22 : vector<4x128xf32>
    %24 = arith.negf %23 : vector<4x128xf32>
    %25 = math.exp %24 : vector<4x128xf32>
    %cst_14 = arith.constant 1.000000e+00 : f32
    %26 = vector.broadcast %cst_14 : f32 to vector<4x128xf32>
    %27 = arith.addf %26, %25 : vector<4x128xf32>
    %28 = arith.divf %26, %27 : vector<4x128xf32>
    %29 = math.tanh %23 : vector<4x128xf32>
    %30 = vector.extract_strided_slice %28 {offsets = [0, 0], sizes = [4, 32], strides = [1, 1]} : vector<4x128xf32> to vector<4x32xf32>
    %31 = vector.extract_strided_slice %28 {offsets = [0, 32], sizes = [4, 32], strides = [1, 1]} : vector<4x128xf32> to vector<4x32xf32>
    %32 = vector.extract_strided_slice %29 {offsets = [0, 64], sizes = [4, 32], strides = [1, 1]} : vector<4x128xf32> to vector<4x32xf32>
    %33 = vector.extract_strided_slice %28 {offsets = [0, 96], sizes = [4, 32], strides = [1, 1]} : vector<4x128xf32> to vector<4x32xf32>
    %34 = arith.mulf %31, %18 : vector<4x32xf32>
    %35 = arith.mulf %30, %32 : vector<4x32xf32>
    %36 = arith.addf %34, %35 : vector<4x32xf32>
    %37 = math.tanh %36 : vector<4x32xf32>
    %38 = arith.mulf %33, %37 : vector<4x32xf32>
    %c0_15 = arith.constant 0 : index
    %c0_16 = arith.constant 0 : index
    %39 = vector.load %arg4[%c0_15, %c0_16] : memref<16x8xf32, #tpu.memory_space<vmem>>, vector<16x8xf32>
    %c0_17 = arith.constant 0 : index
    %c0_18 = arith.constant 0 : index
    %40 = vector.load %arg5[%c0_17, %c0_18] : memref<8x128xf32, #tpu.memory_space<vmem>>, vector<8x128xf32>
    %cst_19 = arith.constant dense<0.000000e+00> : vector<16x128xf32>
    %41 = tpu.matmul %39, %40, %cst_19 {dimension_numbers = #tpu.dot_dimension_numbers<[1], [0], [0], [1], [0, 0, 1, 1], [], []>} : vector<16x8xf32>, vector<8x128xf32>, vector<16x128xf32> -> vector<16x128xf32>
    %c0_20 = arith.constant 0 : index
    %c0_21 = arith.constant 0 : index
    %42 = vector.load %arg7[%c0_20, %c0_21] : memref<1x128xf32, #tpu.memory_space<vmem>>, vector<1x128xf32>
    %43 = vector.broadcast %42 : vector<1x128xf32> to vector<16x128xf32>
    %44 = arith.addf %41, %43 : vector<16x128xf32>
    %c0_22 = arith.constant 0 : index
    %c0_23 = arith.constant 0 : index
    %45 = vector.load %arg50[%c0_22, %c0_23] : memref<32x128xf32, #tpu.memory_space<vmem>>, vector<16x128xf32>
    tpu.vector_store %arg50[%c0_22, %c0_23], %44 {strides = array<i32>} : memref<32x128xf32, #tpu.memory_space<vmem>>, vector<16x128xf32>,
    %c0_24 = arith.constant 0 : index
    %c0_25 = arith.constant 0 : index
    %46 = vector.load %arg6[%c0_24, %c0_25] : memref<32x128xf32, #tpu.memory_space<vmem>>, vector<32x128xf32>
    %c0_26 = arith.constant 0 : index
    %c0_27 = arith.constant 0 : index
    %47 = vector.load %arg50[%c0_26, %c0_27] : memref<32x128xf32, #tpu.memory_space<vmem>>, vector<4x128xf32>
    %48 = arith.negf %47 : vector<4x128xf32>
    %49 = math.exp %48 : vector<4x128xf32>
    %cst_28 = arith.constant 1.000000e+00 : f32
    %50 = vector.broadcast %cst_28 : f32 to vector<4x128xf32>
    %51 = arith.addf %50, %49 : vector<4x128xf32>
    %52 = arith.divf %50, %51 : vector<4x128xf32>
    %53 = math.tanh %47 : vector<4x128xf32>
    %54 = vector.extract_strided_slice %52 {offsets = [0, 0], sizes = [4, 32], strides = [1, 1]} : vector<4x128xf32> to vector<4x32xf32>
    %55 = vector.extract_strided_slice %53 {offsets = [0, 64], sizes = [4, 32], strides = [1, 1]} : vector<4x128xf32> to vector<4x32xf32>
    %56 = vector.extract_strided_slice %52 {offsets = [0, 96], sizes = [4, 32], strides = [1, 1]} : vector<4x128xf32> to vector<4x32xf32>
    %57 = arith.mulf %54, %55 : vector<4x32xf32>
    %58 = math.tanh %57 : vector<4x32xf32>
    %59 = arith.mulf %56, %58 : vector<4x32xf32>
    %c4_29 = arith.constant 4 : index
    %c0_30 = arith.constant 0 : index
    %60 = vector.load %arg50[%c4_29, %c0_30] : memref<32x128xf32, #tpu.memory_space<vmem>>, vector<4x128xf32>
    %cst_31 = arith.constant dense<0.000000e+00> : vector<4x128xf32>
    %61 = tpu.matmul %59, %46, %cst_31 {dimension_numbers = #tpu.dot_dimension_numbers<[1], [0], [0], [1], [0, 0, 1, 1], [], []>} : vector<4x32xf32>, vector<32x128xf32>, vector<4x128xf32> -> vector<4x128xf32>
    %62 = arith.addf %60, %61 : vector<4x128xf32>
    %63 = arith.negf %62 : vector<4x128xf32>
    %64 = math.exp %63 : vector<4x128xf32>
    %cst_32 = arith.constant 1.000000e+00 : f32
    %65 = vector.broadcast %cst_32 : f32 to vector<4x128xf32>
    %66 = arith.addf %65, %64 : vector<4x128xf32>
    %67 = arith.divf %65, %66 : vector<4x128xf32>
    %68 = math.tanh %62 : vector<4x128xf32>
    %69 = vector.extract_strided_slice %67 {offsets = [0, 0], sizes = [4, 32], strides = [1, 1]} : vector<4x128xf32> to vector<4x32xf32>
    %70 = vector.extract_strided_slice %67 {offsets = [0, 32], sizes = [4, 32], strides = [1, 1]} : vector<4x128xf32> to vector<4x32xf32>
    %71 = vector.extract_strided_slice %68 {offsets = [0, 64], sizes = [4, 32], strides = [1, 1]} : vector<4x128xf32> to vector<4x32xf32>
    %72 = vector.extract_strided_slice %67 {offsets = [0, 96], sizes = [4, 32], strides = [1, 1]} : vector<4x128xf32> to vector<4x32xf32>
    %73 = arith.mulf %70, %57 : vector<4x32xf32>
    %74 = arith.mulf %69, %71 : vector<4x32xf32>
    %75 = arith.addf %73, %74 : vector<4x32xf32>
    %76 = math.tanh %75 : vector<4x32xf32>
    %77 = arith.mulf %72, %76 : vector<4x32xf32>
    %c8 = arith.constant 8 : index
    %c0_33 = arith.constant 0 : index
    %78 = vector.load %arg50[%c8, %c0_33] : memref<32x128xf32, #tpu.memory_space<vmem>>, vector<4x128xf32>
    %cst_34 = arith.constant dense<0.000000e+00> : vector<4x128xf32>
    %79 = tpu.matmul %77, %46, %cst_34 {dimension_numbers = #tpu.dot_dimension_numbers<[1], [0], [0], [1], [0, 0, 1, 1], [], []>} : vector<4x32xf32>, vector<32x128xf32>, vector<4x128xf32> -> vector<4x128xf32>
    %80 = arith.addf %78, %79 : vector<4x128xf32>
    %81 = arith.negf %80 : vector<4x128xf32>
    %82 = math.exp %81 : vector<4x128xf32>
    %cst_35 = arith.constant 1.000000e+00 : f32
    %83 = vector.broadcast %cst_35 : f32 to vector<4x128xf32>
    %84 = arith.addf %83, %82 : vector<4x128xf32>
    %85 = arith.divf %83, %84 : vector<4x128xf32>
    %86 = math.tanh %80 : vector<4x128xf32>
    %87 = vector.extract_strided_slice %85 {offsets = [0, 0], sizes = [4, 32], strides = [1, 1]} : vector<4x128xf32> to vector<4x32xf32>
    %88 = vector.extract_strided_slice %85 {offsets = [0, 32], sizes = [4, 32], strides = [1, 1]} : vector<4x128xf32> to vector<4x32xf32>
    %89 = vector.extract_strided_slice %86 {offsets = [0, 64], sizes = [4, 32], strides = [1, 1]} : vector<4x128xf32> to vector<4x32xf32>
    %90 = vector.extract_strided_slice %85 {offsets = [0, 96], sizes = [4, 32], strides = [1, 1]} : vector<4x128xf32> to vector<4x32xf32>
    %91 = arith.mulf %88, %75 : vector<4x32xf32>
    %92 = arith.mulf %87, %89 : vector<4x32xf32>
    %93 = arith.addf %91, %92 : vector<4x32xf32>
    %94 = math.tanh %93 : vector<4x32xf32>
    %95 = arith.mulf %90, %94 : vector<4x32xf32>
    %c12 = arith.constant 12 : index
    %c0_36 = arith.constant 0 : index
    %96 = vector.load %arg50[%c12, %c0_36] : memref<32x128xf32, #tpu.memory_space<vmem>>, vector<4x128xf32>
    %cst_37 = arith.constant dense<0.000000e+00> : vector<4x128xf32>
    %97 = tpu.matmul %95, %46, %cst_37 {dimension_numbers = #tpu.dot_dimension_numbers<[1], [0], [0], [1], [0, 0, 1, 1], [], []>} : vector<4x32xf32>, vector<32x128xf32>, vector<4x128xf32> -> vector<4x128xf32>
    %98 = arith.addf %96, %97 : vector<4x128xf32>
    %99 = arith.negf %98 : vector<4x128xf32>
    %100 = math.exp %99 : vector<4x128xf32>
    %cst_38 = arith.constant 1.000000e+00 : f32
    %101 = vector.broadcast %cst_38 : f32 to vector<4x128xf32>
    %102 = arith.addf %101, %100 : vector<4x128xf32>
    %103 = arith.divf %101, %102 : vector<4x128xf32>
    %104 = math.tanh %98 : vector<4x128xf32>
    %105 = vector.extract_strided_slice %103 {offsets = [0, 0], sizes = [4, 32], strides = [1, 1]} : vector<4x128xf32> to vector<4x32xf32>
    %106 = vector.extract_strided_slice %103 {offsets = [0, 32], sizes = [4, 32], strides = [1, 1]} : vector<4x128xf32> to vector<4x32xf32>
    %107 = vector.extract_strided_slice %104 {offsets = [0, 64], sizes = [4, 32], strides = [1, 1]} : vector<4x128xf32> to vector<4x32xf32>
    %108 = vector.extract_strided_slice %103 {offsets = [0, 96], sizes = [4, 32], strides = [1, 1]} : vector<4x128xf32> to vector<4x32xf32>
    %109 = arith.mulf %106, %93 : vector<4x32xf32>
    %110 = arith.mulf %105, %107 : vector<4x32xf32>
    %111 = arith.addf %109, %110 : vector<4x32xf32>
    %112 = math.tanh %111 : vector<4x32xf32>
    %113 = arith.mulf %108, %112 : vector<4x32xf32>
    %c0_39 = arith.constant 0 : index
    %c0_40 = arith.constant 0 : index
    %114 = vector.load %arg8[%c0_39, %c0_40] : memref<32x8xf32, #tpu.memory_space<vmem>>, vector<32x8xf32>
    %c0_41 = arith.constant 0 : index
    %c0_42 = arith.constant 0 : index
    %115 = vector.load %arg9[%c0_41, %c0_42] : memref<8x128xf32, #tpu.memory_space<vmem>>, vector<8x128xf32>
    %cst_43 = arith.constant dense<0.000000e+00> : vector<32x128xf32>
    %116 = tpu.matmul %114, %115, %cst_43 {dimension_numbers = #tpu.dot_dimension_numbers<[1], [0], [0], [1], [0, 0, 1, 1], [], []>} : vector<32x8xf32>, vector<8x128xf32>, vector<32x128xf32> -> vector<32x128xf32>
    %c0_44 = arith.constant 0 : index
    %c0_45 = arith.constant 0 : index
    %117 = vector.load %arg11[%c0_44, %c0_45] : memref<1x128xf32, #tpu.memory_space<vmem>>, vector<1x128xf32>
    %118 = vector.broadcast %117 : vector<1x128xf32> to vector<32x128xf32>
    %119 = arith.addf %116, %118 : vector<32x128xf32>
    %c0_46 = arith.constant 0 : index
    %c0_47 = arith.constant 0 : index
    %120 = vector.load %arg50[%c0_46, %c0_47] : memref<32x128xf32, #tpu.memory_space<vmem>>, vector<32x128xf32>
    tpu.vector_store %arg50[%c0_46, %c0_47], %119 {strides = array<i32>} : memref<32x128xf32, #tpu.memory_space<vmem>>, vector<32x128xf32>,
    %c0_48 = arith.constant 0 : index
    %c0_49 = arith.constant 0 : index
    %121 = vector.load %arg10[%c0_48, %c0_49] : memref<32x128xf32, #tpu.memory_space<vmem>>, vector<32x128xf32>
    %c0_50 = arith.constant 0 : index
    %c0_51 = arith.constant 0 : index
    %122 = vector.load %arg50[%c0_50, %c0_51] : memref<32x128xf32, #tpu.memory_space<vmem>>, vector<4x128xf32>
    %123 = arith.negf %122 : vector<4x128xf32>
    %124 = math.exp %123 : vector<4x128xf32>
    %cst_52 = arith.constant 1.000000e+00 : f32
    %125 = vector.broadcast %cst_52 : f32 to vector<4x128xf32>
    %126 = arith.addf %125, %124 : vector<4x128xf32>
    %127 = arith.divf %125, %126 : vector<4x128xf32>
    %128 = math.tanh %122 : vector<4x128xf32>
    %129 = vector.extract_strided_slice %127 {offsets = [0, 0], sizes = [4, 32], strides = [1, 1]} : vector<4x128xf32> to vector<4x32xf32>
    %130 = vector.extract_strided_slice %128 {offsets = [0, 64], sizes = [4, 32], strides = [1, 1]} : vector<4x128xf32> to vector<4x32xf32>
    %131 = vector.extract_strided_slice %127 {offsets = [0, 96], sizes = [4, 32], strides = [1, 1]} : vector<4x128xf32> to vector<4x32xf32>
    %132 = arith.mulf %129, %130 : vector<4x32xf32>
    %133 = math.tanh %132 : vector<4x32xf32>
    %134 = arith.mulf %131, %133 : vector<4x32xf32>
    %c4_53 = arith.constant 4 : index
    %c0_54 = arith.constant 0 : index
    %135 = vector.load %arg50[%c4_53, %c0_54] : memref<32x128xf32, #tpu.memory_space<vmem>>, vector<4x128xf32>
    %cst_55 = arith.constant dense<0.000000e+00> : vector<4x128xf32>
    %136 = tpu.matmul %134, %121, %cst_55 {dimension_numbers = #tpu.dot_dimension_numbers<[1], [0], [0], [1], [0, 0, 1, 1], [], []>} : vector<4x32xf32>, vector<32x128xf32>, vector<4x128xf32> -> vector<4x128xf32>
    %137 = arith.addf %135, %136 : vector<4x128xf32>
    %138 = arith.negf %137 : vector<4x128xf32>
    %139 = math.exp %138 : vector<4x128xf32>
    %cst_56 = arith.constant 1.000000e+00 : f32
    %140 = vector.broadcast %cst_56 : f32 to vector<4x128xf32>
    %141 = arith.addf %140, %139 : vector<4x128xf32>
    %142 = arith.divf %140, %141 : vector<4x128xf32>
    %143 = math.tanh %137 : vector<4x128xf32>
    %144 = vector.extract_strided_slice %142 {offsets = [0, 0], sizes = [4, 32], strides = [1, 1]} : vector<4x128xf32> to vector<4x32xf32>
    %145 = vector.extract_strided_slice %142 {offsets = [0, 32], sizes = [4, 32], strides = [1, 1]} : vector<4x128xf32> to vector<4x32xf32>
    %146 = vector.extract_strided_slice %143 {offsets = [0, 64], sizes = [4, 32], strides = [1, 1]} : vector<4x128xf32> to vector<4x32xf32>
    %147 = vector.extract_strided_slice %142 {offsets = [0, 96], sizes = [4, 32], strides = [1, 1]} : vector<4x128xf32> to vector<4x32xf32>
    %148 = arith.mulf %145, %132 : vector<4x32xf32>
    %149 = arith.mulf %144, %146 : vector<4x32xf32>
    %150 = arith.addf %148, %149 : vector<4x32xf32>
    %151 = math.tanh %150 : vector<4x32xf32>
    %152 = arith.mulf %147, %151 : vector<4x32xf32>
    %c8_57 = arith.constant 8 : index
    %c0_58 = arith.constant 0 : index
    %153 = vector.load %arg50[%c8_57, %c0_58] : memref<32x128xf32, #tpu.memory_space<vmem>>, vector<4x128xf32>
    %cst_59 = arith.constant dense<0.000000e+00> : vector<4x128xf32>
    %154 = tpu.matmul %152, %121, %cst_59 {dimension_numbers = #tpu.dot_dimension_numbers<[1], [0], [0], [1], [0, 0, 1, 1], [], []>} : vector<4x32xf32>, vector<32x128xf32>, vector<4x128xf32> -> vector<4x128xf32>
    %155 = arith.addf %153, %154 : vector<4x128xf32>
    %156 = arith.negf %155 : vector<4x128xf32>
    %157 = math.exp %156 : vector<4x128xf32>
    %cst_60 = arith.constant 1.000000e+00 : f32
    %158 = vector.broadcast %cst_60 : f32 to vector<4x128xf32>
    %159 = arith.addf %158, %157 : vector<4x128xf32>
    %160 = arith.divf %158, %159 : vector<4x128xf32>
    %161 = math.tanh %155 : vector<4x128xf32>
    %162 = vector.extract_strided_slice %160 {offsets = [0, 0], sizes = [4, 32], strides = [1, 1]} : vector<4x128xf32> to vector<4x32xf32>
    %163 = vector.extract_strided_slice %160 {offsets = [0, 32], sizes = [4, 32], strides = [1, 1]} : vector<4x128xf32> to vector<4x32xf32>
    %164 = vector.extract_strided_slice %161 {offsets = [0, 64], sizes = [4, 32], strides = [1, 1]} : vector<4x128xf32> to vector<4x32xf32>
    %165 = vector.extract_strided_slice %160 {offsets = [0, 96], sizes = [4, 32], strides = [1, 1]} : vector<4x128xf32> to vector<4x32xf32>
    %166 = arith.mulf %163, %150 : vector<4x32xf32>
    %167 = arith.mulf %162, %164 : vector<4x32xf32>
    %168 = arith.addf %166, %167 : vector<4x32xf32>
    %169 = math.tanh %168 : vector<4x32xf32>
    %170 = arith.mulf %165, %169 : vector<4x32xf32>
    %c12_61 = arith.constant 12 : index
    %c0_62 = arith.constant 0 : index
    %171 = vector.load %arg50[%c12_61, %c0_62] : memref<32x128xf32, #tpu.memory_space<vmem>>, vector<4x128xf32>
    %cst_63 = arith.constant dense<0.000000e+00> : vector<4x128xf32>
    %172 = tpu.matmul %170, %121, %cst_63 {dimension_numbers = #tpu.dot_dimension_numbers<[1], [0], [0], [1], [0, 0, 1, 1], [], []>} : vector<4x32xf32>, vector<32x128xf32>, vector<4x128xf32> -> vector<4x128xf32>
    %173 = arith.addf %171, %172 : vector<4x128xf32>
    %174 = arith.negf %173 : vector<4x128xf32>
    %175 = math.exp %174 : vector<4x128xf32>
    %cst_64 = arith.constant 1.000000e+00 : f32
    %176 = vector.broadcast %cst_64 : f32 to vector<4x128xf32>
    %177 = arith.addf %176, %175 : vector<4x128xf32>
    %178 = arith.divf %176, %177 : vector<4x128xf32>
    %179 = math.tanh %173 : vector<4x128xf32>
    %180 = vector.extract_strided_slice %178 {offsets = [0, 0], sizes = [4, 32], strides = [1, 1]} : vector<4x128xf32> to vector<4x32xf32>
    %181 = vector.extract_strided_slice %178 {offsets = [0, 32], sizes = [4, 32], strides = [1, 1]} : vector<4x128xf32> to vector<4x32xf32>
    %182 = vector.extract_strided_slice %179 {offsets = [0, 64], sizes = [4, 32], strides = [1, 1]} : vector<4x128xf32> to vector<4x32xf32>
    %183 = vector.extract_strided_slice %178 {offsets = [0, 96], sizes = [4, 32], strides = [1, 1]} : vector<4x128xf32> to vector<4x32xf32>
    %184 = arith.mulf %181, %168 : vector<4x32xf32>
    %185 = arith.mulf %180, %182 : vector<4x32xf32>
    %186 = arith.addf %184, %185 : vector<4x32xf32>
    %187 = math.tanh %186 : vector<4x32xf32>
    %188 = arith.mulf %183, %187 : vector<4x32xf32>
    %c16 = arith.constant 16 : index
    %c0_65 = arith.constant 0 : index
    %189 = vector.load %arg50[%c16, %c0_65] : memref<32x128xf32, #tpu.memory_space<vmem>>, vector<4x128xf32>
    %cst_66 = arith.constant dense<0.000000e+00> : vector<4x128xf32>
    %190 = tpu.matmul %188, %121, %cst_66 {dimension_numbers = #tpu.dot_dimension_numbers<[1], [0], [0], [1], [0, 0, 1, 1], [], []>} : vector<4x32xf32>, vector<32x128xf32>, vector<4x128xf32> -> vector<4x128xf32>
    %191 = arith.addf %189, %190 : vector<4x128xf32>
    %192 = arith.negf %191 : vector<4x128xf32>
    %193 = math.exp %192 : vector<4x128xf32>
    %cst_67 = arith.constant 1.000000e+00 : f32
    %194 = vector.broadcast %cst_67 : f32 to vector<4x128xf32>
    %195 = arith.addf %194, %193 : vector<4x128xf32>
    %196 = arith.divf %194, %195 : vector<4x128xf32>
    %197 = math.tanh %191 : vector<4x128xf32>
    %198 = vector.extract_strided_slice %196 {offsets = [0, 0], sizes = [4, 32], strides = [1, 1]} : vector<4x128xf32> to vector<4x32xf32>
    %199 = vector.extract_strided_slice %196 {offsets = [0, 32], sizes = [4, 32], strides = [1, 1]} : vector<4x128xf32> to vector<4x32xf32>
    %200 = vector.extract_strided_slice %197 {offsets = [0, 64], sizes = [4, 32], strides = [1, 1]} : vector<4x128xf32> to vector<4x32xf32>
    %201 = vector.extract_strided_slice %196 {offsets = [0, 96], sizes = [4, 32], strides = [1, 1]} : vector<4x128xf32> to vector<4x32xf32>
    %202 = arith.mulf %199, %186 : vector<4x32xf32>
    %203 = arith.mulf %198, %200 : vector<4x32xf32>
    %204 = arith.addf %202, %203 : vector<4x32xf32>
    %205 = math.tanh %204 : vector<4x32xf32>
    %206 = arith.mulf %201, %205 : vector<4x32xf32>
    %c20 = arith.constant 20 : index
    %c0_68 = arith.constant 0 : index
    %207 = vector.load %arg50[%c20, %c0_68] : memref<32x128xf32, #tpu.memory_space<vmem>>, vector<4x128xf32>
    %cst_69 = arith.constant dense<0.000000e+00> : vector<4x128xf32>
    %208 = tpu.matmul %206, %121, %cst_69 {dimension_numbers = #tpu.dot_dimension_numbers<[1], [0], [0], [1], [0, 0, 1, 1], [], []>} : vector<4x32xf32>, vector<32x128xf32>, vector<4x128xf32> -> vector<4x128xf32>
    %209 = arith.addf %207, %208 : vector<4x128xf32>
    %210 = arith.negf %209 : vector<4x128xf32>
    %211 = math.exp %210 : vector<4x128xf32>
    %cst_70 = arith.constant 1.000000e+00 : f32
    %212 = vector.broadcast %cst_70 : f32 to vector<4x128xf32>
    %213 = arith.addf %212, %211 : vector<4x128xf32>
    %214 = arith.divf %212, %213 : vector<4x128xf32>
    %215 = math.tanh %209 : vector<4x128xf32>
    %216 = vector.extract_strided_slice %214 {offsets = [0, 0], sizes = [4, 32], strides = [1, 1]} : vector<4x128xf32> to vector<4x32xf32>
    %217 = vector.extract_strided_slice %214 {offsets = [0, 32], sizes = [4, 32], strides = [1, 1]} : vector<4x128xf32> to vector<4x32xf32>
    %218 = vector.extract_strided_slice %215 {offsets = [0, 64], sizes = [4, 32], strides = [1, 1]} : vector<4x128xf32> to vector<4x32xf32>
    %219 = vector.extract_strided_slice %214 {offsets = [0, 96], sizes = [4, 32], strides = [1, 1]} : vector<4x128xf32> to vector<4x32xf32>
    %220 = arith.mulf %217, %204 : vector<4x32xf32>
    %221 = arith.mulf %216, %218 : vector<4x32xf32>
    %222 = arith.addf %220, %221 : vector<4x32xf32>
    %223 = math.tanh %222 : vector<4x32xf32>
    %224 = arith.mulf %219, %223 : vector<4x32xf32>
    %c24 = arith.constant 24 : index
    %c0_71 = arith.constant 0 : index
    %225 = vector.load %arg50[%c24, %c0_71] : memref<32x128xf32, #tpu.memory_space<vmem>>, vector<4x128xf32>
    %cst_72 = arith.constant dense<0.000000e+00> : vector<4x128xf32>
    %226 = tpu.matmul %224, %121, %cst_72 {dimension_numbers = #tpu.dot_dimension_numbers<[1], [0], [0], [1], [0, 0, 1, 1], [], []>} : vector<4x32xf32>, vector<32x128xf32>, vector<4x128xf32> -> vector<4x128xf32>
    %227 = arith.addf %225, %226 : vector<4x128xf32>
    %228 = arith.negf %227 : vector<4x128xf32>
    %229 = math.exp %228 : vector<4x128xf32>
    %cst_73 = arith.constant 1.000000e+00 : f32
    %230 = vector.broadcast %cst_73 : f32 to vector<4x128xf32>
    %231 = arith.addf %230, %229 : vector<4x128xf32>
    %232 = arith.divf %230, %231 : vector<4x128xf32>
    %233 = math.tanh %227 : vector<4x128xf32>
    %234 = vector.extract_strided_slice %232 {offsets = [0, 0], sizes = [4, 32], strides = [1, 1]} : vector<4x128xf32> to vector<4x32xf32>
    %235 = vector.extract_strided_slice %232 {offsets = [0, 32], sizes = [4, 32], strides = [1, 1]} : vector<4x128xf32> to vector<4x32xf32>
    %236 = vector.extract_strided_slice %233 {offsets = [0, 64], sizes = [4, 32], strides = [1, 1]} : vector<4x128xf32> to vector<4x32xf32>
    %237 = vector.extract_strided_slice %232 {offsets = [0, 96], sizes = [4, 32], strides = [1, 1]} : vector<4x128xf32> to vector<4x32xf32>
    %238 = arith.mulf %235, %222 : vector<4x32xf32>
    %239 = arith.mulf %234, %236 : vector<4x32xf32>
    %240 = arith.addf %238, %239 : vector<4x32xf32>
    %241 = math.tanh %240 : vector<4x32xf32>
    %242 = arith.mulf %237, %241 : vector<4x32xf32>
    %c28 = arith.constant 28 : index
    %c0_74 = arith.constant 0 : index
    %243 = vector.load %arg50[%c28, %c0_74] : memref<32x128xf32, #tpu.memory_space<vmem>>, vector<4x128xf32>
    %cst_75 = arith.constant dense<0.000000e+00> : vector<4x128xf32>
    %244 = tpu.matmul %242, %121, %cst_75 {dimension_numbers = #tpu.dot_dimension_numbers<[1], [0], [0], [1], [0, 0, 1, 1], [], []>} : vector<4x32xf32>, vector<32x128xf32>, vector<4x128xf32> -> vector<4x128xf32>
    %245 = arith.addf %243, %244 : vector<4x128xf32>
    %246 = arith.negf %245 : vector<4x128xf32>
    %247 = math.exp %246 : vector<4x128xf32>
    %cst_76 = arith.constant 1.000000e+00 : f32
    %248 = vector.broadcast %cst_76 : f32 to vector<4x128xf32>
    %249 = arith.addf %248, %247 : vector<4x128xf32>
    %250 = arith.divf %248, %249 : vector<4x128xf32>
    %251 = math.tanh %245 : vector<4x128xf32>
    %252 = vector.extract_strided_slice %250 {offsets = [0, 0], sizes = [4, 32], strides = [1, 1]} : vector<4x128xf32> to vector<4x32xf32>
    %253 = vector.extract_strided_slice %250 {offsets = [0, 32], sizes = [4, 32], strides = [1, 1]} : vector<4x128xf32> to vector<4x32xf32>
    %254 = vector.extract_strided_slice %251 {offsets = [0, 64], sizes = [4, 32], strides = [1, 1]} : vector<4x128xf32> to vector<4x32xf32>
    %255 = vector.extract_strided_slice %250 {offsets = [0, 96], sizes = [4, 32], strides = [1, 1]} : vector<4x128xf32> to vector<4x32xf32>
    %256 = arith.mulf %253, %240 : vector<4x32xf32>
    %257 = arith.mulf %252, %254 : vector<4x32xf32>
    %258 = arith.addf %256, %257 : vector<4x32xf32>
    %259 = math.tanh %258 : vector<4x32xf32>
    %260 = arith.mulf %255, %259 : vector<4x32xf32>
    %c0_77 = arith.constant 0 : index
    %c0_78 = arith.constant 0 : index
    %261 = vector.load %arg12[%c0_77, %c0_78] : memref<32x32xf32, #tpu.memory_space<vmem>>, vector<32x32xf32>
    %cst_79 = arith.constant dense<0.000000e+00> : vector<4x32xf32>
    %262 = tpu.matmul %38, %261, %cst_79 {dimension_numbers = #tpu.dot_dimension_numbers<[1], [0], [0], [1], [0, 0, 1, 1], [], []>} : vector<4x32xf32>, vector<32x32xf32>, vector<4x32xf32> -> vector<4x32xf32>
    %c0_80 = arith.constant 0 : index
    %c0_81 = arith.constant 0 : index
    %263 = vector.load %arg13[%c0_80, %c0_81] : memref<1x32xf32, #tpu.memory_space<vmem>>, vector<1x32xf32>
    %264 = vector.broadcast %263 : vector<1x32xf32> to vector<4x32xf32>
    %265 = arith.addf %262, %264 : vector<4x32xf32>
    %266 = arith.addf %265, %113 : vector<4x32xf32>
    %c0_82 = arith.constant 0 : index
    %c0_83 = arith.constant 0 : index
    %267 = vector.load %arg14[%c0_82, %c0_83] : memref<32x32xf32, #tpu.memory_space<vmem>>, vector<32x32xf32>
    %cst_84 = arith.constant dense<0.000000e+00> : vector<4x32xf32>
    %268 = tpu.matmul %266, %267, %cst_84 {dimension_numbers = #tpu.dot_dimension_numbers<[1], [0], [0], [1], [0, 0, 1, 1], [], []>} : vector<4x32xf32>, vector<32x32xf32>, vector<4x32xf32> -> vector<4x32xf32>
    %c0_85 = arith.constant 0 : index
    %c0_86 = arith.constant 0 : index
    %269 = vector.load %arg15[%c0_85, %c0_86] : memref<1x32xf32, #tpu.memory_space<vmem>>, vector<1x32xf32>
    %270 = vector.broadcast %269 : vector<1x32xf32> to vector<4x32xf32>
    %271 = arith.addf %268, %270 : vector<4x32xf32>
    %272 = arith.addf %271, %260 : vector<4x32xf32>
    %c0_87 = arith.constant 0 : index
    %c0_88 = arith.constant 0 : index
    %273 = vector.load %arg16[%c0_87, %c0_88] : memref<32x32xf32, #tpu.memory_space<vmem>>, vector<32x32xf32>
    %cst_89 = arith.constant dense<0.000000e+00> : vector<4x32xf32>
    %274 = tpu.matmul %272, %273, %cst_89 {dimension_numbers = #tpu.dot_dimension_numbers<[1], [0], [0], [1], [0, 0, 1, 1], [], []>} : vector<4x32xf32>, vector<32x32xf32>, vector<4x32xf32> -> vector<4x32xf32>
    %c0_90 = arith.constant 0 : index
    %c0_91 = arith.constant 0 : index
    %275 = vector.load %arg17[%c0_90, %c0_91] : memref<1x32xf32, #tpu.memory_space<vmem>>, vector<1x32xf32>
    %276 = vector.broadcast %275 : vector<1x32xf32> to vector<4x32xf32>
    %277 = arith.addf %274, %276 : vector<4x32xf32>
    %c0_92 = arith.constant 0 : index
    %c0_93 = arith.constant 0 : index
    %278 = vector.load %arg18[%c0_92, %c0_93] : memref<32x32xf32, #tpu.memory_space<vmem>>, vector<32x32xf32>
    %cst_94 = arith.constant dense<0.000000e+00> : vector<4x32xf32>
    %279 = tpu.matmul %36, %278, %cst_94 {dimension_numbers = #tpu.dot_dimension_numbers<[1], [0], [0], [1], [0, 0, 1, 1], [], []>} : vector<4x32xf32>, vector<32x32xf32>, vector<4x32xf32> -> vector<4x32xf32>
    %c0_95 = arith.constant 0 : index
    %c0_96 = arith.constant 0 : index
    %280 = vector.load %arg19[%c0_95, %c0_96] : memref<1x32xf32, #tpu.memory_space<vmem>>, vector<1x32xf32>
    %281 = vector.broadcast %280 : vector<1x32xf32> to vector<4x32xf32>
    %282 = arith.addf %279, %281 : vector<4x32xf32>
    %283 = arith.addf %282, %111 : vector<4x32xf32>
    %c0_97 = arith.constant 0 : index
    %c0_98 = arith.constant 0 : index
    %284 = vector.load %arg20[%c0_97, %c0_98] : memref<32x32xf32, #tpu.memory_space<vmem>>, vector<32x32xf32>
    %cst_99 = arith.constant dense<0.000000e+00> : vector<4x32xf32>
    %285 = tpu.matmul %283, %284, %cst_99 {dimension_numbers = #tpu.dot_dimension_numbers<[1], [0], [0], [1], [0, 0, 1, 1], [], []>} : vector<4x32xf32>, vector<32x32xf32>, vector<4x32xf32> -> vector<4x32xf32>
    %c0_100 = arith.constant 0 : index
    %c0_101 = arith.constant 0 : index
    %286 = vector.load %arg21[%c0_100, %c0_101] : memref<1x32xf32, #tpu.memory_space<vmem>>, vector<1x32xf32>
    %287 = vector.broadcast %286 : vector<1x32xf32> to vector<4x32xf32>
    %288 = arith.addf %285, %287 : vector<4x32xf32>
    %289 = arith.addf %288, %258 : vector<4x32xf32>
    %c0_102 = arith.constant 0 : index
    %c0_103 = arith.constant 0 : index
    %290 = vector.load %arg22[%c0_102, %c0_103] : memref<32x32xf32, #tpu.memory_space<vmem>>, vector<32x32xf32>
    %cst_104 = arith.constant dense<0.000000e+00> : vector<4x32xf32>
    %291 = tpu.matmul %289, %290, %cst_104 {dimension_numbers = #tpu.dot_dimension_numbers<[1], [0], [0], [1], [0, 0, 1, 1], [], []>} : vector<4x32xf32>, vector<32x32xf32>, vector<4x32xf32> -> vector<4x32xf32>
    %c0_105 = arith.constant 0 : index
    %c0_106 = arith.constant 0 : index
    %292 = vector.load %arg23[%c0_105, %c0_106] : memref<1x32xf32, #tpu.memory_space<vmem>>, vector<1x32xf32>
    %293 = vector.broadcast %292 : vector<1x32xf32> to vector<4x32xf32>
    %294 = arith.addf %291, %293 : vector<4x32xf32>
    %c0_107 = arith.constant 0 : index
    %c0_108 = arith.constant 0 : index
    %295 = vector.load %arg24[%c0_107, %c0_108] : memref<32x128xf32, #tpu.memory_space<vmem>>, vector<32x128xf32>
    %c0_109 = arith.constant 0 : index
    %c0_110 = arith.constant 0 : index
    %296 = vector.load %arg25[%c0_109, %c0_110] : memref<32x128xf32, #tpu.memory_space<vmem>>, vector<32x128xf32>
    %c0_111 = arith.constant 0 : index
    %c0_112 = arith.constant 0 : index
    %297 = vector.load %arg26[%c0_111, %c0_112] : memref<1x128xf32, #tpu.memory_space<vmem>>, vector<1x128xf32>
    %298 = vector.shape_cast %297 : vector<1x128xf32> to vector<1x128xf32>
    %299 = vector.broadcast %298 : vector<1x128xf32> to vector<4x128xf32>
    %300 = arith.addf %295, %296 : vector<32x128xf32>
    %cst_113 = arith.constant dense<0.000000e+00> : vector<4x128xf32>
    %301 = tpu.matmul %277, %300, %cst_113 {dimension_numbers = #tpu.dot_dimension_numbers<[1], [0], [0], [1], [0, 0, 1, 1], [], []>} : vector<4x32xf32>, vector<32x128xf32>, vector<4x128xf32> -> vector<4x128xf32>
    %302 = arith.addf %301, %299 : vector<4x128xf32>
    %303 = arith.negf %302 : vector<4x128xf32>
    %304 = math.exp %303 : vector<4x128xf32>
    %cst_114 = arith.constant 1.000000e+00 : f32
    %305 = vector.broadcast %cst_114 : f32 to vector<4x128xf32>
    %306 = arith.addf %305, %304 : vector<4x128xf32>
    %307 = arith.divf %305, %306 : vector<4x128xf32>
    %308 = math.tanh %302 : vector<4x128xf32>
    %309 = vector.extract_strided_slice %307 {offsets = [0, 0], sizes = [4, 32], strides = [1, 1]} : vector<4x128xf32> to vector<4x32xf32>
    %310 = vector.extract_strided_slice %307 {offsets = [0, 32], sizes = [4, 32], strides = [1, 1]} : vector<4x128xf32> to vector<4x32xf32>
    %311 = vector.extract_strided_slice %308 {offsets = [0, 64], sizes = [4, 32], strides = [1, 1]} : vector<4x128xf32> to vector<4x32xf32>
    %312 = vector.extract_strided_slice %307 {offsets = [0, 96], sizes = [4, 32], strides = [1, 1]} : vector<4x128xf32> to vector<4x32xf32>
    %313 = arith.mulf %310, %294 : vector<4x32xf32>
    %314 = arith.mulf %309, %311 : vector<4x32xf32>
    %315 = arith.addf %313, %314 : vector<4x32xf32>
    %316 = math.tanh %315 : vector<4x32xf32>
    %317 = arith.mulf %312, %316 : vector<4x32xf32>
    %cst_115 = arith.constant dense<0.000000e+00> : vector<4x128xf32>
    %318 = tpu.matmul %317, %300, %cst_115 {dimension_numbers = #tpu.dot_dimension_numbers<[1], [0], [0], [1], [0, 0, 1, 1], [], []>} : vector<4x32xf32>, vector<32x128xf32>, vector<4x128xf32> -> vector<4x128xf32>
    %319 = arith.addf %318, %299 : vector<4x128xf32>
    %320 = arith.negf %319 : vector<4x128xf32>
    %321 = math.exp %320 : vector<4x128xf32>
    %cst_116 = arith.constant 1.000000e+00 : f32
    %322 = vector.broadcast %cst_116 : f32 to vector<4x128xf32>
    %323 = arith.addf %322, %321 : vector<4x128xf32>
    %324 = arith.divf %322, %323 : vector<4x128xf32>
    %325 = math.tanh %319 : vector<4x128xf32>
    %326 = vector.extract_strided_slice %324 {offsets = [0, 0], sizes = [4, 32], strides = [1, 1]} : vector<4x128xf32> to vector<4x32xf32>
    %327 = vector.extract_strided_slice %324 {offsets = [0, 32], sizes = [4, 32], strides = [1, 1]} : vector<4x128xf32> to vector<4x32xf32>
    %328 = vector.extract_strided_slice %325 {offsets = [0, 64], sizes = [4, 32], strides = [1, 1]} : vector<4x128xf32> to vector<4x32xf32>
    %329 = vector.extract_strided_slice %324 {offsets = [0, 96], sizes = [4, 32], strides = [1, 1]} : vector<4x128xf32> to vector<4x32xf32>
    %330 = arith.mulf %327, %315 : vector<4x32xf32>
    %331 = arith.mulf %326, %328 : vector<4x32xf32>
    %332 = arith.addf %330, %331 : vector<4x32xf32>
    %333 = math.tanh %332 : vector<4x32xf32>
    %334 = arith.mulf %329, %333 : vector<4x32xf32>
    %cst_117 = arith.constant 5.000000e-01 : f32
    %335 = vector.broadcast %cst_117 : f32 to vector<4x32xf32>
    %336 = arith.mulf %335, %334 : vector<4x32xf32>
    %cst_118 = arith.constant 5.000000e-01 : f32
    %337 = vector.broadcast %cst_118 : f32 to vector<4x32xf32>
    %338 = arith.mulf %337, %277 : vector<4x32xf32>
    %339 = arith.addf %336, %338 : vector<4x32xf32>
    %cst_119 = arith.constant dense<0.000000e+00> : vector<4x128xf32>
    %340 = tpu.matmul %334, %295, %cst_119 {dimension_numbers = #tpu.dot_dimension_numbers<[1], [0], [0], [1], [0, 0, 1, 1], [], []>} : vector<4x32xf32>, vector<32x128xf32>, vector<4x128xf32> -> vector<4x128xf32>
    %cst_120 = arith.constant dense<0.000000e+00> : vector<4x128xf32>
    %341 = tpu.matmul %339, %296, %cst_120 {dimension_numbers = #tpu.dot_dimension_numbers<[1], [0], [0], [1], [0, 0, 1, 1], [], []>} : vector<4x32xf32>, vector<32x128xf32>, vector<4x128xf32> -> vector<4x128xf32>
    %342 = arith.addf %340, %341 : vector<4x128xf32>
    %343 = arith.addf %342, %299 : vector<4x128xf32>
    %344 = arith.negf %343 : vector<4x128xf32>
    %345 = math.exp %344 : vector<4x128xf32>
    %cst_121 = arith.constant 1.000000e+00 : f32
    %346 = vector.broadcast %cst_121 : f32 to vector<4x128xf32>
    %347 = arith.addf %346, %345 : vector<4x128xf32>
    %348 = arith.divf %346, %347 : vector<4x128xf32>
    %349 = math.tanh %343 : vector<4x128xf32>
    %350 = vector.extract_strided_slice %348 {offsets = [0, 0], sizes = [4, 32], strides = [1, 1]} : vector<4x128xf32> to vector<4x32xf32>
    %351 = vector.extract_strided_slice %348 {offsets = [0, 32], sizes = [4, 32], strides = [1, 1]} : vector<4x128xf32> to vector<4x32xf32>
    %352 = vector.extract_strided_slice %349 {offsets = [0, 64], sizes = [4, 32], strides = [1, 1]} : vector<4x128xf32> to vector<4x32xf32>
    %353 = vector.extract_strided_slice %348 {offsets = [0, 96], sizes = [4, 32], strides = [1, 1]} : vector<4x128xf32> to vector<4x32xf32>
    %354 = arith.mulf %351, %332 : vector<4x32xf32>
    %355 = arith.mulf %350, %352 : vector<4x32xf32>
    %356 = arith.addf %354, %355 : vector<4x32xf32>
    %357 = math.tanh %356 : vector<4x32xf32>
    %358 = arith.mulf %353, %357 : vector<4x32xf32>
    %c0_122 = arith.constant 0 : index
    %c0_123 = arith.constant 0 : index
    %359 = vector.load %arg27[%c0_122, %c0_123] : memref<32x128xf32, #tpu.memory_space<vmem>>, vector<32x128xf32>
    %c0_124 = arith.constant 0 : index
    %c0_125 = arith.constant 0 : index
    %360 = vector.load %arg28[%c0_124, %c0_125] : memref<32x128xf32, #tpu.memory_space<vmem>>, vector<32x128xf32>
    %c0_126 = arith.constant 0 : index
    %c0_127 = arith.constant 0 : index
    %361 = vector.load %arg29[%c0_126, %c0_127] : memref<1x128xf32, #tpu.memory_space<vmem>>, vector<1x128xf32>
    %362 = vector.shape_cast %361 : vector<1x128xf32> to vector<1x128xf32>
    %363 = vector.broadcast %362 : vector<1x128xf32> to vector<4x128xf32>
    %c0_128 = arith.constant 0 : index
    %c0_129 = arith.constant 0 : index
    %364 = vector.load %arg30[%c0_128, %c0_129] : memref<32x32xf32, #tpu.memory_space<vmem>>, vector<32x32xf32>
    %c0_130 = arith.constant 0 : index
    %c0_131 = arith.constant 0 : index
    %365 = vector.load %arg31[%c0_130, %c0_131] : memref<32x32xf32, #tpu.memory_space<vmem>>, vector<32x32xf32>
    %c0_132 = arith.constant 0 : index
    %c0_133 = arith.constant 0 : index
    %366 = vector.load %arg32[%c0_132, %c0_133] : memref<1x32xf32, #tpu.memory_space<vmem>>, vector<1x32xf32>
    %367 = vector.shape_cast %366 : vector<1x32xf32> to vector<1x32xf32>
    %368 = vector.broadcast %367 : vector<1x32xf32> to vector<4x32xf32>
    %c0_134 = arith.constant 0 : index
    %c0_135 = arith.constant 0 : index
    %369 = vector.load %arg33[%c0_134, %c0_135] : memref<1x1xf32, #tpu.memory_space<vmem>>, vector<1x1xf32>
    %370 = vector.shape_cast %369 : vector<1x1xf32> to vector<1x1xf32>
    %371 = vector.broadcast %370 : vector<1x1xf32> to vector<4x32xf32>
    %c0_136 = arith.constant 0 : index
    %c0_137 = arith.constant 0 : index
    %372 = vector.load %arg34[%c0_136, %c0_137] : memref<32x32xf32, #tpu.memory_space<vmem>>, vector<32x32xf32>
    %c0_138 = arith.constant 0 : index
    %c0_139 = arith.constant 0 : index
    %373 = vector.load %arg35[%c0_138, %c0_139] : memref<1x32xf32, #tpu.memory_space<vmem>>, vector<1x32xf32>
    %374 = vector.shape_cast %373 : vector<1x32xf32> to vector<1x32xf32>
    %375 = vector.broadcast %374 : vector<1x32xf32> to vector<4x32xf32>
    %c0_140 = arith.constant 0 : index
    %c0_141 = arith.constant 0 : index
    %376 = vector.load %arg51[%c0_140, %c0_141] : memref<32x32xf32, #tpu.memory_space<vmem>>, vector<4x32xf32>
    tpu.vector_store %arg51[%c0_140, %c0_141], %277 {strides = array<i32>} : memref<32x32xf32, #tpu.memory_space<vmem>>, vector<4x32xf32>,
    %cst_142 = arith.constant dense<0.000000e+00> : vector<4x32xf32>
    %377 = tpu.matmul %277, %364, %cst_142 {dimension_numbers = #tpu.dot_dimension_numbers<[1], [0], [0], [1], [0, 0, 1, 1], [], []>} : vector<4x32xf32>, vector<32x32xf32>, vector<4x32xf32> -> vector<4x32xf32>
    %cst_143 = arith.constant dense<0.000000e+00> : vector<4x32xf32>
    %378 = tpu.matmul %277, %365, %cst_143 {dimension_numbers = #tpu.dot_dimension_numbers<[1], [0], [0], [1], [0, 0, 1, 1], [], []>} : vector<4x32xf32>, vector<32x32xf32>, vector<4x32xf32> -> vector<4x32xf32>
    %379 = arith.addf %377, %378 : vector<4x32xf32>
    %380 = arith.addf %379, %368 : vector<4x32xf32>
    %cst_144 = arith.constant 0.000000e+00 : f32
    %381 = vector.broadcast %cst_144 : f32 to vector<4x32xf32>
    %382 = arith.cmpf oge, %380, %381 : vector<4x32xf32>
    %383 = arith.mulf %371, %380 : vector<4x32xf32>
    %384 = arith.select %382, %380, %383 : vector<4x32xi1>, vector<4x32xf32>
    %cst_145 = arith.constant dense<0.000000e+00> : vector<4x32xf32>
    %385 = tpu.matmul %384, %372, %cst_145 {dimension_numbers = #tpu.dot_dimension_numbers<[1], [0], [0], [1], [0, 0, 1, 1], [], []>} : vector<4x32xf32>, vector<32x32xf32>, vector<4x32xf32> -> vector<4x32xf32>
    %386 = arith.addf %385, %375 : vector<4x32xf32>
    %cst_146 = arith.constant 1.000000e-01 : f32
    %387 = vector.broadcast %cst_146 : f32 to vector<4x32xf32>
    %388 = arith.mulf %387, %277 : vector<4x32xf32>
    %cst_147 = arith.constant 0.899999976 : f32
    %389 = vector.broadcast %cst_147 : f32 to vector<4x32xf32>
    %390 = arith.mulf %389, %386 : vector<4x32xf32>
    %391 = arith.addf %388, %390 : vector<4x32xf32>
    %cst_148 = arith.constant dense<0.000000e+00> : vector<4x128xf32>
    %392 = tpu.matmul %277, %359, %cst_148 {dimension_numbers = #tpu.dot_dimension_numbers<[1], [0], [0], [1], [0, 0, 1, 1], [], []>} : vector<4x32xf32>, vector<32x128xf32>, vector<4x128xf32> -> vector<4x128xf32>
    %cst_149 = arith.constant dense<0.000000e+00> : vector<4x128xf32>
    %393 = tpu.matmul %391, %360, %cst_149 {dimension_numbers = #tpu.dot_dimension_numbers<[1], [0], [0], [1], [0, 0, 1, 1], [], []>} : vector<4x32xf32>, vector<32x128xf32>, vector<4x128xf32> -> vector<4x128xf32>
    %394 = arith.addf %392, %393 : vector<4x128xf32>
    %395 = arith.addf %394, %363 : vector<4x128xf32>
    %396 = arith.negf %395 : vector<4x128xf32>
    %397 = math.exp %396 : vector<4x128xf32>
    %cst_150 = arith.constant 1.000000e+00 : f32
    %398 = vector.broadcast %cst_150 : f32 to vector<4x128xf32>
    %399 = arith.addf %398, %397 : vector<4x128xf32>
    %400 = arith.divf %398, %399 : vector<4x128xf32>
    %401 = math.tanh %395 : vector<4x128xf32>
    %402 = vector.extract_strided_slice %400 {offsets = [0, 0], sizes = [4, 32], strides = [1, 1]} : vector<4x128xf32> to vector<4x32xf32>
    %403 = vector.extract_strided_slice %400 {offsets = [0, 32], sizes = [4, 32], strides = [1, 1]} : vector<4x128xf32> to vector<4x32xf32>
    %404 = vector.extract_strided_slice %401 {offsets = [0, 64], sizes = [4, 32], strides = [1, 1]} : vector<4x128xf32> to vector<4x32xf32>
    %405 = vector.extract_strided_slice %400 {offsets = [0, 96], sizes = [4, 32], strides = [1, 1]} : vector<4x128xf32> to vector<4x32xf32>
    %406 = arith.mulf %403, %294 : vector<4x32xf32>
    %407 = arith.mulf %402, %404 : vector<4x32xf32>
    %408 = arith.addf %406, %407 : vector<4x32xf32>
    %409 = math.tanh %408 : vector<4x32xf32>
    %410 = arith.mulf %405, %409 : vector<4x32xf32>
    %c4_151 = arith.constant 4 : index
    %c0_152 = arith.constant 0 : index
    %411 = vector.load %arg51[%c4_151, %c0_152] : memref<32x32xf32, #tpu.memory_space<vmem>>, vector<4x32xf32>
    tpu.vector_store %arg51[%c4_151, %c0_152], %410 {strides = array<i32>} : memref<32x32xf32, #tpu.memory_space<vmem>>, vector<4x32xf32>,
    %cst_153 = arith.constant dense<0.000000e+00> : vector<4x32xf32>
    %412 = tpu.matmul %410, %364, %cst_153 {dimension_numbers = #tpu.dot_dimension_numbers<[1], [0], [0], [1], [0, 0, 1, 1], [], []>} : vector<4x32xf32>, vector<32x32xf32>, vector<4x32xf32> -> vector<4x32xf32>
    %cst_154 = arith.constant dense<0.000000e+00> : vector<4x32xf32>
    %413 = tpu.matmul %277, %365, %cst_154 {dimension_numbers = #tpu.dot_dimension_numbers<[1], [0], [0], [1], [0, 0, 1, 1], [], []>} : vector<4x32xf32>, vector<32x32xf32>, vector<4x32xf32> -> vector<4x32xf32>
    %414 = arith.addf %412, %413 : vector<4x32xf32>
    %415 = arith.addf %414, %368 : vector<4x32xf32>
    %cst_155 = arith.constant 0.000000e+00 : f32
    %416 = vector.broadcast %cst_155 : f32 to vector<4x32xf32>
    %417 = arith.cmpf oge, %415, %416 : vector<4x32xf32>
    %418 = arith.mulf %371, %415 : vector<4x32xf32>
    %419 = arith.select %417, %415, %418 : vector<4x32xi1>, vector<4x32xf32>
    %cst_156 = arith.constant dense<0.000000e+00> : vector<4x32xf32>
    %420 = tpu.matmul %419, %372, %cst_156 {dimension_numbers = #tpu.dot_dimension_numbers<[1], [0], [0], [1], [0, 0, 1, 1], [], []>} : vector<4x32xf32>, vector<32x32xf32>, vector<4x32xf32> -> vector<4x32xf32>
    %421 = arith.addf %420, %375 : vector<4x32xf32>
    %cst_157 = arith.constant 1.000000e-01 : f32
    %422 = vector.broadcast %cst_157 : f32 to vector<4x32xf32>
    %423 = arith.mulf %422, %410 : vector<4x32xf32>
    %cst_158 = arith.constant 0.899999976 : f32
    %424 = vector.broadcast %cst_158 : f32 to vector<4x32xf32>
    %425 = arith.mulf %424, %421 : vector<4x32xf32>
    %426 = arith.addf %423, %425 : vector<4x32xf32>
    %cst_159 = arith.constant dense<0.000000e+00> : vector<4x128xf32>
    %427 = tpu.matmul %410, %359, %cst_159 {dimension_numbers = #tpu.dot_dimension_numbers<[1], [0], [0], [1], [0, 0, 1, 1], [], []>} : vector<4x32xf32>, vector<32x128xf32>, vector<4x128xf32> -> vector<4x128xf32>
    %cst_160 = arith.constant dense<0.000000e+00> : vector<4x128xf32>
    %428 = tpu.matmul %426, %360, %cst_160 {dimension_numbers = #tpu.dot_dimension_numbers<[1], [0], [0], [1], [0, 0, 1, 1], [], []>} : vector<4x32xf32>, vector<32x128xf32>, vector<4x128xf32> -> vector<4x128xf32>
    %429 = arith.addf %427, %428 : vector<4x128xf32>
    %430 = arith.addf %429, %363 : vector<4x128xf32>
    %431 = arith.negf %430 : vector<4x128xf32>
    %432 = math.exp %431 : vector<4x128xf32>
    %cst_161 = arith.constant 1.000000e+00 : f32
    %433 = vector.broadcast %cst_161 : f32 to vector<4x128xf32>
    %434 = arith.addf %433, %432 : vector<4x128xf32>
    %435 = arith.divf %433, %434 : vector<4x128xf32>
    %436 = math.tanh %430 : vector<4x128xf32>
    %437 = vector.extract_strided_slice %435 {offsets = [0, 0], sizes = [4, 32], strides = [1, 1]} : vector<4x128xf32> to vector<4x32xf32>
    %438 = vector.extract_strided_slice %435 {offsets = [0, 32], sizes = [4, 32], strides = [1, 1]} : vector<4x128xf32> to vector<4x32xf32>
    %439 = vector.extract_strided_slice %436 {offsets = [0, 64], sizes = [4, 32], strides = [1, 1]} : vector<4x128xf32> to vector<4x32xf32>
    %440 = vector.extract_strided_slice %435 {offsets = [0, 96], sizes = [4, 32], strides = [1, 1]} : vector<4x128xf32> to vector<4x32xf32>
    %441 = arith.mulf %438, %408 : vector<4x32xf32>
    %442 = arith.mulf %437, %439 : vector<4x32xf32>
    %443 = arith.addf %441, %442 : vector<4x32xf32>
    %444 = math.tanh %443 : vector<4x32xf32>
    %445 = arith.mulf %440, %444 : vector<4x32xf32>
    %c8_162 = arith.constant 8 : index
    %c0_163 = arith.constant 0 : index
    %446 = vector.load %arg51[%c8_162, %c0_163] : memref<32x32xf32, #tpu.memory_space<vmem>>, vector<4x32xf32>
    tpu.vector_store %arg51[%c8_162, %c0_163], %445 {strides = array<i32>} : memref<32x32xf32, #tpu.memory_space<vmem>>, vector<4x32xf32>,
    %cst_164 = arith.constant 5.000000e-01 : f32
    %447 = vector.broadcast %cst_164 : f32 to vector<4x32xf32>
    %448 = arith.mulf %447, %445 : vector<4x32xf32>
    %cst_165 = arith.constant 5.000000e-01 : f32
    %449 = vector.broadcast %cst_165 : f32 to vector<4x32xf32>
    %450 = arith.mulf %449, %277 : vector<4x32xf32>
    %451 = arith.addf %448, %450 : vector<4x32xf32>
    %cst_166 = arith.constant dense<0.000000e+00> : vector<4x32xf32>
    %452 = tpu.matmul %451, %364, %cst_166 {dimension_numbers = #tpu.dot_dimension_numbers<[1], [0], [0], [1], [0, 0, 1, 1], [], []>} : vector<4x32xf32>, vector<32x32xf32>, vector<4x32xf32> -> vector<4x32xf32>
    %cst_167 = arith.constant dense<0.000000e+00> : vector<4x32xf32>
    %453 = tpu.matmul %317, %365, %cst_167 {dimension_numbers = #tpu.dot_dimension_numbers<[1], [0], [0], [1], [0, 0, 1, 1], [], []>} : vector<4x32xf32>, vector<32x32xf32>, vector<4x32xf32> -> vector<4x32xf32>
    %454 = arith.addf %452, %453 : vector<4x32xf32>
    %455 = arith.addf %454, %368 : vector<4x32xf32>
    %cst_168 = arith.constant 0.000000e+00 : f32
    %456 = vector.broadcast %cst_168 : f32 to vector<4x32xf32>
    %457 = arith.cmpf oge, %455, %456 : vector<4x32xf32>
    %458 = arith.mulf %371, %455 : vector<4x32xf32>
    %459 = arith.select %457, %455, %458 : vector<4x32xi1>, vector<4x32xf32>
    %cst_169 = arith.constant dense<0.000000e+00> : vector<4x32xf32>
    %460 = tpu.matmul %459, %372, %cst_169 {dimension_numbers = #tpu.dot_dimension_numbers<[1], [0], [0], [1], [0, 0, 1, 1], [], []>} : vector<4x32xf32>, vector<32x32xf32>, vector<4x32xf32> -> vector<4x32xf32>
    %461 = arith.addf %460, %375 : vector<4x32xf32>
    %cst_170 = arith.constant 1.000000e-01 : f32
    %462 = vector.broadcast %cst_170 : f32 to vector<4x32xf32>
    %463 = arith.mulf %462, %451 : vector<4x32xf32>
    %cst_171 = arith.constant 0.899999976 : f32
    %464 = vector.broadcast %cst_171 : f32 to vector<4x32xf32>
    %465 = arith.mulf %464, %461 : vector<4x32xf32>
    %466 = arith.addf %463, %465 : vector<4x32xf32>
    %cst_172 = arith.constant dense<0.000000e+00> : vector<4x128xf32>
    %467 = tpu.matmul %445, %359, %cst_172 {dimension_numbers = #tpu.dot_dimension_numbers<[1], [0], [0], [1], [0, 0, 1, 1], [], []>} : vector<4x32xf32>, vector<32x128xf32>, vector<4x128xf32> -> vector<4x128xf32>
    %cst_173 = arith.constant dense<0.000000e+00> : vector<4x128xf32>
    %468 = tpu.matmul %466, %360, %cst_173 {dimension_numbers = #tpu.dot_dimension_numbers<[1], [0], [0], [1], [0, 0, 1, 1], [], []>} : vector<4x32xf32>, vector<32x128xf32>, vector<4x128xf32> -> vector<4x128xf32>
    %469 = arith.addf %467, %468 : vector<4x128xf32>
    %470 = arith.addf %469, %363 : vector<4x128xf32>
    %471 = arith.negf %470 : vector<4x128xf32>
    %472 = math.exp %471 : vector<4x128xf32>
    %cst_174 = arith.constant 1.000000e+00 : f32
    %473 = vector.broadcast %cst_174 : f32 to vector<4x128xf32>
    %474 = arith.addf %473, %472 : vector<4x128xf32>
    %475 = arith.divf %473, %474 : vector<4x128xf32>
    %476 = math.tanh %470 : vector<4x128xf32>
    %477 = vector.extract_strided_slice %475 {offsets = [0, 0], sizes = [4, 32], strides = [1, 1]} : vector<4x128xf32> to vector<4x32xf32>
    %478 = vector.extract_strided_slice %475 {offsets = [0, 32], sizes = [4, 32], strides = [1, 1]} : vector<4x128xf32> to vector<4x32xf32>
    %479 = vector.extract_strided_slice %476 {offsets = [0, 64], sizes = [4, 32], strides = [1, 1]} : vector<4x128xf32> to vector<4x32xf32>
    %480 = vector.extract_strided_slice %475 {offsets = [0, 96], sizes = [4, 32], strides = [1, 1]} : vector<4x128xf32> to vector<4x32xf32>
    %481 = arith.mulf %478, %443 : vector<4x32xf32>
    %482 = arith.mulf %477, %479 : vector<4x32xf32>
    %483 = arith.addf %481, %482 : vector<4x32xf32>
    %484 = math.tanh %483 : vector<4x32xf32>
    %485 = arith.mulf %480, %484 : vector<4x32xf32>
    %c12_175 = arith.constant 12 : index
    %c0_176 = arith.constant 0 : index
    %486 = vector.load %arg51[%c12_175, %c0_176] : memref<32x32xf32, #tpu.memory_space<vmem>>, vector<4x32xf32>
    tpu.vector_store %arg51[%c12_175, %c0_176], %485 {strides = array<i32>} : memref<32x32xf32, #tpu.memory_space<vmem>>, vector<4x32xf32>,
    %cst_177 = arith.constant 1.000000e+00 : f32
    %487 = vector.broadcast %cst_177 : f32 to vector<4x32xf32>
    %488 = arith.mulf %487, %485 : vector<4x32xf32>
    %cst_178 = arith.constant 0.000000e+00 : f32
    %489 = vector.broadcast %cst_178 : f32 to vector<4x32xf32>
    %490 = arith.mulf %489, %410 : vector<4x32xf32>
    %491 = arith.addf %488, %490 : vector<4x32xf32>
    %cst_179 = arith.constant dense<0.000000e+00> : vector<4x32xf32>
    %492 = tpu.matmul %491, %364, %cst_179 {dimension_numbers = #tpu.dot_dimension_numbers<[1], [0], [0], [1], [0, 0, 1, 1], [], []>} : vector<4x32xf32>, vector<32x32xf32>, vector<4x32xf32> -> vector<4x32xf32>
    %cst_180 = arith.constant dense<0.000000e+00> : vector<4x32xf32>
    %493 = tpu.matmul %317, %365, %cst_180 {dimension_numbers = #tpu.dot_dimension_numbers<[1], [0], [0], [1], [0, 0, 1, 1], [], []>} : vector<4x32xf32>, vector<32x32xf32>, vector<4x32xf32> -> vector<4x32xf32>
    %494 = arith.addf %492, %493 : vector<4x32xf32>
    %495 = arith.addf %494, %368 : vector<4x32xf32>
    %cst_181 = arith.constant 0.000000e+00 : f32
    %496 = vector.broadcast %cst_181 : f32 to vector<4x32xf32>
    %497 = arith.cmpf oge, %495, %496 : vector<4x32xf32>
    %498 = arith.mulf %371, %495 : vector<4x32xf32>
    %499 = arith.select %497, %495, %498 : vector<4x32xi1>, vector<4x32xf32>
    %cst_182 = arith.constant dense<0.000000e+00> : vector<4x32xf32>
    %500 = tpu.matmul %499, %372, %cst_182 {dimension_numbers = #tpu.dot_dimension_numbers<[1], [0], [0], [1], [0, 0, 1, 1], [], []>} : vector<4x32xf32>, vector<32x32xf32>, vector<4x32xf32> -> vector<4x32xf32>
    %501 = arith.addf %500, %375 : vector<4x32xf32>
    %cst_183 = arith.constant 1.000000e-01 : f32
    %502 = vector.broadcast %cst_183 : f32 to vector<4x32xf32>
    %503 = arith.mulf %502, %491 : vector<4x32xf32>
    %cst_184 = arith.constant 0.899999976 : f32
    %504 = vector.broadcast %cst_184 : f32 to vector<4x32xf32>
    %505 = arith.mulf %504, %501 : vector<4x32xf32>
    %506 = arith.addf %503, %505 : vector<4x32xf32>
    %cst_185 = arith.constant dense<0.000000e+00> : vector<4x128xf32>
    %507 = tpu.matmul %485, %359, %cst_185 {dimension_numbers = #tpu.dot_dimension_numbers<[1], [0], [0], [1], [0, 0, 1, 1], [], []>} : vector<4x32xf32>, vector<32x128xf32>, vector<4x128xf32> -> vector<4x128xf32>
    %cst_186 = arith.constant dense<0.000000e+00> : vector<4x128xf32>
    %508 = tpu.matmul %506, %360, %cst_186 {dimension_numbers = #tpu.dot_dimension_numbers<[1], [0], [0], [1], [0, 0, 1, 1], [], []>} : vector<4x32xf32>, vector<32x128xf32>, vector<4x128xf32> -> vector<4x128xf32>
    %509 = arith.addf %507, %508 : vector<4x128xf32>
    %510 = arith.addf %509, %363 : vector<4x128xf32>
    %511 = arith.negf %510 : vector<4x128xf32>
    %512 = math.exp %511 : vector<4x128xf32>
    %cst_187 = arith.constant 1.000000e+00 : f32
    %513 = vector.broadcast %cst_187 : f32 to vector<4x128xf32>
    %514 = arith.addf %513, %512 : vector<4x128xf32>
    %515 = arith.divf %513, %514 : vector<4x128xf32>
    %516 = math.tanh %510 : vector<4x128xf32>
    %517 = vector.extract_strided_slice %515 {offsets = [0, 0], sizes = [4, 32], strides = [1, 1]} : vector<4x128xf32> to vector<4x32xf32>
    %518 = vector.extract_strided_slice %515 {offsets = [0, 32], sizes = [4, 32], strides = [1, 1]} : vector<4x128xf32> to vector<4x32xf32>
    %519 = vector.extract_strided_slice %516 {offsets = [0, 64], sizes = [4, 32], strides = [1, 1]} : vector<4x128xf32> to vector<4x32xf32>
    %520 = vector.extract_strided_slice %515 {offsets = [0, 96], sizes = [4, 32], strides = [1, 1]} : vector<4x128xf32> to vector<4x32xf32>
    %521 = arith.mulf %518, %483 : vector<4x32xf32>
    %522 = arith.mulf %517, %519 : vector<4x32xf32>
    %523 = arith.addf %521, %522 : vector<4x32xf32>
    %524 = math.tanh %523 : vector<4x32xf32>
    %525 = arith.mulf %520, %524 : vector<4x32xf32>
    %c16_188 = arith.constant 16 : index
    %c0_189 = arith.constant 0 : index
    %526 = vector.load %arg51[%c16_188, %c0_189] : memref<32x32xf32, #tpu.memory_space<vmem>>, vector<4x32xf32>
    tpu.vector_store %arg51[%c16_188, %c0_189], %525 {strides = array<i32>} : memref<32x32xf32, #tpu.memory_space<vmem>>, vector<4x32xf32>,
    %cst_190 = arith.constant 0.000000e+00 : f32
    %527 = vector.broadcast %cst_190 : f32 to vector<4x32xf32>
    %528 = arith.mulf %527, %525 : vector<4x32xf32>
    %cst_191 = arith.constant 1.000000e+00 : f32
    %529 = vector.broadcast %cst_191 : f32 to vector<4x32xf32>
    %530 = arith.mulf %529, %445 : vector<4x32xf32>
    %531 = arith.addf %528, %530 : vector<4x32xf32>
    %cst_192 = arith.constant dense<0.000000e+00> : vector<4x32xf32>
    %532 = tpu.matmul %531, %364, %cst_192 {dimension_numbers = #tpu.dot_dimension_numbers<[1], [0], [0], [1], [0, 0, 1, 1], [], []>} : vector<4x32xf32>, vector<32x32xf32>, vector<4x32xf32> -> vector<4x32xf32>
    %cst_193 = arith.constant dense<0.000000e+00> : vector<4x32xf32>
    %533 = tpu.matmul %334, %365, %cst_193 {dimension_numbers = #tpu.dot_dimension_numbers<[1], [0], [0], [1], [0, 0, 1, 1], [], []>} : vector<4x32xf32>, vector<32x32xf32>, vector<4x32xf32> -> vector<4x32xf32>
    %534 = arith.addf %532, %533 : vector<4x32xf32>
    %535 = arith.addf %534, %368 : vector<4x32xf32>
    %cst_194 = arith.constant 0.000000e+00 : f32
    %536 = vector.broadcast %cst_194 : f32 to vector<4x32xf32>
    %537 = arith.cmpf oge, %535, %536 : vector<4x32xf32>
    %538 = arith.mulf %371, %535 : vector<4x32xf32>
    %539 = arith.select %537, %535, %538 : vector<4x32xi1>, vector<4x32xf32>
    %cst_195 = arith.constant dense<0.000000e+00> : vector<4x32xf32>
    %540 = tpu.matmul %539, %372, %cst_195 {dimension_numbers = #tpu.dot_dimension_numbers<[1], [0], [0], [1], [0, 0, 1, 1], [], []>} : vector<4x32xf32>, vector<32x32xf32>, vector<4x32xf32> -> vector<4x32xf32>
    %541 = arith.addf %540, %375 : vector<4x32xf32>
    %cst_196 = arith.constant 1.000000e-01 : f32
    %542 = vector.broadcast %cst_196 : f32 to vector<4x32xf32>
    %543 = arith.mulf %542, %531 : vector<4x32xf32>
    %cst_197 = arith.constant 0.899999976 : f32
    %544 = vector.broadcast %cst_197 : f32 to vector<4x32xf32>
    %545 = arith.mulf %544, %541 : vector<4x32xf32>
    %546 = arith.addf %543, %545 : vector<4x32xf32>
    %cst_198 = arith.constant dense<0.000000e+00> : vector<4x128xf32>
    %547 = tpu.matmul %525, %359, %cst_198 {dimension_numbers = #tpu.dot_dimension_numbers<[1], [0], [0], [1], [0, 0, 1, 1], [], []>} : vector<4x32xf32>, vector<32x128xf32>, vector<4x128xf32> -> vector<4x128xf32>
    %cst_199 = arith.constant dense<0.000000e+00> : vector<4x128xf32>
    %548 = tpu.matmul %546, %360, %cst_199 {dimension_numbers = #tpu.dot_dimension_numbers<[1], [0], [0], [1], [0, 0, 1, 1], [], []>} : vector<4x32xf32>, vector<32x128xf32>, vector<4x128xf32> -> vector<4x128xf32>
    %549 = arith.addf %547, %548 : vector<4x128xf32>
    %550 = arith.addf %549, %363 : vector<4x128xf32>
    %551 = arith.negf %550 : vector<4x128xf32>
    %552 = math.exp %551 : vector<4x128xf32>
    %cst_200 = arith.constant 1.000000e+00 : f32
    %553 = vector.broadcast %cst_200 : f32 to vector<4x128xf32>
    %554 = arith.addf %553, %552 : vector<4x128xf32>
    %555 = arith.divf %553, %554 : vector<4x128xf32>
    %556 = math.tanh %550 : vector<4x128xf32>
    %557 = vector.extract_strided_slice %555 {offsets = [0, 0], sizes = [4, 32], strides = [1, 1]} : vector<4x128xf32> to vector<4x32xf32>
    %558 = vector.extract_strided_slice %555 {offsets = [0, 32], sizes = [4, 32], strides = [1, 1]} : vector<4x128xf32> to vector<4x32xf32>
    %559 = vector.extract_strided_slice %556 {offsets = [0, 64], sizes = [4, 32], strides = [1, 1]} : vector<4x128xf32> to vector<4x32xf32>
    %560 = vector.extract_strided_slice %555 {offsets = [0, 96], sizes = [4, 32], strides = [1, 1]} : vector<4x128xf32> to vector<4x32xf32>
    %561 = arith.mulf %558, %523 : vector<4x32xf32>
    %562 = arith.mulf %557, %559 : vector<4x32xf32>
    %563 = arith.addf %561, %562 : vector<4x32xf32>
    %564 = math.tanh %563 : vector<4x32xf32>
    %565 = arith.mulf %560, %564 : vector<4x32xf32>
    %c20_201 = arith.constant 20 : index
    %c0_202 = arith.constant 0 : index
    %566 = vector.load %arg51[%c20_201, %c0_202] : memref<32x32xf32, #tpu.memory_space<vmem>>, vector<4x32xf32>
    tpu.vector_store %arg51[%c20_201, %c0_202], %565 {strides = array<i32>} : memref<32x32xf32, #tpu.memory_space<vmem>>, vector<4x32xf32>,
    %cst_203 = arith.constant 5.000000e-01 : f32
    %567 = vector.broadcast %cst_203 : f32 to vector<4x32xf32>
    %568 = arith.mulf %567, %565 : vector<4x32xf32>
    %cst_204 = arith.constant 5.000000e-01 : f32
    %569 = vector.broadcast %cst_204 : f32 to vector<4x32xf32>
    %570 = arith.mulf %569, %485 : vector<4x32xf32>
    %571 = arith.addf %568, %570 : vector<4x32xf32>
    %cst_205 = arith.constant dense<0.000000e+00> : vector<4x32xf32>
    %572 = tpu.matmul %571, %364, %cst_205 {dimension_numbers = #tpu.dot_dimension_numbers<[1], [0], [0], [1], [0, 0, 1, 1], [], []>} : vector<4x32xf32>, vector<32x32xf32>, vector<4x32xf32> -> vector<4x32xf32>
    %cst_206 = arith.constant dense<0.000000e+00> : vector<4x32xf32>
    %573 = tpu.matmul %334, %365, %cst_206 {dimension_numbers = #tpu.dot_dimension_numbers<[1], [0], [0], [1], [0, 0, 1, 1], [], []>} : vector<4x32xf32>, vector<32x32xf32>, vector<4x32xf32> -> vector<4x32xf32>
    %574 = arith.addf %572, %573 : vector<4x32xf32>
    %575 = arith.addf %574, %368 : vector<4x32xf32>
    %cst_207 = arith.constant 0.000000e+00 : f32
    %576 = vector.broadcast %cst_207 : f32 to vector<4x32xf32>
    %577 = arith.cmpf oge, %575, %576 : vector<4x32xf32>
    %578 = arith.mulf %371, %575 : vector<4x32xf32>
    %579 = arith.select %577, %575, %578 : vector<4x32xi1>, vector<4x32xf32>
    %cst_208 = arith.constant dense<0.000000e+00> : vector<4x32xf32>
    %580 = tpu.matmul %579, %372, %cst_208 {dimension_numbers = #tpu.dot_dimension_numbers<[1], [0], [0], [1], [0, 0, 1, 1], [], []>} : vector<4x32xf32>, vector<32x32xf32>, vector<4x32xf32> -> vector<4x32xf32>
    %581 = arith.addf %580, %375 : vector<4x32xf32>
    %cst_209 = arith.constant 1.000000e-01 : f32
    %582 = vector.broadcast %cst_209 : f32 to vector<4x32xf32>
    %583 = arith.mulf %582, %571 : vector<4x32xf32>
    %cst_210 = arith.constant 0.899999976 : f32
    %584 = vector.broadcast %cst_210 : f32 to vector<4x32xf32>
    %585 = arith.mulf %584, %581 : vector<4x32xf32>
    %586 = arith.addf %583, %585 : vector<4x32xf32>
    %cst_211 = arith.constant dense<0.000000e+00> : vector<4x128xf32>
    %587 = tpu.matmul %565, %359, %cst_211 {dimension_numbers = #tpu.dot_dimension_numbers<[1], [0], [0], [1], [0, 0, 1, 1], [], []>} : vector<4x32xf32>, vector<32x128xf32>, vector<4x128xf32> -> vector<4x128xf32>
    %cst_212 = arith.constant dense<0.000000e+00> : vector<4x128xf32>
    %588 = tpu.matmul %586, %360, %cst_212 {dimension_numbers = #tpu.dot_dimension_numbers<[1], [0], [0], [1], [0, 0, 1, 1], [], []>} : vector<4x32xf32>, vector<32x128xf32>, vector<4x128xf32> -> vector<4x128xf32>
    %589 = arith.addf %587, %588 : vector<4x128xf32>
    %590 = arith.addf %589, %363 : vector<4x128xf32>
    %591 = arith.negf %590 : vector<4x128xf32>
    %592 = math.exp %591 : vector<4x128xf32>
    %cst_213 = arith.constant 1.000000e+00 : f32
    %593 = vector.broadcast %cst_213 : f32 to vector<4x128xf32>
    %594 = arith.addf %593, %592 : vector<4x128xf32>
    %595 = arith.divf %593, %594 : vector<4x128xf32>
    %596 = math.tanh %590 : vector<4x128xf32>
    %597 = vector.extract_strided_slice %595 {offsets = [0, 0], sizes = [4, 32], strides = [1, 1]} : vector<4x128xf32> to vector<4x32xf32>
    %598 = vector.extract_strided_slice %595 {offsets = [0, 32], sizes = [4, 32], strides = [1, 1]} : vector<4x128xf32> to vector<4x32xf32>
    %599 = vector.extract_strided_slice %596 {offsets = [0, 64], sizes = [4, 32], strides = [1, 1]} : vector<4x128xf32> to vector<4x32xf32>
    %600 = vector.extract_strided_slice %595 {offsets = [0, 96], sizes = [4, 32], strides = [1, 1]} : vector<4x128xf32> to vector<4x32xf32>
    %601 = arith.mulf %598, %563 : vector<4x32xf32>
    %602 = arith.mulf %597, %599 : vector<4x32xf32>
    %603 = arith.addf %601, %602 : vector<4x32xf32>
    %604 = math.tanh %603 : vector<4x32xf32>
    %605 = arith.mulf %600, %604 : vector<4x32xf32>
    %c24_214 = arith.constant 24 : index
    %c0_215 = arith.constant 0 : index
    %606 = vector.load %arg51[%c24_214, %c0_215] : memref<32x32xf32, #tpu.memory_space<vmem>>, vector<4x32xf32>
    tpu.vector_store %arg51[%c24_214, %c0_215], %605 {strides = array<i32>} : memref<32x32xf32, #tpu.memory_space<vmem>>, vector<4x32xf32>,
    %cst_216 = arith.constant 1.000000e+00 : f32
    %607 = vector.broadcast %cst_216 : f32 to vector<4x32xf32>
    %608 = arith.mulf %607, %605 : vector<4x32xf32>
    %cst_217 = arith.constant 0.000000e+00 : f32
    %609 = vector.broadcast %cst_217 : f32 to vector<4x32xf32>
    %610 = arith.mulf %609, %525 : vector<4x32xf32>
    %611 = arith.addf %608, %610 : vector<4x32xf32>
    %cst_218 = arith.constant dense<0.000000e+00> : vector<4x32xf32>
    %612 = tpu.matmul %611, %364, %cst_218 {dimension_numbers = #tpu.dot_dimension_numbers<[1], [0], [0], [1], [0, 0, 1, 1], [], []>} : vector<4x32xf32>, vector<32x32xf32>, vector<4x32xf32> -> vector<4x32xf32>
    %cst_219 = arith.constant dense<0.000000e+00> : vector<4x32xf32>
    %613 = tpu.matmul %358, %365, %cst_219 {dimension_numbers = #tpu.dot_dimension_numbers<[1], [0], [0], [1], [0, 0, 1, 1], [], []>} : vector<4x32xf32>, vector<32x32xf32>, vector<4x32xf32> -> vector<4x32xf32>
    %614 = arith.addf %612, %613 : vector<4x32xf32>
    %615 = arith.addf %614, %368 : vector<4x32xf32>
    %cst_220 = arith.constant 0.000000e+00 : f32
    %616 = vector.broadcast %cst_220 : f32 to vector<4x32xf32>
    %617 = arith.cmpf oge, %615, %616 : vector<4x32xf32>
    %618 = arith.mulf %371, %615 : vector<4x32xf32>
    %619 = arith.select %617, %615, %618 : vector<4x32xi1>, vector<4x32xf32>
    %cst_221 = arith.constant dense<0.000000e+00> : vector<4x32xf32>
    %620 = tpu.matmul %619, %372, %cst_221 {dimension_numbers = #tpu.dot_dimension_numbers<[1], [0], [0], [1], [0, 0, 1, 1], [], []>} : vector<4x32xf32>, vector<32x32xf32>, vector<4x32xf32> -> vector<4x32xf32>
    %621 = arith.addf %620, %375 : vector<4x32xf32>
    %cst_222 = arith.constant 1.000000e-01 : f32
    %622 = vector.broadcast %cst_222 : f32 to vector<4x32xf32>
    %623 = arith.mulf %622, %611 : vector<4x32xf32>
    %cst_223 = arith.constant 0.899999976 : f32
    %624 = vector.broadcast %cst_223 : f32 to vector<4x32xf32>
    %625 = arith.mulf %624, %621 : vector<4x32xf32>
    %626 = arith.addf %623, %625 : vector<4x32xf32>
    %cst_224 = arith.constant dense<0.000000e+00> : vector<4x128xf32>
    %627 = tpu.matmul %605, %359, %cst_224 {dimension_numbers = #tpu.dot_dimension_numbers<[1], [0], [0], [1], [0, 0, 1, 1], [], []>} : vector<4x32xf32>, vector<32x128xf32>, vector<4x128xf32> -> vector<4x128xf32>
    %cst_225 = arith.constant dense<0.000000e+00> : vector<4x128xf32>
    %628 = tpu.matmul %626, %360, %cst_225 {dimension_numbers = #tpu.dot_dimension_numbers<[1], [0], [0], [1], [0, 0, 1, 1], [], []>} : vector<4x32xf32>, vector<32x128xf32>, vector<4x128xf32> -> vector<4x128xf32>
    %629 = arith.addf %627, %628 : vector<4x128xf32>
    %630 = arith.addf %629, %363 : vector<4x128xf32>
    %631 = arith.negf %630 : vector<4x128xf32>
    %632 = math.exp %631 : vector<4x128xf32>
    %cst_226 = arith.constant 1.000000e+00 : f32
    %633 = vector.broadcast %cst_226 : f32 to vector<4x128xf32>
    %634 = arith.addf %633, %632 : vector<4x128xf32>
    %635 = arith.divf %633, %634 : vector<4x128xf32>
    %636 = math.tanh %630 : vector<4x128xf32>
    %637 = vector.extract_strided_slice %635 {offsets = [0, 0], sizes = [4, 32], strides = [1, 1]} : vector<4x128xf32> to vector<4x32xf32>
    %638 = vector.extract_strided_slice %635 {offsets = [0, 32], sizes = [4, 32], strides = [1, 1]} : vector<4x128xf32> to vector<4x32xf32>
    %639 = vector.extract_strided_slice %636 {offsets = [0, 64], sizes = [4, 32], strides = [1, 1]} : vector<4x128xf32> to vector<4x32xf32>
    %640 = vector.extract_strided_slice %635 {offsets = [0, 96], sizes = [4, 32], strides = [1, 1]} : vector<4x128xf32> to vector<4x32xf32>
    %641 = arith.mulf %638, %603 : vector<4x32xf32>
    %642 = arith.mulf %637, %639 : vector<4x32xf32>
    %643 = arith.addf %641, %642 : vector<4x32xf32>
    %644 = math.tanh %643 : vector<4x32xf32>
    %645 = arith.mulf %640, %644 : vector<4x32xf32>
    %c28_227 = arith.constant 28 : index
    %c0_228 = arith.constant 0 : index
    %646 = vector.load %arg51[%c28_227, %c0_228] : memref<32x32xf32, #tpu.memory_space<vmem>>, vector<4x32xf32>
    tpu.vector_store %arg51[%c28_227, %c0_228], %645 {strides = array<i32>} : memref<32x32xf32, #tpu.memory_space<vmem>>, vector<4x32xf32>,
    %c0_229 = arith.constant 0 : index
    %c0_230 = arith.constant 0 : index
    %647 = vector.load %arg51[%c0_229, %c0_230] : memref<32x32xf32, #tpu.memory_space<vmem>>, vector<32x32xf32>
    %c0_231 = arith.constant 0 : index
    %c0_232 = arith.constant 0 : index
    %648 = vector.load %arg36[%c0_231, %c0_232] : memref<32x8xf32, #tpu.memory_space<vmem>>, vector<32x8xf32>
    %cst_233 = arith.constant dense<0.000000e+00> : vector<32x8xf32>
    %649 = tpu.matmul %647, %648, %cst_233 {dimension_numbers = #tpu.dot_dimension_numbers<[1], [0], [0], [1], [0, 0, 1, 1], [], []>} : vector<32x32xf32>, vector<32x8xf32>, vector<32x8xf32> -> vector<32x8xf32>
    %c0_234 = arith.constant 0 : index
    %c0_235 = arith.constant 0 : index
    %650 = vector.load %arg37[%c0_234, %c0_235] : memref<1x8xf32, #tpu.memory_space<vmem>>, vector<1x8xf32>
    %651 = vector.broadcast %650 : vector<1x8xf32> to vector<32x8xf32>
    %652 = arith.addf %649, %651 : vector<32x8xf32>
    %c0_236 = arith.constant 0 : index
    %c0_237 = arith.constant 0 : index
    %653 = vector.load %arg44[%c0_236, %c0_237] : memref<32x8xf32, #tpu.memory_space<vmem>>, vector<32x8xf32>
    tpu.vector_store %arg44[%c0_236, %c0_237], %652 {strides = array<i32>} : memref<32x8xf32, #tpu.memory_space<vmem>>, vector<32x8xf32>,
    %c0_238 = arith.constant 0 : index
    %c0_239 = arith.constant 0 : index
    %654 = vector.load %arg43[%c0_238, %c0_239] : memref<32x8xf32, #tpu.memory_space<vmem>>, vector<32x8xf32>
    %655 = arith.subf %652, %654 : vector<32x8xf32>
    %c0_240 = arith.constant 0 : index
    %c0_241 = arith.constant 0 : index
    %656 = vector.load %arg45[%c0_240, %c0_241] : memref<32x8xf32, #tpu.memory_space<vmem>>, vector<32x8xf32>
    tpu.vector_store %arg45[%c0_240, %c0_241], %655 {strides = array<i32>} : memref<32x8xf32, #tpu.memory_space<vmem>>, vector<32x8xf32>,
    %657 = arith.mulf %655, %655 : vector<32x8xf32>
    %cst_242 = arith.constant dense<0.000000e+00> : vector<32xf32>
    %658 = vector.multi_reduction <add>, %657, %cst_242 [1] : vector<32x8xf32> to vector<32xf32>
    %659 = vector.shape_cast %658 : vector<32xf32> to vector<32x1xf32>
    %cst_243 = arith.constant dense<0.000000e+00> : vector<1xf32>
    %660 = vector.multi_reduction <add>, %659, %cst_243 [0] : vector<32x1xf32> to vector<1xf32>
    %661 = vector.shape_cast %660 : vector<1xf32> to vector<1x1xf32>
    %cst_244 = arith.constant 3.906250e-03 : f32
    %662 = vector.broadcast %cst_244 : f32 to vector<1x1xf32>
    %663 = arith.mulf %661, %662 : vector<1x1xf32>
    %c0_245 = arith.constant 0 : index
    %c0_246 = arith.constant 0 : index
    %664 = vector.load %arg46[%c0_245, %c0_246] : memref<1x1xf32, #tpu.memory_space<vmem>>, vector<1x1xf32>
    tpu.vector_store %arg46[%c0_245, %c0_246], %663 {strides = array<i32>} : memref<1x1xf32, #tpu.memory_space<vmem>>, vector<1x1xf32>,
    %c0_247 = arith.constant 0 : index
    %c0_248 = arith.constant 0 : index
    %665 = vector.load %arg47[%c0_247, %c0_248] : memref<4x32xf32, #tpu.memory_space<vmem>>, vector<4x32xf32>
    tpu.vector_store %arg47[%c0_247, %c0_248], %391 {strides = array<i32>} : memref<4x32xf32, #tpu.memory_space<vmem>>, vector<4x32xf32>,
    %c0_249 = arith.constant 0 : index
    %c0_250 = arith.constant 0 : index
    %666 = vector.load %arg48[%c0_249, %c0_250] : memref<4x32xf32, #tpu.memory_space<vmem>>, vector<4x32xf32>
    tpu.vector_store %arg48[%c0_249, %c0_250], %294 {strides = array<i32>} : memref<4x32xf32, #tpu.memory_space<vmem>>, vector<4x32xf32>,
    %c0_251 = arith.constant 0 : index
    %c0_252 = arith.constant 0 : index
    %667 = vector.load %arg8[%c0_251, %c0_252] : memref<32x8xf32, #tpu.memory_space<vmem>>, vector<32x8xf32>
    %c0_253 = arith.constant 0 : index
    %c0_254 = arith.constant 0 : index
    %668 = vector.load %arg38[%c0_253, %c0_254] : memref<8x128xf32, #tpu.memory_space<vmem>>, vector<8x128xf32>
    %cst_255 = arith.constant dense<0.000000e+00> : vector<32x128xf32>
    %669 = tpu.matmul %667, %668, %cst_255 {dimension_numbers = #tpu.dot_dimension_numbers<[1], [0], [0], [1], [0, 0, 1, 1], [], []>} : vector<32x8xf32>, vector<8x128xf32>, vector<32x128xf32> -> vector<32x128xf32>
    %c0_256 = arith.constant 0 : index
    %c0_257 = arith.constant 0 : index
    %670 = vector.load %arg40[%c0_256, %c0_257] : memref<1x128xf32, #tpu.memory_space<vmem>>, vector<1x128xf32>
    %671 = vector.broadcast %670 : vector<1x128xf32> to vector<32x128xf32>
    %672 = arith.addf %669, %671 : vector<32x128xf32>
    %c0_258 = arith.constant 0 : index
    %c0_259 = arith.constant 0 : index
    %673 = vector.load %arg50[%c0_258, %c0_259] : memref<32x128xf32, #tpu.memory_space<vmem>>, vector<32x128xf32>
    tpu.vector_store %arg50[%c0_258, %c0_259], %672 {strides = array<i32>} : memref<32x128xf32, #tpu.memory_space<vmem>>, vector<32x128xf32>,
    %c0_260 = arith.constant 0 : index
    %c0_261 = arith.constant 0 : index
    %674 = vector.load %arg39[%c0_260, %c0_261] : memref<32x128xf32, #tpu.memory_space<vmem>>, vector<32x128xf32>
    %c0_262 = arith.constant 0 : index
    %c0_263 = arith.constant 0 : index
    %675 = vector.load %arg50[%c0_262, %c0_263] : memref<32x128xf32, #tpu.memory_space<vmem>>, vector<4x128xf32>
    %cst_264 = arith.constant dense<0.000000e+00> : vector<4x128xf32>
    %676 = tpu.matmul %391, %674, %cst_264 {dimension_numbers = #tpu.dot_dimension_numbers<[1], [0], [0], [1], [0, 0, 1, 1], [], []>} : vector<4x32xf32>, vector<32x128xf32>, vector<4x128xf32> -> vector<4x128xf32>
    %677 = arith.addf %675, %676 : vector<4x128xf32>
    %678 = arith.negf %677 : vector<4x128xf32>
    %679 = math.exp %678 : vector<4x128xf32>
    %cst_265 = arith.constant 1.000000e+00 : f32
    %680 = vector.broadcast %cst_265 : f32 to vector<4x128xf32>
    %681 = arith.addf %680, %679 : vector<4x128xf32>
    %682 = arith.divf %680, %681 : vector<4x128xf32>
    %683 = math.tanh %677 : vector<4x128xf32>
    %684 = vector.extract_strided_slice %682 {offsets = [0, 0], sizes = [4, 32], strides = [1, 1]} : vector<4x128xf32> to vector<4x32xf32>
    %685 = vector.extract_strided_slice %682 {offsets = [0, 32], sizes = [4, 32], strides = [1, 1]} : vector<4x128xf32> to vector<4x32xf32>
    %686 = vector.extract_strided_slice %683 {offsets = [0, 64], sizes = [4, 32], strides = [1, 1]} : vector<4x128xf32> to vector<4x32xf32>
    %687 = vector.extract_strided_slice %682 {offsets = [0, 96], sizes = [4, 32], strides = [1, 1]} : vector<4x128xf32> to vector<4x32xf32>
    %688 = arith.mulf %685, %294 : vector<4x32xf32>
    %689 = arith.mulf %684, %686 : vector<4x32xf32>
    %690 = arith.addf %688, %689 : vector<4x32xf32>
    %691 = math.tanh %690 : vector<4x32xf32>
    %692 = arith.mulf %687, %691 : vector<4x32xf32>
    %c0_266 = arith.constant 0 : index
    %c0_267 = arith.constant 0 : index
    %693 = vector.load %arg52[%c0_266, %c0_267] : memref<32x32xf32, #tpu.memory_space<vmem>>, vector<4x32xf32>
    tpu.vector_store %arg52[%c0_266, %c0_267], %692 {strides = array<i32>} : memref<32x32xf32, #tpu.memory_space<vmem>>, vector<4x32xf32>,
    %c4_268 = arith.constant 4 : index
    %c0_269 = arith.constant 0 : index
    %694 = vector.load %arg50[%c4_268, %c0_269] : memref<32x128xf32, #tpu.memory_space<vmem>>, vector<4x128xf32>
    %cst_270 = arith.constant dense<0.000000e+00> : vector<4x128xf32>
    %695 = tpu.matmul %692, %674, %cst_270 {dimension_numbers = #tpu.dot_dimension_numbers<[1], [0], [0], [1], [0, 0, 1, 1], [], []>} : vector<4x32xf32>, vector<32x128xf32>, vector<4x128xf32> -> vector<4x128xf32>
    %696 = arith.addf %694, %695 : vector<4x128xf32>
    %697 = arith.negf %696 : vector<4x128xf32>
    %698 = math.exp %697 : vector<4x128xf32>
    %cst_271 = arith.constant 1.000000e+00 : f32
    %699 = vector.broadcast %cst_271 : f32 to vector<4x128xf32>
    %700 = arith.addf %699, %698 : vector<4x128xf32>
    %701 = arith.divf %699, %700 : vector<4x128xf32>
    %702 = math.tanh %696 : vector<4x128xf32>
    %703 = vector.extract_strided_slice %701 {offsets = [0, 0], sizes = [4, 32], strides = [1, 1]} : vector<4x128xf32> to vector<4x32xf32>
    %704 = vector.extract_strided_slice %701 {offsets = [0, 32], sizes = [4, 32], strides = [1, 1]} : vector<4x128xf32> to vector<4x32xf32>
    %705 = vector.extract_strided_slice %702 {offsets = [0, 64], sizes = [4, 32], strides = [1, 1]} : vector<4x128xf32> to vector<4x32xf32>
    %706 = vector.extract_strided_slice %701 {offsets = [0, 96], sizes = [4, 32], strides = [1, 1]} : vector<4x128xf32> to vector<4x32xf32>
    %707 = arith.mulf %704, %690 : vector<4x32xf32>
    %708 = arith.mulf %703, %705 : vector<4x32xf32>
    %709 = arith.addf %707, %708 : vector<4x32xf32>
    %710 = math.tanh %709 : vector<4x32xf32>
    %711 = arith.mulf %706, %710 : vector<4x32xf32>
    %c4_272 = arith.constant 4 : index
    %c0_273 = arith.constant 0 : index
    %712 = vector.load %arg52[%c4_272, %c0_273] : memref<32x32xf32, #tpu.memory_space<vmem>>, vector<4x32xf32>
    tpu.vector_store %arg52[%c4_272, %c0_273], %711 {strides = array<i32>} : memref<32x32xf32, #tpu.memory_space<vmem>>, vector<4x32xf32>,
    %c8_274 = arith.constant 8 : index
    %c0_275 = arith.constant 0 : index
    %713 = vector.load %arg50[%c8_274, %c0_275] : memref<32x128xf32, #tpu.memory_space<vmem>>, vector<4x128xf32>
    %cst_276 = arith.constant dense<0.000000e+00> : vector<4x128xf32>
    %714 = tpu.matmul %711, %674, %cst_276 {dimension_numbers = #tpu.dot_dimension_numbers<[1], [0], [0], [1], [0, 0, 1, 1], [], []>} : vector<4x32xf32>, vector<32x128xf32>, vector<4x128xf32> -> vector<4x128xf32>
    %715 = arith.addf %713, %714 : vector<4x128xf32>
    %716 = arith.negf %715 : vector<4x128xf32>
    %717 = math.exp %716 : vector<4x128xf32>
    %cst_277 = arith.constant 1.000000e+00 : f32
    %718 = vector.broadcast %cst_277 : f32 to vector<4x128xf32>
    %719 = arith.addf %718, %717 : vector<4x128xf32>
    %720 = arith.divf %718, %719 : vector<4x128xf32>
    %721 = math.tanh %715 : vector<4x128xf32>
    %722 = vector.extract_strided_slice %720 {offsets = [0, 0], sizes = [4, 32], strides = [1, 1]} : vector<4x128xf32> to vector<4x32xf32>
    %723 = vector.extract_strided_slice %720 {offsets = [0, 32], sizes = [4, 32], strides = [1, 1]} : vector<4x128xf32> to vector<4x32xf32>
    %724 = vector.extract_strided_slice %721 {offsets = [0, 64], sizes = [4, 32], strides = [1, 1]} : vector<4x128xf32> to vector<4x32xf32>
    %725 = vector.extract_strided_slice %720 {offsets = [0, 96], sizes = [4, 32], strides = [1, 1]} : vector<4x128xf32> to vector<4x32xf32>
    %726 = arith.mulf %723, %709 : vector<4x32xf32>
    %727 = arith.mulf %722, %724 : vector<4x32xf32>
    %728 = arith.addf %726, %727 : vector<4x32xf32>
    %729 = math.tanh %728 : vector<4x32xf32>
    %730 = arith.mulf %725, %729 : vector<4x32xf32>
    %c8_278 = arith.constant 8 : index
    %c0_279 = arith.constant 0 : index
    %731 = vector.load %arg52[%c8_278, %c0_279] : memref<32x32xf32, #tpu.memory_space<vmem>>, vector<4x32xf32>
    tpu.vector_store %arg52[%c8_278, %c0_279], %730 {strides = array<i32>} : memref<32x32xf32, #tpu.memory_space<vmem>>, vector<4x32xf32>,
    %c12_280 = arith.constant 12 : index
    %c0_281 = arith.constant 0 : index
    %732 = vector.load %arg50[%c12_280, %c0_281] : memref<32x128xf32, #tpu.memory_space<vmem>>, vector<4x128xf32>
    %cst_282 = arith.constant dense<0.000000e+00> : vector<4x128xf32>
    %733 = tpu.matmul %730, %674, %cst_282 {dimension_numbers = #tpu.dot_dimension_numbers<[1], [0], [0], [1], [0, 0, 1, 1], [], []>} : vector<4x32xf32>, vector<32x128xf32>, vector<4x128xf32> -> vector<4x128xf32>
    %734 = arith.addf %732, %733 : vector<4x128xf32>
    %735 = arith.negf %734 : vector<4x128xf32>
    %736 = math.exp %735 : vector<4x128xf32>
    %cst_283 = arith.constant 1.000000e+00 : f32
    %737 = vector.broadcast %cst_283 : f32 to vector<4x128xf32>
    %738 = arith.addf %737, %736 : vector<4x128xf32>
    %739 = arith.divf %737, %738 : vector<4x128xf32>
    %740 = math.tanh %734 : vector<4x128xf32>
    %741 = vector.extract_strided_slice %739 {offsets = [0, 0], sizes = [4, 32], strides = [1, 1]} : vector<4x128xf32> to vector<4x32xf32>
    %742 = vector.extract_strided_slice %739 {offsets = [0, 32], sizes = [4, 32], strides = [1, 1]} : vector<4x128xf32> to vector<4x32xf32>
    %743 = vector.extract_strided_slice %740 {offsets = [0, 64], sizes = [4, 32], strides = [1, 1]} : vector<4x128xf32> to vector<4x32xf32>
    %744 = vector.extract_strided_slice %739 {offsets = [0, 96], sizes = [4, 32], strides = [1, 1]} : vector<4x128xf32> to vector<4x32xf32>
    %745 = arith.mulf %742, %728 : vector<4x32xf32>
    %746 = arith.mulf %741, %743 : vector<4x32xf32>
    %747 = arith.addf %745, %746 : vector<4x32xf32>
    %748 = math.tanh %747 : vector<4x32xf32>
    %749 = arith.mulf %744, %748 : vector<4x32xf32>
    %c12_284 = arith.constant 12 : index
    %c0_285 = arith.constant 0 : index
    %750 = vector.load %arg52[%c12_284, %c0_285] : memref<32x32xf32, #tpu.memory_space<vmem>>, vector<4x32xf32>
    tpu.vector_store %arg52[%c12_284, %c0_285], %749 {strides = array<i32>} : memref<32x32xf32, #tpu.memory_space<vmem>>, vector<4x32xf32>,
    %c16_286 = arith.constant 16 : index
    %c0_287 = arith.constant 0 : index
    %751 = vector.load %arg50[%c16_286, %c0_287] : memref<32x128xf32, #tpu.memory_space<vmem>>, vector<4x128xf32>
    %cst_288 = arith.constant dense<0.000000e+00> : vector<4x128xf32>
    %752 = tpu.matmul %749, %674, %cst_288 {dimension_numbers = #tpu.dot_dimension_numbers<[1], [0], [0], [1], [0, 0, 1, 1], [], []>} : vector<4x32xf32>, vector<32x128xf32>, vector<4x128xf32> -> vector<4x128xf32>
    %753 = arith.addf %751, %752 : vector<4x128xf32>
    %754 = arith.negf %753 : vector<4x128xf32>
    %755 = math.exp %754 : vector<4x128xf32>
    %cst_289 = arith.constant 1.000000e+00 : f32
    %756 = vector.broadcast %cst_289 : f32 to vector<4x128xf32>
    %757 = arith.addf %756, %755 : vector<4x128xf32>
    %758 = arith.divf %756, %757 : vector<4x128xf32>
    %759 = math.tanh %753 : vector<4x128xf32>
    %760 = vector.extract_strided_slice %758 {offsets = [0, 0], sizes = [4, 32], strides = [1, 1]} : vector<4x128xf32> to vector<4x32xf32>
    %761 = vector.extract_strided_slice %758 {offsets = [0, 32], sizes = [4, 32], strides = [1, 1]} : vector<4x128xf32> to vector<4x32xf32>
    %762 = vector.extract_strided_slice %759 {offsets = [0, 64], sizes = [4, 32], strides = [1, 1]} : vector<4x128xf32> to vector<4x32xf32>
    %763 = vector.extract_strided_slice %758 {offsets = [0, 96], sizes = [4, 32], strides = [1, 1]} : vector<4x128xf32> to vector<4x32xf32>
    %764 = arith.mulf %761, %747 : vector<4x32xf32>
    %765 = arith.mulf %760, %762 : vector<4x32xf32>
    %766 = arith.addf %764, %765 : vector<4x32xf32>
    %767 = math.tanh %766 : vector<4x32xf32>
    %768 = arith.mulf %763, %767 : vector<4x32xf32>
    %c16_290 = arith.constant 16 : index
    %c0_291 = arith.constant 0 : index
    %769 = vector.load %arg52[%c16_290, %c0_291] : memref<32x32xf32, #tpu.memory_space<vmem>>, vector<4x32xf32>
    tpu.vector_store %arg52[%c16_290, %c0_291], %768 {strides = array<i32>} : memref<32x32xf32, #tpu.memory_space<vmem>>, vector<4x32xf32>,
    %c20_292 = arith.constant 20 : index
    %c0_293 = arith.constant 0 : index
    %770 = vector.load %arg50[%c20_292, %c0_293] : memref<32x128xf32, #tpu.memory_space<vmem>>, vector<4x128xf32>
    %cst_294 = arith.constant dense<0.000000e+00> : vector<4x128xf32>
    %771 = tpu.matmul %768, %674, %cst_294 {dimension_numbers = #tpu.dot_dimension_numbers<[1], [0], [0], [1], [0, 0, 1, 1], [], []>} : vector<4x32xf32>, vector<32x128xf32>, vector<4x128xf32> -> vector<4x128xf32>
    %772 = arith.addf %770, %771 : vector<4x128xf32>
    %773 = arith.negf %772 : vector<4x128xf32>
    %774 = math.exp %773 : vector<4x128xf32>
    %cst_295 = arith.constant 1.000000e+00 : f32
    %775 = vector.broadcast %cst_295 : f32 to vector<4x128xf32>
    %776 = arith.addf %775, %774 : vector<4x128xf32>
    %777 = arith.divf %775, %776 : vector<4x128xf32>
    %778 = math.tanh %772 : vector<4x128xf32>
    %779 = vector.extract_strided_slice %777 {offsets = [0, 0], sizes = [4, 32], strides = [1, 1]} : vector<4x128xf32> to vector<4x32xf32>
    %780 = vector.extract_strided_slice %777 {offsets = [0, 32], sizes = [4, 32], strides = [1, 1]} : vector<4x128xf32> to vector<4x32xf32>
    %781 = vector.extract_strided_slice %778 {offsets = [0, 64], sizes = [4, 32], strides = [1, 1]} : vector<4x128xf32> to vector<4x32xf32>
    %782 = vector.extract_strided_slice %777 {offsets = [0, 96], sizes = [4, 32], strides = [1, 1]} : vector<4x128xf32> to vector<4x32xf32>
    %783 = arith.mulf %780, %766 : vector<4x32xf32>
    %784 = arith.mulf %779, %781 : vector<4x32xf32>
    %785 = arith.addf %783, %784 : vector<4x32xf32>
    %786 = math.tanh %785 : vector<4x32xf32>
    %787 = arith.mulf %782, %786 : vector<4x32xf32>
    %c20_296 = arith.constant 20 : index
    %c0_297 = arith.constant 0 : index
    %788 = vector.load %arg52[%c20_296, %c0_297] : memref<32x32xf32, #tpu.memory_space<vmem>>, vector<4x32xf32>
    tpu.vector_store %arg52[%c20_296, %c0_297], %787 {strides = array<i32>} : memref<32x32xf32, #tpu.memory_space<vmem>>, vector<4x32xf32>,
    %c24_298 = arith.constant 24 : index
    %c0_299 = arith.constant 0 : index
    %789 = vector.load %arg50[%c24_298, %c0_299] : memref<32x128xf32, #tpu.memory_space<vmem>>, vector<4x128xf32>
    %cst_300 = arith.constant dense<0.000000e+00> : vector<4x128xf32>
    %790 = tpu.matmul %787, %674, %cst_300 {dimension_numbers = #tpu.dot_dimension_numbers<[1], [0], [0], [1], [0, 0, 1, 1], [], []>} : vector<4x32xf32>, vector<32x128xf32>, vector<4x128xf32> -> vector<4x128xf32>
    %791 = arith.addf %789, %790 : vector<4x128xf32>
    %792 = arith.negf %791 : vector<4x128xf32>
    %793 = math.exp %792 : vector<4x128xf32>
    %cst_301 = arith.constant 1.000000e+00 : f32
    %794 = vector.broadcast %cst_301 : f32 to vector<4x128xf32>
    %795 = arith.addf %794, %793 : vector<4x128xf32>
    %796 = arith.divf %794, %795 : vector<4x128xf32>
    %797 = math.tanh %791 : vector<4x128xf32>
    %798 = vector.extract_strided_slice %796 {offsets = [0, 0], sizes = [4, 32], strides = [1, 1]} : vector<4x128xf32> to vector<4x32xf32>
    %799 = vector.extract_strided_slice %796 {offsets = [0, 32], sizes = [4, 32], strides = [1, 1]} : vector<4x128xf32> to vector<4x32xf32>
    %800 = vector.extract_strided_slice %797 {offsets = [0, 64], sizes = [4, 32], strides = [1, 1]} : vector<4x128xf32> to vector<4x32xf32>
    %801 = vector.extract_strided_slice %796 {offsets = [0, 96], sizes = [4, 32], strides = [1, 1]} : vector<4x128xf32> to vector<4x32xf32>
    %802 = arith.mulf %799, %785 : vector<4x32xf32>
    %803 = arith.mulf %798, %800 : vector<4x32xf32>
    %804 = arith.addf %802, %803 : vector<4x32xf32>
    %805 = math.tanh %804 : vector<4x32xf32>
    %806 = arith.mulf %801, %805 : vector<4x32xf32>
    %c24_302 = arith.constant 24 : index
    %c0_303 = arith.constant 0 : index
    %807 = vector.load %arg52[%c24_302, %c0_303] : memref<32x32xf32, #tpu.memory_space<vmem>>, vector<4x32xf32>
    tpu.vector_store %arg52[%c24_302, %c0_303], %806 {strides = array<i32>} : memref<32x32xf32, #tpu.memory_space<vmem>>, vector<4x32xf32>,
    %c28_304 = arith.constant 28 : index
    %c0_305 = arith.constant 0 : index
    %808 = vector.load %arg50[%c28_304, %c0_305] : memref<32x128xf32, #tpu.memory_space<vmem>>, vector<4x128xf32>
    %cst_306 = arith.constant dense<0.000000e+00> : vector<4x128xf32>
    %809 = tpu.matmul %806, %674, %cst_306 {dimension_numbers = #tpu.dot_dimension_numbers<[1], [0], [0], [1], [0, 0, 1, 1], [], []>} : vector<4x32xf32>, vector<32x128xf32>, vector<4x128xf32> -> vector<4x128xf32>
    %810 = arith.addf %808, %809 : vector<4x128xf32>
    %811 = arith.negf %810 : vector<4x128xf32>
    %812 = math.exp %811 : vector<4x128xf32>
    %cst_307 = arith.constant 1.000000e+00 : f32
    %813 = vector.broadcast %cst_307 : f32 to vector<4x128xf32>
    %814 = arith.addf %813, %812 : vector<4x128xf32>
    %815 = arith.divf %813, %814 : vector<4x128xf32>
    %816 = math.tanh %810 : vector<4x128xf32>
    %817 = vector.extract_strided_slice %815 {offsets = [0, 0], sizes = [4, 32], strides = [1, 1]} : vector<4x128xf32> to vector<4x32xf32>
    %818 = vector.extract_strided_slice %815 {offsets = [0, 32], sizes = [4, 32], strides = [1, 1]} : vector<4x128xf32> to vector<4x32xf32>
    %819 = vector.extract_strided_slice %816 {offsets = [0, 64], sizes = [4, 32], strides = [1, 1]} : vector<4x128xf32> to vector<4x32xf32>
    %820 = vector.extract_strided_slice %815 {offsets = [0, 96], sizes = [4, 32], strides = [1, 1]} : vector<4x128xf32> to vector<4x32xf32>
    %821 = arith.mulf %818, %804 : vector<4x32xf32>
    %822 = arith.mulf %817, %819 : vector<4x32xf32>
    %823 = arith.addf %821, %822 : vector<4x32xf32>
    %824 = math.tanh %823 : vector<4x32xf32>
    %825 = arith.mulf %820, %824 : vector<4x32xf32>
    %c28_308 = arith.constant 28 : index
    %c0_309 = arith.constant 0 : index
    %826 = vector.load %arg52[%c28_308, %c0_309] : memref<32x32xf32, #tpu.memory_space<vmem>>, vector<4x32xf32>
    tpu.vector_store %arg52[%c28_308, %c0_309], %825 {strides = array<i32>} : memref<32x32xf32, #tpu.memory_space<vmem>>, vector<4x32xf32>,
    %c0_310 = arith.constant 0 : index
    %c0_311 = arith.constant 0 : index
    %827 = vector.load %arg52[%c0_310, %c0_311] : memref<32x32xf32, #tpu.memory_space<vmem>>, vector<32x32xf32>
    %c0_312 = arith.constant 0 : index
    %c0_313 = arith.constant 0 : index
    %828 = vector.load %arg41[%c0_312, %c0_313] : memref<32x8xf32, #tpu.memory_space<vmem>>, vector<32x8xf32>
    %cst_314 = arith.constant dense<0.000000e+00> : vector<32x8xf32>
    %829 = tpu.matmul %827, %828, %cst_314 {dimension_numbers = #tpu.dot_dimension_numbers<[1], [0], [0], [1], [0, 0, 1, 1], [], []>} : vector<32x32xf32>, vector<32x8xf32>, vector<32x8xf32> -> vector<32x8xf32>
    %c0_315 = arith.constant 0 : index
    %c0_316 = arith.constant 0 : index
    %830 = vector.load %arg42[%c0_315, %c0_316] : memref<1x8xf32, #tpu.memory_space<vmem>>, vector<1x8xf32>
    %831 = vector.broadcast %830 : vector<1x8xf32> to vector<32x8xf32>
    %832 = arith.addf %829, %831 : vector<32x8xf32>
    %c0_317 = arith.constant 0 : index
    %c0_318 = arith.constant 0 : index
    %833 = vector.load %arg49[%c0_317, %c0_318] : memref<32x8xf32, #tpu.memory_space<vmem>>, vector<32x8xf32>
    tpu.vector_store %arg49[%c0_317, %c0_318], %832 {strides = array<i32>} : memref<32x8xf32, #tpu.memory_space<vmem>>, vector<32x8xf32>,
    return
  }
}

</mosaic_0001>

<llo_original>
// kernel: forward.1
$region0: #{forward.1}
  #allocation0 [shape = 'u32[]', space=smem, size = 0x4, offset = 0x4, fixed_abs, tag = 'smem constant byte address 0x4 - core index']
  #allocation1 [shape = 'u32[144,128]{1,0:T(1,128)}', space=vmem, size = 0x12000, scoped, tag = 'internal scratch']
  #allocation2 [shape = 'f32[32,128]{1,0:T(8,128)}', space=vmem, size = 0x4000, scoped, tag = 'scratch operand']
  #allocation3 [shape = 'f32[32,32]{1,0:T(8,128)}', space=vmem, size = 0x4000, scoped, tag = 'scratch operand']
  #allocation4 [shape = 'f32[32,32]{1,0:T(8,128)}', space=vmem, size = 0x4000, scoped, tag = 'scratch operand']
  #allocation5 [shape = 'f32[1,1]{1,0:T(1,128)S(1)}', space=vmem, size = 0x200, scoped, tag = 'scoped memory for forward.1']
  %s0 = inlined_call_operand.smem [shape: u32[50], index: -1, kind: input, shape index: {}]
  %s1 = sld [smem:[%s0]]
  %s2 = scalar_lea.smem %s0, 1
  %s3 = sld [smem:[%s2]]
  %s4 = scalar_lea.smem %s0, 2
  %s5 = sld [smem:[%s4]]
  %s6 = scalar_lea.smem %s0, 3
  %s7 = sld [smem:[%s6]]
  %s8 = scalar_lea.smem %s0, 4
  %s9 = sld [smem:[%s8]]
  %s10 = scalar_lea.smem %s0, 5
  %s11 = sld [smem:[%s10]]
  %s12 = scalar_lea.smem %s0, 6
  %s13 = sld [smem:[%s12]]
  %s14 = scalar_lea.smem %s0, 7
  %s15 = sld [smem:[%s14]]
  %s16 = scalar_lea.smem %s0, 8
  %s17 = sld [smem:[%s16]]
  %s18 = scalar_lea.smem %s0, 9
  %s19 = sld [smem:[%s18]]
  %s20 = scalar_lea.smem %s0, 10
  %s21 = sld [smem:[%s20]]
  %s22 = scalar_lea.smem %s0, 11
  %s23 = sld [smem:[%s22]]
  %s24 = scalar_lea.smem %s0, 12
  %s25 = sld [smem:[%s24]]
  %s26 = scalar_lea.smem %s0, 13
  %s27 = sld [smem:[%s26]]
  %s28 = scalar_lea.smem %s0, 14
  %s29 = sld [smem:[%s28]]
  %s30 = scalar_lea.smem %s0, 15
  %s31 = sld [smem:[%s30]]
  %s32 = scalar_lea.smem %s0, 16
  %s33 = sld [smem:[%s32]]
  %s34 = scalar_lea.smem %s0, 17
  %s35 = sld [smem:[%s34]]
  %s36 = scalar_lea.smem %s0, 18
  %s37 = sld [smem:[%s36]]
  %s38 = scalar_lea.smem %s0, 19
  %s39 = sld [smem:[%s38]]
  %s40 = scalar_lea.smem %s0, 20
  %s41 = sld [smem:[%s40]]
  %s42 = scalar_lea.smem %s0, 21
  %s43 = sld [smem:[%s42]]
  %s44 = scalar_lea.smem %s0, 22
  %s45 = sld [smem:[%s44]]
  %s46 = scalar_lea.smem %s0, 23
  %s47 = sld [smem:[%s46]]
  %s48 = scalar_lea.smem %s0, 24
  %s49 = sld [smem:[%s48]]
  %s50 = scalar_lea.smem %s0, 25
  %s51 = sld [smem:[%s50]]
  %s52 = scalar_lea.smem %s0, 26
  %s53 = sld [smem:[%s52]]
  %s54 = scalar_lea.smem %s0, 27
  %s55 = sld [smem:[%s54]]
  %s56 = scalar_lea.smem %s0, 28
  %s57 = sld [smem:[%s56]]
  %s58 = scalar_lea.smem %s0, 29
  %s59 = sld [smem:[%s58]]
  %s60 = scalar_lea.smem %s0, 30
  %s61 = sld [smem:[%s60]]
  %s62 = scalar_lea.smem %s0, 31
  %s63 = sld [smem:[%s62]]
  %s64 = scalar_lea.smem %s0, 32
  %s65 = sld [smem:[%s64]]
  %s66 = scalar_lea.smem %s0, 33
  %s67 = sld [smem:[%s66]]
  %s68 = scalar_lea.smem %s0, 34
  %s69 = sld [smem:[%s68]]
  %s70 = scalar_lea.smem %s0, 35
  %s71 = sld [smem:[%s70]]
  %s72 = scalar_lea.smem %s0, 36
  %s73 = sld [smem:[%s72]]
  %s74 = scalar_lea.smem %s0, 37
  %s75 = sld [smem:[%s74]]
  %s76 = scalar_lea.smem %s0, 38
  %s77 = sld [smem:[%s76]]
  %s78 = scalar_lea.smem %s0, 39
  %s79 = sld [smem:[%s78]]
  %s80 = scalar_lea.smem %s0, 40
  %s81 = sld [smem:[%s80]]
  %s82 = scalar_lea.smem %s0, 41
  %s83 = sld [smem:[%s82]]
  %s84 = scalar_lea.smem %s0, 42
  %s85 = sld [smem:[%s84]]
  %s86 = scalar_lea.smem %s0, 43
  %s87 = sld [smem:[%s86]]
  %s88 = scalar_lea.smem %s0, 44
  %s89 = sld [smem:[%s88]]
  %s90 = scalar_lea.smem %s0, 45
  %s91 = sld [smem:[%s90]]
  %s92 = scalar_lea.smem %s0, 46
  %s93 = sld [smem:[%s92]]
  %s94 = scalar_lea.smem %s0, 47
  %s95 = sld [smem:[%s94]]
  %s96 = scalar_lea.smem %s0, 48
  %s97 = sld [smem:[%s96]]
  %s98 = scalar_lea.smem %s0, 49
  %s99 = sld [smem:[%s98]]
  %100 = xla_tuple %s89, %s91, %s93, %s95, %s97, %s99
  %s101 = sld [smem:[#allocation0]]
  $region226: #{forward.1} parent=0
    _
  %s103 = ssub.s32 1, %s101
  %s104 = scalar_select 0, %s103, %s101
  %v105 = vstv %s67
  %106 = vst [vmem:[#allocation5] sm:$0x1] %v105
  $region1: #{forward.1} parent=0
    #allocation6 [shape = 'u8[512]{0}', space=vmem, size = 0x400, scoped, tag = 'output window, operand 2, single buffered']
    #allocation7 [shape = 's32[1]{0}', space=sflag, size = 0x4, scoped, tag = 'scoped memory for forward.1']
    #allocation8 [shape = 'u8[2048]{0}', space=vmem, size = 0x800, scoped, tag = 'output window, operand 3, single buffered']
    #allocation9 [shape = 's32[1]{0}', space=sflag, size = 0x4, scoped, tag = 'scoped memory for forward.1']
    #allocation10 [shape = 'u8[2048]{0}', space=vmem, size = 0x800, scoped, tag = 'output window, operand 4, single buffered']
    %107 = vsyncpa [#allocation7], 0
    %108 = vsyncpa [#allocation9], 0
    // Predicated region
    $region2: #{forward.1} parent=1 // pred_check
      _
    $region3: #{forward.1} parent=1 // pred_check_branch
      %110 = sbr.rel (0) target = $region5
    $region4: #{forward.1} parent=1 // pred_region
      _
    $region5: #{forward.1} parent=1 // pred_fallthru
      _
    // Predicated region
    $region6: #{forward.1} parent=1 // pred_check
      _
    $region7: #{forward.1} parent=1 // pred_check_branch
      %112 = sbr.rel (0) target = $region9
    $region8: #{forward.1} parent=1 // pred_region
      _
    $region9: #{forward.1} parent=1 // pred_fallthru
      _
    // Predicated region
    $region10: #{forward.1} parent=1 // pred_check
      _
    $region11: #{forward.1} parent=1 // pred_check_branch
      %114 = sbr.rel (0) target = $region13
    $region12: #{forward.1} parent=1 // pred_region
      _
    $region13: #{forward.1} parent=1 // pred_fallthru
      _
    // Predicated region
    $region14: #{forward.1} parent=1 // pred_check
      _
    $region15: #{forward.1} parent=1 // pred_check_branch
      %116 = sbr.rel (0) target = $region17
    $region16: #{forward.1} parent=1 // pred_region
      _
    $region17: #{forward.1} parent=1 // pred_fallthru
      _
    // Predicated region
    $region18: #{forward.1} parent=1 // pred_check
      _
    $region19: #{forward.1} parent=1 // pred_check_branch
      %118 = sbr.rel (0) target = $region21
    $region20: #{forward.1} parent=1 // pred_region
      _
    $region21: #{forward.1} parent=1 // pred_fallthru
      _
    // Predicated region
    $region22: #{forward.1} parent=1 // pred_check
      _
    $region23: #{forward.1} parent=1 // pred_check_branch
      %120 = sbr.rel (0) target = $region25
    $region24: #{forward.1} parent=1 // pred_region
      _
    $region25: #{forward.1} parent=1 // pred_fallthru
      _
    // Predicated region
    $region26: #{forward.1} parent=1 // pred_check
      _
    $region27: #{forward.1} parent=1 // pred_check_branch
      %122 = sbr.rel (0) target = $region29
    $region28: #{forward.1} parent=1 // pred_region
      _
    $region29: #{forward.1} parent=1 // pred_fallthru
      _
    // Predicated region
    $region30: #{forward.1} parent=1 // pred_check
      _
    $region31: #{forward.1} parent=1 // pred_check_branch
      %124 = sbr.rel (0) target = $region33
    $region32: #{forward.1} parent=1 // pred_region
      _
    $region33: #{forward.1} parent=1 // pred_fallthru
      _
    // Predicated region
    $region34: #{forward.1} parent=1 // pred_check
      _
    $region35: #{forward.1} parent=1 // pred_check_branch
      %126 = sbr.rel (0) target = $region37
    $region36: #{forward.1} parent=1 // pred_region
      _
    $region37: #{forward.1} parent=1 // pred_fallthru
      _
    // Predicated region
    $region38: #{forward.1} parent=1 // pred_check
      _
    $region39: #{forward.1} parent=1 // pred_check_branch
      %128 = sbr.rel (0) target = $region41
    $region40: #{forward.1} parent=1 // pred_region
      _
    $region41: #{forward.1} parent=1 // pred_fallthru
      _
    // Predicated region
    $region42: #{forward.1} parent=1 // pred_check
      _
    $region43: #{forward.1} parent=1 // pred_check_branch
      %130 = sbr.rel (0) target = $region45
    $region44: #{forward.1} parent=1 // pred_region
      _
    $region45: #{forward.1} parent=1 // pred_fallthru
      _
    // Predicated region
    $region46: #{forward.1} parent=1 // pred_check
      _
    $region47: #{forward.1} parent=1 // pred_check_branch
      %132 = sbr.rel (0) target = $region49
    $region48: #{forward.1} parent=1 // pred_region
      _
    $region49: #{forward.1} parent=1 // pred_fallthru
      _
    // Predicated region
    $region50: #{forward.1} parent=1 // pred_check
      _
    $region51: #{forward.1} parent=1 // pred_check_branch
      %134 = sbr.rel (0) target = $region53
    $region52: #{forward.1} parent=1 // pred_region
      _
    $region53: #{forward.1} parent=1 // pred_fallthru
      _
    // Predicated region
    $region54: #{forward.1} parent=1 // pred_check
      _
    $region55: #{forward.1} parent=1 // pred_check_branch
      %136 = sbr.rel (0) target = $region57
    $region56: #{forward.1} parent=1 // pred_region
      _
    $region57: #{forward.1} parent=1 // pred_fallthru
      _
    // Predicated region
    $region58: #{forward.1} parent=1 // pred_check
      _
    $region59: #{forward.1} parent=1 // pred_check_branch
      %138 = sbr.rel (0) target = $region61
    $region60: #{forward.1} parent=1 // pred_region
      _
    $region61: #{forward.1} parent=1 // pred_fallthru
      _
    // Predicated region
    $region62: #{forward.1} parent=1 // pred_check
      _
    $region63: #{forward.1} parent=1 // pred_check_branch
      %140 = sbr.rel (0) target = $region65
    $region64: #{forward.1} parent=1 // pred_region
      _
    $region65: #{forward.1} parent=1 // pred_fallthru
      _
    // Predicated region
    $region66: #{forward.1} parent=1 // pred_check
      _
    $region67: #{forward.1} parent=1 // pred_check_branch
      %142 = sbr.rel (0) target = $region69
    $region68: #{forward.1} parent=1 // pred_region
      _
    $region69: #{forward.1} parent=1 // pred_fallthru
      _
    // Predicated region
    $region70: #{forward.1} parent=1 // pred_check
      _
    $region71: #{forward.1} parent=1 // pred_check_branch
      %144 = sbr.rel (0) target = $region73
    $region72: #{forward.1} parent=1 // pred_region
      _
    $region73: #{forward.1} parent=1 // pred_fallthru
      _
    // Predicated region
    $region74: #{forward.1} parent=1 // pred_check
      _
    $region75: #{forward.1} parent=1 // pred_check_branch
      %146 = sbr.rel (0) target = $region77
    $region76: #{forward.1} parent=1 // pred_region
      _
    $region77: #{forward.1} parent=1 // pred_fallthru
      _
    // Predicated region
    $region78: #{forward.1} parent=1 // pred_check
      _
    $region79: #{forward.1} parent=1 // pred_check_branch
      %148 = sbr.rel (0) target = $region81
    $region80: #{forward.1} parent=1 // pred_region
      _
    $region81: #{forward.1} parent=1 // pred_fallthru
      _
    // Predicated region
    $region82: #{forward.1} parent=1 // pred_check
      _
    $region83: #{forward.1} parent=1 // pred_check_branch
      %150 = sbr.rel (0) target = $region85
    $region84: #{forward.1} parent=1 // pred_region
      _
    $region85: #{forward.1} parent=1 // pred_fallthru
      _
    // Predicated region
    $region86: #{forward.1} parent=1 // pred_check
      _
    $region87: #{forward.1} parent=1 // pred_check_branch
      %152 = sbr.rel (0) target = $region89
    $region88: #{forward.1} parent=1 // pred_region
      _
    $region89: #{forward.1} parent=1 // pred_fallthru
      _
    // Predicated region
    $region90: #{forward.1} parent=1 // pred_check
      _
    $region91: #{forward.1} parent=1 // pred_check_branch
      %154 = sbr.rel (0) target = $region93
    $region92: #{forward.1} parent=1 // pred_region
      _
    $region93: #{forward.1} parent=1 // pred_fallthru
      _
    // Predicated region
    $region94: #{forward.1} parent=1 // pred_check
      _
    $region95: #{forward.1} parent=1 // pred_check_branch
      %156 = sbr.rel (0) target = $region97
    $region96: #{forward.1} parent=1 // pred_region
      _
    $region97: #{forward.1} parent=1 // pred_fallthru
      _
    // Predicated region
    $region98: #{forward.1} parent=1 // pred_check
      _
    $region99: #{forward.1} parent=1 // pred_check_branch
      %158 = sbr.rel (0) target = $region101
    $region100: #{forward.1} parent=1 // pred_region
      _
    $region101: #{forward.1} parent=1 // pred_fallthru
      _
    // Predicated region
    $region102: #{forward.1} parent=1 // pred_check
      _
    $region103: #{forward.1} parent=1 // pred_check_branch
      %160 = sbr.rel (0) target = $region105
    $region104: #{forward.1} parent=1 // pred_region
      _
    $region105: #{forward.1} parent=1 // pred_fallthru
      _
    // Predicated region
    $region106: #{forward.1} parent=1 // pred_check
      _
    $region107: #{forward.1} parent=1 // pred_check_branch
      %162 = sbr.rel (0) target = $region109
    $region108: #{forward.1} parent=1 // pred_region
      _
    $region109: #{forward.1} parent=1 // pred_fallthru
      _
    // Predicated region
    $region110: #{forward.1} parent=1 // pred_check
      _
    $region111: #{forward.1} parent=1 // pred_check_branch
      %164 = sbr.rel (0) target = $region113
    $region112: #{forward.1} parent=1 // pred_region
      _
    $region113: #{forward.1} parent=1 // pred_fallthru
      _
    // Predicated region
    $region114: #{forward.1} parent=1 // pred_check
      _
    $region115: #{forward.1} parent=1 // pred_check_branch
      %166 = sbr.rel (0) target = $region117
    $region116: #{forward.1} parent=1 // pred_region
      _
    $region117: #{forward.1} parent=1 // pred_fallthru
      _
    // Predicated region
    $region118: #{forward.1} parent=1 // pred_check
      _
    $region119: #{forward.1} parent=1 // pred_check_branch
      %168 = sbr.rel (0) target = $region121
    $region120: #{forward.1} parent=1 // pred_region
      _
    $region121: #{forward.1} parent=1 // pred_fallthru
      _
    // Predicated region
    $region122: #{forward.1} parent=1 // pred_check
      _
    $region123: #{forward.1} parent=1 // pred_check_branch
      %170 = sbr.rel (0) target = $region125
    $region124: #{forward.1} parent=1 // pred_region
      _
    $region125: #{forward.1} parent=1 // pred_fallthru
      _
    // Predicated region
    $region126: #{forward.1} parent=1 // pred_check
      _
    $region127: #{forward.1} parent=1 // pred_check_branch
      %172 = sbr.rel (0) target = $region129
    $region128: #{forward.1} parent=1 // pred_region
      _
    $region129: #{forward.1} parent=1 // pred_fallthru
      _
    // Predicated region
    $region130: #{forward.1} parent=1 // pred_check
      _
    $region131: #{forward.1} parent=1 // pred_check_branch
      %174 = sbr.rel (0) target = $region133
    $region132: #{forward.1} parent=1 // pred_region
      _
    $region133: #{forward.1} parent=1 // pred_fallthru
      _
    // Predicated region
    $region134: #{forward.1} parent=1 // pred_check
      _
    $region135: #{forward.1} parent=1 // pred_check_branch
      %176 = sbr.rel (0) target = $region137
    $region136: #{forward.1} parent=1 // pred_region
      _
    $region137: #{forward.1} parent=1 // pred_fallthru
      _
    // Predicated region
    $region138: #{forward.1} parent=1 // pred_check
      _
    $region139: #{forward.1} parent=1 // pred_check_branch
      %178 = sbr.rel (0) target = $region141
    $region140: #{forward.1} parent=1 // pred_region
      _
    $region141: #{forward.1} parent=1 // pred_fallthru
      _
    // Predicated region
    $region142: #{forward.1} parent=1 // pred_check
      _
    $region143: #{forward.1} parent=1 // pred_check_branch
      %180 = sbr.rel (0) target = $region145
    $region144: #{forward.1} parent=1 // pred_region
      _
    $region145: #{forward.1} parent=1 // pred_fallthru
      _
    // Predicated region
    $region146: #{forward.1} parent=1 // pred_check
      _
    $region147: #{forward.1} parent=1 // pred_check_branch
      %182 = sbr.rel (0) target = $region149
    $region148: #{forward.1} parent=1 // pred_region
      _
    $region149: #{forward.1} parent=1 // pred_fallthru
      _
    // Predicated region
    $region150: #{forward.1} parent=1 // pred_check
      _
    $region151: #{forward.1} parent=1 // pred_check_branch
      %184 = sbr.rel (0) target = $region153
    $region152: #{forward.1} parent=1 // pred_region
      _
    $region153: #{forward.1} parent=1 // pred_fallthru
      _
    // Predicated region
    $region154: #{forward.1} parent=1 // pred_check
      _
    $region155: #{forward.1} parent=1 // pred_check_branch
      %186 = sbr.rel (0) target = $region157
    $region156: #{forward.1} parent=1 // pred_region
      _
    $region157: #{forward.1} parent=1 // pred_fallthru
      _
    // Predicated region
    $region158: #{forward.1} parent=1 // pred_check
      _
    $region159: #{forward.1} parent=1 // pred_check_branch
      %188 = sbr.rel (0) target = $region161
    $region160: #{forward.1} parent=1 // pred_region
      _
    $region161: #{forward.1} parent=1 // pred_fallthru
      _
    // Predicated region
    $region162: #{forward.1} parent=1 // pred_check
      _
    $region163: #{forward.1} parent=1 // pred_check_branch
      %190 = sbr.rel (0) target = $region165
    $region164: #{forward.1} parent=1 // pred_region
      _
    $region165: #{forward.1} parent=1 // pred_fallthru
      _
    // Predicated region
    $region166: #{forward.1} parent=1 // pred_check
      _
    $region167: #{forward.1} parent=1 // pred_check_branch
      %192 = sbr.rel (0) target = $region169
    $region168: #{forward.1} parent=1 // pred_region
      _
    $region169: #{forward.1} parent=1 // pred_fallthru
      _
    // Predicated region
    $region170: #{forward.1} parent=1 // pred_check
      _
    $region171: #{forward.1} parent=1 // pred_check_branch
      %194 = sbr.rel (0) target = $region173
    $region172: #{forward.1} parent=1 // pred_region
      _
    $region173: #{forward.1} parent=1 // pred_fallthru
      _
    // Predicated region
    $region174: #{forward.1} parent=1 // pred_check
      _
    $region175: #{forward.1} parent=1 // pred_check_branch
      %196 = sbr.rel (0) target = $region177
    $region176: #{forward.1} parent=1 // pred_region
      _
    $region177: #{forward.1} parent=1 // pred_fallthru
      _
    %v197 = vld [vmem:[%s1] sm:$0xff]
    %v198 = vld [vmem:[%s3] sm:$0xff]
    %v199 = vld [vmem:[%s7] sm:$0x1]
    %v201 = vlaneseq
    %v202 = vshrl.u32 %v201, 7
    %v203 = vsub.s32 0, %v202
    %v204 = vrot.slane %v199, %v203
    %vm206 = vcmask 64512
    %v208 = vsel %vm206, %v197, 0
    %210 = vmatprep.subr.mxu0 0.0
    %211 = vmatpush1.msra.mxu0 %v198
    %212 = vmatprep.subr.mxu0 0.0
    %213 = vmatpush1.msra.mxu0 0.0
    %214 = vmatprep.subr.mxu0 0.0
    %215 = vmatpush1.msra.mxu0 0.0
    %216 = vmatprep.subr.mxu0 0.0
    %217 = vmatpush1.msra.mxu0 0.0
    %218 = vmatprep.subr.mxu0 0.0
    %219 = vmatpush1.msra.mxu0 0.0
    %220 = vmatprep.subr.mxu0 0.0
    %221 = vmatpush1.msra.mxu0 0.0
    %222 = vmatprep.subr.mxu0 0.0
    %223 = vmatpush1.msra.mxu0 0.0
    %224 = vmatprep.subr.mxu0 0.0
    %225 = vmatpush1.msra.mxu0 0.0
    %226 = vmatprep.subr.mxu0 0.0
    %227 = vmatpush1.msra.mxu0 0.0
    %228 = vmatprep.subr.mxu0 0.0
    %229 = vmatpush1.msra.mxu0 0.0
    %230 = vmatprep.subr.mxu0 0.0
    %231 = vmatpush1.msra.mxu0 0.0
    %232 = vmatprep.subr.mxu0 0.0
    %233 = vmatpush1.msra.mxu0 0.0
    %234 = vmatprep.subr.mxu0 0.0
    %235 = vmatpush1.msra.mxu0 0.0
    %236 = vmatprep.subr.mxu0 0.0
    %237 = vmatpush1.msra.mxu0 0.0
    %238 = vmatprep.subr.mxu0 0.0
    %239 = vmatpush1.msra.mxu0 0.0
    %240 = vmatprep.subr.mxu0 0.0
    %241 = vmatpush1.msra.mxu0 0.0
    %242 = vmatprep.subr.mxu0 0.0
    %243 = vmatpush1.msra.mxu0 0.0
    %244 = vmatprep.subr.mxu0 0.0
    %245 = vmatpush1.msra.mxu0 0.0
    %246 = vmatprep.subr.mxu0 0.0
    %247 = vmatpush1.msra.mxu0 0.0
    %248 = vmatprep.subr.mxu0 0.0
    %249 = vmatpush1.msra.mxu0 0.0
    %250 = vmatprep.subr.mxu0 0.0
    %251 = vmatpush1.msra.mxu0 0.0
    %252 = vmatprep.subr.mxu0 0.0
    %253 = vmatpush1.msra.mxu0 0.0
    %254 = vmatprep.subr.mxu0 0.0
    %255 = vmatpush1.msra.mxu0 0.0
    %256 = vmatprep.subr.mxu0 0.0
    %257 = vmatpush1.msra.mxu0 0.0
    %258 = vmatprep.subr.mxu0 0.0
    %259 = vmatpush1.msra.mxu0 0.0
    %260 = vmatprep.subr.mxu0 0.0
    %261 = vmatpush1.msra.mxu0 0.0
    %262 = vmatprep.subr.mxu0 0.0
    %263 = vmatpush1.msra.mxu0 0.0
    %264 = vmatprep.subr.mxu0 0.0
    %265 = vmatpush1.msra.mxu0 0.0
    %266 = vmatprep.subr.mxu0 0.0
    %267 = vmatpush1.msra.mxu0 0.0
    %268 = vmatprep.subr.mxu0 0.0
    %269 = vmatpush1.msra.mxu0 0.0
    %270 = vmatprep.subr.mxu0 0.0
    %271 = vmatpush1.msra.mxu0 0.0
    %272 = vmatprep.subr.mxu0 0.0
    %273 = vmatpush1.msra.mxu0 0.0
    %274 = vmatprep.mubr.f32.mxu0 0.0
    %275 = vmatmul.mubr.f32.gmra.mrb[0].mxu0 %v208
    %v276 = vpop.f32.mrb[0].mxu0
    %v277 = vadd.f32 %v204, %v276
    %v278 = vpop.f32.mrb[0].mxu0
    %279 = vdwg.mxu0
    %280 = vst [vmem:[#allocation2] sm:$0xff] %v277
    %v281 = vld [vmem:[%s5] sm:$0xff]
    %v282 = vld [vmem:[%s5 + $0x8] sm:$0xff]
    %v283 = vld [vmem:[%s5 + $0x10] sm:$0xff]
    %v284 = vld [vmem:[%s5 + $0x18] sm:$0xff]
    %v285 = vld [vmem:[#allocation2] sm:$0xf]
    %v286 = vxor.u32 %v285, 2147483648
    %v287 = vmul.f32 %v286, 1.442695
    %v288 = vpow.pop %v287
    %v289 = vadd.f32 %v288, 1.0
    %v290 = vrcp.pop %v289
    %v291 = vmul.f32 1.0, %v290
    %v292 = vtanh.pop %v285
    %294 = vrot.lane.b32.xlu0 %v292, 64
    %v295 = vpop.permute.xlu0 %294
    %v297 = vmul.f32 %v291, %v295
    %v298 = vtanh.pop %v297
    %300 = vrot.lane.b32.xlu0 %v298, 96
    %v301 = vpop.permute.xlu0 %300
    %v303 = vmul.f32 %v291, %v301
    %v304 = vld [vmem:[#allocation2 + $0x4] sm:$0xf]
    %306 = vrot.lane.b32.xlu0 %v303, 32
    %v307 = vpop.permute.xlu0 %306
    %vm308 = vcmask 261120
    %v309 = vsel %vm308, %v307, 0
    %311 = vmatprep.subr.mxu0 0.0
    %312 = vmatpush1.msra.mxu0 %v281
    %313 = vmatprep.subr.mxu0 0.0
    %314 = vmatpush1.msra.mxu0 %v282
    %315 = vmatprep.subr.mxu0 0.0
    %316 = vmatpush1.msra.mxu0 %v283
    %317 = vmatprep.subr.mxu0 0.0
    %318 = vmatpush1.msra.mxu0 %v284
    %319 = vmatprep.subr.mxu0 0.0
    %320 = vmatpush1.msra.mxu0 0.0
    %321 = vmatprep.subr.mxu0 0.0
    %322 = vmatpush1.msra.mxu0 0.0
    %323 = vmatprep.subr.mxu0 0.0
    %324 = vmatpush1.msra.mxu0 0.0
    %325 = vmatprep.subr.mxu0 0.0
    %326 = vmatpush1.msra.mxu0 0.0
    %327 = vmatprep.subr.mxu0 0.0
    %328 = vmatpush1.msra.mxu0 0.0
    %329 = vmatprep.subr.mxu0 0.0
    %330 = vmatpush1.msra.mxu0 0.0
    %331 = vmatprep.subr.mxu0 0.0
    %332 = vmatpush1.msra.mxu0 0.0
    %333 = vmatprep.subr.mxu0 0.0
    %334 = vmatpush1.msra.mxu0 0.0
    %335 = vmatprep.subr.mxu0 0.0
    %336 = vmatpush1.msra.mxu0 0.0
    %337 = vmatprep.subr.mxu0 0.0
    %338 = vmatpush1.msra.mxu0 0.0
    %339 = vmatprep.subr.mxu0 0.0
    %340 = vmatpush1.msra.mxu0 0.0
    %341 = vmatprep.subr.mxu0 0.0
    %342 = vmatpush1.msra.mxu0 0.0
    %343 = vmatprep.subr.mxu0 0.0
    %344 = vmatpush1.msra.mxu0 0.0
    %345 = vmatprep.subr.mxu0 0.0
    %346 = vmatpush1.msra.mxu0 0.0
    %347 = vmatprep.subr.mxu0 0.0
    %348 = vmatpush1.msra.mxu0 0.0
    %349 = vmatprep.subr.mxu0 0.0
    %350 = vmatpush1.msra.mxu0 0.0
    %351 = vmatprep.subr.mxu0 0.0
    %352 = vmatpush1.msra.mxu0 0.0
    %353 = vmatprep.subr.mxu0 0.0
    %354 = vmatpush1.msra.mxu0 0.0
    %355 = vmatprep.subr.mxu0 0.0
    %356 = vmatpush1.msra.mxu0 0.0
    %357 = vmatprep.subr.mxu0 0.0
    %358 = vmatpush1.msra.mxu0 0.0
    %359 = vmatprep.subr.mxu0 0.0
    %360 = vmatpush1.msra.mxu0 0.0
    %361 = vmatprep.subr.mxu0 0.0
    %362 = vmatpush1.msra.mxu0 0.0
    %363 = vmatprep.subr.mxu0 0.0
    %364 = vmatpush1.msra.mxu0 0.0
    %365 = vmatprep.subr.mxu0 0.0
    %366 = vmatpush1.msra.mxu0 0.0
    %367 = vmatprep.subr.mxu0 0.0
    %368 = vmatpush1.msra.mxu0 0.0
    %369 = vmatprep.subr.mxu0 0.0
    %370 = vmatpush1.msra.mxu0 0.0
    %371 = vmatprep.subr.mxu0 0.0
    %372 = vmatpush1.msra.mxu0 0.0
    %373 = vmatprep.subr.mxu0 0.0
    %374 = vmatpush1.msra.mxu0 0.0
    %375 = vmatprep.mubr.f32.mxu0 0.0
    %376 = vmatmul.mubr.f32.gmra.mrb[0].mxu0 %v309
    %v377 = vpop.f32.mrb[0].mxu0
    %v378 = vadd.f32 0.0, %v377
    %v379 = vpop.f32.mrb[0].mxu0
    %380 = vdwg.mxu0
    %v381 = vadd.f32 %v304, %v378
    %v382 = vxor.u32 %v381, 2147483648
    %v383 = vmul.f32 %v382, 1.442695
    %v384 = vpow.pop %v383
    %v385 = vadd.f32 %v384, 1.0
    %v386 = vrcp.pop %v385
    %v387 = vmul.f32 1.0, %v386
    %v388 = vtanh.pop %v381
    %390 = vrot.lane.b32.xlu0 %v297, 32
    %v391 = vpop.permute.xlu0 %390
    %v393 = vmul.f32 %v387, %v391
    %395 = vrot.lane.b32.xlu0 %v388, 64
    %v396 = vpop.permute.xlu0 %395
    %v398 = vmul.f32 %v387, %v396
    %400 = vrot.lane.b32.xlu0 %v398, 32
    %v401 = vpop.permute.xlu0 %400
    %v403 = vadd.f32 %v393, %v401
    %v404 = vtanh.pop %v403
    %406 = vrot.lane.b32.xlu0 %v404, 64
    %v407 = vpop.permute.xlu0 %406
    %v409 = vmul.f32 %v387, %v407
    %v410 = vld [vmem:[%s9] sm:$0xff]
    %v411 = vld [vmem:[%s9 + $0x8] sm:$0xff]
    %v412 = vld [vmem:[%s11] sm:$0xff]
    %v413 = vld [vmem:[%s15] sm:$0x1]
    %v415 = vlaneseq
    %v416 = vshrl.u32 %v415, 7
    %v417 = vsub.s32 0, %v416
    %v418 = vrot.slane %v413, %v417
    %v421 = vsel %vm206, %v410, 0
    %v424 = vsel %vm206, %v411, 0
    %426 = vmatprep.subr.mxu0 0.0
    %427 = vmatpush1.msra.mxu0 %v412
    %428 = vmatprep.subr.mxu0 0.0
    %429 = vmatpush1.msra.mxu0 0.0
    %430 = vmatprep.subr.mxu0 0.0
    %431 = vmatpush1.msra.mxu0 0.0
    %432 = vmatprep.subr.mxu0 0.0
    %433 = vmatpush1.msra.mxu0 0.0
    %434 = vmatprep.subr.mxu0 0.0
    %435 = vmatpush1.msra.mxu0 0.0
    %436 = vmatprep.subr.mxu0 0.0
    %437 = vmatpush1.msra.mxu0 0.0
    %438 = vmatprep.subr.mxu0 0.0
    %439 = vmatpush1.msra.mxu0 0.0
    %440 = vmatprep.subr.mxu0 0.0
    %441 = vmatpush1.msra.mxu0 0.0
    %442 = vmatprep.subr.mxu0 0.0
    %443 = vmatpush1.msra.mxu0 0.0
    %444 = vmatprep.subr.mxu0 0.0
    %445 = vmatpush1.msra.mxu0 0.0
    %446 = vmatprep.subr.mxu0 0.0
    %447 = vmatpush1.msra.mxu0 0.0
    %448 = vmatprep.subr.mxu0 0.0
    %449 = vmatpush1.msra.mxu0 0.0
    %450 = vmatprep.subr.mxu0 0.0
    %451 = vmatpush1.msra.mxu0 0.0
    %452 = vmatprep.subr.mxu0 0.0
    %453 = vmatpush1.msra.mxu0 0.0
    %454 = vmatprep.subr.mxu0 0.0
    %455 = vmatpush1.msra.mxu0 0.0
    %456 = vmatprep.subr.mxu0 0.0
    %457 = vmatpush1.msra.mxu0 0.0
    %458 = vmatprep.subr.mxu0 0.0
    %459 = vmatpush1.msra.mxu0 0.0
    %460 = vmatprep.subr.mxu0 0.0
    %461 = vmatpush1.msra.mxu0 0.0
    %462 = vmatprep.subr.mxu0 0.0
    %463 = vmatpush1.msra.mxu0 0.0
    %464 = vmatprep.subr.mxu0 0.0
    %465 = vmatpush1.msra.mxu0 0.0
    %466 = vmatprep.subr.mxu0 0.0
    %467 = vmatpush1.msra.mxu0 0.0
    %468 = vmatprep.subr.mxu0 0.0
    %469 = vmatpush1.msra.mxu0 0.0
    %470 = vmatprep.subr.mxu0 0.0
    %471 = vmatpush1.msra.mxu0 0.0
    %472 = vmatprep.subr.mxu0 0.0
    %473 = vmatpush1.msra.mxu0 0.0
    %474 = vmatprep.subr.mxu0 0.0
    %475 = vmatpush1.msra.mxu0 0.0
    %476 = vmatprep.subr.mxu0 0.0
    %477 = vmatpush1.msra.mxu0 0.0
    %478 = vmatprep.subr.mxu0 0.0
    %479 = vmatpush1.msra.mxu0 0.0
    %480 = vmatprep.subr.mxu0 0.0
    %481 = vmatpush1.msra.mxu0 0.0
    %482 = vmatprep.subr.mxu0 0.0
    %483 = vmatpush1.msra.mxu0 0.0
    %484 = vmatprep.subr.mxu0 0.0
    %485 = vmatpush1.msra.mxu0 0.0
    %486 = vmatprep.subr.mxu0 0.0
    %487 = vmatpush1.msra.mxu0 0.0
    %488 = vmatprep.subr.mxu0 0.0
    %489 = vmatpush1.msra.mxu0 0.0
    %490 = vmatprep.mubr.f32.mxu0 0.0
    %491 = vmatmul.mubr.f32.gmra.mrb[0].mxu0 %v421
    %v492 = vpop.f32.mrb[0].mxu0
    %v493 = vadd.f32 %v418, %v492
    %v494 = vpop.f32.mrb[0].mxu0
    %495 = vmatprep.mubr.f32.mxu0 0.0
    %496 = vmatmul.mubr.f32.gmra.mrb[0].mxu0 %v424
    %v497 = vpop.f32.mrb[0].mxu0
    %v498 = vadd.f32 %v418, %v497
    %v499 = vpop.f32.mrb[0].mxu0
    %500 = vdwg.mxu0
    %501 = vst [vmem:[#allocation2] sm:$0xff] %v493
    %502 = vst [vmem:[#allocation2 + $0x8] sm:$0xff] %v498
    %v503 = vld [vmem:[%s13] sm:$0xff]
    %v504 = vld [vmem:[%s13 + $0x8] sm:$0xff]
    %v505 = vld [vmem:[%s13 + $0x10] sm:$0xff]
    %v506 = vld [vmem:[%s13 + $0x18] sm:$0xff]
    %v507 = vld [vmem:[#allocation2] sm:$0xf]
    %v508 = vxor.u32 %v507, 2147483648
    %v509 = vmul.f32 %v508, 1.442695
    %v510 = vpow.pop %v509
    %v511 = vadd.f32 %v510, 1.0
    %v512 = vrcp.pop %v511
    %v513 = vmul.f32 1.0, %v512
    %v514 = vtanh.pop %v507
    %516 = vrot.lane.b32.xlu0 %v514, 64
    %v517 = vpop.permute.xlu0 %516
    %v519 = vmul.f32 %v513, %v517
    %v520 = vtanh.pop %v519
    %522 = vrot.lane.b32.xlu0 %v520, 96
    %v523 = vpop.permute.xlu0 %522
    %v525 = vmul.f32 %v513, %v523
    %v526 = vld [vmem:[#allocation2 + $0x4] sm:$0xf]
    %528 = vrot.lane.b32.xlu0 %v525, 32
    %v529 = vpop.permute.xlu0 %528
    %v530 = vsel %vm308, %v529, 0
    %532 = vmatprep.subr.mxu0 0.0
    %533 = vmatpush1.msra.mxu0 %v503
    %534 = vmatprep.subr.mxu0 0.0
    %535 = vmatpush1.msra.mxu0 %v504
    %536 = vmatprep.subr.mxu0 0.0
    %537 = vmatpush1.msra.mxu0 %v505
    %538 = vmatprep.subr.mxu0 0.0
    %539 = vmatpush1.msra.mxu0 %v506
    %540 = vmatprep.subr.mxu0 0.0
    %541 = vmatpush1.msra.mxu0 0.0
    %542 = vmatprep.subr.mxu0 0.0
    %543 = vmatpush1.msra.mxu0 0.0
    %544 = vmatprep.subr.mxu0 0.0
    %545 = vmatpush1.msra.mxu0 0.0
    %546 = vmatprep.subr.mxu0 0.0
    %547 = vmatpush1.msra.mxu0 0.0
    %548 = vmatprep.subr.mxu0 0.0
    %549 = vmatpush1.msra.mxu0 0.0
    %550 = vmatprep.subr.mxu0 0.0
    %551 = vmatpush1.msra.mxu0 0.0
    %552 = vmatprep.subr.mxu0 0.0
    %553 = vmatpush1.msra.mxu0 0.0
    %554 = vmatprep.subr.mxu0 0.0
    %555 = vmatpush1.msra.mxu0 0.0
    %556 = vmatprep.subr.mxu0 0.0
    %557 = vmatpush1.msra.mxu0 0.0
    %558 = vmatprep.subr.mxu0 0.0
    %559 = vmatpush1.msra.mxu0 0.0
    %560 = vmatprep.subr.mxu0 0.0
    %561 = vmatpush1.msra.mxu0 0.0
    %562 = vmatprep.subr.mxu0 0.0
    %563 = vmatpush1.msra.mxu0 0.0
    %564 = vmatprep.subr.mxu0 0.0
    %565 = vmatpush1.msra.mxu0 0.0
    %566 = vmatprep.subr.mxu0 0.0
    %567 = vmatpush1.msra.mxu0 0.0
    %568 = vmatprep.subr.mxu0 0.0
    %569 = vmatpush1.msra.mxu0 0.0
    %570 = vmatprep.subr.mxu0 0.0
    %571 = vmatpush1.msra.mxu0 0.0
    %572 = vmatprep.subr.mxu0 0.0
    %573 = vmatpush1.msra.mxu0 0.0
    %574 = vmatprep.subr.mxu0 0.0
    %575 = vmatpush1.msra.mxu0 0.0
    %576 = vmatprep.subr.mxu0 0.0
    %577 = vmatpush1.msra.mxu0 0.0
    %578 = vmatprep.subr.mxu0 0.0
    %579 = vmatpush1.msra.mxu0 0.0
    %580 = vmatprep.subr.mxu0 0.0
    %581 = vmatpush1.msra.mxu0 0.0
    %582 = vmatprep.subr.mxu0 0.0
    %583 = vmatpush1.msra.mxu0 0.0
    %584 = vmatprep.subr.mxu0 0.0
    %585 = vmatpush1.msra.mxu0 0.0
    %586 = vmatprep.subr.mxu0 0.0
    %587 = vmatpush1.msra.mxu0 0.0
    %588 = vmatprep.subr.mxu0 0.0
    %589 = vmatpush1.msra.mxu0 0.0
    %590 = vmatprep.subr.mxu0 0.0
    %591 = vmatpush1.msra.mxu0 0.0
    %592 = vmatprep.subr.mxu0 0.0
    %593 = vmatpush1.msra.mxu0 0.0
    %594 = vmatprep.subr.mxu0 0.0
    %595 = vmatpush1.msra.mxu0 0.0
    %596 = vmatprep.mubr.f32.mxu0 0.0
    %597 = vmatmul.mubr.f32.gmra.mrb[0].mxu0 %v530
    %v598 = vpop.f32.mrb[0].mxu0
    %v599 = vadd.f32 0.0, %v598
    %v600 = vpop.f32.mrb[0].mxu0
    %601 = vdwg.mxu0
    %v602 = vadd.f32 %v526, %v599
    %v603 = vxor.u32 %v602, 2147483648
    %v604 = vmul.f32 %v603, 1.442695
    %v605 = vpow.pop %v604
    %v606 = vadd.f32 %v605, 1.0
    %v607 = vrcp.pop %v606
    %v608 = vmul.f32 1.0, %v607
    %v609 = vtanh.pop %v602
    %611 = vrot.lane.b32.xlu0 %v519, 32
    %v612 = vpop.permute.xlu0 %611
    %v614 = vmul.f32 %v608, %v612
    %616 = vrot.lane.b32.xlu0 %v609, 64
    %v617 = vpop.permute.xlu0 %616
    %v619 = vmul.f32 %v608, %v617
    %621 = vrot.lane.b32.xlu0 %v619, 32
    %v622 = vpop.permute.xlu0 %621
    %v624 = vadd.f32 %v614, %v622
    %v625 = vtanh.pop %v624
    %627 = vrot.lane.b32.xlu0 %v625, 64
    %v628 = vpop.permute.xlu0 %627
    %v630 = vmul.f32 %v608, %v628
    %v631 = vld [vmem:[#allocation2 + $0x8] sm:$0xf]
    %633 = vrot.lane.b32.xlu0 %v630, 32
    %v634 = vpop.permute.xlu0 %633
    %v635 = vsel %vm308, %v634, 0
    %637 = vmatprep.subr.mxu0 0.0
    %638 = vmatpush1.msra.mxu0 %v503
    %639 = vmatprep.subr.mxu0 0.0
    %640 = vmatpush1.msra.mxu0 %v504
    %641 = vmatprep.subr.mxu0 0.0
    %642 = vmatpush1.msra.mxu0 %v505
    %643 = vmatprep.subr.mxu0 0.0
    %644 = vmatpush1.msra.mxu0 %v506
    %645 = vmatprep.subr.mxu0 0.0
    %646 = vmatpush1.msra.mxu0 0.0
    %647 = vmatprep.subr.mxu0 0.0
    %648 = vmatpush1.msra.mxu0 0.0
    %649 = vmatprep.subr.mxu0 0.0
    %650 = vmatpush1.msra.mxu0 0.0
    %651 = vmatprep.subr.mxu0 0.0
    %652 = vmatpush1.msra.mxu0 0.0
    %653 = vmatprep.subr.mxu0 0.0
    %654 = vmatpush1.msra.mxu0 0.0
    %655 = vmatprep.subr.mxu0 0.0
    %656 = vmatpush1.msra.mxu0 0.0
    %657 = vmatprep.subr.mxu0 0.0
    %658 = vmatpush1.msra.mxu0 0.0
    %659 = vmatprep.subr.mxu0 0.0
    %660 = vmatpush1.msra.mxu0 0.0
    %661 = vmatprep.subr.mxu0 0.0
    %662 = vmatpush1.msra.mxu0 0.0
    %663 = vmatprep.subr.mxu0 0.0
    %664 = vmatpush1.msra.mxu0 0.0
    %665 = vmatprep.subr.mxu0 0.0
    %666 = vmatpush1.msra.mxu0 0.0
    %667 = vmatprep.subr.mxu0 0.0
    %668 = vmatpush1.msra.mxu0 0.0
    %669 = vmatprep.subr.mxu0 0.0
    %670 = vmatpush1.msra.mxu0 0.0
    %671 = vmatprep.subr.mxu0 0.0
    %672 = vmatpush1.msra.mxu0 0.0
    %673 = vmatprep.subr.mxu0 0.0
    %674 = vmatpush1.msra.mxu0 0.0
    %675 = vmatprep.subr.mxu0 0.0
    %676 = vmatpush1.msra.mxu0 0.0
    %677 = vmatprep.subr.mxu0 0.0
    %678 = vmatpush1.msra.mxu0 0.0
    %679 = vmatprep.subr.mxu0 0.0
    %680 = vmatpush1.msra.mxu0 0.0
    %681 = vmatprep.subr.mxu0 0.0
    %682 = vmatpush1.msra.mxu0 0.0
    %683 = vmatprep.subr.mxu0 0.0
    %684 = vmatpush1.msra.mxu0 0.0
    %685 = vmatprep.subr.mxu0 0.0
    %686 = vmatpush1.msra.mxu0 0.0
    %687 = vmatprep.subr.mxu0 0.0
    %688 = vmatpush1.msra.mxu0 0.0
    %689 = vmatprep.subr.mxu0 0.0
    %690 = vmatpush1.msra.mxu0 0.0
    %691 = vmatprep.subr.mxu0 0.0
    %692 = vmatpush1.msra.mxu0 0.0
    %693 = vmatprep.subr.mxu0 0.0
    %694 = vmatpush1.msra.mxu0 0.0
    %695 = vmatprep.subr.mxu0 0.0
    %696 = vmatpush1.msra.mxu0 0.0
    %697 = vmatprep.subr.mxu0 0.0
    %698 = vmatpush1.msra.mxu0 0.0
    %699 = vmatprep.subr.mxu0 0.0
    %700 = vmatpush1.msra.mxu0 0.0
    %701 = vmatprep.mubr.f32.mxu0 0.0
    %702 = vmatmul.mubr.f32.gmra.mrb[0].mxu0 %v635
    %v703 = vpop.f32.mrb[0].mxu0
    %v704 = vadd.f32 0.0, %v703
    %v705 = vpop.f32.mrb[0].mxu0
    %706 = vdwg.mxu0
    %v707 = vadd.f32 %v631, %v704
    %v708 = vxor.u32 %v707, 2147483648
    %v709 = vmul.f32 %v708, 1.442695
    %v710 = vpow.pop %v709
    %v711 = vadd.f32 %v710, 1.0
    %v712 = vrcp.pop %v711
    %v713 = vmul.f32 1.0, %v712
    %v714 = vtanh.pop %v707
    %v715 = vmul.f32 %v713, %v624
    %717 = vrot.lane.b32.xlu0 %v714, 64
    %v718 = vpop.permute.xlu0 %717
    %v720 = vmul.f32 %v713, %v718
    %722 = vrot.lane.b32.xlu0 %v720, 32
    %v723 = vpop.permute.xlu0 %722
    %v725 = vadd.f32 %v715, %v723
    %v726 = vtanh.pop %v725
    %728 = vrot.lane.b32.xlu0 %v726, 64
    %v729 = vpop.permute.xlu0 %728
    %v731 = vmul.f32 %v713, %v729
    %v732 = vld [vmem:[#allocation2 + $0xc] sm:$0xf]
    %734 = vrot.lane.b32.xlu0 %v731, 32
    %v735 = vpop.permute.xlu0 %734
    %v736 = vsel %vm308, %v735, 0
    %738 = vmatprep.subr.mxu0 0.0
    %739 = vmatpush1.msra.mxu0 %v503
    %740 = vmatprep.subr.mxu0 0.0
    %741 = vmatpush1.msra.mxu0 %v504
    %742 = vmatprep.subr.mxu0 0.0
    %743 = vmatpush1.msra.mxu0 %v505
    %744 = vmatprep.subr.mxu0 0.0
    %745 = vmatpush1.msra.mxu0 %v506
    %746 = vmatprep.subr.mxu0 0.0
    %747 = vmatpush1.msra.mxu0 0.0
    %748 = vmatprep.subr.mxu0 0.0
    %749 = vmatpush1.msra.mxu0 0.0
    %750 = vmatprep.subr.mxu0 0.0
    %751 = vmatpush1.msra.mxu0 0.0
    %752 = vmatprep.subr.mxu0 0.0
    %753 = vmatpush1.msra.mxu0 0.0
    %754 = vmatprep.subr.mxu0 0.0
    %755 = vmatpush1.msra.mxu0 0.0
    %756 = vmatprep.subr.mxu0 0.0
    %757 = vmatpush1.msra.mxu0 0.0
    %758 = vmatprep.subr.mxu0 0.0
    %759 = vmatpush1.msra.mxu0 0.0
    %760 = vmatprep.subr.mxu0 0.0
    %761 = vmatpush1.msra.mxu0 0.0
    %762 = vmatprep.subr.mxu0 0.0
    %763 = vmatpush1.msra.mxu0 0.0
    %764 = vmatprep.subr.mxu0 0.0
    %765 = vmatpush1.msra.mxu0 0.0
    %766 = vmatprep.subr.mxu0 0.0
    %767 = vmatpush1.msra.mxu0 0.0
    %768 = vmatprep.subr.mxu0 0.0
    %769 = vmatpush1.msra.mxu0 0.0
    %770 = vmatprep.subr.mxu0 0.0
    %771 = vmatpush1.msra.mxu0 0.0
    %772 = vmatprep.subr.mxu0 0.0
    %773 = vmatpush1.msra.mxu0 0.0
    %774 = vmatprep.subr.mxu0 0.0
    %775 = vmatpush1.msra.mxu0 0.0
    %776 = vmatprep.subr.mxu0 0.0
    %777 = vmatpush1.msra.mxu0 0.0
    %778 = vmatprep.subr.mxu0 0.0
    %779 = vmatpush1.msra.mxu0 0.0
    %780 = vmatprep.subr.mxu0 0.0
    %781 = vmatpush1.msra.mxu0 0.0
    %782 = vmatprep.subr.mxu0 0.0
    %783 = vmatpush1.msra.mxu0 0.0
    %784 = vmatprep.subr.mxu0 0.0
    %785 = vmatpush1.msra.mxu0 0.0
    %786 = vmatprep.subr.mxu0 0.0
    %787 = vmatpush1.msra.mxu0 0.0
    %788 = vmatprep.subr.mxu0 0.0
    %789 = vmatpush1.msra.mxu0 0.0
    %790 = vmatprep.subr.mxu0 0.0
    %791 = vmatpush1.msra.mxu0 0.0
    %792 = vmatprep.subr.mxu0 0.0
    %793 = vmatpush1.msra.mxu0 0.0
    %794 = vmatprep.subr.mxu0 0.0
    %795 = vmatpush1.msra.mxu0 0.0
    %796 = vmatprep.subr.mxu0 0.0
    %797 = vmatpush1.msra.mxu0 0.0
    %798 = vmatprep.subr.mxu0 0.0
    %799 = vmatpush1.msra.mxu0 0.0
    %800 = vmatprep.subr.mxu0 0.0
    %801 = vmatpush1.msra.mxu0 0.0
    %802 = vmatprep.mubr.f32.mxu0 0.0
    %803 = vmatmul.mubr.f32.gmra.mrb[0].mxu0 %v736
    %v804 = vpop.f32.mrb[0].mxu0
    %v805 = vadd.f32 0.0, %v804
    %v806 = vpop.f32.mrb[0].mxu0
    %807 = vdwg.mxu0
    %v808 = vadd.f32 %v732, %v805
    %v809 = vxor.u32 %v808, 2147483648
    %v810 = vmul.f32 %v809, 1.442695
    %v811 = vpow.pop %v810
    %v812 = vadd.f32 %v811, 1.0
    %v813 = vrcp.pop %v812
    %v814 = vmul.f32 1.0, %v813
    %v815 = vtanh.pop %v808
    %v816 = vmul.f32 %v814, %v725
    %818 = vrot.lane.b32.xlu0 %v815, 64
    %v819 = vpop.permute.xlu0 %818
    %v821 = vmul.f32 %v814, %v819
    %823 = vrot.lane.b32.xlu0 %v821, 32
    %v824 = vpop.permute.xlu0 %823
    %v826 = vadd.f32 %v816, %v824
    %v827 = vtanh.pop %v826
    %829 = vrot.lane.b32.xlu0 %v827, 64
    %v830 = vpop.permute.xlu0 %829
    %v832 = vmul.f32 %v814, %v830
    %v833 = vld [vmem:[%s17] sm:$0xff]
    %v834 = vld [vmem:[%s17 + $0x8] sm:$0xff]
    %v835 = vld [vmem:[%s17 + $0x10] sm:$0xff]
    %v836 = vld [vmem:[%s17 + $0x18] sm:$0xff]
    %v837 = vld [vmem:[%s19] sm:$0xff]
    %v838 = vld [vmem:[%s23] sm:$0x1]
    %v840 = vlaneseq
    %v841 = vshrl.u32 %v840, 7
    %v842 = vsub.s32 0, %v841
    %v843 = vrot.slane %v838, %v842
    %v846 = vsel %vm206, %v833, 0
    %v849 = vsel %vm206, %v834, 0
    %v852 = vsel %vm206, %v835, 0
    %v855 = vsel %vm206, %v836, 0
    %857 = vmatprep.subr.mxu0 0.0
    %858 = vmatpush1.msra.mxu0 %v837
    %859 = vmatprep.subr.mxu0 0.0
    %860 = vmatpush1.msra.mxu0 0.0
    %861 = vmatprep.subr.mxu0 0.0
    %862 = vmatpush1.msra.mxu0 0.0
    %863 = vmatprep.subr.mxu0 0.0
    %864 = vmatpush1.msra.mxu0 0.0
    %865 = vmatprep.subr.mxu0 0.0
    %866 = vmatpush1.msra.mxu0 0.0
    %867 = vmatprep.subr.mxu0 0.0
    %868 = vmatpush1.msra.mxu0 0.0
    %869 = vmatprep.subr.mxu0 0.0
    %870 = vmatpush1.msra.mxu0 0.0
    %871 = vmatprep.subr.mxu0 0.0
    %872 = vmatpush1.msra.mxu0 0.0
    %873 = vmatprep.subr.mxu0 0.0
    %874 = vmatpush1.msra.mxu0 0.0
    %875 = vmatprep.subr.mxu0 0.0
    %876 = vmatpush1.msra.mxu0 0.0
    %877 = vmatprep.subr.mxu0 0.0
    %878 = vmatpush1.msra.mxu0 0.0
    %879 = vmatprep.subr.mxu0 0.0
    %880 = vmatpush1.msra.mxu0 0.0
    %881 = vmatprep.subr.mxu0 0.0
    %882 = vmatpush1.msra.mxu0 0.0
    %883 = vmatprep.subr.mxu0 0.0
    %884 = vmatpush1.msra.mxu0 0.0
    %885 = vmatprep.subr.mxu0 0.0
    %886 = vmatpush1.msra.mxu0 0.0
    %887 = vmatprep.subr.mxu0 0.0
    %888 = vmatpush1.msra.mxu0 0.0
    %889 = vmatprep.subr.mxu0 0.0
    %890 = vmatpush1.msra.mxu0 0.0
    %891 = vmatprep.subr.mxu0 0.0
    %892 = vmatpush1.msra.mxu0 0.0
    %893 = vmatprep.subr.mxu0 0.0
    %894 = vmatpush1.msra.mxu0 0.0
    %895 = vmatprep.subr.mxu0 0.0
    %896 = vmatpush1.msra.mxu0 0.0
    %897 = vmatprep.subr.mxu0 0.0
    %898 = vmatpush1.msra.mxu0 0.0
    %899 = vmatprep.subr.mxu0 0.0
    %900 = vmatpush1.msra.mxu0 0.0
    %901 = vmatprep.subr.mxu0 0.0
    %902 = vmatpush1.msra.mxu0 0.0
    %903 = vmatprep.subr.mxu0 0.0
    %904 = vmatpush1.msra.mxu0 0.0
    %905 = vmatprep.subr.mxu0 0.0
    %906 = vmatpush1.msra.mxu0 0.0
    %907 = vmatprep.subr.mxu0 0.0
    %908 = vmatpush1.msra.mxu0 0.0
    %909 = vmatprep.subr.mxu0 0.0
    %910 = vmatpush1.msra.mxu0 0.0
    %911 = vmatprep.subr.mxu0 0.0
    %912 = vmatpush1.msra.mxu0 0.0
    %913 = vmatprep.subr.mxu0 0.0
    %914 = vmatpush1.msra.mxu0 0.0
    %915 = vmatprep.subr.mxu0 0.0
    %916 = vmatpush1.msra.mxu0 0.0
    %917 = vmatprep.subr.mxu0 0.0
    %918 = vmatpush1.msra.mxu0 0.0
    %919 = vmatprep.subr.mxu0 0.0
    %920 = vmatpush1.msra.mxu0 0.0
    %921 = vmatprep.mubr.f32.mxu0 0.0
    %922 = vmatmul.mubr.f32.gmra.mrb[0].mxu0 %v846
    %v923 = vpop.f32.mrb[0].mxu0
    %v924 = vadd.f32 %v843, %v923
    %v925 = vpop.f32.mrb[0].mxu0
    %926 = vmatprep.mubr.f32.mxu0 0.0
    %927 = vmatmul.mubr.f32.gmra.mrb[0].mxu0 %v849
    %v928 = vpop.f32.mrb[0].mxu0
    %v929 = vadd.f32 %v843, %v928
    %v930 = vpop.f32.mrb[0].mxu0
    %931 = vmatprep.mubr.f32.mxu0 0.0
    %932 = vmatmul.mubr.f32.gmra.mrb[0].mxu0 %v852
    %v933 = vpop.f32.mrb[0].mxu0
    %v934 = vadd.f32 %v843, %v933
    %v935 = vpop.f32.mrb[0].mxu0
    %936 = vmatprep.mubr.f32.mxu0 0.0
    %937 = vmatmul.mubr.f32.gmra.mrb[0].mxu0 %v855
    %v938 = vpop.f32.mrb[0].mxu0
    %v939 = vadd.f32 %v843, %v938
    %v940 = vpop.f32.mrb[0].mxu0
    %941 = vdwg.mxu0
    %942 = vst [vmem:[#allocation2] sm:$0xff] %v924
    %943 = vst [vmem:[#allocation2 + $0x8] sm:$0xff] %v929
    %944 = vst [vmem:[#allocation2 + $0x10] sm:$0xff] %v934
    %945 = vst [vmem:[#allocation2 + $0x18] sm:$0xff] %v939
    %v946 = vld [vmem:[%s21] sm:$0xff]
    %v947 = vld [vmem:[%s21 + $0x8] sm:$0xff]
    %v948 = vld [vmem:[%s21 + $0x10] sm:$0xff]
    %v949 = vld [vmem:[%s21 + $0x18] sm:$0xff]
    %v950 = vld [vmem:[#allocation2] sm:$0xf]
    %v951 = vxor.u32 %v950, 2147483648
    %v952 = vmul.f32 %v951, 1.442695
    %v953 = vpow.pop %v952
    %v954 = vadd.f32 %v953, 1.0
    %v955 = vrcp.pop %v954
    %v956 = vmul.f32 1.0, %v955
    %v957 = vtanh.pop %v950
    %959 = vrot.lane.b32.xlu0 %v957, 64
    %v960 = vpop.permute.xlu0 %959
    %v962 = vmul.f32 %v956, %v960
    %v963 = vtanh.pop %v962
    %965 = vrot.lane.b32.xlu0 %v963, 96
    %v966 = vpop.permute.xlu0 %965
    %v968 = vmul.f32 %v956, %v966
    %v969 = vld [vmem:[#allocation2 + $0x4] sm:$0xf]
    %971 = vrot.lane.b32.xlu0 %v968, 32
    %v972 = vpop.permute.xlu0 %971
    %v973 = vsel %vm308, %v972, 0
    %975 = vmatprep.subr.mxu0 0.0
    %976 = vmatpush1.msra.mxu0 %v946
    %977 = vmatprep.subr.mxu0 0.0
    %978 = vmatpush1.msra.mxu0 %v947
    %979 = vmatprep.subr.mxu0 0.0
    %980 = vmatpush1.msra.mxu0 %v948
    %981 = vmatprep.subr.mxu0 0.0
    %982 = vmatpush1.msra.mxu0 %v949
    %983 = vmatprep.subr.mxu0 0.0
    %984 = vmatpush1.msra.mxu0 0.0
    %985 = vmatprep.subr.mxu0 0.0
    %986 = vmatpush1.msra.mxu0 0.0
    %987 = vmatprep.subr.mxu0 0.0
    %988 = vmatpush1.msra.mxu0 0.0
    %989 = vmatprep.subr.mxu0 0.0
    %990 = vmatpush1.msra.mxu0 0.0
    %991 = vmatprep.subr.mxu0 0.0
    %992 = vmatpush1.msra.mxu0 0.0
    %993 = vmatprep.subr.mxu0 0.0
    %994 = vmatpush1.msra.mxu0 0.0
    %995 = vmatprep.subr.mxu0 0.0
    %996 = vmatpush1.msra.mxu0 0.0
    %997 = vmatprep.subr.mxu0 0.0
    %998 = vmatpush1.msra.mxu0 0.0
    %999 = vmatprep.subr.mxu0 0.0
    %1000 = vmatpush1.msra.mxu0 0.0
    %1001 = vmatprep.subr.mxu0 0.0
    %1002 = vmatpush1.msra.mxu0 0.0
    %1003 = vmatprep.subr.mxu0 0.0
    %1004 = vmatpush1.msra.mxu0 0.0
    %1005 = vmatprep.subr.mxu0 0.0
    %1006 = vmatpush1.msra.mxu0 0.0
    %1007 = vmatprep.subr.mxu0 0.0
    %1008 = vmatpush1.msra.mxu0 0.0
    %1009 = vmatprep.subr.mxu0 0.0
    %1010 = vmatpush1.msra.mxu0 0.0
    %1011 = vmatprep.subr.mxu0 0.0
    %1012 = vmatpush1.msra.mxu0 0.0
    %1013 = vmatprep.subr.mxu0 0.0
    %1014 = vmatpush1.msra.mxu0 0.0
    %1015 = vmatprep.subr.mxu0 0.0
    %1016 = vmatpush1.msra.mxu0 0.0
    %1017 = vmatprep.subr.mxu0 0.0
    %1018 = vmatpush1.msra.mxu0 0.0
    %1019 = vmatprep.subr.mxu0 0.0
    %1020 = vmatpush1.msra.mxu0 0.0
    %1021 = vmatprep.subr.mxu0 0.0
    %1022 = vmatpush1.msra.mxu0 0.0
    %1023 = vmatprep.subr.mxu0 0.0
    %1024 = vmatpush1.msra.mxu0 0.0
    %1025 = vmatprep.subr.mxu0 0.0
    %1026 = vmatpush1.msra.mxu0 0.0
    %1027 = vmatprep.subr.mxu0 0.0
    %1028 = vmatpush1.msra.mxu0 0.0
    %1029 = vmatprep.subr.mxu0 0.0
    %1030 = vmatpush1.msra.mxu0 0.0
    %1031 = vmatprep.subr.mxu0 0.0
    %1032 = vmatpush1.msra.mxu0 0.0
    %1033 = vmatprep.subr.mxu0 0.0
    %1034 = vmatpush1.msra.mxu0 0.0
    %1035 = vmatprep.subr.mxu0 0.0
    %1036 = vmatpush1.msra.mxu0 0.0
    %1037 = vmatprep.subr.mxu0 0.0
    %1038 = vmatpush1.msra.mxu0 0.0
    %1039 = vmatprep.mubr.f32.mxu0 0.0
    %1040 = vmatmul.mubr.f32.gmra.mrb[0].mxu0 %v973
    %v1041 = vpop.f32.mrb[0].mxu0
    %v1042 = vadd.f32 0.0, %v1041
    %v1043 = vpop.f32.mrb[0].mxu0
    %1044 = vdwg.mxu0
    %v1045 = vadd.f32 %v969, %v1042
    %v1046 = vxor.u32 %v1045, 2147483648
    %v1047 = vmul.f32 %v1046, 1.442695
    %v1048 = vpow.pop %v1047
    %v1049 = vadd.f32 %v1048, 1.0
    %v1050 = vrcp.pop %v1049
    %v1051 = vmul.f32 1.0, %v1050
    %v1052 = vtanh.pop %v1045
    %1054 = vrot.lane.b32.xlu0 %v962, 32
    %v1055 = vpop.permute.xlu0 %1054
    %v1057 = vmul.f32 %v1051, %v1055
    %1059 = vrot.lane.b32.xlu0 %v1052, 64
    %v1060 = vpop.permute.xlu0 %1059
    %v1062 = vmul.f32 %v1051, %v1060
    %1064 = vrot.lane.b32.xlu0 %v1062, 32
    %v1065 = vpop.permute.xlu0 %1064
    %v1067 = vadd.f32 %v1057, %v1065
    %v1068 = vtanh.pop %v1067
    %1070 = vrot.lane.b32.xlu0 %v1068, 64
    %v1071 = vpop.permute.xlu0 %1070
    %v1073 = vmul.f32 %v1051, %v1071
    %v1074 = vld [vmem:[#allocation2 + $0x8] sm:$0xf]
    %1076 = vrot.lane.b32.xlu0 %v1073, 32
    %v1077 = vpop.permute.xlu0 %1076
    %v1078 = vsel %vm308, %v1077, 0
    %1080 = vmatprep.subr.mxu0 0.0
    %1081 = vmatpush1.msra.mxu0 %v946
    %1082 = vmatprep.subr.mxu0 0.0
    %1083 = vmatpush1.msra.mxu0 %v947
    %1084 = vmatprep.subr.mxu0 0.0
    %1085 = vmatpush1.msra.mxu0 %v948
    %1086 = vmatprep.subr.mxu0 0.0
    %1087 = vmatpush1.msra.mxu0 %v949
    %1088 = vmatprep.subr.mxu0 0.0
    %1089 = vmatpush1.msra.mxu0 0.0
    %1090 = vmatprep.subr.mxu0 0.0
    %1091 = vmatpush1.msra.mxu0 0.0
    %1092 = vmatprep.subr.mxu0 0.0
    %1093 = vmatpush1.msra.mxu0 0.0
    %1094 = vmatprep.subr.mxu0 0.0
    %1095 = vmatpush1.msra.mxu0 0.0
    %1096 = vmatprep.subr.mxu0 0.0
    %1097 = vmatpush1.msra.mxu0 0.0
    %1098 = vmatprep.subr.mxu0 0.0
    %1099 = vmatpush1.msra.mxu0 0.0
    %1100 = vmatprep.subr.mxu0 0.0
    %1101 = vmatpush1.msra.mxu0 0.0
    %1102 = vmatprep.subr.mxu0 0.0
    %1103 = vmatpush1.msra.mxu0 0.0
    %1104 = vmatprep.subr.mxu0 0.0
    %1105 = vmatpush1.msra.mxu0 0.0
    %1106 = vmatprep.subr.mxu0 0.0
    %1107 = vmatpush1.msra.mxu0 0.0
    %1108 = vmatprep.subr.mxu0 0.0
    %1109 = vmatpush1.msra.mxu0 0.0
    %1110 = vmatprep.subr.mxu0 0.0
    %1111 = vmatpush1.msra.mxu0 0.0
    %1112 = vmatprep.subr.mxu0 0.0
    %1113 = vmatpush1.msra.mxu0 0.0
    %1114 = vmatprep.subr.mxu0 0.0
    %1115 = vmatpush1.msra.mxu0 0.0
    %1116 = vmatprep.subr.mxu0 0.0
    %1117 = vmatpush1.msra.mxu0 0.0
    %1118 = vmatprep.subr.mxu0 0.0
    %1119 = vmatpush1.msra.mxu0 0.0
    %1120 = vmatprep.subr.mxu0 0.0
    %1121 = vmatpush1.msra.mxu0 0.0
    %1122 = vmatprep.subr.mxu0 0.0
    %1123 = vmatpush1.msra.mxu0 0.0
    %1124 = vmatprep.subr.mxu0 0.0
    %1125 = vmatpush1.msra.mxu0 0.0
    %1126 = vmatprep.subr.mxu0 0.0
    %1127 = vmatpush1.msra.mxu0 0.0
    %1128 = vmatprep.subr.mxu0 0.0
    %1129 = vmatpush1.msra.mxu0 0.0
    %1130 = vmatprep.subr.mxu0 0.0
    %1131 = vmatpush1.msra.mxu0 0.0
    %1132 = vmatprep.subr.mxu0 0.0
    %1133 = vmatpush1.msra.mxu0 0.0
    %1134 = vmatprep.subr.mxu0 0.0
    %1135 = vmatpush1.msra.mxu0 0.0
    %1136 = vmatprep.subr.mxu0 0.0
    %1137 = vmatpush1.msra.mxu0 0.0
    %1138 = vmatprep.subr.mxu0 0.0
    %1139 = vmatpush1.msra.mxu0 0.0
    %1140 = vmatprep.subr.mxu0 0.0
    %1141 = vmatpush1.msra.mxu0 0.0
    %1142 = vmatprep.subr.mxu0 0.0
    %1143 = vmatpush1.msra.mxu0 0.0
    %1144 = vmatprep.mubr.f32.mxu0 0.0
    %1145 = vmatmul.mubr.f32.gmra.mrb[0].mxu0 %v1078
    %v1146 = vpop.f32.mrb[0].mxu0
    %v1147 = vadd.f32 0.0, %v1146
    %v1148 = vpop.f32.mrb[0].mxu0
    %1149 = vdwg.mxu0
    %v1150 = vadd.f32 %v1074, %v1147
    %v1151 = vxor.u32 %v1150, 2147483648
    %v1152 = vmul.f32 %v1151, 1.442695
    %v1153 = vpow.pop %v1152
    %v1154 = vadd.f32 %v1153, 1.0
    %v1155 = vrcp.pop %v1154
    %v1156 = vmul.f32 1.0, %v1155
    %v1157 = vtanh.pop %v1150
    %v1158 = vmul.f32 %v1156, %v1067
    %1160 = vrot.lane.b32.xlu0 %v1157, 64
    %v1161 = vpop.permute.xlu0 %1160
    %v1163 = vmul.f32 %v1156, %v1161
    %1165 = vrot.lane.b32.xlu0 %v1163, 32
    %v1166 = vpop.permute.xlu0 %1165
    %v1168 = vadd.f32 %v1158, %v1166
    %v1169 = vtanh.pop %v1168
    %1171 = vrot.lane.b32.xlu0 %v1169, 64
    %v1172 = vpop.permute.xlu0 %1171
    %v1174 = vmul.f32 %v1156, %v1172
    %v1175 = vld [vmem:[#allocation2 + $0xc] sm:$0xf]
    %1177 = vrot.lane.b32.xlu0 %v1174, 32
    %v1178 = vpop.permute.xlu0 %1177
    %v1179 = vsel %vm308, %v1178, 0
    %1181 = vmatprep.subr.mxu0 0.0
    %1182 = vmatpush1.msra.mxu0 %v946
    %1183 = vmatprep.subr.mxu0 0.0
    %1184 = vmatpush1.msra.mxu0 %v947
    %1185 = vmatprep.subr.mxu0 0.0
    %1186 = vmatpush1.msra.mxu0 %v948
    %1187 = vmatprep.subr.mxu0 0.0
    %1188 = vmatpush1.msra.mxu0 %v949
    %1189 = vmatprep.subr.mxu0 0.0
    %1190 = vmatpush1.msra.mxu0 0.0
    %1191 = vmatprep.subr.mxu0 0.0
    %1192 = vmatpush1.msra.mxu0 0.0
    %1193 = vmatprep.subr.mxu0 0.0
    %1194 = vmatpush1.msra.mxu0 0.0
    %1195 = vmatprep.subr.mxu0 0.0
    %1196 = vmatpush1.msra.mxu0 0.0
    %1197 = vmatprep.subr.mxu0 0.0
    %1198 = vmatpush1.msra.mxu0 0.0
    %1199 = vmatprep.subr.mxu0 0.0
    %1200 = vmatpush1.msra.mxu0 0.0
    %1201 = vmatprep.subr.mxu0 0.0
    %1202 = vmatpush1.msra.mxu0 0.0
    %1203 = vmatprep.subr.mxu0 0.0
    %1204 = vmatpush1.msra.mxu0 0.0
    %1205 = vmatprep.subr.mxu0 0.0
    %1206 = vmatpush1.msra.mxu0 0.0
    %1207 = vmatprep.subr.mxu0 0.0
    %1208 = vmatpush1.msra.mxu0 0.0
    %1209 = vmatprep.subr.mxu0 0.0
    %1210 = vmatpush1.msra.mxu0 0.0
    %1211 = vmatprep.subr.mxu0 0.0
    %1212 = vmatpush1.msra.mxu0 0.0
    %1213 = vmatprep.subr.mxu0 0.0
    %1214 = vmatpush1.msra.mxu0 0.0
    %1215 = vmatprep.subr.mxu0 0.0
    %1216 = vmatpush1.msra.mxu0 0.0
    %1217 = vmatprep.subr.mxu0 0.0
    %1218 = vmatpush1.msra.mxu0 0.0
    %1219 = vmatprep.subr.mxu0 0.0
    %1220 = vmatpush1.msra.mxu0 0.0
    %1221 = vmatprep.subr.mxu0 0.0
    %1222 = vmatpush1.msra.mxu0 0.0
    %1223 = vmatprep.subr.mxu0 0.0
    %1224 = vmatpush1.msra.mxu0 0.0
    %1225 = vmatprep.subr.mxu0 0.0
    %1226 = vmatpush1.msra.mxu0 0.0
    %1227 = vmatprep.subr.mxu0 0.0
    %1228 = vmatpush1.msra.mxu0 0.0
    %1229 = vmatprep.subr.mxu0 0.0
    %1230 = vmatpush1.msra.mxu0 0.0
    %1231 = vmatprep.subr.mxu0 0.0
    %1232 = vmatpush1.msra.mxu0 0.0
    %1233 = vmatprep.subr.mxu0 0.0
    %1234 = vmatpush1.msra.mxu0 0.0
    %1235 = vmatprep.subr.mxu0 0.0
    %1236 = vmatpush1.msra.mxu0 0.0
    %1237 = vmatprep.subr.mxu0 0.0
    %1238 = vmatpush1.msra.mxu0 0.0
    %1239 = vmatprep.subr.mxu0 0.0
    %1240 = vmatpush1.msra.mxu0 0.0
    %1241 = vmatprep.subr.mxu0 0.0
    %1242 = vmatpush1.msra.mxu0 0.0
    %1243 = vmatprep.subr.mxu0 0.0
    %1244 = vmatpush1.msra.mxu0 0.0
    %1245 = vmatprep.mubr.f32.mxu0 0.0
    %1246 = vmatmul.mubr.f32.gmra.mrb[0].mxu0 %v1179
    %v1247 = vpop.f32.mrb[0].mxu0
    %v1248 = vadd.f32 0.0, %v1247
    %v1249 = vpop.f32.mrb[0].mxu0
    %1250 = vdwg.mxu0
    %v1251 = vadd.f32 %v1175, %v1248
    %v1252 = vxor.u32 %v1251, 2147483648
    %v1253 = vmul.f32 %v1252, 1.442695
    %v1254 = vpow.pop %v1253
    %v1255 = vadd.f32 %v1254, 1.0
    %v1256 = vrcp.pop %v1255
    %v1257 = vmul.f32 1.0, %v1256
    %v1258 = vtanh.pop %v1251
    %v1259 = vmul.f32 %v1257, %v1168
    %1261 = vrot.lane.b32.xlu0 %v1258, 64
    %v1262 = vpop.permute.xlu0 %1261
    %v1264 = vmul.f32 %v1257, %v1262
    %1266 = vrot.lane.b32.xlu0 %v1264, 32
    %v1267 = vpop.permute.xlu0 %1266
    %v1269 = vadd.f32 %v1259, %v1267
    %v1270 = vtanh.pop %v1269
    %1272 = vrot.lane.b32.xlu0 %v1270, 64
    %v1273 = vpop.permute.xlu0 %1272
    %v1275 = vmul.f32 %v1257, %v1273
    %v1276 = vld [vmem:[#allocation2 + $0x10] sm:$0xf]
    %1278 = vrot.lane.b32.xlu0 %v1275, 32
    %v1279 = vpop.permute.xlu0 %1278
    %v1280 = vsel %vm308, %v1279, 0
    %1282 = vmatprep.subr.mxu0 0.0
    %1283 = vmatpush1.msra.mxu0 %v946
    %1284 = vmatprep.subr.mxu0 0.0
    %1285 = vmatpush1.msra.mxu0 %v947
    %1286 = vmatprep.subr.mxu0 0.0
    %1287 = vmatpush1.msra.mxu0 %v948
    %1288 = vmatprep.subr.mxu0 0.0
    %1289 = vmatpush1.msra.mxu0 %v949
    %1290 = vmatprep.subr.mxu0 0.0
    %1291 = vmatpush1.msra.mxu0 0.0
    %1292 = vmatprep.subr.mxu0 0.0
    %1293 = vmatpush1.msra.mxu0 0.0
    %1294 = vmatprep.subr.mxu0 0.0
    %1295 = vmatpush1.msra.mxu0 0.0
    %1296 = vmatprep.subr.mxu0 0.0
    %1297 = vmatpush1.msra.mxu0 0.0
    %1298 = vmatprep.subr.mxu0 0.0
    %1299 = vmatpush1.msra.mxu0 0.0
    %1300 = vmatprep.subr.mxu0 0.0
    %1301 = vmatpush1.msra.mxu0 0.0
    %1302 = vmatprep.subr.mxu0 0.0
    %1303 = vmatpush1.msra.mxu0 0.0
    %1304 = vmatprep.subr.mxu0 0.0
    %1305 = vmatpush1.msra.mxu0 0.0
    %1306 = vmatprep.subr.mxu0 0.0
    %1307 = vmatpush1.msra.mxu0 0.0
    %1308 = vmatprep.subr.mxu0 0.0
    %1309 = vmatpush1.msra.mxu0 0.0
    %1310 = vmatprep.subr.mxu0 0.0
    %1311 = vmatpush1.msra.mxu0 0.0
    %1312 = vmatprep.subr.mxu0 0.0
    %1313 = vmatpush1.msra.mxu0 0.0
    %1314 = vmatprep.subr.mxu0 0.0
    %1315 = vmatpush1.msra.mxu0 0.0
    %1316 = vmatprep.subr.mxu0 0.0
    %1317 = vmatpush1.msra.mxu0 0.0
    %1318 = vmatprep.subr.mxu0 0.0
    %1319 = vmatpush1.msra.mxu0 0.0
    %1320 = vmatprep.subr.mxu0 0.0
    %1321 = vmatpush1.msra.mxu0 0.0
    %1322 = vmatprep.subr.mxu0 0.0
    %1323 = vmatpush1.msra.mxu0 0.0
    %1324 = vmatprep.subr.mxu0 0.0
    %1325 = vmatpush1.msra.mxu0 0.0
    %1326 = vmatprep.subr.mxu0 0.0
    %1327 = vmatpush1.msra.mxu0 0.0
    %1328 = vmatprep.subr.mxu0 0.0
    %1329 = vmatpush1.msra.mxu0 0.0
    %1330 = vmatprep.subr.mxu0 0.0
    %1331 = vmatpush1.msra.mxu0 0.0
    %1332 = vmatprep.subr.mxu0 0.0
    %1333 = vmatpush1.msra.mxu0 0.0
    %1334 = vmatprep.subr.mxu0 0.0
    %1335 = vmatpush1.msra.mxu0 0.0
    %1336 = vmatprep.subr.mxu0 0.0
    %1337 = vmatpush1.msra.mxu0 0.0
    %1338 = vmatprep.subr.mxu0 0.0
    %1339 = vmatpush1.msra.mxu0 0.0
    %1340 = vmatprep.subr.mxu0 0.0
    %1341 = vmatpush1.msra.mxu0 0.0
    %1342 = vmatprep.subr.mxu0 0.0
    %1343 = vmatpush1.msra.mxu0 0.0
    %1344 = vmatprep.subr.mxu0 0.0
    %1345 = vmatpush1.msra.mxu0 0.0
    %1346 = vmatprep.mubr.f32.mxu0 0.0
    %1347 = vmatmul.mubr.f32.gmra.mrb[0].mxu0 %v1280
    %v1348 = vpop.f32.mrb[0].mxu0
    %v1349 = vadd.f32 0.0, %v1348
    %v1350 = vpop.f32.mrb[0].mxu0
    %1351 = vdwg.mxu0
    %v1352 = vadd.f32 %v1276, %v1349
    %v1353 = vxor.u32 %v1352, 2147483648
    %v1354 = vmul.f32 %v1353, 1.442695
    %v1355 = vpow.pop %v1354
    %v1356 = vadd.f32 %v1355, 1.0
    %v1357 = vrcp.pop %v1356
    %v1358 = vmul.f32 1.0, %v1357
    %v1359 = vtanh.pop %v1352
    %v1360 = vmul.f32 %v1358, %v1269
    %1362 = vrot.lane.b32.xlu0 %v1359, 64
    %v1363 = vpop.permute.xlu0 %1362
    %v1365 = vmul.f32 %v1358, %v1363
    %1367 = vrot.lane.b32.xlu0 %v1365, 32
    %v1368 = vpop.permute.xlu0 %1367
    %v1370 = vadd.f32 %v1360, %v1368
    %v1371 = vtanh.pop %v1370
    %1373 = vrot.lane.b32.xlu0 %v1371, 64
    %v1374 = vpop.permute.xlu0 %1373
    %v1376 = vmul.f32 %v1358, %v1374
    %v1377 = vld [vmem:[#allocation2 + $0x14] sm:$0xf]
    %1379 = vrot.lane.b32.xlu0 %v1376, 32
    %v1380 = vpop.permute.xlu0 %1379
    %v1381 = vsel %vm308, %v1380, 0
    %1383 = vmatprep.subr.mxu0 0.0
    %1384 = vmatpush1.msra.mxu0 %v946
    %1385 = vmatprep.subr.mxu0 0.0
    %1386 = vmatpush1.msra.mxu0 %v947
    %1387 = vmatprep.subr.mxu0 0.0
    %1388 = vmatpush1.msra.mxu0 %v948
    %1389 = vmatprep.subr.mxu0 0.0
    %1390 = vmatpush1.msra.mxu0 %v949
    %1391 = vmatprep.subr.mxu0 0.0
    %1392 = vmatpush1.msra.mxu0 0.0
    %1393 = vmatprep.subr.mxu0 0.0
    %1394 = vmatpush1.msra.mxu0 0.0
    %1395 = vmatprep.subr.mxu0 0.0
    %1396 = vmatpush1.msra.mxu0 0.0
    %1397 = vmatprep.subr.mxu0 0.0
    %1398 = vmatpush1.msra.mxu0 0.0
    %1399 = vmatprep.subr.mxu0 0.0
    %1400 = vmatpush1.msra.mxu0 0.0
    %1401 = vmatprep.subr.mxu0 0.0
    %1402 = vmatpush1.msra.mxu0 0.0
    %1403 = vmatprep.subr.mxu0 0.0
    %1404 = vmatpush1.msra.mxu0 0.0
    %1405 = vmatprep.subr.mxu0 0.0
    %1406 = vmatpush1.msra.mxu0 0.0
    %1407 = vmatprep.subr.mxu0 0.0
    %1408 = vmatpush1.msra.mxu0 0.0
    %1409 = vmatprep.subr.mxu0 0.0
    %1410 = vmatpush1.msra.mxu0 0.0
    %1411 = vmatprep.subr.mxu0 0.0
    %1412 = vmatpush1.msra.mxu0 0.0
    %1413 = vmatprep.subr.mxu0 0.0
    %1414 = vmatpush1.msra.mxu0 0.0
    %1415 = vmatprep.subr.mxu0 0.0
    %1416 = vmatpush1.msra.mxu0 0.0
    %1417 = vmatprep.subr.mxu0 0.0
    %1418 = vmatpush1.msra.mxu0 0.0
    %1419 = vmatprep.subr.mxu0 0.0
    %1420 = vmatpush1.msra.mxu0 0.0
    %1421 = vmatprep.subr.mxu0 0.0
    %1422 = vmatpush1.msra.mxu0 0.0
    %1423 = vmatprep.subr.mxu0 0.0
    %1424 = vmatpush1.msra.mxu0 0.0
    %1425 = vmatprep.subr.mxu0 0.0
    %1426 = vmatpush1.msra.mxu0 0.0
    %1427 = vmatprep.subr.mxu0 0.0
    %1428 = vmatpush1.msra.mxu0 0.0
    %1429 = vmatprep.subr.mxu0 0.0
    %1430 = vmatpush1.msra.mxu0 0.0
    %1431 = vmatprep.subr.mxu0 0.0
    %1432 = vmatpush1.msra.mxu0 0.0
    %1433 = vmatprep.subr.mxu0 0.0
    %1434 = vmatpush1.msra.mxu0 0.0
    %1435 = vmatprep.subr.mxu0 0.0
    %1436 = vmatpush1.msra.mxu0 0.0
    %1437 = vmatprep.subr.mxu0 0.0
    %1438 = vmatpush1.msra.mxu0 0.0
    %1439 = vmatprep.subr.mxu0 0.0
    %1440 = vmatpush1.msra.mxu0 0.0
    %1441 = vmatprep.subr.mxu0 0.0
    %1442 = vmatpush1.msra.mxu0 0.0
    %1443 = vmatprep.subr.mxu0 0.0
    %1444 = vmatpush1.msra.mxu0 0.0
    %1445 = vmatprep.subr.mxu0 0.0
    %1446 = vmatpush1.msra.mxu0 0.0
    %1447 = vmatprep.mubr.f32.mxu0 0.0
    %1448 = vmatmul.mubr.f32.gmra.mrb[0].mxu0 %v1381
    %v1449 = vpop.f32.mrb[0].mxu0
    %v1450 = vadd.f32 0.0, %v1449
    %v1451 = vpop.f32.mrb[0].mxu0
    %1452 = vdwg.mxu0
    %v1453 = vadd.f32 %v1377, %v1450
    %v1454 = vxor.u32 %v1453, 2147483648
    %v1455 = vmul.f32 %v1454, 1.442695
    %v1456 = vpow.pop %v1455
    %v1457 = vadd.f32 %v1456, 1.0
    %v1458 = vrcp.pop %v1457
    %v1459 = vmul.f32 1.0, %v1458
    %v1460 = vtanh.pop %v1453
    %v1461 = vmul.f32 %v1459, %v1370
    %1463 = vrot.lane.b32.xlu0 %v1460, 64
    %v1464 = vpop.permute.xlu0 %1463
    %v1466 = vmul.f32 %v1459, %v1464
    %1468 = vrot.lane.b32.xlu0 %v1466, 32
    %v1469 = vpop.permute.xlu0 %1468
    %v1471 = vadd.f32 %v1461, %v1469
    %v1472 = vtanh.pop %v1471
    %1474 = vrot.lane.b32.xlu0 %v1472, 64
    %v1475 = vpop.permute.xlu0 %1474
    %v1477 = vmul.f32 %v1459, %v1475
    %v1478 = vld [vmem:[#allocation2 + $0x18] sm:$0xf]
    %1480 = vrot.lane.b32.xlu0 %v1477, 32
    %v1481 = vpop.permute.xlu0 %1480
    %v1482 = vsel %vm308, %v1481, 0
    %1484 = vmatprep.subr.mxu0 0.0
    %1485 = vmatpush1.msra.mxu0 %v946
    %1486 = vmatprep.subr.mxu0 0.0
    %1487 = vmatpush1.msra.mxu0 %v947
    %1488 = vmatprep.subr.mxu0 0.0
    %1489 = vmatpush1.msra.mxu0 %v948
    %1490 = vmatprep.subr.mxu0 0.0
    %1491 = vmatpush1.msra.mxu0 %v949
    %1492 = vmatprep.subr.mxu0 0.0
    %1493 = vmatpush1.msra.mxu0 0.0
    %1494 = vmatprep.subr.mxu0 0.0
    %1495 = vmatpush1.msra.mxu0 0.0
    %1496 = vmatprep.subr.mxu0 0.0
    %1497 = vmatpush1.msra.mxu0 0.0
    %1498 = vmatprep.subr.mxu0 0.0
    %1499 = vmatpush1.msra.mxu0 0.0
    %1500 = vmatprep.subr.mxu0 0.0
    %1501 = vmatpush1.msra.mxu0 0.0
    %1502 = vmatprep.subr.mxu0 0.0
    %1503 = vmatpush1.msra.mxu0 0.0
    %1504 = vmatprep.subr.mxu0 0.0
    %1505 = vmatpush1.msra.mxu0 0.0
    %1506 = vmatprep.subr.mxu0 0.0
    %1507 = vmatpush1.msra.mxu0 0.0
    %1508 = vmatprep.subr.mxu0 0.0
    %1509 = vmatpush1.msra.mxu0 0.0
    %1510 = vmatprep.subr.mxu0 0.0
    %1511 = vmatpush1.msra.mxu0 0.0
    %1512 = vmatprep.subr.mxu0 0.0
    %1513 = vmatpush1.msra.mxu0 0.0
    %1514 = vmatprep.subr.mxu0 0.0
    %1515 = vmatpush1.msra.mxu0 0.0
    %1516 = vmatprep.subr.mxu0 0.0
    %1517 = vmatpush1.msra.mxu0 0.0
    %1518 = vmatprep.subr.mxu0 0.0
    %1519 = vmatpush1.msra.mxu0 0.0
    %1520 = vmatprep.subr.mxu0 0.0
    %1521 = vmatpush1.msra.mxu0 0.0
    %1522 = vmatprep.subr.mxu0 0.0
    %1523 = vmatpush1.msra.mxu0 0.0
    %1524 = vmatprep.subr.mxu0 0.0
    %1525 = vmatpush1.msra.mxu0 0.0
    %1526 = vmatprep.subr.mxu0 0.0
    %1527 = vmatpush1.msra.mxu0 0.0
    %1528 = vmatprep.subr.mxu0 0.0
    %1529 = vmatpush1.msra.mxu0 0.0
    %1530 = vmatprep.subr.mxu0 0.0
    %1531 = vmatpush1.msra.mxu0 0.0
    %1532 = vmatprep.subr.mxu0 0.0
    %1533 = vmatpush1.msra.mxu0 0.0
    %1534 = vmatprep.subr.mxu0 0.0
    %1535 = vmatpush1.msra.mxu0 0.0
    %1536 = vmatprep.subr.mxu0 0.0
    %1537 = vmatpush1.msra.mxu0 0.0
    %1538 = vmatprep.subr.mxu0 0.0
    %1539 = vmatpush1.msra.mxu0 0.0
    %1540 = vmatprep.subr.mxu0 0.0
    %1541 = vmatpush1.msra.mxu0 0.0
    %1542 = vmatprep.subr.mxu0 0.0
    %1543 = vmatpush1.msra.mxu0 0.0
    %1544 = vmatprep.subr.mxu0 0.0
    %1545 = vmatpush1.msra.mxu0 0.0
    %1546 = vmatprep.subr.mxu0 0.0
    %1547 = vmatpush1.msra.mxu0 0.0
    %1548 = vmatprep.mubr.f32.mxu0 0.0
    %1549 = vmatmul.mubr.f32.gmra.mrb[0].mxu0 %v1482
    %v1550 = vpop.f32.mrb[0].mxu0
    %v1551 = vadd.f32 0.0, %v1550
    %v1552 = vpop.f32.mrb[0].mxu0
    %1553 = vdwg.mxu0
    %v1554 = vadd.f32 %v1478, %v1551
    %v1555 = vxor.u32 %v1554, 2147483648
    %v1556 = vmul.f32 %v1555, 1.442695
    %v1557 = vpow.pop %v1556
    %v1558 = vadd.f32 %v1557, 1.0
    %v1559 = vrcp.pop %v1558
    %v1560 = vmul.f32 1.0, %v1559
    %v1561 = vtanh.pop %v1554
    %v1562 = vmul.f32 %v1560, %v1471
    %1564 = vrot.lane.b32.xlu0 %v1561, 64
    %v1565 = vpop.permute.xlu0 %1564
    %v1567 = vmul.f32 %v1560, %v1565
    %1569 = vrot.lane.b32.xlu0 %v1567, 32
    %v1570 = vpop.permute.xlu0 %1569
    %v1572 = vadd.f32 %v1562, %v1570
    %v1573 = vtanh.pop %v1572
    %1575 = vrot.lane.b32.xlu0 %v1573, 64
    %v1576 = vpop.permute.xlu0 %1575
    %v1578 = vmul.f32 %v1560, %v1576
    %v1579 = vld [vmem:[#allocation2 + $0x1c] sm:$0xf]
    %1581 = vrot.lane.b32.xlu0 %v1578, 32
    %v1582 = vpop.permute.xlu0 %1581
    %v1583 = vsel %vm308, %v1582, 0
    %1585 = vmatprep.subr.mxu0 0.0
    %1586 = vmatpush1.msra.mxu0 %v946
    %1587 = vmatprep.subr.mxu0 0.0
    %1588 = vmatpush1.msra.mxu0 %v947
    %1589 = vmatprep.subr.mxu0 0.0
    %1590 = vmatpush1.msra.mxu0 %v948
    %1591 = vmatprep.subr.mxu0 0.0
    %1592 = vmatpush1.msra.mxu0 %v949
    %1593 = vmatprep.subr.mxu0 0.0
    %1594 = vmatpush1.msra.mxu0 0.0
    %1595 = vmatprep.subr.mxu0 0.0
    %1596 = vmatpush1.msra.mxu0 0.0
    %1597 = vmatprep.subr.mxu0 0.0
    %1598 = vmatpush1.msra.mxu0 0.0
    %1599 = vmatprep.subr.mxu0 0.0
    %1600 = vmatpush1.msra.mxu0 0.0
    %1601 = vmatprep.subr.mxu0 0.0
    %1602 = vmatpush1.msra.mxu0 0.0
    %1603 = vmatprep.subr.mxu0 0.0
    %1604 = vmatpush1.msra.mxu0 0.0
    %1605 = vmatprep.subr.mxu0 0.0
    %1606 = vmatpush1.msra.mxu0 0.0
    %1607 = vmatprep.subr.mxu0 0.0
    %1608 = vmatpush1.msra.mxu0 0.0
    %1609 = vmatprep.subr.mxu0 0.0
    %1610 = vmatpush1.msra.mxu0 0.0
    %1611 = vmatprep.subr.mxu0 0.0
    %1612 = vmatpush1.msra.mxu0 0.0
    %1613 = vmatprep.subr.mxu0 0.0
    %1614 = vmatpush1.msra.mxu0 0.0
    %1615 = vmatprep.subr.mxu0 0.0
    %1616 = vmatpush1.msra.mxu0 0.0
    %1617 = vmatprep.subr.mxu0 0.0
    %1618 = vmatpush1.msra.mxu0 0.0
    %1619 = vmatprep.subr.mxu0 0.0
    %1620 = vmatpush1.msra.mxu0 0.0
    %1621 = vmatprep.subr.mxu0 0.0
    %1622 = vmatpush1.msra.mxu0 0.0
    %1623 = vmatprep.subr.mxu0 0.0
    %1624 = vmatpush1.msra.mxu0 0.0
    %1625 = vmatprep.subr.mxu0 0.0
    %1626 = vmatpush1.msra.mxu0 0.0
    %1627 = vmatprep.subr.mxu0 0.0
    %1628 = vmatpush1.msra.mxu0 0.0
    %1629 = vmatprep.subr.mxu0 0.0
    %1630 = vmatpush1.msra.mxu0 0.0
    %1631 = vmatprep.subr.mxu0 0.0
    %1632 = vmatpush1.msra.mxu0 0.0
    %1633 = vmatprep.subr.mxu0 0.0
    %1634 = vmatpush1.msra.mxu0 0.0
    %1635 = vmatprep.subr.mxu0 0.0
    %1636 = vmatpush1.msra.mxu0 0.0
    %1637 = vmatprep.subr.mxu0 0.0
    %1638 = vmatpush1.msra.mxu0 0.0
    %1639 = vmatprep.subr.mxu0 0.0
    %1640 = vmatpush1.msra.mxu0 0.0
    %1641 = vmatprep.subr.mxu0 0.0
    %1642 = vmatpush1.msra.mxu0 0.0
    %1643 = vmatprep.subr.mxu0 0.0
    %1644 = vmatpush1.msra.mxu0 0.0
    %1645 = vmatprep.subr.mxu0 0.0
    %1646 = vmatpush1.msra.mxu0 0.0
    %1647 = vmatprep.subr.mxu0 0.0
    %1648 = vmatpush1.msra.mxu0 0.0
    %1649 = vmatprep.mubr.f32.mxu0 0.0
    %1650 = vmatmul.mubr.f32.gmra.mrb[0].mxu0 %v1583
    %v1651 = vpop.f32.mrb[0].mxu0
    %v1652 = vadd.f32 0.0, %v1651
    %v1653 = vpop.f32.mrb[0].mxu0
    %1654 = vdwg.mxu0
    %v1655 = vadd.f32 %v1579, %v1652
    %v1656 = vxor.u32 %v1655, 2147483648
    %v1657 = vmul.f32 %v1656, 1.442695
    %v1658 = vpow.pop %v1657
    %v1659 = vadd.f32 %v1658, 1.0
    %v1660 = vrcp.pop %v1659
    %v1661 = vmul.f32 1.0, %v1660
    %v1662 = vtanh.pop %v1655
    %v1663 = vmul.f32 %v1661, %v1572
    %1665 = vrot.lane.b32.xlu0 %v1662, 64
    %v1666 = vpop.permute.xlu0 %1665
    %v1668 = vmul.f32 %v1661, %v1666
    %1670 = vrot.lane.b32.xlu0 %v1668, 32
    %v1671 = vpop.permute.xlu0 %1670
    %v1673 = vadd.f32 %v1663, %v1671
    %v1674 = vtanh.pop %v1673
    %1676 = vrot.lane.b32.xlu0 %v1674, 64
    %v1677 = vpop.permute.xlu0 %1676
    %v1679 = vmul.f32 %v1661, %v1677
    %v1680 = vld [vmem:[%s25] sm:$0xff]
    %v1681 = vld [vmem:[%s25 + $0x8] sm:$0xff]
    %v1682 = vld [vmem:[%s25 + $0x10] sm:$0xff]
    %v1683 = vld [vmem:[%s25 + $0x18] sm:$0xff]
    %v1684 = vld [vmem:[%s27] sm:$0x1]
    %v1686 = vlaneseq
    %v1687 = vshrl.u32 %v1686, 7
    %v1688 = vsub.s32 0, %v1687
    %v1689 = vrot.slane %v1684, %v1688
    %1692 = vrot.lane.b32.xlu0 %v409, 32
    %v1693 = vpop.permute.xlu0 %1692
    %v1694 = vsel %vm308, %v1693, 0
    %1696 = vmatprep.subr.mxu0 0.0
    %1697 = vmatpush1.msra.mxu0 %v1680
    %1698 = vmatprep.subr.mxu0 0.0
    %1699 = vmatpush1.msra.mxu0 %v1681
    %1700 = vmatprep.subr.mxu0 0.0
    %1701 = vmatpush1.msra.mxu0 %v1682
    %1702 = vmatprep.subr.mxu0 0.0
    %1703 = vmatpush1.msra.mxu0 %v1683
    %1704 = vmatprep.subr.mxu0 0.0
    %1705 = vmatpush1.msra.mxu0 0.0
    %1706 = vmatprep.subr.mxu0 0.0
    %1707 = vmatpush1.msra.mxu0 0.0
    %1708 = vmatprep.subr.mxu0 0.0
    %1709 = vmatpush1.msra.mxu0 0.0
    %1710 = vmatprep.subr.mxu0 0.0
    %1711 = vmatpush1.msra.mxu0 0.0
    %1712 = vmatprep.subr.mxu0 0.0
    %1713 = vmatpush1.msra.mxu0 0.0
    %1714 = vmatprep.subr.mxu0 0.0
    %1715 = vmatpush1.msra.mxu0 0.0
    %1716 = vmatprep.subr.mxu0 0.0
    %1717 = vmatpush1.msra.mxu0 0.0
    %1718 = vmatprep.subr.mxu0 0.0
    %1719 = vmatpush1.msra.mxu0 0.0
    %1720 = vmatprep.subr.mxu0 0.0
    %1721 = vmatpush1.msra.mxu0 0.0
    %1722 = vmatprep.subr.mxu0 0.0
    %1723 = vmatpush1.msra.mxu0 0.0
    %1724 = vmatprep.subr.mxu0 0.0
    %1725 = vmatpush1.msra.mxu0 0.0
    %1726 = vmatprep.subr.mxu0 0.0
    %1727 = vmatpush1.msra.mxu0 0.0
    %1728 = vmatprep.subr.mxu0 0.0
    %1729 = vmatpush1.msra.mxu0 0.0
    %1730 = vmatprep.subr.mxu0 0.0
    %1731 = vmatpush1.msra.mxu0 0.0
    %1732 = vmatprep.subr.mxu0 0.0
    %1733 = vmatpush1.msra.mxu0 0.0
    %1734 = vmatprep.subr.mxu0 0.0
    %1735 = vmatpush1.msra.mxu0 0.0
    %1736 = vmatprep.subr.mxu0 0.0
    %1737 = vmatpush1.msra.mxu0 0.0
    %1738 = vmatprep.subr.mxu0 0.0
    %1739 = vmatpush1.msra.mxu0 0.0
    %1740 = vmatprep.subr.mxu0 0.0
    %1741 = vmatpush1.msra.mxu0 0.0
    %1742 = vmatprep.subr.mxu0 0.0
    %1743 = vmatpush1.msra.mxu0 0.0
    %1744 = vmatprep.subr.mxu0 0.0
    %1745 = vmatpush1.msra.mxu0 0.0
    %1746 = vmatprep.subr.mxu0 0.0
    %1747 = vmatpush1.msra.mxu0 0.0
    %1748 = vmatprep.subr.mxu0 0.0
    %1749 = vmatpush1.msra.mxu0 0.0
    %1750 = vmatprep.subr.mxu0 0.0
    %1751 = vmatpush1.msra.mxu0 0.0
    %1752 = vmatprep.subr.mxu0 0.0
    %1753 = vmatpush1.msra.mxu0 0.0
    %1754 = vmatprep.subr.mxu0 0.0
    %1755 = vmatpush1.msra.mxu0 0.0
    %1756 = vmatprep.subr.mxu0 0.0
    %1757 = vmatpush1.msra.mxu0 0.0
    %1758 = vmatprep.subr.mxu0 0.0
    %1759 = vmatpush1.msra.mxu0 0.0
    %1760 = vmatprep.mubr.f32.mxu0 0.0
    %1761 = vmatmul.mubr.f32.gmra.mrb[0].mxu0 %v1694
    %v1762 = vpop.f32.mrb[0].mxu0
    %v1763 = vadd.f32 %v1689, %v1762
    %v1764 = vpop.f32.mrb[0].mxu0
    %1765 = vdwg.mxu0
    %1767 = vrot.lane.b32.xlu0 %v832, 32
    %v1768 = vpop.permute.xlu0 %1767
    %v1770 = vadd.f32 %v1763, %v1768
    %v1771 = vld [vmem:[%s29] sm:$0xff]
    %v1772 = vld [vmem:[%s29 + $0x8] sm:$0xff]
    %v1773 = vld [vmem:[%s29 + $0x10] sm:$0xff]
    %v1774 = vld [vmem:[%s29 + $0x18] sm:$0xff]
    %v1775 = vld [vmem:[%s31] sm:$0x1]
    %v1777 = vlaneseq
    %v1778 = vshrl.u32 %v1777, 7
    %v1779 = vsub.s32 0, %v1778
    %v1780 = vrot.slane %v1775, %v1779
    %v1783 = vsel %vm308, %v1770, 0
    %1785 = vmatprep.subr.mxu0 0.0
    %1786 = vmatpush1.msra.mxu0 %v1771
    %1787 = vmatprep.subr.mxu0 0.0
    %1788 = vmatpush1.msra.mxu0 %v1772
    %1789 = vmatprep.subr.mxu0 0.0
    %1790 = vmatpush1.msra.mxu0 %v1773
    %1791 = vmatprep.subr.mxu0 0.0
    %1792 = vmatpush1.msra.mxu0 %v1774
    %1793 = vmatprep.subr.mxu0 0.0
    %1794 = vmatpush1.msra.mxu0 0.0
    %1795 = vmatprep.subr.mxu0 0.0
    %1796 = vmatpush1.msra.mxu0 0.0
    %1797 = vmatprep.subr.mxu0 0.0
    %1798 = vmatpush1.msra.mxu0 0.0
    %1799 = vmatprep.subr.mxu0 0.0
    %1800 = vmatpush1.msra.mxu0 0.0
    %1801 = vmatprep.subr.mxu0 0.0
    %1802 = vmatpush1.msra.mxu0 0.0
    %1803 = vmatprep.subr.mxu0 0.0
    %1804 = vmatpush1.msra.mxu0 0.0
    %1805 = vmatprep.subr.mxu0 0.0
    %1806 = vmatpush1.msra.mxu0 0.0
    %1807 = vmatprep.subr.mxu0 0.0
    %1808 = vmatpush1.msra.mxu0 0.0
    %1809 = vmatprep.subr.mxu0 0.0
    %1810 = vmatpush1.msra.mxu0 0.0
    %1811 = vmatprep.subr.mxu0 0.0
    %1812 = vmatpush1.msra.mxu0 0.0
    %1813 = vmatprep.subr.mxu0 0.0
    %1814 = vmatpush1.msra.mxu0 0.0
    %1815 = vmatprep.subr.mxu0 0.0
    %1816 = vmatpush1.msra.mxu0 0.0
    %1817 = vmatprep.subr.mxu0 0.0
    %1818 = vmatpush1.msra.mxu0 0.0
    %1819 = vmatprep.subr.mxu0 0.0
    %1820 = vmatpush1.msra.mxu0 0.0
    %1821 = vmatprep.subr.mxu0 0.0
    %1822 = vmatpush1.msra.mxu0 0.0
    %1823 = vmatprep.subr.mxu0 0.0
    %1824 = vmatpush1.msra.mxu0 0.0
    %1825 = vmatprep.subr.mxu0 0.0
    %1826 = vmatpush1.msra.mxu0 0.0
    %1827 = vmatprep.subr.mxu0 0.0
    %1828 = vmatpush1.msra.mxu0 0.0
    %1829 = vmatprep.subr.mxu0 0.0
    %1830 = vmatpush1.msra.mxu0 0.0
    %1831 = vmatprep.subr.mxu0 0.0
    %1832 = vmatpush1.msra.mxu0 0.0
    %1833 = vmatprep.subr.mxu0 0.0
    %1834 = vmatpush1.msra.mxu0 0.0
    %1835 = vmatprep.subr.mxu0 0.0
    %1836 = vmatpush1.msra.mxu0 0.0
    %1837 = vmatprep.subr.mxu0 0.0
    %1838 = vmatpush1.msra.mxu0 0.0
    %1839 = vmatprep.subr.mxu0 0.0
    %1840 = vmatpush1.msra.mxu0 0.0
    %1841 = vmatprep.subr.mxu0 0.0
    %1842 = vmatpush1.msra.mxu0 0.0
    %1843 = vmatprep.subr.mxu0 0.0
    %1844 = vmatpush1.msra.mxu0 0.0
    %1845 = vmatprep.subr.mxu0 0.0
    %1846 = vmatpush1.msra.mxu0 0.0
    %1847 = vmatprep.subr.mxu0 0.0
    %1848 = vmatpush1.msra.mxu0 0.0
    %1849 = vmatprep.mubr.f32.mxu0 0.0
    %1850 = vmatmul.mubr.f32.gmra.mrb[0].mxu0 %v1783
    %v1851 = vpop.f32.mrb[0].mxu0
    %v1852 = vadd.f32 %v1780, %v1851
    %v1853 = vpop.f32.mrb[0].mxu0
    %1854 = vdwg.mxu0
    %1856 = vrot.lane.b32.xlu0 %v1679, 32
    %v1857 = vpop.permute.xlu0 %1856
    %v1859 = vadd.f32 %v1852, %v1857
    %v1860 = vld [vmem:[%s33] sm:$0xff]
    %v1861 = vld [vmem:[%s33 + $0x8] sm:$0xff]
    %v1862 = vld [vmem:[%s33 + $0x10] sm:$0xff]
    %v1863 = vld [vmem:[%s33 + $0x18] sm:$0xff]
    %v1864 = vld [vmem:[%s35] sm:$0x1]
    %v1866 = vlaneseq
    %v1867 = vshrl.u32 %v1866, 7
    %v1868 = vsub.s32 0, %v1867
    %v1869 = vrot.slane %v1864, %v1868
    %v1872 = vsel %vm308, %v1859, 0
    %1874 = vmatprep.subr.mxu0 0.0
    %1875 = vmatpush1.msra.mxu0 %v1860
    %1876 = vmatprep.subr.mxu0 0.0
    %1877 = vmatpush1.msra.mxu0 %v1861
    %1878 = vmatprep.subr.mxu0 0.0
    %1879 = vmatpush1.msra.mxu0 %v1862
    %1880 = vmatprep.subr.mxu0 0.0
    %1881 = vmatpush1.msra.mxu0 %v1863
    %1882 = vmatprep.subr.mxu0 0.0
    %1883 = vmatpush1.msra.mxu0 0.0
    %1884 = vmatprep.subr.mxu0 0.0
    %1885 = vmatpush1.msra.mxu0 0.0
    %1886 = vmatprep.subr.mxu0 0.0
    %1887 = vmatpush1.msra.mxu0 0.0
    %1888 = vmatprep.subr.mxu0 0.0
    %1889 = vmatpush1.msra.mxu0 0.0
    %1890 = vmatprep.subr.mxu0 0.0
    %1891 = vmatpush1.msra.mxu0 0.0
    %1892 = vmatprep.subr.mxu0 0.0
    %1893 = vmatpush1.msra.mxu0 0.0
    %1894 = vmatprep.subr.mxu0 0.0
    %1895 = vmatpush1.msra.mxu0 0.0
    %1896 = vmatprep.subr.mxu0 0.0
    %1897 = vmatpush1.msra.mxu0 0.0
    %1898 = vmatprep.subr.mxu0 0.0
    %1899 = vmatpush1.msra.mxu0 0.0
    %1900 = vmatprep.subr.mxu0 0.0
    %1901 = vmatpush1.msra.mxu0 0.0
    %1902 = vmatprep.subr.mxu0 0.0
    %1903 = vmatpush1.msra.mxu0 0.0
    %1904 = vmatprep.subr.mxu0 0.0
    %1905 = vmatpush1.msra.mxu0 0.0
    %1906 = vmatprep.subr.mxu0 0.0
    %1907 = vmatpush1.msra.mxu0 0.0
    %1908 = vmatprep.subr.mxu0 0.0
    %1909 = vmatpush1.msra.mxu0 0.0
    %1910 = vmatprep.subr.mxu0 0.0
    %1911 = vmatpush1.msra.mxu0 0.0
    %1912 = vmatprep.subr.mxu0 0.0
    %1913 = vmatpush1.msra.mxu0 0.0
    %1914 = vmatprep.subr.mxu0 0.0
    %1915 = vmatpush1.msra.mxu0 0.0
    %1916 = vmatprep.subr.mxu0 0.0
    %1917 = vmatpush1.msra.mxu0 0.0
    %1918 = vmatprep.subr.mxu0 0.0
    %1919 = vmatpush1.msra.mxu0 0.0
    %1920 = vmatprep.subr.mxu0 0.0
    %1921 = vmatpush1.msra.mxu0 0.0
    %1922 = vmatprep.subr.mxu0 0.0
    %1923 = vmatpush1.msra.mxu0 0.0
    %1924 = vmatprep.subr.mxu0 0.0
    %1925 = vmatpush1.msra.mxu0 0.0
    %1926 = vmatprep.subr.mxu0 0.0
    %1927 = vmatpush1.msra.mxu0 0.0
    %1928 = vmatprep.subr.mxu0 0.0
    %1929 = vmatpush1.msra.mxu0 0.0
    %1930 = vmatprep.subr.mxu0 0.0
    %1931 = vmatpush1.msra.mxu0 0.0
    %1932 = vmatprep.subr.mxu0 0.0
    %1933 = vmatpush1.msra.mxu0 0.0
    %1934 = vmatprep.subr.mxu0 0.0
    %1935 = vmatpush1.msra.mxu0 0.0
    %1936 = vmatprep.subr.mxu0 0.0
    %1937 = vmatpush1.msra.mxu0 0.0
    %1938 = vmatprep.mubr.f32.mxu0 0.0
    %1939 = vmatmul.mubr.f32.gmra.mrb[0].mxu0 %v1872
    %v1940 = vpop.f32.mrb[0].mxu0
    %v1941 = vadd.f32 %v1869, %v1940
    %v1942 = vpop.f32.mrb[0].mxu0
    %1943 = vdwg.mxu0
    %v1944 = vld [vmem:[%s37] sm:$0xff]
    %v1945 = vld [vmem:[%s37 + $0x8] sm:$0xff]
    %v1946 = vld [vmem:[%s37 + $0x10] sm:$0xff]
    %v1947 = vld [vmem:[%s37 + $0x18] sm:$0xff]
    %v1948 = vld [vmem:[%s39] sm:$0x1]
    %v1950 = vlaneseq
    %v1951 = vshrl.u32 %v1950, 7
    %v1952 = vsub.s32 0, %v1951
    %v1953 = vrot.slane %v1948, %v1952
    %1956 = vrot.lane.b32.xlu0 %v403, 96
    %v1957 = vpop.permute.xlu0 %1956
    %v1958 = vsel %vm308, %v1957, 0
    %1960 = vmatprep.subr.mxu0 0.0
    %1961 = vmatpush1.msra.mxu0 %v1944
    %1962 = vmatprep.subr.mxu0 0.0
    %1963 = vmatpush1.msra.mxu0 %v1945
    %1964 = vmatprep.subr.mxu0 0.0
    %1965 = vmatpush1.msra.mxu0 %v1946
    %1966 = vmatprep.subr.mxu0 0.0
    %1967 = vmatpush1.msra.mxu0 %v1947
    %1968 = vmatprep.subr.mxu0 0.0
    %1969 = vmatpush1.msra.mxu0 0.0
    %1970 = vmatprep.subr.mxu0 0.0
    %1971 = vmatpush1.msra.mxu0 0.0
    %1972 = vmatprep.subr.mxu0 0.0
    %1973 = vmatpush1.msra.mxu0 0.0
    %1974 = vmatprep.subr.mxu0 0.0
    %1975 = vmatpush1.msra.mxu0 0.0
    %1976 = vmatprep.subr.mxu0 0.0
    %1977 = vmatpush1.msra.mxu0 0.0
    %1978 = vmatprep.subr.mxu0 0.0
    %1979 = vmatpush1.msra.mxu0 0.0
    %1980 = vmatprep.subr.mxu0 0.0
    %1981 = vmatpush1.msra.mxu0 0.0
    %1982 = vmatprep.subr.mxu0 0.0
    %1983 = vmatpush1.msra.mxu0 0.0
    %1984 = vmatprep.subr.mxu0 0.0
    %1985 = vmatpush1.msra.mxu0 0.0
    %1986 = vmatprep.subr.mxu0 0.0
    %1987 = vmatpush1.msra.mxu0 0.0
    %1988 = vmatprep.subr.mxu0 0.0
    %1989 = vmatpush1.msra.mxu0 0.0
    %1990 = vmatprep.subr.mxu0 0.0
    %1991 = vmatpush1.msra.mxu0 0.0
    %1992 = vmatprep.subr.mxu0 0.0
    %1993 = vmatpush1.msra.mxu0 0.0
    %1994 = vmatprep.subr.mxu0 0.0
    %1995 = vmatpush1.msra.mxu0 0.0
    %1996 = vmatprep.subr.mxu0 0.0
    %1997 = vmatpush1.msra.mxu0 0.0
    %1998 = vmatprep.subr.mxu0 0.0
    %1999 = vmatpush1.msra.mxu0 0.0
    %2000 = vmatprep.subr.mxu0 0.0
    %2001 = vmatpush1.msra.mxu0 0.0
    %2002 = vmatprep.subr.mxu0 0.0
    %2003 = vmatpush1.msra.mxu0 0.0
    %2004 = vmatprep.subr.mxu0 0.0
    %2005 = vmatpush1.msra.mxu0 0.0
    %2006 = vmatprep.subr.mxu0 0.0
    %2007 = vmatpush1.msra.mxu0 0.0
    %2008 = vmatprep.subr.mxu0 0.0
    %2009 = vmatpush1.msra.mxu0 0.0
    %2010 = vmatprep.subr.mxu0 0.0
    %2011 = vmatpush1.msra.mxu0 0.0
    %2012 = vmatprep.subr.mxu0 0.0
    %2013 = vmatpush1.msra.mxu0 0.0
    %2014 = vmatprep.subr.mxu0 0.0
    %2015 = vmatpush1.msra.mxu0 0.0
    %2016 = vmatprep.subr.mxu0 0.0
    %2017 = vmatpush1.msra.mxu0 0.0
    %2018 = vmatprep.subr.mxu0 0.0
    %2019 = vmatpush1.msra.mxu0 0.0
    %2020 = vmatprep.subr.mxu0 0.0
    %2021 = vmatpush1.msra.mxu0 0.0
    %2022 = vmatprep.subr.mxu0 0.0
    %2023 = vmatpush1.msra.mxu0 0.0
    %2024 = vmatprep.mubr.f32.mxu0 0.0
    %2025 = vmatmul.mubr.f32.gmra.mrb[0].mxu0 %v1958
    %v2026 = vpop.f32.mrb[0].mxu0
    %v2027 = vadd.f32 %v1953, %v2026
    %v2028 = vpop.f32.mrb[0].mxu0
    %2029 = vdwg.mxu0
    %2031 = vrot.lane.b32.xlu0 %v826, 96
    %v2032 = vpop.permute.xlu0 %2031
    %v2034 = vadd.f32 %v2027, %v2032
    %v2035 = vld [vmem:[%s41] sm:$0xff]
    %v2036 = vld [vmem:[%s41 + $0x8] sm:$0xff]
    %v2037 = vld [vmem:[%s41 + $0x10] sm:$0xff]
    %v2038 = vld [vmem:[%s41 + $0x18] sm:$0xff]
    %v2039 = vld [vmem:[%s43] sm:$0x1]
    %v2041 = vlaneseq
    %v2042 = vshrl.u32 %v2041, 7
    %v2043 = vsub.s32 0, %v2042
    %v2044 = vrot.slane %v2039, %v2043
    %v2047 = vsel %vm308, %v2034, 0
    %2049 = vmatprep.subr.mxu0 0.0
    %2050 = vmatpush1.msra.mxu0 %v2035
    %2051 = vmatprep.subr.mxu0 0.0
    %2052 = vmatpush1.msra.mxu0 %v2036
    %2053 = vmatprep.subr.mxu0 0.0
    %2054 = vmatpush1.msra.mxu0 %v2037
    %2055 = vmatprep.subr.mxu0 0.0
    %2056 = vmatpush1.msra.mxu0 %v2038
    %2057 = vmatprep.subr.mxu0 0.0
    %2058 = vmatpush1.msra.mxu0 0.0
    %2059 = vmatprep.subr.mxu0 0.0
    %2060 = vmatpush1.msra.mxu0 0.0
    %2061 = vmatprep.subr.mxu0 0.0
    %2062 = vmatpush1.msra.mxu0 0.0
    %2063 = vmatprep.subr.mxu0 0.0
    %2064 = vmatpush1.msra.mxu0 0.0
    %2065 = vmatprep.subr.mxu0 0.0
    %2066 = vmatpush1.msra.mxu0 0.0
    %2067 = vmatprep.subr.mxu0 0.0
    %2068 = vmatpush1.msra.mxu0 0.0
    %2069 = vmatprep.subr.mxu0 0.0
    %2070 = vmatpush1.msra.mxu0 0.0
    %2071 = vmatprep.subr.mxu0 0.0
    %2072 = vmatpush1.msra.mxu0 0.0
    %2073 = vmatprep.subr.mxu0 0.0
    %2074 = vmatpush1.msra.mxu0 0.0
    %2075 = vmatprep.subr.mxu0 0.0
    %2076 = vmatpush1.msra.mxu0 0.0
    %2077 = vmatprep.subr.mxu0 0.0
    %2078 = vmatpush1.msra.mxu0 0.0
    %2079 = vmatprep.subr.mxu0 0.0
    %2080 = vmatpush1.msra.mxu0 0.0
    %2081 = vmatprep.subr.mxu0 0.0
    %2082 = vmatpush1.msra.mxu0 0.0
    %2083 = vmatprep.subr.mxu0 0.0
    %2084 = vmatpush1.msra.mxu0 0.0
    %2085 = vmatprep.subr.mxu0 0.0
    %2086 = vmatpush1.msra.mxu0 0.0
    %2087 = vmatprep.subr.mxu0 0.0
    %2088 = vmatpush1.msra.mxu0 0.0
    %2089 = vmatprep.subr.mxu0 0.0
    %2090 = vmatpush1.msra.mxu0 0.0
    %2091 = vmatprep.subr.mxu0 0.0
    %2092 = vmatpush1.msra.mxu0 0.0
    %2093 = vmatprep.subr.mxu0 0.0
    %2094 = vmatpush1.msra.mxu0 0.0
    %2095 = vmatprep.subr.mxu0 0.0
    %2096 = vmatpush1.msra.mxu0 0.0
    %2097 = vmatprep.subr.mxu0 0.0
    %2098 = vmatpush1.msra.mxu0 0.0
    %2099 = vmatprep.subr.mxu0 0.0
    %2100 = vmatpush1.msra.mxu0 0.0
    %2101 = vmatprep.subr.mxu0 0.0
    %2102 = vmatpush1.msra.mxu0 0.0
    %2103 = vmatprep.subr.mxu0 0.0
    %2104 = vmatpush1.msra.mxu0 0.0
    %2105 = vmatprep.subr.mxu0 0.0
    %2106 = vmatpush1.msra.mxu0 0.0
    %2107 = vmatprep.subr.mxu0 0.0
    %2108 = vmatpush1.msra.mxu0 0.0
    %2109 = vmatprep.subr.mxu0 0.0
    %2110 = vmatpush1.msra.mxu0 0.0
    %2111 = vmatprep.subr.mxu0 0.0
    %2112 = vmatpush1.msra.mxu0 0.0
    %2113 = vmatprep.mubr.f32.mxu0 0.0
    %2114 = vmatmul.mubr.f32.gmra.mrb[0].mxu0 %v2047
    %v2115 = vpop.f32.mrb[0].mxu0
    %v2116 = vadd.f32 %v2044, %v2115
    %v2117 = vpop.f32.mrb[0].mxu0
    %2118 = vdwg.mxu0
    %2120 = vrot.lane.b32.xlu0 %v1673, 96
    %v2121 = vpop.permute.xlu0 %2120
    %v2123 = vadd.f32 %v2116, %v2121
    %v2124 = vld [vmem:[%s45] sm:$0xff]
    %v2125 = vld [vmem:[%s45 + $0x8] sm:$0xff]
    %v2126 = vld [vmem:[%s45 + $0x10] sm:$0xff]
    %v2127 = vld [vmem:[%s45 + $0x18] sm:$0xff]
    %v2128 = vld [vmem:[%s47] sm:$0x1]
    %v2130 = vlaneseq
    %v2131 = vshrl.u32 %v2130, 7
    %v2132 = vsub.s32 0, %v2131
    %v2133 = vrot.slane %v2128, %v2132
    %v2136 = vsel %vm308, %v2123, 0
    %2138 = vmatprep.subr.mxu0 0.0
    %2139 = vmatpush1.msra.mxu0 %v2124
    %2140 = vmatprep.subr.mxu0 0.0
    %2141 = vmatpush1.msra.mxu0 %v2125
    %2142 = vmatprep.subr.mxu0 0.0
    %2143 = vmatpush1.msra.mxu0 %v2126
    %2144 = vmatprep.subr.mxu0 0.0
    %2145 = vmatpush1.msra.mxu0 %v2127
    %2146 = vmatprep.subr.mxu0 0.0
    %2147 = vmatpush1.msra.mxu0 0.0
    %2148 = vmatprep.subr.mxu0 0.0
    %2149 = vmatpush1.msra.mxu0 0.0
    %2150 = vmatprep.subr.mxu0 0.0
    %2151 = vmatpush1.msra.mxu0 0.0
    %2152 = vmatprep.subr.mxu0 0.0
    %2153 = vmatpush1.msra.mxu0 0.0
    %2154 = vmatprep.subr.mxu0 0.0
    %2155 = vmatpush1.msra.mxu0 0.0
    %2156 = vmatprep.subr.mxu0 0.0
    %2157 = vmatpush1.msra.mxu0 0.0
    %2158 = vmatprep.subr.mxu0 0.0
    %2159 = vmatpush1.msra.mxu0 0.0
    %2160 = vmatprep.subr.mxu0 0.0
    %2161 = vmatpush1.msra.mxu0 0.0
    %2162 = vmatprep.subr.mxu0 0.0
    %2163 = vmatpush1.msra.mxu0 0.0
    %2164 = vmatprep.subr.mxu0 0.0
    %2165 = vmatpush1.msra.mxu0 0.0
    %2166 = vmatprep.subr.mxu0 0.0
    %2167 = vmatpush1.msra.mxu0 0.0
    %2168 = vmatprep.subr.mxu0 0.0
    %2169 = vmatpush1.msra.mxu0 0.0
    %2170 = vmatprep.subr.mxu0 0.0
    %2171 = vmatpush1.msra.mxu0 0.0
    %2172 = vmatprep.subr.mxu0 0.0
    %2173 = vmatpush1.msra.mxu0 0.0
    %2174 = vmatprep.subr.mxu0 0.0
    %2175 = vmatpush1.msra.mxu0 0.0
    %2176 = vmatprep.subr.mxu0 0.0
    %2177 = vmatpush1.msra.mxu0 0.0
    %2178 = vmatprep.subr.mxu0 0.0
    %2179 = vmatpush1.msra.mxu0 0.0
    %2180 = vmatprep.subr.mxu0 0.0
    %2181 = vmatpush1.msra.mxu0 0.0
    %2182 = vmatprep.subr.mxu0 0.0
    %2183 = vmatpush1.msra.mxu0 0.0
    %2184 = vmatprep.subr.mxu0 0.0
    %2185 = vmatpush1.msra.mxu0 0.0
    %2186 = vmatprep.subr.mxu0 0.0
    %2187 = vmatpush1.msra.mxu0 0.0
    %2188 = vmatprep.subr.mxu0 0.0
    %2189 = vmatpush1.msra.mxu0 0.0
    %2190 = vmatprep.subr.mxu0 0.0
    %2191 = vmatpush1.msra.mxu0 0.0
    %2192 = vmatprep.subr.mxu0 0.0
    %2193 = vmatpush1.msra.mxu0 0.0
    %2194 = vmatprep.subr.mxu0 0.0
    %2195 = vmatpush1.msra.mxu0 0.0
    %2196 = vmatprep.subr.mxu0 0.0
    %2197 = vmatpush1.msra.mxu0 0.0
    %2198 = vmatprep.subr.mxu0 0.0
    %2199 = vmatpush1.msra.mxu0 0.0
    %2200 = vmatprep.subr.mxu0 0.0
    %2201 = vmatpush1.msra.mxu0 0.0
    %2202 = vmatprep.mubr.f32.mxu0 0.0
    %2203 = vmatmul.mubr.f32.gmra.mrb[0].mxu0 %v2136
    %v2204 = vpop.f32.mrb[0].mxu0
    %v2205 = vadd.f32 %v2133, %v2204
    %v2206 = vpop.f32.mrb[0].mxu0
    %2207 = vdwg.mxu0
    %v2208 = vld [vmem:[%s49] sm:$0xff]
    %v2209 = vld [vmem:[%s49 + $0x8] sm:$0xff]
    %v2210 = vld [vmem:[%s49 + $0x10] sm:$0xff]
    %v2211 = vld [vmem:[%s49 + $0x18] sm:$0xff]
    %v2212 = vld [vmem:[%s51] sm:$0xff]
    %v2213 = vld [vmem:[%s51 + $0x8] sm:$0xff]
    %v2214 = vld [vmem:[%s51 + $0x10] sm:$0xff]
    %v2215 = vld [vmem:[%s51 + $0x18] sm:$0xff]
    %v2216 = vld [vmem:[%s53] sm:$0x1]
    %v2218 = vlaneseq
    %v2219 = vshrl.u32 %v2218, 7
    %v2220 = vsub.s32 0, %v2219
    %v2221 = vrot.slane %v2216, %v2220
    %v2223 = vadd.f32 %v2208, %v2212
    %v2224 = vadd.f32 %v2209, %v2213
    %v2225 = vadd.f32 %v2210, %v2214
    %v2226 = vadd.f32 %v2211, %v2215
    %v2228 = vsel %vm308, %v1941, 0
    %2230 = vmatprep.subr.mxu0 0.0
    %2231 = vmatpush1.msra.mxu0 %v2223
    %2232 = vmatprep.subr.mxu0 0.0
    %2233 = vmatpush1.msra.mxu0 %v2224
    %2234 = vmatprep.subr.mxu0 0.0
    %2235 = vmatpush1.msra.mxu0 %v2225
    %2236 = vmatprep.subr.mxu0 0.0
    %2237 = vmatpush1.msra.mxu0 %v2226
    %2238 = vmatprep.subr.mxu0 0.0
    %2239 = vmatpush1.msra.mxu0 0.0
    %2240 = vmatprep.subr.mxu0 0.0
    %2241 = vmatpush1.msra.mxu0 0.0
    %2242 = vmatprep.subr.mxu0 0.0
    %2243 = vmatpush1.msra.mxu0 0.0
    %2244 = vmatprep.subr.mxu0 0.0
    %2245 = vmatpush1.msra.mxu0 0.0
    %2246 = vmatprep.subr.mxu0 0.0
    %2247 = vmatpush1.msra.mxu0 0.0
    %2248 = vmatprep.subr.mxu0 0.0
    %2249 = vmatpush1.msra.mxu0 0.0
    %2250 = vmatprep.subr.mxu0 0.0
    %2251 = vmatpush1.msra.mxu0 0.0
    %2252 = vmatprep.subr.mxu0 0.0
    %2253 = vmatpush1.msra.mxu0 0.0
    %2254 = vmatprep.subr.mxu0 0.0
    %2255 = vmatpush1.msra.mxu0 0.0
    %2256 = vmatprep.subr.mxu0 0.0
    %2257 = vmatpush1.msra.mxu0 0.0
    %2258 = vmatprep.subr.mxu0 0.0
    %2259 = vmatpush1.msra.mxu0 0.0
    %2260 = vmatprep.subr.mxu0 0.0
    %2261 = vmatpush1.msra.mxu0 0.0
    %2262 = vmatprep.subr.mxu0 0.0
    %2263 = vmatpush1.msra.mxu0 0.0
    %2264 = vmatprep.subr.mxu0 0.0
    %2265 = vmatpush1.msra.mxu0 0.0
    %2266 = vmatprep.subr.mxu0 0.0
    %2267 = vmatpush1.msra.mxu0 0.0
    %2268 = vmatprep.subr.mxu0 0.0
    %2269 = vmatpush1.msra.mxu0 0.0
    %2270 = vmatprep.subr.mxu0 0.0
    %2271 = vmatpush1.msra.mxu0 0.0
    %2272 = vmatprep.subr.mxu0 0.0
    %2273 = vmatpush1.msra.mxu0 0.0
    %2274 = vmatprep.subr.mxu0 0.0
    %2275 = vmatpush1.msra.mxu0 0.0
    %2276 = vmatprep.subr.mxu0 0.0
    %2277 = vmatpush1.msra.mxu0 0.0
    %2278 = vmatprep.subr.mxu0 0.0
    %2279 = vmatpush1.msra.mxu0 0.0
    %2280 = vmatprep.subr.mxu0 0.0
    %2281 = vmatpush1.msra.mxu0 0.0
    %2282 = vmatprep.subr.mxu0 0.0
    %2283 = vmatpush1.msra.mxu0 0.0
    %2284 = vmatprep.subr.mxu0 0.0
    %2285 = vmatpush1.msra.mxu0 0.0
    %2286 = vmatprep.subr.mxu0 0.0
    %2287 = vmatpush1.msra.mxu0 0.0
    %2288 = vmatprep.subr.mxu0 0.0
    %2289 = vmatpush1.msra.mxu0 0.0
    %2290 = vmatprep.subr.mxu0 0.0
    %2291 = vmatpush1.msra.mxu0 0.0
    %2292 = vmatprep.subr.mxu0 0.0
    %2293 = vmatpush1.msra.mxu0 0.0
    %2294 = vmatprep.mubr.f32.mxu0 0.0
    %2295 = vmatmul.mubr.f32.gmra.mrb[0].mxu0 %v2228
    %v2296 = vpop.f32.mrb[0].mxu0
    %v2297 = vadd.f32 %v2221, %v2296
    %v2298 = vpop.f32.mrb[0].mxu0
    %2299 = vdwg.mxu0
    %v2300 = vxor.u32 %v2297, 2147483648
    %v2301 = vmul.f32 %v2300, 1.442695
    %v2302 = vpow.pop %v2301
    %v2303 = vadd.f32 %v2302, 1.0
    %v2304 = vrcp.pop %v2303
    %v2305 = vmul.f32 1.0, %v2304
    %v2306 = vtanh.pop %v2297
    %2308 = vrot.lane.b32.xlu0 %v2205, 32
    %v2309 = vpop.permute.xlu0 %2308
    %v2311 = vmul.f32 %v2305, %v2309
    %2313 = vrot.lane.b32.xlu0 %v2306, 64
    %v2314 = vpop.permute.xlu0 %2313
    %v2316 = vmul.f32 %v2305, %v2314
    %2318 = vrot.lane.b32.xlu0 %v2316, 32
    %v2319 = vpop.permute.xlu0 %2318
    %v2321 = vadd.f32 %v2311, %v2319
    %v2322 = vtanh.pop %v2321
    %2324 = vrot.lane.b32.xlu0 %v2322, 64
    %v2325 = vpop.permute.xlu0 %2324
    %v2327 = vmul.f32 %v2305, %v2325
    %2329 = vrot.lane.b32.xlu0 %v2327, 32
    %v2330 = vpop.permute.xlu0 %2329
    %v2331 = vsel %vm308, %v2330, 0
    %2333 = vmatprep.subr.mxu0 0.0
    %2334 = vmatpush1.msra.mxu0 %v2223
    %2335 = vmatprep.subr.mxu0 0.0
    %2336 = vmatpush1.msra.mxu0 %v2224
    %2337 = vmatprep.subr.mxu0 0.0
    %2338 = vmatpush1.msra.mxu0 %v2225
    %2339 = vmatprep.subr.mxu0 0.0
    %2340 = vmatpush1.msra.mxu0 %v2226
    %2341 = vmatprep.subr.mxu0 0.0
    %2342 = vmatpush1.msra.mxu0 0.0
    %2343 = vmatprep.subr.mxu0 0.0
    %2344 = vmatpush1.msra.mxu0 0.0
    %2345 = vmatprep.subr.mxu0 0.0
    %2346 = vmatpush1.msra.mxu0 0.0
    %2347 = vmatprep.subr.mxu0 0.0
    %2348 = vmatpush1.msra.mxu0 0.0
    %2349 = vmatprep.subr.mxu0 0.0
    %2350 = vmatpush1.msra.mxu0 0.0
    %2351 = vmatprep.subr.mxu0 0.0
    %2352 = vmatpush1.msra.mxu0 0.0
    %2353 = vmatprep.subr.mxu0 0.0
    %2354 = vmatpush1.msra.mxu0 0.0
    %2355 = vmatprep.subr.mxu0 0.0
    %2356 = vmatpush1.msra.mxu0 0.0
    %2357 = vmatprep.subr.mxu0 0.0
    %2358 = vmatpush1.msra.mxu0 0.0
    %2359 = vmatprep.subr.mxu0 0.0
    %2360 = vmatpush1.msra.mxu0 0.0
    %2361 = vmatprep.subr.mxu0 0.0
    %2362 = vmatpush1.msra.mxu0 0.0
    %2363 = vmatprep.subr.mxu0 0.0
    %2364 = vmatpush1.msra.mxu0 0.0
    %2365 = vmatprep.subr.mxu0 0.0
    %2366 = vmatpush1.msra.mxu0 0.0
    %2367 = vmatprep.subr.mxu0 0.0
    %2368 = vmatpush1.msra.mxu0 0.0
    %2369 = vmatprep.subr.mxu0 0.0
    %2370 = vmatpush1.msra.mxu0 0.0
    %2371 = vmatprep.subr.mxu0 0.0
    %2372 = vmatpush1.msra.mxu0 0.0
    %2373 = vmatprep.subr.mxu0 0.0
    %2374 = vmatpush1.msra.mxu0 0.0
    %2375 = vmatprep.subr.mxu0 0.0
    %2376 = vmatpush1.msra.mxu0 0.0
    %2377 = vmatprep.subr.mxu0 0.0
    %2378 = vmatpush1.msra.mxu0 0.0
    %2379 = vmatprep.subr.mxu0 0.0
    %2380 = vmatpush1.msra.mxu0 0.0
    %2381 = vmatprep.subr.mxu0 0.0
    %2382 = vmatpush1.msra.mxu0 0.0
    %2383 = vmatprep.subr.mxu0 0.0
    %2384 = vmatpush1.msra.mxu0 0.0
    %2385 = vmatprep.subr.mxu0 0.0
    %2386 = vmatpush1.msra.mxu0 0.0
    %2387 = vmatprep.subr.mxu0 0.0
    %2388 = vmatpush1.msra.mxu0 0.0
    %2389 = vmatprep.subr.mxu0 0.0
    %2390 = vmatpush1.msra.mxu0 0.0
    %2391 = vmatprep.subr.mxu0 0.0
    %2392 = vmatpush1.msra.mxu0 0.0
    %2393 = vmatprep.subr.mxu0 0.0
    %2394 = vmatpush1.msra.mxu0 0.0
    %2395 = vmatprep.subr.mxu0 0.0
    %2396 = vmatpush1.msra.mxu0 0.0
    %2397 = vmatprep.mubr.f32.mxu0 0.0
    %2398 = vmatmul.mubr.f32.gmra.mrb[0].mxu0 %v2331
    %v2399 = vpop.f32.mrb[0].mxu0
    %v2400 = vadd.f32 %v2221, %v2399
    %v2401 = vpop.f32.mrb[0].mxu0
    %2402 = vdwg.mxu0
    %v2403 = vxor.u32 %v2400, 2147483648
    %v2404 = vmul.f32 %v2403, 1.442695
    %v2405 = vpow.pop %v2404
    %v2406 = vadd.f32 %v2405, 1.0
    %v2407 = vrcp.pop %v2406
    %v2408 = vmul.f32 1.0, %v2407
    %v2409 = vtanh.pop %v2400
    %v2410 = vmul.f32 %v2408, %v2321
    %2412 = vrot.lane.b32.xlu0 %v2409, 64
    %v2413 = vpop.permute.xlu0 %2412
    %v2415 = vmul.f32 %v2408, %v2413
    %2417 = vrot.lane.b32.xlu0 %v2415, 32
    %v2418 = vpop.permute.xlu0 %2417
    %v2420 = vadd.f32 %v2410, %v2418
    %v2421 = vtanh.pop %v2420
    %2423 = vrot.lane.b32.xlu0 %v2421, 64
    %v2424 = vpop.permute.xlu0 %2423
    %v2426 = vmul.f32 %v2408, %v2424
    %v2427 = vmul.f32 %v2426, 0.5
    %v2428 = vmul.f32 %v1941, 0.5
    %2430 = vrot.lane.b32.xlu0 %v2428, 96
    %v2431 = vpop.permute.xlu0 %2430
    %v2433 = vadd.f32 %v2427, %v2431
    %2435 = vrot.lane.b32.xlu0 %v2433, 32
    %v2436 = vpop.permute.xlu0 %2435
    %v2437 = vsel %vm308, %v2436, 0
    %2439 = vmatprep.subr.mxu0 0.0
    %2440 = vmatpush1.msra.mxu0 %v2212
    %2441 = vmatprep.subr.mxu0 0.0
    %2442 = vmatpush1.msra.mxu0 %v2213
    %2443 = vmatprep.subr.mxu0 0.0
    %2444 = vmatpush1.msra.mxu0 %v2214
    %2445 = vmatprep.subr.mxu0 0.0
    %2446 = vmatpush1.msra.mxu0 %v2215
    %2447 = vmatprep.subr.mxu0 0.0
    %2448 = vmatpush1.msra.mxu0 0.0
    %2449 = vmatprep.subr.mxu0 0.0
    %2450 = vmatpush1.msra.mxu0 0.0
    %2451 = vmatprep.subr.mxu0 0.0
    %2452 = vmatpush1.msra.mxu0 0.0
    %2453 = vmatprep.subr.mxu0 0.0
    %2454 = vmatpush1.msra.mxu0 0.0
    %2455 = vmatprep.subr.mxu0 0.0
    %2456 = vmatpush1.msra.mxu0 0.0
    %2457 = vmatprep.subr.mxu0 0.0
    %2458 = vmatpush1.msra.mxu0 0.0
    %2459 = vmatprep.subr.mxu0 0.0
    %2460 = vmatpush1.msra.mxu0 0.0
    %2461 = vmatprep.subr.mxu0 0.0
    %2462 = vmatpush1.msra.mxu0 0.0
    %2463 = vmatprep.subr.mxu0 0.0
    %2464 = vmatpush1.msra.mxu0 0.0
    %2465 = vmatprep.subr.mxu0 0.0
    %2466 = vmatpush1.msra.mxu0 0.0
    %2467 = vmatprep.subr.mxu0 0.0
    %2468 = vmatpush1.msra.mxu0 0.0
    %2469 = vmatprep.subr.mxu0 0.0
    %2470 = vmatpush1.msra.mxu0 0.0
    %2471 = vmatprep.subr.mxu0 0.0
    %2472 = vmatpush1.msra.mxu0 0.0
    %2473 = vmatprep.subr.mxu0 0.0
    %2474 = vmatpush1.msra.mxu0 0.0
    %2475 = vmatprep.subr.mxu0 0.0
    %2476 = vmatpush1.msra.mxu0 0.0
    %2477 = vmatprep.subr.mxu0 0.0
    %2478 = vmatpush1.msra.mxu0 0.0
    %2479 = vmatprep.subr.mxu0 0.0
    %2480 = vmatpush1.msra.mxu0 0.0
    %2481 = vmatprep.subr.mxu0 0.0
    %2482 = vmatpush1.msra.mxu0 0.0
    %2483 = vmatprep.subr.mxu0 0.0
    %2484 = vmatpush1.msra.mxu0 0.0
    %2485 = vmatprep.subr.mxu0 0.0
    %2486 = vmatpush1.msra.mxu0 0.0
    %2487 = vmatprep.subr.mxu0 0.0
    %2488 = vmatpush1.msra.mxu0 0.0
    %2489 = vmatprep.subr.mxu0 0.0
    %2490 = vmatpush1.msra.mxu0 0.0
    %2491 = vmatprep.subr.mxu0 0.0
    %2492 = vmatpush1.msra.mxu0 0.0
    %2493 = vmatprep.subr.mxu0 0.0
    %2494 = vmatpush1.msra.mxu0 0.0
    %2495 = vmatprep.subr.mxu0 0.0
    %2496 = vmatpush1.msra.mxu0 0.0
    %2497 = vmatprep.subr.mxu0 0.0
    %2498 = vmatpush1.msra.mxu0 0.0
    %2499 = vmatprep.subr.mxu0 0.0
    %2500 = vmatpush1.msra.mxu0 0.0
    %2501 = vmatprep.subr.mxu0 0.0
    %2502 = vmatpush1.msra.mxu0 0.0
    %2503 = vmatprep.mubr.f32.mxu0 0.0
    %2504 = vmatmul.mubr.f32.gmra.mrb[0].mxu0 %v2437
    %v2505 = vpop.f32.mrb[0].mxu0
    %v2506 = vadd.f32 0.0, %v2505
    %v2507 = vpop.f32.mrb[0].mxu0
    %2508 = vdwg.mxu0
    %2510 = vrot.lane.b32.xlu0 %v2426, 32
    %v2511 = vpop.permute.xlu0 %2510
    %v2512 = vsel %vm308, %v2511, 0
    %2514 = vmatprep.subr.mxu0 0.0
    %2515 = vmatpush1.msra.mxu0 %v2208
    %2516 = vmatprep.subr.mxu0 0.0
    %2517 = vmatpush1.msra.mxu0 %v2209
    %2518 = vmatprep.subr.mxu0 0.0
    %2519 = vmatpush1.msra.mxu0 %v2210
    %2520 = vmatprep.subr.mxu0 0.0
    %2521 = vmatpush1.msra.mxu0 %v2211
    %2522 = vmatprep.subr.mxu0 0.0
    %2523 = vmatpush1.msra.mxu0 0.0
    %2524 = vmatprep.subr.mxu0 0.0
    %2525 = vmatpush1.msra.mxu0 0.0
    %2526 = vmatprep.subr.mxu0 0.0
    %2527 = vmatpush1.msra.mxu0 0.0
    %2528 = vmatprep.subr.mxu0 0.0
    %2529 = vmatpush1.msra.mxu0 0.0
    %2530 = vmatprep.subr.mxu0 0.0
    %2531 = vmatpush1.msra.mxu0 0.0
    %2532 = vmatprep.subr.mxu0 0.0
    %2533 = vmatpush1.msra.mxu0 0.0
    %2534 = vmatprep.subr.mxu0 0.0
    %2535 = vmatpush1.msra.mxu0 0.0
    %2536 = vmatprep.subr.mxu0 0.0
    %2537 = vmatpush1.msra.mxu0 0.0
    %2538 = vmatprep.subr.mxu0 0.0
    %2539 = vmatpush1.msra.mxu0 0.0
    %2540 = vmatprep.subr.mxu0 0.0
    %2541 = vmatpush1.msra.mxu0 0.0
    %2542 = vmatprep.subr.mxu0 0.0
    %2543 = vmatpush1.msra.mxu0 0.0
    %2544 = vmatprep.subr.mxu0 0.0
    %2545 = vmatpush1.msra.mxu0 0.0
    %2546 = vmatprep.subr.mxu0 0.0
    %2547 = vmatpush1.msra.mxu0 0.0
    %2548 = vmatprep.subr.mxu0 0.0
    %2549 = vmatpush1.msra.mxu0 0.0
    %2550 = vmatprep.subr.mxu0 0.0
    %2551 = vmatpush1.msra.mxu0 0.0
    %2552 = vmatprep.subr.mxu0 0.0
    %2553 = vmatpush1.msra.mxu0 0.0
    %2554 = vmatprep.subr.mxu0 0.0
    %2555 = vmatpush1.msra.mxu0 0.0
    %2556 = vmatprep.subr.mxu0 0.0
    %2557 = vmatpush1.msra.mxu0 0.0
    %2558 = vmatprep.subr.mxu0 0.0
    %2559 = vmatpush1.msra.mxu0 0.0
    %2560 = vmatprep.subr.mxu0 0.0
    %2561 = vmatpush1.msra.mxu0 0.0
    %2562 = vmatprep.subr.mxu0 0.0
    %2563 = vmatpush1.msra.mxu0 0.0
    %2564 = vmatprep.subr.mxu0 0.0
    %2565 = vmatpush1.msra.mxu0 0.0
    %2566 = vmatprep.subr.mxu0 0.0
    %2567 = vmatpush1.msra.mxu0 0.0
    %2568 = vmatprep.subr.mxu0 0.0
    %2569 = vmatpush1.msra.mxu0 0.0
    %2570 = vmatprep.subr.mxu0 0.0
    %2571 = vmatpush1.msra.mxu0 0.0
    %2572 = vmatprep.subr.mxu0 0.0
    %2573 = vmatpush1.msra.mxu0 0.0
    %2574 = vmatprep.subr.mxu0 0.0
    %2575 = vmatpush1.msra.mxu0 0.0
    %2576 = vmatprep.subr.mxu0 0.0
    %2577 = vmatpush1.msra.mxu0 0.0
    %2578 = vmatprep.mubr.f32.mxu0 0.0
    %2579 = vmatmul.mubr.f32.gmra.mrb[0].mxu0 %v2512
    %v2580 = vpop.f32.mrb[0].mxu0
    %v2581 = vadd.f32 %v2506, %v2580
    %v2582 = vpop.f32.mrb[0].mxu0
    %2583 = vdwg.mxu0
    %v2584 = vadd.f32 %v2581, %v2221
    %v2585 = vxor.u32 %v2584, 2147483648
    %v2586 = vmul.f32 %v2585, 1.442695
    %v2587 = vpow.pop %v2586
    %v2588 = vadd.f32 %v2587, 1.0
    %v2589 = vrcp.pop %v2588
    %v2590 = vmul.f32 1.0, %v2589
    %v2591 = vtanh.pop %v2584
    %v2592 = vmul.f32 %v2590, %v2420
    %2594 = vrot.lane.b32.xlu0 %v2591, 64
    %v2595 = vpop.permute.xlu0 %2594
    %v2597 = vmul.f32 %v2590, %v2595
    %2599 = vrot.lane.b32.xlu0 %v2597, 32
    %v2600 = vpop.permute.xlu0 %2599
    %v2602 = vadd.f32 %v2592, %v2600
    %v2603 = vtanh.pop %v2602
    %2605 = vrot.lane.b32.xlu0 %v2603, 64
    %v2606 = vpop.permute.xlu0 %2605
    %v2608 = vmul.f32 %v2590, %v2606
    %v2609 = vld [vmem:[%s55] sm:$0xff]
    %v2610 = vld [vmem:[%s55 + $0x8] sm:$0xff]
    %v2611 = vld [vmem:[%s55 + $0x10] sm:$0xff]
    %v2612 = vld [vmem:[%s55 + $0x18] sm:$0xff]
    %v2613 = vld [vmem:[%s57] sm:$0xff]
    %v2614 = vld [vmem:[%s57 + $0x8] sm:$0xff]
    %v2615 = vld [vmem:[%s57 + $0x10] sm:$0xff]
    %v2616 = vld [vmem:[%s57 + $0x18] sm:$0xff]
    %v2617 = vld [vmem:[%s59] sm:$0x1]
    %v2619 = vlaneseq
    %v2620 = vshrl.u32 %v2619, 7
    %v2621 = vsub.s32 0, %v2620
    %v2622 = vrot.slane %v2617, %v2621
    %v2624 = vld [vmem:[%s61] sm:$0xff]
    %v2625 = vld [vmem:[%s61 + $0x8] sm:$0xff]
    %v2626 = vld [vmem:[%s61 + $0x10] sm:$0xff]
    %v2627 = vld [vmem:[%s61 + $0x18] sm:$0xff]
    %v2628 = vld [vmem:[%s63] sm:$0xff]
    %v2629 = vld [vmem:[%s63 + $0x8] sm:$0xff]
    %v2630 = vld [vmem:[%s63 + $0x10] sm:$0xff]
    %v2631 = vld [vmem:[%s63 + $0x18] sm:$0xff]
    %v2632 = vld [vmem:[%s65] sm:$0x1]
    %v2634 = vlaneseq
    %v2635 = vshrl.u32 %v2634, 7
    %v2636 = vsub.s32 0, %v2635
    %v2637 = vrot.slane %v2632, %v2636
    %v2639 = vld [vmem:[#allocation5] sm:$0x1]
    %v2641 = vlaneseq
    %v2642 = vshrl.u32 %v2641, 7
    %v2643 = vsub.s32 0, %v2642
    %v2644 = vrot.slane %v2639, %v2643
    %2645 = vset.pattern.permute.xlu0 0
    %2646 = vperm.xlu0 %2645, %v2644
    %v2647 = vpop.permute.xlu0 %2646
    %v2649 = vld [vmem:[%s69] sm:$0xff]
    %v2650 = vld [vmem:[%s69 + $0x8] sm:$0xff]
    %v2651 = vld [vmem:[%s69 + $0x10] sm:$0xff]
    %v2652 = vld [vmem:[%s69 + $0x18] sm:$0xff]
    %v2653 = vld [vmem:[%s71] sm:$0x1]
    %v2655 = vlaneseq
    %v2656 = vshrl.u32 %v2655, 7
    %v2657 = vsub.s32 0, %v2656
    %v2658 = vrot.slane %v2653, %v2657
    %vm2660 = vcmask 257024
    %2661 = vst.msk [vmem:[#allocation3] sm:$0xf] %vm2660, %v1941
    %2662 = vmatprep.subr.mxu0 0.0
    %2663 = vmatpush1.msra.mxu0 %v2628
    %2664 = vmatprep.subr.mxu0 0.0
    %2665 = vmatpush1.msra.mxu0 %v2629
    %2666 = vmatprep.subr.mxu0 0.0
    %2667 = vmatpush1.msra.mxu0 %v2630
    %2668 = vmatprep.subr.mxu0 0.0
    %2669 = vmatpush1.msra.mxu0 %v2631
    %2670 = vmatprep.subr.mxu0 0.0
    %2671 = vmatpush1.msra.mxu0 0.0
    %2672 = vmatprep.subr.mxu0 0.0
    %2673 = vmatpush1.msra.mxu0 0.0
    %2674 = vmatprep.subr.mxu0 0.0
    %2675 = vmatpush1.msra.mxu0 0.0
    %2676 = vmatprep.subr.mxu0 0.0
    %2677 = vmatpush1.msra.mxu0 0.0
    %2678 = vmatprep.subr.mxu0 0.0
    %2679 = vmatpush1.msra.mxu0 0.0
    %2680 = vmatprep.subr.mxu0 0.0
    %2681 = vmatpush1.msra.mxu0 0.0
    %2682 = vmatprep.subr.mxu0 0.0
    %2683 = vmatpush1.msra.mxu0 0.0
    %2684 = vmatprep.subr.mxu0 0.0
    %2685 = vmatpush1.msra.mxu0 0.0
    %2686 = vmatprep.subr.mxu0 0.0
    %2687 = vmatpush1.msra.mxu0 0.0
    %2688 = vmatprep.subr.mxu0 0.0
    %2689 = vmatpush1.msra.mxu0 0.0
    %2690 = vmatprep.subr.mxu0 0.0
    %2691 = vmatpush1.msra.mxu0 0.0
    %2692 = vmatprep.subr.mxu0 0.0
    %2693 = vmatpush1.msra.mxu0 0.0
    %2694 = vmatprep.subr.mxu0 0.0
    %2695 = vmatpush1.msra.mxu0 0.0
    %2696 = vmatprep.subr.mxu0 0.0
    %2697 = vmatpush1.msra.mxu0 0.0
    %2698 = vmatprep.subr.mxu0 0.0
    %2699 = vmatpush1.msra.mxu0 0.0
    %2700 = vmatprep.subr.mxu0 0.0
    %2701 = vmatpush1.msra.mxu0 0.0
    %2702 = vmatprep.subr.mxu0 0.0
    %2703 = vmatpush1.msra.mxu0 0.0
    %2704 = vmatprep.subr.mxu0 0.0
    %2705 = vmatpush1.msra.mxu0 0.0
    %2706 = vmatprep.subr.mxu0 0.0
    %2707 = vmatpush1.msra.mxu0 0.0
    %2708 = vmatprep.subr.mxu0 0.0
    %2709 = vmatpush1.msra.mxu0 0.0
    %2710 = vmatprep.subr.mxu0 0.0
    %2711 = vmatpush1.msra.mxu0 0.0
    %2712 = vmatprep.subr.mxu0 0.0
    %2713 = vmatpush1.msra.mxu0 0.0
    %2714 = vmatprep.subr.mxu0 0.0
    %2715 = vmatpush1.msra.mxu0 0.0
    %2716 = vmatprep.subr.mxu0 0.0
    %2717 = vmatpush1.msra.mxu0 0.0
    %2718 = vmatprep.subr.mxu0 0.0
    %2719 = vmatpush1.msra.mxu0 0.0
    %2720 = vmatprep.subr.mxu0 0.0
    %2721 = vmatpush1.msra.mxu0 0.0
    %2722 = vmatprep.subr.mxu0 0.0
    %2723 = vmatpush1.msra.mxu0 0.0
    %2724 = vmatprep.subr.mxu0 0.0
    %2725 = vmatpush1.msra.mxu0 0.0
    %2726 = vmatprep.mubr.f32.mxu0 0.0
    %2727 = vmatmul.mubr.f32.gmra.mrb[0].mxu0 %v2228
    %v2728 = vpop.f32.mrb[0].mxu0
    %v2729 = vadd.f32 0.0, %v2728
    %v2730 = vpop.f32.mrb[0].mxu0
    %2731 = vdwg.mxu0
    %2732 = vmatprep.subr.mxu0 0.0
    %2733 = vmatpush1.msra.mxu0 %v2624
    %2734 = vmatprep.subr.mxu0 0.0
    %2735 = vmatpush1.msra.mxu0 %v2625
    %2736 = vmatprep.subr.mxu0 0.0
    %2737 = vmatpush1.msra.mxu0 %v2626
    %2738 = vmatprep.subr.mxu0 0.0
    %2739 = vmatpush1.msra.mxu0 %v2627
    %2740 = vmatprep.subr.mxu0 0.0
    %2741 = vmatpush1.msra.mxu0 0.0
    %2742 = vmatprep.subr.mxu0 0.0
    %2743 = vmatpush1.msra.mxu0 0.0
    %2744 = vmatprep.subr.mxu0 0.0
    %2745 = vmatpush1.msra.mxu0 0.0
    %2746 = vmatprep.subr.mxu0 0.0
    %2747 = vmatpush1.msra.mxu0 0.0
    %2748 = vmatprep.subr.mxu0 0.0
    %2749 = vmatpush1.msra.mxu0 0.0
    %2750 = vmatprep.subr.mxu0 0.0
    %2751 = vmatpush1.msra.mxu0 0.0
    %2752 = vmatprep.subr.mxu0 0.0
    %2753 = vmatpush1.msra.mxu0 0.0
    %2754 = vmatprep.subr.mxu0 0.0
    %2755 = vmatpush1.msra.mxu0 0.0
    %2756 = vmatprep.subr.mxu0 0.0
    %2757 = vmatpush1.msra.mxu0 0.0
    %2758 = vmatprep.subr.mxu0 0.0
    %2759 = vmatpush1.msra.mxu0 0.0
    %2760 = vmatprep.subr.mxu0 0.0
    %2761 = vmatpush1.msra.mxu0 0.0
    %2762 = vmatprep.subr.mxu0 0.0
    %2763 = vmatpush1.msra.mxu0 0.0
    %2764 = vmatprep.subr.mxu0 0.0
    %2765 = vmatpush1.msra.mxu0 0.0
    %2766 = vmatprep.subr.mxu0 0.0
    %2767 = vmatpush1.msra.mxu0 0.0
    %2768 = vmatprep.subr.mxu0 0.0
    %2769 = vmatpush1.msra.mxu0 0.0
    %2770 = vmatprep.subr.mxu0 0.0
    %2771 = vmatpush1.msra.mxu0 0.0
    %2772 = vmatprep.subr.mxu0 0.0
    %2773 = vmatpush1.msra.mxu0 0.0
    %2774 = vmatprep.subr.mxu0 0.0
    %2775 = vmatpush1.msra.mxu0 0.0
    %2776 = vmatprep.subr.mxu0 0.0
    %2777 = vmatpush1.msra.mxu0 0.0
    %2778 = vmatprep.subr.mxu0 0.0
    %2779 = vmatpush1.msra.mxu0 0.0
    %2780 = vmatprep.subr.mxu0 0.0
    %2781 = vmatpush1.msra.mxu0 0.0
    %2782 = vmatprep.subr.mxu0 0.0
    %2783 = vmatpush1.msra.mxu0 0.0
    %2784 = vmatprep.subr.mxu0 0.0
    %2785 = vmatpush1.msra.mxu0 0.0
    %2786 = vmatprep.subr.mxu0 0.0
    %2787 = vmatpush1.msra.mxu0 0.0
    %2788 = vmatprep.subr.mxu0 0.0
    %2789 = vmatpush1.msra.mxu0 0.0
    %2790 = vmatprep.subr.mxu0 0.0
    %2791 = vmatpush1.msra.mxu0 0.0
    %2792 = vmatprep.subr.mxu0 0.0
    %2793 = vmatpush1.msra.mxu0 0.0
    %2794 = vmatprep.subr.mxu0 0.0
    %2795 = vmatpush1.msra.mxu0 0.0
    %2796 = vmatprep.mubr.f32.mxu0 0.0
    %2797 = vmatmul.mubr.f32.gmra.mrb[0].mxu0 %v2228
    %v2798 = vpop.f32.mrb[0].mxu0
    %v2799 = vadd.f32 %v2729, %v2798
    %v2800 = vpop.f32.mrb[0].mxu0
    %2801 = vdwg.mxu0
    %v2802 = vadd.f32 %v2799, %v2637
    %vm2803 = vcmp.ge.f32.partialorder %v2802, 0.0
    %v2804 = vmul.f32 %v2647, %v2802
    %v2805 = vsel %vm2803, %v2802, %v2804
    %v2807 = vsel %vm308, %v2805, 0
    %2809 = vmatprep.subr.mxu0 0.0
    %2810 = vmatpush1.msra.mxu0 %v2649
    %2811 = vmatprep.subr.mxu0 0.0
    %2812 = vmatpush1.msra.mxu0 %v2650
    %2813 = vmatprep.subr.mxu0 0.0
    %2814 = vmatpush1.msra.mxu0 %v2651
    %2815 = vmatprep.subr.mxu0 0.0
    %2816 = vmatpush1.msra.mxu0 %v2652
    %2817 = vmatprep.subr.mxu0 0.0
    %2818 = vmatpush1.msra.mxu0 0.0
    %2819 = vmatprep.subr.mxu0 0.0
    %2820 = vmatpush1.msra.mxu0 0.0
    %2821 = vmatprep.subr.mxu0 0.0
    %2822 = vmatpush1.msra.mxu0 0.0
    %2823 = vmatprep.subr.mxu0 0.0
    %2824 = vmatpush1.msra.mxu0 0.0
    %2825 = vmatprep.subr.mxu0 0.0
    %2826 = vmatpush1.msra.mxu0 0.0
    %2827 = vmatprep.subr.mxu0 0.0
    %2828 = vmatpush1.msra.mxu0 0.0
    %2829 = vmatprep.subr.mxu0 0.0
    %2830 = vmatpush1.msra.mxu0 0.0
    %2831 = vmatprep.subr.mxu0 0.0
    %2832 = vmatpush1.msra.mxu0 0.0
    %2833 = vmatprep.subr.mxu0 0.0
    %2834 = vmatpush1.msra.mxu0 0.0
    %2835 = vmatprep.subr.mxu0 0.0
    %2836 = vmatpush1.msra.mxu0 0.0
    %2837 = vmatprep.subr.mxu0 0.0
    %2838 = vmatpush1.msra.mxu0 0.0
    %2839 = vmatprep.subr.mxu0 0.0
    %2840 = vmatpush1.msra.mxu0 0.0
    %2841 = vmatprep.subr.mxu0 0.0
    %2842 = vmatpush1.msra.mxu0 0.0
    %2843 = vmatprep.subr.mxu0 0.0
    %2844 = vmatpush1.msra.mxu0 0.0
    %2845 = vmatprep.subr.mxu0 0.0
    %2846 = vmatpush1.msra.mxu0 0.0
    %2847 = vmatprep.subr.mxu0 0.0
    %2848 = vmatpush1.msra.mxu0 0.0
    %2849 = vmatprep.subr.mxu0 0.0
    %2850 = vmatpush1.msra.mxu0 0.0
    %2851 = vmatprep.subr.mxu0 0.0
    %2852 = vmatpush1.msra.mxu0 0.0
    %2853 = vmatprep.subr.mxu0 0.0
    %2854 = vmatpush1.msra.mxu0 0.0
    %2855 = vmatprep.subr.mxu0 0.0
    %2856 = vmatpush1.msra.mxu0 0.0
    %2857 = vmatprep.subr.mxu0 0.0
    %2858 = vmatpush1.msra.mxu0 0.0
    %2859 = vmatprep.subr.mxu0 0.0
    %2860 = vmatpush1.msra.mxu0 0.0
    %2861 = vmatprep.subr.mxu0 0.0
    %2862 = vmatpush1.msra.mxu0 0.0
    %2863 = vmatprep.subr.mxu0 0.0
    %2864 = vmatpush1.msra.mxu0 0.0
    %2865 = vmatprep.subr.mxu0 0.0
    %2866 = vmatpush1.msra.mxu0 0.0
    %2867 = vmatprep.subr.mxu0 0.0
    %2868 = vmatpush1.msra.mxu0 0.0
    %2869 = vmatprep.subr.mxu0 0.0
    %2870 = vmatpush1.msra.mxu0 0.0
    %2871 = vmatprep.subr.mxu0 0.0
    %2872 = vmatpush1.msra.mxu0 0.0
    %2873 = vmatprep.mubr.f32.mxu0 0.0
    %2874 = vmatmul.mubr.f32.gmra.mrb[0].mxu0 %v2807
    %v2875 = vpop.f32.mrb[0].mxu0
    %v2876 = vadd.f32 %v2658, %v2875
    %v2877 = vpop.f32.mrb[0].mxu0
    %2878 = vdwg.mxu0
    %v2879 = vmul.f32 %v1941, 0.1
    %v2880 = vmul.f32 %v2876, 0.9
    %v2881 = vadd.f32 %v2879, %v2880
    %v2883 = vsel %vm308, %v2881, 0
    %2885 = vmatprep.subr.mxu0 0.0
    %2886 = vmatpush1.msra.mxu0 %v2613
    %2887 = vmatprep.subr.mxu0 0.0
    %2888 = vmatpush1.msra.mxu0 %v2614
    %2889 = vmatprep.subr.mxu0 0.0
    %2890 = vmatpush1.msra.mxu0 %v2615
    %2891 = vmatprep.subr.mxu0 0.0
    %2892 = vmatpush1.msra.mxu0 %v2616
    %2893 = vmatprep.subr.mxu0 0.0
    %2894 = vmatpush1.msra.mxu0 0.0
    %2895 = vmatprep.subr.mxu0 0.0
    %2896 = vmatpush1.msra.mxu0 0.0
    %2897 = vmatprep.subr.mxu0 0.0
    %2898 = vmatpush1.msra.mxu0 0.0
    %2899 = vmatprep.subr.mxu0 0.0
    %2900 = vmatpush1.msra.mxu0 0.0
    %2901 = vmatprep.subr.mxu0 0.0
    %2902 = vmatpush1.msra.mxu0 0.0
    %2903 = vmatprep.subr.mxu0 0.0
    %2904 = vmatpush1.msra.mxu0 0.0
    %2905 = vmatprep.subr.mxu0 0.0
    %2906 = vmatpush1.msra.mxu0 0.0
    %2907 = vmatprep.subr.mxu0 0.0
    %2908 = vmatpush1.msra.mxu0 0.0
    %2909 = vmatprep.subr.mxu0 0.0
    %2910 = vmatpush1.msra.mxu0 0.0
    %2911 = vmatprep.subr.mxu0 0.0
    %2912 = vmatpush1.msra.mxu0 0.0
    %2913 = vmatprep.subr.mxu0 0.0
    %2914 = vmatpush1.msra.mxu0 0.0
    %2915 = vmatprep.subr.mxu0 0.0
    %2916 = vmatpush1.msra.mxu0 0.0
    %2917 = vmatprep.subr.mxu0 0.0
    %2918 = vmatpush1.msra.mxu0 0.0
    %2919 = vmatprep.subr.mxu0 0.0
    %2920 = vmatpush1.msra.mxu0 0.0
    %2921 = vmatprep.subr.mxu0 0.0
    %2922 = vmatpush1.msra.mxu0 0.0
    %2923 = vmatprep.subr.mxu0 0.0
    %2924 = vmatpush1.msra.mxu0 0.0
    %2925 = vmatprep.subr.mxu0 0.0
    %2926 = vmatpush1.msra.mxu0 0.0
    %2927 = vmatprep.subr.mxu0 0.0
    %2928 = vmatpush1.msra.mxu0 0.0
    %2929 = vmatprep.subr.mxu0 0.0
    %2930 = vmatpush1.msra.mxu0 0.0
    %2931 = vmatprep.subr.mxu0 0.0
    %2932 = vmatpush1.msra.mxu0 0.0
    %2933 = vmatprep.subr.mxu0 0.0
    %2934 = vmatpush1.msra.mxu0 0.0
    %2935 = vmatprep.subr.mxu0 0.0
    %2936 = vmatpush1.msra.mxu0 0.0
    %2937 = vmatprep.subr.mxu0 0.0
    %2938 = vmatpush1.msra.mxu0 0.0
    %2939 = vmatprep.subr.mxu0 0.0
    %2940 = vmatpush1.msra.mxu0 0.0
    %2941 = vmatprep.subr.mxu0 0.0
    %2942 = vmatpush1.msra.mxu0 0.0
    %2943 = vmatprep.subr.mxu0 0.0
    %2944 = vmatpush1.msra.mxu0 0.0
    %2945 = vmatprep.subr.mxu0 0.0
    %2946 = vmatpush1.msra.mxu0 0.0
    %2947 = vmatprep.subr.mxu0 0.0
    %2948 = vmatpush1.msra.mxu0 0.0
    %2949 = vmatprep.mubr.f32.mxu0 0.0
    %2950 = vmatmul.mubr.f32.gmra.mrb[0].mxu0 %v2883
    %v2951 = vpop.f32.mrb[0].mxu0
    %v2952 = vadd.f32 0.0, %v2951
    %v2953 = vpop.f32.mrb[0].mxu0
    %2954 = vdwg.mxu0
    %2955 = vmatprep.subr.mxu0 0.0
    %2956 = vmatpush1.msra.mxu0 %v2609
    %2957 = vmatprep.subr.mxu0 0.0
    %2958 = vmatpush1.msra.mxu0 %v2610
    %2959 = vmatprep.subr.mxu0 0.0
    %2960 = vmatpush1.msra.mxu0 %v2611
    %2961 = vmatprep.subr.mxu0 0.0
    %2962 = vmatpush1.msra.mxu0 %v2612
    %2963 = vmatprep.subr.mxu0 0.0
    %2964 = vmatpush1.msra.mxu0 0.0
    %2965 = vmatprep.subr.mxu0 0.0
    %2966 = vmatpush1.msra.mxu0 0.0
    %2967 = vmatprep.subr.mxu0 0.0
    %2968 = vmatpush1.msra.mxu0 0.0
    %2969 = vmatprep.subr.mxu0 0.0
    %2970 = vmatpush1.msra.mxu0 0.0
    %2971 = vmatprep.subr.mxu0 0.0
    %2972 = vmatpush1.msra.mxu0 0.0
    %2973 = vmatprep.subr.mxu0 0.0
    %2974 = vmatpush1.msra.mxu0 0.0
    %2975 = vmatprep.subr.mxu0 0.0
    %2976 = vmatpush1.msra.mxu0 0.0
    %2977 = vmatprep.subr.mxu0 0.0
    %2978 = vmatpush1.msra.mxu0 0.0
    %2979 = vmatprep.subr.mxu0 0.0
    %2980 = vmatpush1.msra.mxu0 0.0
    %2981 = vmatprep.subr.mxu0 0.0
    %2982 = vmatpush1.msra.mxu0 0.0
    %2983 = vmatprep.subr.mxu0 0.0
    %2984 = vmatpush1.msra.mxu0 0.0
    %2985 = vmatprep.subr.mxu0 0.0
    %2986 = vmatpush1.msra.mxu0 0.0
    %2987 = vmatprep.subr.mxu0 0.0
    %2988 = vmatpush1.msra.mxu0 0.0
    %2989 = vmatprep.subr.mxu0 0.0
    %2990 = vmatpush1.msra.mxu0 0.0
    %2991 = vmatprep.subr.mxu0 0.0
    %2992 = vmatpush1.msra.mxu0 0.0
    %2993 = vmatprep.subr.mxu0 0.0
    %2994 = vmatpush1.msra.mxu0 0.0
    %2995 = vmatprep.subr.mxu0 0.0
    %2996 = vmatpush1.msra.mxu0 0.0
    %2997 = vmatprep.subr.mxu0 0.0
    %2998 = vmatpush1.msra.mxu0 0.0
    %2999 = vmatprep.subr.mxu0 0.0
    %3000 = vmatpush1.msra.mxu0 0.0
    %3001 = vmatprep.subr.mxu0 0.0
    %3002 = vmatpush1.msra.mxu0 0.0
    %3003 = vmatprep.subr.mxu0 0.0
    %3004 = vmatpush1.msra.mxu0 0.0
    %3005 = vmatprep.subr.mxu0 0.0
    %3006 = vmatpush1.msra.mxu0 0.0
    %3007 = vmatprep.subr.mxu0 0.0
    %3008 = vmatpush1.msra.mxu0 0.0
    %3009 = vmatprep.subr.mxu0 0.0
    %3010 = vmatpush1.msra.mxu0 0.0
    %3011 = vmatprep.subr.mxu0 0.0
    %3012 = vmatpush1.msra.mxu0 0.0
    %3013 = vmatprep.subr.mxu0 0.0
    %3014 = vmatpush1.msra.mxu0 0.0
    %3015 = vmatprep.subr.mxu0 0.0
    %3016 = vmatpush1.msra.mxu0 0.0
    %3017 = vmatprep.subr.mxu0 0.0
    %3018 = vmatpush1.msra.mxu0 0.0
    %3019 = vmatprep.mubr.f32.mxu0 0.0
    %3020 = vmatmul.mubr.f32.gmra.mrb[0].mxu0 %v2228
    %v3021 = vpop.f32.mrb[0].mxu0
    %v3022 = vadd.f32 %v2952, %v3021
    %v3023 = vpop.f32.mrb[0].mxu0
    %3024 = vdwg.mxu0
    %v3025 = vadd.f32 %v3022, %v2622
    %v3026 = vxor.u32 %v3025, 2147483648
    %v3027 = vmul.f32 %v3026, 1.442695
    %v3028 = vpow.pop %v3027
    %v3029 = vadd.f32 %v3028, 1.0
    %v3030 = vrcp.pop %v3029
    %v3031 = vmul.f32 1.0, %v3030
    %v3032 = vtanh.pop %v3025
    %v3033 = vmul.f32 %v3031, %v2309
    %3035 = vrot.lane.b32.xlu0 %v3032, 64
    %v3036 = vpop.permute.xlu0 %3035
    %v3038 = vmul.f32 %v3031, %v3036
    %3040 = vrot.lane.b32.xlu0 %v3038, 32
    %v3041 = vpop.permute.xlu0 %3040
    %v3043 = vadd.f32 %v3033, %v3041
    %v3044 = vtanh.pop %v3043
    %3046 = vrot.lane.b32.xlu0 %v3044, 64
    %v3047 = vpop.permute.xlu0 %3046
    %v3049 = vmul.f32 %v3031, %v3047
    %3051 = vrot.lane.b32.xlu0 %v3049, 32
    %v3052 = vpop.permute.xlu0 %3051
    %3054 = vst.msk [vmem:[#allocation3 + $0x4] sm:$0xf] %vm2660, %v3052
    %v3055 = vsel %vm308, %v3052, 0
    %3057 = vmatprep.subr.mxu0 0.0
    %3058 = vmatpush1.msra.mxu0 %v2624
    %3059 = vmatprep.subr.mxu0 0.0
    %3060 = vmatpush1.msra.mxu0 %v2625
    %3061 = vmatprep.subr.mxu0 0.0
    %3062 = vmatpush1.msra.mxu0 %v2626
    %3063 = vmatprep.subr.mxu0 0.0
    %3064 = vmatpush1.msra.mxu0 %v2627
    %3065 = vmatprep.subr.mxu0 0.0
    %3066 = vmatpush1.msra.mxu0 0.0
    %3067 = vmatprep.subr.mxu0 0.0
    %3068 = vmatpush1.msra.mxu0 0.0
    %3069 = vmatprep.subr.mxu0 0.0
    %3070 = vmatpush1.msra.mxu0 0.0
    %3071 = vmatprep.subr.mxu0 0.0
    %3072 = vmatpush1.msra.mxu0 0.0
    %3073 = vmatprep.subr.mxu0 0.0
    %3074 = vmatpush1.msra.mxu0 0.0
    %3075 = vmatprep.subr.mxu0 0.0
    %3076 = vmatpush1.msra.mxu0 0.0
    %3077 = vmatprep.subr.mxu0 0.0
    %3078 = vmatpush1.msra.mxu0 0.0
    %3079 = vmatprep.subr.mxu0 0.0
    %3080 = vmatpush1.msra.mxu0 0.0
    %3081 = vmatprep.subr.mxu0 0.0
    %3082 = vmatpush1.msra.mxu0 0.0
    %3083 = vmatprep.subr.mxu0 0.0
    %3084 = vmatpush1.msra.mxu0 0.0
    %3085 = vmatprep.subr.mxu0 0.0
    %3086 = vmatpush1.msra.mxu0 0.0
    %3087 = vmatprep.subr.mxu0 0.0
    %3088 = vmatpush1.msra.mxu0 0.0
    %3089 = vmatprep.subr.mxu0 0.0
    %3090 = vmatpush1.msra.mxu0 0.0
    %3091 = vmatprep.subr.mxu0 0.0
    %3092 = vmatpush1.msra.mxu0 0.0
    %3093 = vmatprep.subr.mxu0 0.0
    %3094 = vmatpush1.msra.mxu0 0.0
    %3095 = vmatprep.subr.mxu0 0.0
    %3096 = vmatpush1.msra.mxu0 0.0
    %3097 = vmatprep.subr.mxu0 0.0
    %3098 = vmatpush1.msra.mxu0 0.0
    %3099 = vmatprep.subr.mxu0 0.0
    %3100 = vmatpush1.msra.mxu0 0.0
    %3101 = vmatprep.subr.mxu0 0.0
    %3102 = vmatpush1.msra.mxu0 0.0
    %3103 = vmatprep.subr.mxu0 0.0
    %3104 = vmatpush1.msra.mxu0 0.0
    %3105 = vmatprep.subr.mxu0 0.0
    %3106 = vmatpush1.msra.mxu0 0.0
    %3107 = vmatprep.subr.mxu0 0.0
    %3108 = vmatpush1.msra.mxu0 0.0
    %3109 = vmatprep.subr.mxu0 0.0
    %3110 = vmatpush1.msra.mxu0 0.0
    %3111 = vmatprep.subr.mxu0 0.0
    %3112 = vmatpush1.msra.mxu0 0.0
    %3113 = vmatprep.subr.mxu0 0.0
    %3114 = vmatpush1.msra.mxu0 0.0
    %3115 = vmatprep.subr.mxu0 0.0
    %3116 = vmatpush1.msra.mxu0 0.0
    %3117 = vmatprep.subr.mxu0 0.0
    %3118 = vmatpush1.msra.mxu0 0.0
    %3119 = vmatprep.subr.mxu0 0.0
    %3120 = vmatpush1.msra.mxu0 0.0
    %3121 = vmatprep.mubr.f32.mxu0 0.0
    %3122 = vmatmul.mubr.f32.gmra.mrb[0].mxu0 %v3055
    %v3123 = vpop.f32.mrb[0].mxu0
    %v3124 = vadd.f32 %v2729, %v3123
    %v3125 = vpop.f32.mrb[0].mxu0
    %3126 = vdwg.mxu0
    %v3127 = vadd.f32 %v3124, %v2637
    %vm3128 = vcmp.ge.f32.partialorder %v3127, 0.0
    %v3129 = vmul.f32 %v2647, %v3127
    %v3130 = vsel %vm3128, %v3127, %v3129
    %v3132 = vsel %vm308, %v3130, 0
    %3134 = vmatprep.subr.mxu0 0.0
    %3135 = vmatpush1.msra.mxu0 %v2649
    %3136 = vmatprep.subr.mxu0 0.0
    %3137 = vmatpush1.msra.mxu0 %v2650
    %3138 = vmatprep.subr.mxu0 0.0
    %3139 = vmatpush1.msra.mxu0 %v2651
    %3140 = vmatprep.subr.mxu0 0.0
    %3141 = vmatpush1.msra.mxu0 %v2652
    %3142 = vmatprep.subr.mxu0 0.0
    %3143 = vmatpush1.msra.mxu0 0.0
    %3144 = vmatprep.subr.mxu0 0.0
    %3145 = vmatpush1.msra.mxu0 0.0
    %3146 = vmatprep.subr.mxu0 0.0
    %3147 = vmatpush1.msra.mxu0 0.0
    %3148 = vmatprep.subr.mxu0 0.0
    %3149 = vmatpush1.msra.mxu0 0.0
    %3150 = vmatprep.subr.mxu0 0.0
    %3151 = vmatpush1.msra.mxu0 0.0
    %3152 = vmatprep.subr.mxu0 0.0
    %3153 = vmatpush1.msra.mxu0 0.0
    %3154 = vmatprep.subr.mxu0 0.0
    %3155 = vmatpush1.msra.mxu0 0.0
    %3156 = vmatprep.subr.mxu0 0.0
    %3157 = vmatpush1.msra.mxu0 0.0
    %3158 = vmatprep.subr.mxu0 0.0
    %3159 = vmatpush1.msra.mxu0 0.0
    %3160 = vmatprep.subr.mxu0 0.0
    %3161 = vmatpush1.msra.mxu0 0.0
    %3162 = vmatprep.subr.mxu0 0.0
    %3163 = vmatpush1.msra.mxu0 0.0
    %3164 = vmatprep.subr.mxu0 0.0
    %3165 = vmatpush1.msra.mxu0 0.0
    %3166 = vmatprep.subr.mxu0 0.0
    %3167 = vmatpush1.msra.mxu0 0.0
    %3168 = vmatprep.subr.mxu0 0.0
    %3169 = vmatpush1.msra.mxu0 0.0
    %3170 = vmatprep.subr.mxu0 0.0
    %3171 = vmatpush1.msra.mxu0 0.0
    %3172 = vmatprep.subr.mxu0 0.0
    %3173 = vmatpush1.msra.mxu0 0.0
    %3174 = vmatprep.subr.mxu0 0.0
    %3175 = vmatpush1.msra.mxu0 0.0
    %3176 = vmatprep.subr.mxu0 0.0
    %3177 = vmatpush1.msra.mxu0 0.0
    %3178 = vmatprep.subr.mxu0 0.0
    %3179 = vmatpush1.msra.mxu0 0.0
    %3180 = vmatprep.subr.mxu0 0.0
    %3181 = vmatpush1.msra.mxu0 0.0
    %3182 = vmatprep.subr.mxu0 0.0
    %3183 = vmatpush1.msra.mxu0 0.0
    %3184 = vmatprep.subr.mxu0 0.0
    %3185 = vmatpush1.msra.mxu0 0.0
    %3186 = vmatprep.subr.mxu0 0.0
    %3187 = vmatpush1.msra.mxu0 0.0
    %3188 = vmatprep.subr.mxu0 0.0
    %3189 = vmatpush1.msra.mxu0 0.0
    %3190 = vmatprep.subr.mxu0 0.0
    %3191 = vmatpush1.msra.mxu0 0.0
    %3192 = vmatprep.subr.mxu0 0.0
    %3193 = vmatpush1.msra.mxu0 0.0
    %3194 = vmatprep.subr.mxu0 0.0
    %3195 = vmatpush1.msra.mxu0 0.0
    %3196 = vmatprep.subr.mxu0 0.0
    %3197 = vmatpush1.msra.mxu0 0.0
    %3198 = vmatprep.mubr.f32.mxu0 0.0
    %3199 = vmatmul.mubr.f32.gmra.mrb[0].mxu0 %v3132
    %v3200 = vpop.f32.mrb[0].mxu0
    %v3201 = vadd.f32 %v2658, %v3200
    %v3202 = vpop.f32.mrb[0].mxu0
    %3203 = vdwg.mxu0
    %v3204 = vmul.f32 %v3049, 0.1
    %v3205 = vmul.f32 %v3201, 0.9
    %3207 = vrot.lane.b32.xlu0 %v3205, 96
    %v3208 = vpop.permute.xlu0 %3207
    %v3210 = vadd.f32 %v3204, %v3208
    %3212 = vrot.lane.b32.xlu0 %v3210, 32
    %v3213 = vpop.permute.xlu0 %3212
    %v3214 = vsel %vm308, %v3213, 0
    %3216 = vmatprep.subr.mxu0 0.0
    %3217 = vmatpush1.msra.mxu0 %v2613
    %3218 = vmatprep.subr.mxu0 0.0
    %3219 = vmatpush1.msra.mxu0 %v2614
    %3220 = vmatprep.subr.mxu0 0.0
    %3221 = vmatpush1.msra.mxu0 %v2615
    %3222 = vmatprep.subr.mxu0 0.0
    %3223 = vmatpush1.msra.mxu0 %v2616
    %3224 = vmatprep.subr.mxu0 0.0
    %3225 = vmatpush1.msra.mxu0 0.0
    %3226 = vmatprep.subr.mxu0 0.0
    %3227 = vmatpush1.msra.mxu0 0.0
    %3228 = vmatprep.subr.mxu0 0.0
    %3229 = vmatpush1.msra.mxu0 0.0
    %3230 = vmatprep.subr.mxu0 0.0
    %3231 = vmatpush1.msra.mxu0 0.0
    %3232 = vmatprep.subr.mxu0 0.0
    %3233 = vmatpush1.msra.mxu0 0.0
    %3234 = vmatprep.subr.mxu0 0.0
    %3235 = vmatpush1.msra.mxu0 0.0
    %3236 = vmatprep.subr.mxu0 0.0
    %3237 = vmatpush1.msra.mxu0 0.0
    %3238 = vmatprep.subr.mxu0 0.0
    %3239 = vmatpush1.msra.mxu0 0.0
    %3240 = vmatprep.subr.mxu0 0.0
    %3241 = vmatpush1.msra.mxu0 0.0
    %3242 = vmatprep.subr.mxu0 0.0
    %3243 = vmatpush1.msra.mxu0 0.0
    %3244 = vmatprep.subr.mxu0 0.0
    %3245 = vmatpush1.msra.mxu0 0.0
    %3246 = vmatprep.subr.mxu0 0.0
    %3247 = vmatpush1.msra.mxu0 0.0
    %3248 = vmatprep.subr.mxu0 0.0
    %3249 = vmatpush1.msra.mxu0 0.0
    %3250 = vmatprep.subr.mxu0 0.0
    %3251 = vmatpush1.msra.mxu0 0.0
    %3252 = vmatprep.subr.mxu0 0.0
    %3253 = vmatpush1.msra.mxu0 0.0
    %3254 = vmatprep.subr.mxu0 0.0
    %3255 = vmatpush1.msra.mxu0 0.0
    %3256 = vmatprep.subr.mxu0 0.0
    %3257 = vmatpush1.msra.mxu0 0.0
    %3258 = vmatprep.subr.mxu0 0.0
    %3259 = vmatpush1.msra.mxu0 0.0
    %3260 = vmatprep.subr.mxu0 0.0
    %3261 = vmatpush1.msra.mxu0 0.0
    %3262 = vmatprep.subr.mxu0 0.0
    %3263 = vmatpush1.msra.mxu0 0.0
    %3264 = vmatprep.subr.mxu0 0.0
    %3265 = vmatpush1.msra.mxu0 0.0
    %3266 = vmatprep.subr.mxu0 0.0
    %3267 = vmatpush1.msra.mxu0 0.0
    %3268 = vmatprep.subr.mxu0 0.0
    %3269 = vmatpush1.msra.mxu0 0.0
    %3270 = vmatprep.subr.mxu0 0.0
    %3271 = vmatpush1.msra.mxu0 0.0
    %3272 = vmatprep.subr.mxu0 0.0
    %3273 = vmatpush1.msra.mxu0 0.0
    %3274 = vmatprep.subr.mxu0 0.0
    %3275 = vmatpush1.msra.mxu0 0.0
    %3276 = vmatprep.subr.mxu0 0.0
    %3277 = vmatpush1.msra.mxu0 0.0
    %3278 = vmatprep.subr.mxu0 0.0
    %3279 = vmatpush1.msra.mxu0 0.0
    %3280 = vmatprep.mubr.f32.mxu0 0.0
    %3281 = vmatmul.mubr.f32.gmra.mrb[0].mxu0 %v3214
    %v3282 = vpop.f32.mrb[0].mxu0
    %v3283 = vadd.f32 0.0, %v3282
    %v3284 = vpop.f32.mrb[0].mxu0
    %3285 = vdwg.mxu0
    %3286 = vmatprep.subr.mxu0 0.0
    %3287 = vmatpush1.msra.mxu0 %v2609
    %3288 = vmatprep.subr.mxu0 0.0
    %3289 = vmatpush1.msra.mxu0 %v2610
    %3290 = vmatprep.subr.mxu0 0.0
    %3291 = vmatpush1.msra.mxu0 %v2611
    %3292 = vmatprep.subr.mxu0 0.0
    %3293 = vmatpush1.msra.mxu0 %v2612
    %3294 = vmatprep.subr.mxu0 0.0
    %3295 = vmatpush1.msra.mxu0 0.0
    %3296 = vmatprep.subr.mxu0 0.0
    %3297 = vmatpush1.msra.mxu0 0.0
    %3298 = vmatprep.subr.mxu0 0.0
    %3299 = vmatpush1.msra.mxu0 0.0
    %3300 = vmatprep.subr.mxu0 0.0
    %3301 = vmatpush1.msra.mxu0 0.0
    %3302 = vmatprep.subr.mxu0 0.0
    %3303 = vmatpush1.msra.mxu0 0.0
    %3304 = vmatprep.subr.mxu0 0.0
    %3305 = vmatpush1.msra.mxu0 0.0
    %3306 = vmatprep.subr.mxu0 0.0
    %3307 = vmatpush1.msra.mxu0 0.0
    %3308 = vmatprep.subr.mxu0 0.0
    %3309 = vmatpush1.msra.mxu0 0.0
    %3310 = vmatprep.subr.mxu0 0.0
    %3311 = vmatpush1.msra.mxu0 0.0
    %3312 = vmatprep.subr.mxu0 0.0
    %3313 = vmatpush1.msra.mxu0 0.0
    %3314 = vmatprep.subr.mxu0 0.0
    %3315 = vmatpush1.msra.mxu0 0.0
    %3316 = vmatprep.subr.mxu0 0.0
    %3317 = vmatpush1.msra.mxu0 0.0
    %3318 = vmatprep.subr.mxu0 0.0
    %3319 = vmatpush1.msra.mxu0 0.0
    %3320 = vmatprep.subr.mxu0 0.0
    %3321 = vmatpush1.msra.mxu0 0.0
    %3322 = vmatprep.subr.mxu0 0.0
    %3323 = vmatpush1.msra.mxu0 0.0
    %3324 = vmatprep.subr.mxu0 0.0
    %3325 = vmatpush1.msra.mxu0 0.0
    %3326 = vmatprep.subr.mxu0 0.0
    %3327 = vmatpush1.msra.mxu0 0.0
    %3328 = vmatprep.subr.mxu0 0.0
    %3329 = vmatpush1.msra.mxu0 0.0
    %3330 = vmatprep.subr.mxu0 0.0
    %3331 = vmatpush1.msra.mxu0 0.0
    %3332 = vmatprep.subr.mxu0 0.0
    %3333 = vmatpush1.msra.mxu0 0.0
    %3334 = vmatprep.subr.mxu0 0.0
    %3335 = vmatpush1.msra.mxu0 0.0
    %3336 = vmatprep.subr.mxu0 0.0
    %3337 = vmatpush1.msra.mxu0 0.0
    %3338 = vmatprep.subr.mxu0 0.0
    %3339 = vmatpush1.msra.mxu0 0.0
    %3340 = vmatprep.subr.mxu0 0.0
    %3341 = vmatpush1.msra.mxu0 0.0
    %3342 = vmatprep.subr.mxu0 0.0
    %3343 = vmatpush1.msra.mxu0 0.0
    %3344 = vmatprep.subr.mxu0 0.0
    %3345 = vmatpush1.msra.mxu0 0.0
    %3346 = vmatprep.subr.mxu0 0.0
    %3347 = vmatpush1.msra.mxu0 0.0
    %3348 = vmatprep.subr.mxu0 0.0
    %3349 = vmatpush1.msra.mxu0 0.0
    %3350 = vmatprep.mubr.f32.mxu0 0.0
    %3351 = vmatmul.mubr.f32.gmra.mrb[0].mxu0 %v3055
    %v3352 = vpop.f32.mrb[0].mxu0
    %v3353 = vadd.f32 %v3283, %v3352
    %v3354 = vpop.f32.mrb[0].mxu0
    %3355 = vdwg.mxu0
    %v3356 = vadd.f32 %v3353, %v2622
    %v3357 = vxor.u32 %v3356, 2147483648
    %v3358 = vmul.f32 %v3357, 1.442695
    %v3359 = vpow.pop %v3358
    %v3360 = vadd.f32 %v3359, 1.0
    %v3361 = vrcp.pop %v3360
    %v3362 = vmul.f32 1.0, %v3361
    %v3363 = vtanh.pop %v3356
    %v3364 = vmul.f32 %v3362, %v3043
    %3366 = vrot.lane.b32.xlu0 %v3363, 64
    %v3367 = vpop.permute.xlu0 %3366
    %v3369 = vmul.f32 %v3362, %v3367
    %3371 = vrot.lane.b32.xlu0 %v3369, 32
    %v3372 = vpop.permute.xlu0 %3371
    %v3374 = vadd.f32 %v3364, %v3372
    %v3375 = vtanh.pop %v3374
    %3377 = vrot.lane.b32.xlu0 %v3375, 64
    %v3378 = vpop.permute.xlu0 %3377
    %v3380 = vmul.f32 %v3362, %v3378
    %3382 = vrot.lane.b32.xlu0 %v3380, 32
    %v3383 = vpop.permute.xlu0 %3382
    %3385 = vst.msk [vmem:[#allocation3 + $0x8] sm:$0xf] %vm2660, %v3383
    %v3386 = vmul.f32 %v3380, 0.5
    %v3387 = vadd.f32 %v3386, %v2431
    %3388 = vmatprep.subr.mxu0 0.0
    %3389 = vmatpush1.msra.mxu0 %v2628
    %3390 = vmatprep.subr.mxu0 0.0
    %3391 = vmatpush1.msra.mxu0 %v2629
    %3392 = vmatprep.subr.mxu0 0.0
    %3393 = vmatpush1.msra.mxu0 %v2630
    %3394 = vmatprep.subr.mxu0 0.0
    %3395 = vmatpush1.msra.mxu0 %v2631
    %3396 = vmatprep.subr.mxu0 0.0
    %3397 = vmatpush1.msra.mxu0 0.0
    %3398 = vmatprep.subr.mxu0 0.0
    %3399 = vmatpush1.msra.mxu0 0.0
    %3400 = vmatprep.subr.mxu0 0.0
    %3401 = vmatpush1.msra.mxu0 0.0
    %3402 = vmatprep.subr.mxu0 0.0
    %3403 = vmatpush1.msra.mxu0 0.0
    %3404 = vmatprep.subr.mxu0 0.0
    %3405 = vmatpush1.msra.mxu0 0.0
    %3406 = vmatprep.subr.mxu0 0.0
    %3407 = vmatpush1.msra.mxu0 0.0
    %3408 = vmatprep.subr.mxu0 0.0
    %3409 = vmatpush1.msra.mxu0 0.0
    %3410 = vmatprep.subr.mxu0 0.0
    %3411 = vmatpush1.msra.mxu0 0.0
    %3412 = vmatprep.subr.mxu0 0.0
    %3413 = vmatpush1.msra.mxu0 0.0
    %3414 = vmatprep.subr.mxu0 0.0
    %3415 = vmatpush1.msra.mxu0 0.0
    %3416 = vmatprep.subr.mxu0 0.0
    %3417 = vmatpush1.msra.mxu0 0.0
    %3418 = vmatprep.subr.mxu0 0.0
    %3419 = vmatpush1.msra.mxu0 0.0
    %3420 = vmatprep.subr.mxu0 0.0
    %3421 = vmatpush1.msra.mxu0 0.0
    %3422 = vmatprep.subr.mxu0 0.0
    %3423 = vmatpush1.msra.mxu0 0.0
    %3424 = vmatprep.subr.mxu0 0.0
    %3425 = vmatpush1.msra.mxu0 0.0
    %3426 = vmatprep.subr.mxu0 0.0
    %3427 = vmatpush1.msra.mxu0 0.0
    %3428 = vmatprep.subr.mxu0 0.0
    %3429 = vmatpush1.msra.mxu0 0.0
    %3430 = vmatprep.subr.mxu0 0.0
    %3431 = vmatpush1.msra.mxu0 0.0
    %3432 = vmatprep.subr.mxu0 0.0
    %3433 = vmatpush1.msra.mxu0 0.0
    %3434 = vmatprep.subr.mxu0 0.0
    %3435 = vmatpush1.msra.mxu0 0.0
    %3436 = vmatprep.subr.mxu0 0.0
    %3437 = vmatpush1.msra.mxu0 0.0
    %3438 = vmatprep.subr.mxu0 0.0
    %3439 = vmatpush1.msra.mxu0 0.0
    %3440 = vmatprep.subr.mxu0 0.0
    %3441 = vmatpush1.msra.mxu0 0.0
    %3442 = vmatprep.subr.mxu0 0.0
    %3443 = vmatpush1.msra.mxu0 0.0
    %3444 = vmatprep.subr.mxu0 0.0
    %3445 = vmatpush1.msra.mxu0 0.0
    %3446 = vmatprep.subr.mxu0 0.0
    %3447 = vmatpush1.msra.mxu0 0.0
    %3448 = vmatprep.subr.mxu0 0.0
    %3449 = vmatpush1.msra.mxu0 0.0
    %3450 = vmatprep.subr.mxu0 0.0
    %3451 = vmatpush1.msra.mxu0 0.0
    %3452 = vmatprep.mubr.f32.mxu0 0.0
    %3453 = vmatmul.mubr.f32.gmra.mrb[0].mxu0 %v2331
    %v3454 = vpop.f32.mrb[0].mxu0
    %v3455 = vadd.f32 0.0, %v3454
    %v3456 = vpop.f32.mrb[0].mxu0
    %3457 = vdwg.mxu0
    %3459 = vrot.lane.b32.xlu0 %v3387, 32
    %v3460 = vpop.permute.xlu0 %3459
    %v3461 = vsel %vm308, %v3460, 0
    %3463 = vmatprep.subr.mxu0 0.0
    %3464 = vmatpush1.msra.mxu0 %v2624
    %3465 = vmatprep.subr.mxu0 0.0
    %3466 = vmatpush1.msra.mxu0 %v2625
    %3467 = vmatprep.subr.mxu0 0.0
    %3468 = vmatpush1.msra.mxu0 %v2626
    %3469 = vmatprep.subr.mxu0 0.0
    %3470 = vmatpush1.msra.mxu0 %v2627
    %3471 = vmatprep.subr.mxu0 0.0
    %3472 = vmatpush1.msra.mxu0 0.0
    %3473 = vmatprep.subr.mxu0 0.0
    %3474 = vmatpush1.msra.mxu0 0.0
    %3475 = vmatprep.subr.mxu0 0.0
    %3476 = vmatpush1.msra.mxu0 0.0
    %3477 = vmatprep.subr.mxu0 0.0
    %3478 = vmatpush1.msra.mxu0 0.0
    %3479 = vmatprep.subr.mxu0 0.0
    %3480 = vmatpush1.msra.mxu0 0.0
    %3481 = vmatprep.subr.mxu0 0.0
    %3482 = vmatpush1.msra.mxu0 0.0
    %3483 = vmatprep.subr.mxu0 0.0
    %3484 = vmatpush1.msra.mxu0 0.0
    %3485 = vmatprep.subr.mxu0 0.0
    %3486 = vmatpush1.msra.mxu0 0.0
    %3487 = vmatprep.subr.mxu0 0.0
    %3488 = vmatpush1.msra.mxu0 0.0
    %3489 = vmatprep.subr.mxu0 0.0
    %3490 = vmatpush1.msra.mxu0 0.0
    %3491 = vmatprep.subr.mxu0 0.0
    %3492 = vmatpush1.msra.mxu0 0.0
    %3493 = vmatprep.subr.mxu0 0.0
    %3494 = vmatpush1.msra.mxu0 0.0
    %3495 = vmatprep.subr.mxu0 0.0
    %3496 = vmatpush1.msra.mxu0 0.0
    %3497 = vmatprep.subr.mxu0 0.0
    %3498 = vmatpush1.msra.mxu0 0.0
    %3499 = vmatprep.subr.mxu0 0.0
    %3500 = vmatpush1.msra.mxu0 0.0
    %3501 = vmatprep.subr.mxu0 0.0
    %3502 = vmatpush1.msra.mxu0 0.0
    %3503 = vmatprep.subr.mxu0 0.0
    %3504 = vmatpush1.msra.mxu0 0.0
    %3505 = vmatprep.subr.mxu0 0.0
    %3506 = vmatpush1.msra.mxu0 0.0
    %3507 = vmatprep.subr.mxu0 0.0
    %3508 = vmatpush1.msra.mxu0 0.0
    %3509 = vmatprep.subr.mxu0 0.0
    %3510 = vmatpush1.msra.mxu0 0.0
    %3511 = vmatprep.subr.mxu0 0.0
    %3512 = vmatpush1.msra.mxu0 0.0
    %3513 = vmatprep.subr.mxu0 0.0
    %3514 = vmatpush1.msra.mxu0 0.0
    %3515 = vmatprep.subr.mxu0 0.0
    %3516 = vmatpush1.msra.mxu0 0.0
    %3517 = vmatprep.subr.mxu0 0.0
    %3518 = vmatpush1.msra.mxu0 0.0
    %3519 = vmatprep.subr.mxu0 0.0
    %3520 = vmatpush1.msra.mxu0 0.0
    %3521 = vmatprep.subr.mxu0 0.0
    %3522 = vmatpush1.msra.mxu0 0.0
    %3523 = vmatprep.subr.mxu0 0.0
    %3524 = vmatpush1.msra.mxu0 0.0
    %3525 = vmatprep.subr.mxu0 0.0
    %3526 = vmatpush1.msra.mxu0 0.0
    %3527 = vmatprep.mubr.f32.mxu0 0.0
    %3528 = vmatmul.mubr.f32.gmra.mrb[0].mxu0 %v3461
    %v3529 = vpop.f32.mrb[0].mxu0
    %v3530 = vadd.f32 %v3455, %v3529
    %v3531 = vpop.f32.mrb[0].mxu0
    %3532 = vdwg.mxu0
    %v3533 = vadd.f32 %v3530, %v2637
    %vm3534 = vcmp.ge.f32.partialorder %v3533, 0.0
    %v3535 = vmul.f32 %v2647, %v3533
    %v3536 = vsel %vm3534, %v3533, %v3535
    %v3538 = vsel %vm308, %v3536, 0
    %3540 = vmatprep.subr.mxu0 0.0
    %3541 = vmatpush1.msra.mxu0 %v2649
    %3542 = vmatprep.subr.mxu0 0.0
    %3543 = vmatpush1.msra.mxu0 %v2650
    %3544 = vmatprep.subr.mxu0 0.0
    %3545 = vmatpush1.msra.mxu0 %v2651
    %3546 = vmatprep.subr.mxu0 0.0
    %3547 = vmatpush1.msra.mxu0 %v2652
    %3548 = vmatprep.subr.mxu0 0.0
    %3549 = vmatpush1.msra.mxu0 0.0
    %3550 = vmatprep.subr.mxu0 0.0
    %3551 = vmatpush1.msra.mxu0 0.0
    %3552 = vmatprep.subr.mxu0 0.0
    %3553 = vmatpush1.msra.mxu0 0.0
    %3554 = vmatprep.subr.mxu0 0.0
    %3555 = vmatpush1.msra.mxu0 0.0
    %3556 = vmatprep.subr.mxu0 0.0
    %3557 = vmatpush1.msra.mxu0 0.0
    %3558 = vmatprep.subr.mxu0 0.0
    %3559 = vmatpush1.msra.mxu0 0.0
    %3560 = vmatprep.subr.mxu0 0.0
    %3561 = vmatpush1.msra.mxu0 0.0
    %3562 = vmatprep.subr.mxu0 0.0
    %3563 = vmatpush1.msra.mxu0 0.0
    %3564 = vmatprep.subr.mxu0 0.0
    %3565 = vmatpush1.msra.mxu0 0.0
    %3566 = vmatprep.subr.mxu0 0.0
    %3567 = vmatpush1.msra.mxu0 0.0
    %3568 = vmatprep.subr.mxu0 0.0
    %3569 = vmatpush1.msra.mxu0 0.0
    %3570 = vmatprep.subr.mxu0 0.0
    %3571 = vmatpush1.msra.mxu0 0.0
    %3572 = vmatprep.subr.mxu0 0.0
    %3573 = vmatpush1.msra.mxu0 0.0
    %3574 = vmatprep.subr.mxu0 0.0
    %3575 = vmatpush1.msra.mxu0 0.0
    %3576 = vmatprep.subr.mxu0 0.0
    %3577 = vmatpush1.msra.mxu0 0.0
    %3578 = vmatprep.subr.mxu0 0.0
    %3579 = vmatpush1.msra.mxu0 0.0
    %3580 = vmatprep.subr.mxu0 0.0
    %3581 = vmatpush1.msra.mxu0 0.0
    %3582 = vmatprep.subr.mxu0 0.0
    %3583 = vmatpush1.msra.mxu0 0.0
    %3584 = vmatprep.subr.mxu0 0.0
    %3585 = vmatpush1.msra.mxu0 0.0
    %3586 = vmatprep.subr.mxu0 0.0
    %3587 = vmatpush1.msra.mxu0 0.0
    %3588 = vmatprep.subr.mxu0 0.0
    %3589 = vmatpush1.msra.mxu0 0.0
    %3590 = vmatprep.subr.mxu0 0.0
    %3591 = vmatpush1.msra.mxu0 0.0
    %3592 = vmatprep.subr.mxu0 0.0
    %3593 = vmatpush1.msra.mxu0 0.0
    %3594 = vmatprep.subr.mxu0 0.0
    %3595 = vmatpush1.msra.mxu0 0.0
    %3596 = vmatprep.subr.mxu0 0.0
    %3597 = vmatpush1.msra.mxu0 0.0
    %3598 = vmatprep.subr.mxu0 0.0
    %3599 = vmatpush1.msra.mxu0 0.0
    %3600 = vmatprep.subr.mxu0 0.0
    %3601 = vmatpush1.msra.mxu0 0.0
    %3602 = vmatprep.subr.mxu0 0.0
    %3603 = vmatpush1.msra.mxu0 0.0
    %3604 = vmatprep.mubr.f32.mxu0 0.0
    %3605 = vmatmul.mubr.f32.gmra.mrb[0].mxu0 %v3538
    %v3606 = vpop.f32.mrb[0].mxu0
    %v3607 = vadd.f32 %v2658, %v3606
    %v3608 = vpop.f32.mrb[0].mxu0
    %3609 = vdwg.mxu0
    %v3610 = vmul.f32 %v3387, 0.1
    %v3611 = vmul.f32 %v3607, 0.9
    %3613 = vrot.lane.b32.xlu0 %v3611, 96
    %v3614 = vpop.permute.xlu0 %3613
    %v3616 = vadd.f32 %v3610, %v3614
    %3618 = vrot.lane.b32.xlu0 %v3616, 32
    %v3619 = vpop.permute.xlu0 %3618
    %v3620 = vsel %vm308, %v3619, 0
    %3622 = vmatprep.subr.mxu0 0.0
    %3623 = vmatpush1.msra.mxu0 %v2613
    %3624 = vmatprep.subr.mxu0 0.0
    %3625 = vmatpush1.msra.mxu0 %v2614
    %3626 = vmatprep.subr.mxu0 0.0
    %3627 = vmatpush1.msra.mxu0 %v2615
    %3628 = vmatprep.subr.mxu0 0.0
    %3629 = vmatpush1.msra.mxu0 %v2616
    %3630 = vmatprep.subr.mxu0 0.0
    %3631 = vmatpush1.msra.mxu0 0.0
    %3632 = vmatprep.subr.mxu0 0.0
    %3633 = vmatpush1.msra.mxu0 0.0
    %3634 = vmatprep.subr.mxu0 0.0
    %3635 = vmatpush1.msra.mxu0 0.0
    %3636 = vmatprep.subr.mxu0 0.0
    %3637 = vmatpush1.msra.mxu0 0.0
    %3638 = vmatprep.subr.mxu0 0.0
    %3639 = vmatpush1.msra.mxu0 0.0
    %3640 = vmatprep.subr.mxu0 0.0
    %3641 = vmatpush1.msra.mxu0 0.0
    %3642 = vmatprep.subr.mxu0 0.0
    %3643 = vmatpush1.msra.mxu0 0.0
    %3644 = vmatprep.subr.mxu0 0.0
    %3645 = vmatpush1.msra.mxu0 0.0
    %3646 = vmatprep.subr.mxu0 0.0
    %3647 = vmatpush1.msra.mxu0 0.0
    %3648 = vmatprep.subr.mxu0 0.0
    %3649 = vmatpush1.msra.mxu0 0.0
    %3650 = vmatprep.subr.mxu0 0.0
    %3651 = vmatpush1.msra.mxu0 0.0
    %3652 = vmatprep.subr.mxu0 0.0
    %3653 = vmatpush1.msra.mxu0 0.0
    %3654 = vmatprep.subr.mxu0 0.0
    %3655 = vmatpush1.msra.mxu0 0.0
    %3656 = vmatprep.subr.mxu0 0.0
    %3657 = vmatpush1.msra.mxu0 0.0
    %3658 = vmatprep.subr.mxu0 0.0
    %3659 = vmatpush1.msra.mxu0 0.0
    %3660 = vmatprep.subr.mxu0 0.0
    %3661 = vmatpush1.msra.mxu0 0.0
    %3662 = vmatprep.subr.mxu0 0.0
    %3663 = vmatpush1.msra.mxu0 0.0
    %3664 = vmatprep.subr.mxu0 0.0
    %3665 = vmatpush1.msra.mxu0 0.0
    %3666 = vmatprep.subr.mxu0 0.0
    %3667 = vmatpush1.msra.mxu0 0.0
    %3668 = vmatprep.subr.mxu0 0.0
    %3669 = vmatpush1.msra.mxu0 0.0
    %3670 = vmatprep.subr.mxu0 0.0
    %3671 = vmatpush1.msra.mxu0 0.0
    %3672 = vmatprep.subr.mxu0 0.0
    %3673 = vmatpush1.msra.mxu0 0.0
    %3674 = vmatprep.subr.mxu0 0.0
    %3675 = vmatpush1.msra.mxu0 0.0
    %3676 = vmatprep.subr.mxu0 0.0
    %3677 = vmatpush1.msra.mxu0 0.0
    %3678 = vmatprep.subr.mxu0 0.0
    %3679 = vmatpush1.msra.mxu0 0.0
    %3680 = vmatprep.subr.mxu0 0.0
    %3681 = vmatpush1.msra.mxu0 0.0
    %3682 = vmatprep.subr.mxu0 0.0
    %3683 = vmatpush1.msra.mxu0 0.0
    %3684 = vmatprep.subr.mxu0 0.0
    %3685 = vmatpush1.msra.mxu0 0.0
    %3686 = vmatprep.mubr.f32.mxu0 0.0
    %3687 = vmatmul.mubr.f32.gmra.mrb[0].mxu0 %v3620
    %v3688 = vpop.f32.mrb[0].mxu0
    %v3689 = vadd.f32 0.0, %v3688
    %v3690 = vpop.f32.mrb[0].mxu0
    %3691 = vdwg.mxu0
    %v3692 = vsel %vm308, %v3383, 0
    %3694 = vmatprep.subr.mxu0 0.0
    %3695 = vmatpush1.msra.mxu0 %v2609
    %3696 = vmatprep.subr.mxu0 0.0
    %3697 = vmatpush1.msra.mxu0 %v2610
    %3698 = vmatprep.subr.mxu0 0.0
    %3699 = vmatpush1.msra.mxu0 %v2611
    %3700 = vmatprep.subr.mxu0 0.0
    %3701 = vmatpush1.msra.mxu0 %v2612
    %3702 = vmatprep.subr.mxu0 0.0
    %3703 = vmatpush1.msra.mxu0 0.0
    %3704 = vmatprep.subr.mxu0 0.0
    %3705 = vmatpush1.msra.mxu0 0.0
    %3706 = vmatprep.subr.mxu0 0.0
    %3707 = vmatpush1.msra.mxu0 0.0
    %3708 = vmatprep.subr.mxu0 0.0
    %3709 = vmatpush1.msra.mxu0 0.0
    %3710 = vmatprep.subr.mxu0 0.0
    %3711 = vmatpush1.msra.mxu0 0.0
    %3712 = vmatprep.subr.mxu0 0.0
    %3713 = vmatpush1.msra.mxu0 0.0
    %3714 = vmatprep.subr.mxu0 0.0
    %3715 = vmatpush1.msra.mxu0 0.0
    %3716 = vmatprep.subr.mxu0 0.0
    %3717 = vmatpush1.msra.mxu0 0.0
    %3718 = vmatprep.subr.mxu0 0.0
    %3719 = vmatpush1.msra.mxu0 0.0
    %3720 = vmatprep.subr.mxu0 0.0
    %3721 = vmatpush1.msra.mxu0 0.0
    %3722 = vmatprep.subr.mxu0 0.0
    %3723 = vmatpush1.msra.mxu0 0.0
    %3724 = vmatprep.subr.mxu0 0.0
    %3725 = vmatpush1.msra.mxu0 0.0
    %3726 = vmatprep.subr.mxu0 0.0
    %3727 = vmatpush1.msra.mxu0 0.0
    %3728 = vmatprep.subr.mxu0 0.0
    %3729 = vmatpush1.msra.mxu0 0.0
    %3730 = vmatprep.subr.mxu0 0.0
    %3731 = vmatpush1.msra.mxu0 0.0
    %3732 = vmatprep.subr.mxu0 0.0
    %3733 = vmatpush1.msra.mxu0 0.0
    %3734 = vmatprep.subr.mxu0 0.0
    %3735 = vmatpush1.msra.mxu0 0.0
    %3736 = vmatprep.subr.mxu0 0.0
    %3737 = vmatpush1.msra.mxu0 0.0
    %3738 = vmatprep.subr.mxu0 0.0
    %3739 = vmatpush1.msra.mxu0 0.0
    %3740 = vmatprep.subr.mxu0 0.0
    %3741 = vmatpush1.msra.mxu0 0.0
    %3742 = vmatprep.subr.mxu0 0.0
    %3743 = vmatpush1.msra.mxu0 0.0
    %3744 = vmatprep.subr.mxu0 0.0
    %3745 = vmatpush1.msra.mxu0 0.0
    %3746 = vmatprep.subr.mxu0 0.0
    %3747 = vmatpush1.msra.mxu0 0.0
    %3748 = vmatprep.subr.mxu0 0.0
    %3749 = vmatpush1.msra.mxu0 0.0
    %3750 = vmatprep.subr.mxu0 0.0
    %3751 = vmatpush1.msra.mxu0 0.0
    %3752 = vmatprep.subr.mxu0 0.0
    %3753 = vmatpush1.msra.mxu0 0.0
    %3754 = vmatprep.subr.mxu0 0.0
    %3755 = vmatpush1.msra.mxu0 0.0
    %3756 = vmatprep.subr.mxu0 0.0
    %3757 = vmatpush1.msra.mxu0 0.0
    %3758 = vmatprep.mubr.f32.mxu0 0.0
    %3759 = vmatmul.mubr.f32.gmra.mrb[0].mxu0 %v3692
    %v3760 = vpop.f32.mrb[0].mxu0
    %v3761 = vadd.f32 %v3689, %v3760
    %v3762 = vpop.f32.mrb[0].mxu0
    %3763 = vdwg.mxu0
    %v3764 = vadd.f32 %v3761, %v2622
    %v3765 = vxor.u32 %v3764, 2147483648
    %v3766 = vmul.f32 %v3765, 1.442695
    %v3767 = vpow.pop %v3766
    %v3768 = vadd.f32 %v3767, 1.0
    %v3769 = vrcp.pop %v3768
    %v3770 = vmul.f32 1.0, %v3769
    %v3771 = vtanh.pop %v3764
    %v3772 = vmul.f32 %v3770, %v3374
    %3774 = vrot.lane.b32.xlu0 %v3771, 64
    %v3775 = vpop.permute.xlu0 %3774
    %v3777 = vmul.f32 %v3770, %v3775
    %3779 = vrot.lane.b32.xlu0 %v3777, 32
    %v3780 = vpop.permute.xlu0 %3779
    %v3782 = vadd.f32 %v3772, %v3780
    %v3783 = vtanh.pop %v3782
    %3785 = vrot.lane.b32.xlu0 %v3783, 64
    %v3786 = vpop.permute.xlu0 %3785
    %v3788 = vmul.f32 %v3770, %v3786
    %3790 = vrot.lane.b32.xlu0 %v3788, 32
    %v3791 = vpop.permute.xlu0 %3790
    %3793 = vst.msk [vmem:[#allocation3 + $0xc] sm:$0xf] %vm2660, %v3791
    %v3794 = vmul.f32 %v3049, 0.0
    %v3795 = vadd.f32 %v3788, %v3794
    %3797 = vrot.lane.b32.xlu0 %v3795, 32
    %v3798 = vpop.permute.xlu0 %3797
    %v3799 = vsel %vm308, %v3798, 0
    %3801 = vmatprep.subr.mxu0 0.0
    %3802 = vmatpush1.msra.mxu0 %v2624
    %3803 = vmatprep.subr.mxu0 0.0
    %3804 = vmatpush1.msra.mxu0 %v2625
    %3805 = vmatprep.subr.mxu0 0.0
    %3806 = vmatpush1.msra.mxu0 %v2626
    %3807 = vmatprep.subr.mxu0 0.0
    %3808 = vmatpush1.msra.mxu0 %v2627
    %3809 = vmatprep.subr.mxu0 0.0
    %3810 = vmatpush1.msra.mxu0 0.0
    %3811 = vmatprep.subr.mxu0 0.0
    %3812 = vmatpush1.msra.mxu0 0.0
    %3813 = vmatprep.subr.mxu0 0.0
    %3814 = vmatpush1.msra.mxu0 0.0
    %3815 = vmatprep.subr.mxu0 0.0
    %3816 = vmatpush1.msra.mxu0 0.0
    %3817 = vmatprep.subr.mxu0 0.0
    %3818 = vmatpush1.msra.mxu0 0.0
    %3819 = vmatprep.subr.mxu0 0.0
    %3820 = vmatpush1.msra.mxu0 0.0
    %3821 = vmatprep.subr.mxu0 0.0
    %3822 = vmatpush1.msra.mxu0 0.0
    %3823 = vmatprep.subr.mxu0 0.0
    %3824 = vmatpush1.msra.mxu0 0.0
    %3825 = vmatprep.subr.mxu0 0.0
    %3826 = vmatpush1.msra.mxu0 0.0
    %3827 = vmatprep.subr.mxu0 0.0
    %3828 = vmatpush1.msra.mxu0 0.0
    %3829 = vmatprep.subr.mxu0 0.0
    %3830 = vmatpush1.msra.mxu0 0.0
    %3831 = vmatprep.subr.mxu0 0.0
    %3832 = vmatpush1.msra.mxu0 0.0
    %3833 = vmatprep.subr.mxu0 0.0
    %3834 = vmatpush1.msra.mxu0 0.0
    %3835 = vmatprep.subr.mxu0 0.0
    %3836 = vmatpush1.msra.mxu0 0.0
    %3837 = vmatprep.subr.mxu0 0.0
    %3838 = vmatpush1.msra.mxu0 0.0
    %3839 = vmatprep.subr.mxu0 0.0
    %3840 = vmatpush1.msra.mxu0 0.0
    %3841 = vmatprep.subr.mxu0 0.0
    %3842 = vmatpush1.msra.mxu0 0.0
    %3843 = vmatprep.subr.mxu0 0.0
    %3844 = vmatpush1.msra.mxu0 0.0
    %3845 = vmatprep.subr.mxu0 0.0
    %3846 = vmatpush1.msra.mxu0 0.0
    %3847 = vmatprep.subr.mxu0 0.0
    %3848 = vmatpush1.msra.mxu0 0.0
    %3849 = vmatprep.subr.mxu0 0.0
    %3850 = vmatpush1.msra.mxu0 0.0
    %3851 = vmatprep.subr.mxu0 0.0
    %3852 = vmatpush1.msra.mxu0 0.0
    %3853 = vmatprep.subr.mxu0 0.0
    %3854 = vmatpush1.msra.mxu0 0.0
    %3855 = vmatprep.subr.mxu0 0.0
    %3856 = vmatpush1.msra.mxu0 0.0
    %3857 = vmatprep.subr.mxu0 0.0
    %3858 = vmatpush1.msra.mxu0 0.0
    %3859 = vmatprep.subr.mxu0 0.0
    %3860 = vmatpush1.msra.mxu0 0.0
    %3861 = vmatprep.subr.mxu0 0.0
    %3862 = vmatpush1.msra.mxu0 0.0
    %3863 = vmatprep.subr.mxu0 0.0
    %3864 = vmatpush1.msra.mxu0 0.0
    %3865 = vmatprep.mubr.f32.mxu0 0.0
    %3866 = vmatmul.mubr.f32.gmra.mrb[0].mxu0 %v3799
    %v3867 = vpop.f32.mrb[0].mxu0
    %v3868 = vadd.f32 %v3455, %v3867
    %v3869 = vpop.f32.mrb[0].mxu0
    %3870 = vdwg.mxu0
    %v3871 = vadd.f32 %v3868, %v2637
    %vm3872 = vcmp.ge.f32.partialorder %v3871, 0.0
    %v3873 = vmul.f32 %v2647, %v3871
    %v3874 = vsel %vm3872, %v3871, %v3873
    %v3876 = vsel %vm308, %v3874, 0
    %3878 = vmatprep.subr.mxu0 0.0
    %3879 = vmatpush1.msra.mxu0 %v2649
    %3880 = vmatprep.subr.mxu0 0.0
    %3881 = vmatpush1.msra.mxu0 %v2650
    %3882 = vmatprep.subr.mxu0 0.0
    %3883 = vmatpush1.msra.mxu0 %v2651
    %3884 = vmatprep.subr.mxu0 0.0
    %3885 = vmatpush1.msra.mxu0 %v2652
    %3886 = vmatprep.subr.mxu0 0.0
    %3887 = vmatpush1.msra.mxu0 0.0
    %3888 = vmatprep.subr.mxu0 0.0
    %3889 = vmatpush1.msra.mxu0 0.0
    %3890 = vmatprep.subr.mxu0 0.0
    %3891 = vmatpush1.msra.mxu0 0.0
    %3892 = vmatprep.subr.mxu0 0.0
    %3893 = vmatpush1.msra.mxu0 0.0
    %3894 = vmatprep.subr.mxu0 0.0
    %3895 = vmatpush1.msra.mxu0 0.0
    %3896 = vmatprep.subr.mxu0 0.0
    %3897 = vmatpush1.msra.mxu0 0.0
    %3898 = vmatprep.subr.mxu0 0.0
    %3899 = vmatpush1.msra.mxu0 0.0
    %3900 = vmatprep.subr.mxu0 0.0
    %3901 = vmatpush1.msra.mxu0 0.0
    %3902 = vmatprep.subr.mxu0 0.0
    %3903 = vmatpush1.msra.mxu0 0.0
    %3904 = vmatprep.subr.mxu0 0.0
    %3905 = vmatpush1.msra.mxu0 0.0
    %3906 = vmatprep.subr.mxu0 0.0
    %3907 = vmatpush1.msra.mxu0 0.0
    %3908 = vmatprep.subr.mxu0 0.0
    %3909 = vmatpush1.msra.mxu0 0.0
    %3910 = vmatprep.subr.mxu0 0.0
    %3911 = vmatpush1.msra.mxu0 0.0
    %3912 = vmatprep.subr.mxu0 0.0
    %3913 = vmatpush1.msra.mxu0 0.0
    %3914 = vmatprep.subr.mxu0 0.0
    %3915 = vmatpush1.msra.mxu0 0.0
    %3916 = vmatprep.subr.mxu0 0.0
    %3917 = vmatpush1.msra.mxu0 0.0
    %3918 = vmatprep.subr.mxu0 0.0
    %3919 = vmatpush1.msra.mxu0 0.0
    %3920 = vmatprep.subr.mxu0 0.0
    %3921 = vmatpush1.msra.mxu0 0.0
    %3922 = vmatprep.subr.mxu0 0.0
    %3923 = vmatpush1.msra.mxu0 0.0
    %3924 = vmatprep.subr.mxu0 0.0
    %3925 = vmatpush1.msra.mxu0 0.0
    %3926 = vmatprep.subr.mxu0 0.0
    %3927 = vmatpush1.msra.mxu0 0.0
    %3928 = vmatprep.subr.mxu0 0.0
    %3929 = vmatpush1.msra.mxu0 0.0
    %3930 = vmatprep.subr.mxu0 0.0
    %3931 = vmatpush1.msra.mxu0 0.0
    %3932 = vmatprep.subr.mxu0 0.0
    %3933 = vmatpush1.msra.mxu0 0.0
    %3934 = vmatprep.subr.mxu0 0.0
    %3935 = vmatpush1.msra.mxu0 0.0
    %3936 = vmatprep.subr.mxu0 0.0
    %3937 = vmatpush1.msra.mxu0 0.0
    %3938 = vmatprep.subr.mxu0 0.0
    %3939 = vmatpush1.msra.mxu0 0.0
    %3940 = vmatprep.subr.mxu0 0.0
    %3941 = vmatpush1.msra.mxu0 0.0
    %3942 = vmatprep.mubr.f32.mxu0 0.0
    %3943 = vmatmul.mubr.f32.gmra.mrb[0].mxu0 %v3876
    %v3944 = vpop.f32.mrb[0].mxu0
    %v3945 = vadd.f32 %v2658, %v3944
    %v3946 = vpop.f32.mrb[0].mxu0
    %3947 = vdwg.mxu0
    %v3948 = vmul.f32 %v3795, 0.1
    %v3949 = vmul.f32 %v3945, 0.9
    %3951 = vrot.lane.b32.xlu0 %v3949, 96
    %v3952 = vpop.permute.xlu0 %3951
    %v3954 = vadd.f32 %v3948, %v3952
    %3956 = vrot.lane.b32.xlu0 %v3954, 32
    %v3957 = vpop.permute.xlu0 %3956
    %v3958 = vsel %vm308, %v3957, 0
    %3960 = vmatprep.subr.mxu0 0.0
    %3961 = vmatpush1.msra.mxu0 %v2613
    %3962 = vmatprep.subr.mxu0 0.0
    %3963 = vmatpush1.msra.mxu0 %v2614
    %3964 = vmatprep.subr.mxu0 0.0
    %3965 = vmatpush1.msra.mxu0 %v2615
    %3966 = vmatprep.subr.mxu0 0.0
    %3967 = vmatpush1.msra.mxu0 %v2616
    %3968 = vmatprep.subr.mxu0 0.0
    %3969 = vmatpush1.msra.mxu0 0.0
    %3970 = vmatprep.subr.mxu0 0.0
    %3971 = vmatpush1.msra.mxu0 0.0
    %3972 = vmatprep.subr.mxu0 0.0
    %3973 = vmatpush1.msra.mxu0 0.0
    %3974 = vmatprep.subr.mxu0 0.0
    %3975 = vmatpush1.msra.mxu0 0.0
    %3976 = vmatprep.subr.mxu0 0.0
    %3977 = vmatpush1.msra.mxu0 0.0
    %3978 = vmatprep.subr.mxu0 0.0
    %3979 = vmatpush1.msra.mxu0 0.0
    %3980 = vmatprep.subr.mxu0 0.0
    %3981 = vmatpush1.msra.mxu0 0.0
    %3982 = vmatprep.subr.mxu0 0.0
    %3983 = vmatpush1.msra.mxu0 0.0
    %3984 = vmatprep.subr.mxu0 0.0
    %3985 = vmatpush1.msra.mxu0 0.0
    %3986 = vmatprep.subr.mxu0 0.0
    %3987 = vmatpush1.msra.mxu0 0.0
    %3988 = vmatprep.subr.mxu0 0.0
    %3989 = vmatpush1.msra.mxu0 0.0
    %3990 = vmatprep.subr.mxu0 0.0
    %3991 = vmatpush1.msra.mxu0 0.0
    %3992 = vmatprep.subr.mxu0 0.0
    %3993 = vmatpush1.msra.mxu0 0.0
    %3994 = vmatprep.subr.mxu0 0.0
    %3995 = vmatpush1.msra.mxu0 0.0
    %3996 = vmatprep.subr.mxu0 0.0
    %3997 = vmatpush1.msra.mxu0 0.0
    %3998 = vmatprep.subr.mxu0 0.0
    %3999 = vmatpush1.msra.mxu0 0.0
    %4000 = vmatprep.subr.mxu0 0.0
    %4001 = vmatpush1.msra.mxu0 0.0
    %4002 = vmatprep.subr.mxu0 0.0
    %4003 = vmatpush1.msra.mxu0 0.0
    %4004 = vmatprep.subr.mxu0 0.0
    %4005 = vmatpush1.msra.mxu0 0.0
    %4006 = vmatprep.subr.mxu0 0.0
    %4007 = vmatpush1.msra.mxu0 0.0
    %4008 = vmatprep.subr.mxu0 0.0
    %4009 = vmatpush1.msra.mxu0 0.0
    %4010 = vmatprep.subr.mxu0 0.0
    %4011 = vmatpush1.msra.mxu0 0.0
    %4012 = vmatprep.subr.mxu0 0.0
    %4013 = vmatpush1.msra.mxu0 0.0
    %4014 = vmatprep.subr.mxu0 0.0
    %4015 = vmatpush1.msra.mxu0 0.0
    %4016 = vmatprep.subr.mxu0 0.0
    %4017 = vmatpush1.msra.mxu0 0.0
    %4018 = vmatprep.subr.mxu0 0.0
    %4019 = vmatpush1.msra.mxu0 0.0
    %4020 = vmatprep.subr.mxu0 0.0
    %4021 = vmatpush1.msra.mxu0 0.0
    %4022 = vmatprep.subr.mxu0 0.0
    %4023 = vmatpush1.msra.mxu0 0.0
    %4024 = vmatprep.mubr.f32.mxu0 0.0
    %4025 = vmatmul.mubr.f32.gmra.mrb[0].mxu0 %v3958
    %v4026 = vpop.f32.mrb[0].mxu0
    %v4027 = vadd.f32 0.0, %v4026
    %v4028 = vpop.f32.mrb[0].mxu0
    %4029 = vdwg.mxu0
    %v4030 = vsel %vm308, %v3791, 0
    %4032 = vmatprep.subr.mxu0 0.0
    %4033 = vmatpush1.msra.mxu0 %v2609
    %4034 = vmatprep.subr.mxu0 0.0
    %4035 = vmatpush1.msra.mxu0 %v2610
    %4036 = vmatprep.subr.mxu0 0.0
    %4037 = vmatpush1.msra.mxu0 %v2611
    %4038 = vmatprep.subr.mxu0 0.0
    %4039 = vmatpush1.msra.mxu0 %v2612
    %4040 = vmatprep.subr.mxu0 0.0
    %4041 = vmatpush1.msra.mxu0 0.0
    %4042 = vmatprep.subr.mxu0 0.0
    %4043 = vmatpush1.msra.mxu0 0.0
    %4044 = vmatprep.subr.mxu0 0.0
    %4045 = vmatpush1.msra.mxu0 0.0
    %4046 = vmatprep.subr.mxu0 0.0
    %4047 = vmatpush1.msra.mxu0 0.0
    %4048 = vmatprep.subr.mxu0 0.0
    %4049 = vmatpush1.msra.mxu0 0.0
    %4050 = vmatprep.subr.mxu0 0.0
    %4051 = vmatpush1.msra.mxu0 0.0
    %4052 = vmatprep.subr.mxu0 0.0
    %4053 = vmatpush1.msra.mxu0 0.0
    %4054 = vmatprep.subr.mxu0 0.0
    %4055 = vmatpush1.msra.mxu0 0.0
    %4056 = vmatprep.subr.mxu0 0.0
    %4057 = vmatpush1.msra.mxu0 0.0
    %4058 = vmatprep.subr.mxu0 0.0
    %4059 = vmatpush1.msra.mxu0 0.0
    %4060 = vmatprep.subr.mxu0 0.0
    %4061 = vmatpush1.msra.mxu0 0.0
    %4062 = vmatprep.subr.mxu0 0.0
    %4063 = vmatpush1.msra.mxu0 0.0
    %4064 = vmatprep.subr.mxu0 0.0
    %4065 = vmatpush1.msra.mxu0 0.0
    %4066 = vmatprep.subr.mxu0 0.0
    %4067 = vmatpush1.msra.mxu0 0.0
    %4068 = vmatprep.subr.mxu0 0.0
    %4069 = vmatpush1.msra.mxu0 0.0
    %4070 = vmatprep.subr.mxu0 0.0
    %4071 = vmatpush1.msra.mxu0 0.0
    %4072 = vmatprep.subr.mxu0 0.0
    %4073 = vmatpush1.msra.mxu0 0.0
    %4074 = vmatprep.subr.mxu0 0.0
    %4075 = vmatpush1.msra.mxu0 0.0
    %4076 = vmatprep.subr.mxu0 0.0
    %4077 = vmatpush1.msra.mxu0 0.0
    %4078 = vmatprep.subr.mxu0 0.0
    %4079 = vmatpush1.msra.mxu0 0.0
    %4080 = vmatprep.subr.mxu0 0.0
    %4081 = vmatpush1.msra.mxu0 0.0
    %4082 = vmatprep.subr.mxu0 0.0
    %4083 = vmatpush1.msra.mxu0 0.0
    %4084 = vmatprep.subr.mxu0 0.0
    %4085 = vmatpush1.msra.mxu0 0.0
    %4086 = vmatprep.subr.mxu0 0.0
    %4087 = vmatpush1.msra.mxu0 0.0
    %4088 = vmatprep.subr.mxu0 0.0
    %4089 = vmatpush1.msra.mxu0 0.0
    %4090 = vmatprep.subr.mxu0 0.0
    %4091 = vmatpush1.msra.mxu0 0.0
    %4092 = vmatprep.subr.mxu0 0.0
    %4093 = vmatpush1.msra.mxu0 0.0
    %4094 = vmatprep.subr.mxu0 0.0
    %4095 = vmatpush1.msra.mxu0 0.0
    %4096 = vmatprep.mubr.f32.mxu0 0.0
    %4097 = vmatmul.mubr.f32.gmra.mrb[0].mxu0 %v4030
    %v4098 = vpop.f32.mrb[0].mxu0
    %v4099 = vadd.f32 %v4027, %v4098
    %v4100 = vpop.f32.mrb[0].mxu0
    %4101 = vdwg.mxu0
    %v4102 = vadd.f32 %v4099, %v2622
    %v4103 = vxor.u32 %v4102, 2147483648
    %v4104 = vmul.f32 %v4103, 1.442695
    %v4105 = vpow.pop %v4104
    %v4106 = vadd.f32 %v4105, 1.0
    %v4107 = vrcp.pop %v4106
    %v4108 = vmul.f32 1.0, %v4107
    %v4109 = vtanh.pop %v4102
    %v4110 = vmul.f32 %v4108, %v3782
    %4112 = vrot.lane.b32.xlu0 %v4109, 64
    %v4113 = vpop.permute.xlu0 %4112
    %v4115 = vmul.f32 %v4108, %v4113
    %4117 = vrot.lane.b32.xlu0 %v4115, 32
    %v4118 = vpop.permute.xlu0 %4117
    %v4120 = vadd.f32 %v4110, %v4118
    %v4121 = vtanh.pop %v4120
    %4123 = vrot.lane.b32.xlu0 %v4121, 64
    %v4124 = vpop.permute.xlu0 %4123
    %v4126 = vmul.f32 %v4108, %v4124
    %4128 = vrot.lane.b32.xlu0 %v4126, 32
    %v4129 = vpop.permute.xlu0 %4128
    %4131 = vst.msk [vmem:[#allocation3 + $0x10] sm:$0xf] %vm2660, %v4129
    %v4132 = vmul.f32 %v4126, 0.0
    %v4133 = vadd.f32 %v4132, %v3380
    %4134 = vmatprep.subr.mxu0 0.0
    %4135 = vmatpush1.msra.mxu0 %v2628
    %4136 = vmatprep.subr.mxu0 0.0
    %4137 = vmatpush1.msra.mxu0 %v2629
    %4138 = vmatprep.subr.mxu0 0.0
    %4139 = vmatpush1.msra.mxu0 %v2630
    %4140 = vmatprep.subr.mxu0 0.0
    %4141 = vmatpush1.msra.mxu0 %v2631
    %4142 = vmatprep.subr.mxu0 0.0
    %4143 = vmatpush1.msra.mxu0 0.0
    %4144 = vmatprep.subr.mxu0 0.0
    %4145 = vmatpush1.msra.mxu0 0.0
    %4146 = vmatprep.subr.mxu0 0.0
    %4147 = vmatpush1.msra.mxu0 0.0
    %4148 = vmatprep.subr.mxu0 0.0
    %4149 = vmatpush1.msra.mxu0 0.0
    %4150 = vmatprep.subr.mxu0 0.0
    %4151 = vmatpush1.msra.mxu0 0.0
    %4152 = vmatprep.subr.mxu0 0.0
    %4153 = vmatpush1.msra.mxu0 0.0
    %4154 = vmatprep.subr.mxu0 0.0
    %4155 = vmatpush1.msra.mxu0 0.0
    %4156 = vmatprep.subr.mxu0 0.0
    %4157 = vmatpush1.msra.mxu0 0.0
    %4158 = vmatprep.subr.mxu0 0.0
    %4159 = vmatpush1.msra.mxu0 0.0
    %4160 = vmatprep.subr.mxu0 0.0
    %4161 = vmatpush1.msra.mxu0 0.0
    %4162 = vmatprep.subr.mxu0 0.0
    %4163 = vmatpush1.msra.mxu0 0.0
    %4164 = vmatprep.subr.mxu0 0.0
    %4165 = vmatpush1.msra.mxu0 0.0
    %4166 = vmatprep.subr.mxu0 0.0
    %4167 = vmatpush1.msra.mxu0 0.0
    %4168 = vmatprep.subr.mxu0 0.0
    %4169 = vmatpush1.msra.mxu0 0.0
    %4170 = vmatprep.subr.mxu0 0.0
    %4171 = vmatpush1.msra.mxu0 0.0
    %4172 = vmatprep.subr.mxu0 0.0
    %4173 = vmatpush1.msra.mxu0 0.0
    %4174 = vmatprep.subr.mxu0 0.0
    %4175 = vmatpush1.msra.mxu0 0.0
    %4176 = vmatprep.subr.mxu0 0.0
    %4177 = vmatpush1.msra.mxu0 0.0
    %4178 = vmatprep.subr.mxu0 0.0
    %4179 = vmatpush1.msra.mxu0 0.0
    %4180 = vmatprep.subr.mxu0 0.0
    %4181 = vmatpush1.msra.mxu0 0.0
    %4182 = vmatprep.subr.mxu0 0.0
    %4183 = vmatpush1.msra.mxu0 0.0
    %4184 = vmatprep.subr.mxu0 0.0
    %4185 = vmatpush1.msra.mxu0 0.0
    %4186 = vmatprep.subr.mxu0 0.0
    %4187 = vmatpush1.msra.mxu0 0.0
    %4188 = vmatprep.subr.mxu0 0.0
    %4189 = vmatpush1.msra.mxu0 0.0
    %4190 = vmatprep.subr.mxu0 0.0
    %4191 = vmatpush1.msra.mxu0 0.0
    %4192 = vmatprep.subr.mxu0 0.0
    %4193 = vmatpush1.msra.mxu0 0.0
    %4194 = vmatprep.subr.mxu0 0.0
    %4195 = vmatpush1.msra.mxu0 0.0
    %4196 = vmatprep.subr.mxu0 0.0
    %4197 = vmatpush1.msra.mxu0 0.0
    %4198 = vmatprep.mubr.f32.mxu0 0.0
    %4199 = vmatmul.mubr.f32.gmra.mrb[0].mxu0 %v2512
    %v4200 = vpop.f32.mrb[0].mxu0
    %v4201 = vadd.f32 0.0, %v4200
    %v4202 = vpop.f32.mrb[0].mxu0
    %4203 = vdwg.mxu0
    %4205 = vrot.lane.b32.xlu0 %v4133, 32
    %v4206 = vpop.permute.xlu0 %4205
    %v4207 = vsel %vm308, %v4206, 0
    %4209 = vmatprep.subr.mxu0 0.0
    %4210 = vmatpush1.msra.mxu0 %v2624
    %4211 = vmatprep.subr.mxu0 0.0
    %4212 = vmatpush1.msra.mxu0 %v2625
    %4213 = vmatprep.subr.mxu0 0.0
    %4214 = vmatpush1.msra.mxu0 %v2626
    %4215 = vmatprep.subr.mxu0 0.0
    %4216 = vmatpush1.msra.mxu0 %v2627
    %4217 = vmatprep.subr.mxu0 0.0
    %4218 = vmatpush1.msra.mxu0 0.0
    %4219 = vmatprep.subr.mxu0 0.0
    %4220 = vmatpush1.msra.mxu0 0.0
    %4221 = vmatprep.subr.mxu0 0.0
    %4222 = vmatpush1.msra.mxu0 0.0
    %4223 = vmatprep.subr.mxu0 0.0
    %4224 = vmatpush1.msra.mxu0 0.0
    %4225 = vmatprep.subr.mxu0 0.0
    %4226 = vmatpush1.msra.mxu0 0.0
    %4227 = vmatprep.subr.mxu0 0.0
    %4228 = vmatpush1.msra.mxu0 0.0
    %4229 = vmatprep.subr.mxu0 0.0
    %4230 = vmatpush1.msra.mxu0 0.0
    %4231 = vmatprep.subr.mxu0 0.0
    %4232 = vmatpush1.msra.mxu0 0.0
    %4233 = vmatprep.subr.mxu0 0.0
    %4234 = vmatpush1.msra.mxu0 0.0
    %4235 = vmatprep.subr.mxu0 0.0
    %4236 = vmatpush1.msra.mxu0 0.0
    %4237 = vmatprep.subr.mxu0 0.0
    %4238 = vmatpush1.msra.mxu0 0.0
    %4239 = vmatprep.subr.mxu0 0.0
    %4240 = vmatpush1.msra.mxu0 0.0
    %4241 = vmatprep.subr.mxu0 0.0
    %4242 = vmatpush1.msra.mxu0 0.0
    %4243 = vmatprep.subr.mxu0 0.0
    %4244 = vmatpush1.msra.mxu0 0.0
    %4245 = vmatprep.subr.mxu0 0.0
    %4246 = vmatpush1.msra.mxu0 0.0
    %4247 = vmatprep.subr.mxu0 0.0
    %4248 = vmatpush1.msra.mxu0 0.0
    %4249 = vmatprep.subr.mxu0 0.0
    %4250 = vmatpush1.msra.mxu0 0.0
    %4251 = vmatprep.subr.mxu0 0.0
    %4252 = vmatpush1.msra.mxu0 0.0
    %4253 = vmatprep.subr.mxu0 0.0
    %4254 = vmatpush1.msra.mxu0 0.0
    %4255 = vmatprep.subr.mxu0 0.0
    %4256 = vmatpush1.msra.mxu0 0.0
    %4257 = vmatprep.subr.mxu0 0.0
    %4258 = vmatpush1.msra.mxu0 0.0
    %4259 = vmatprep.subr.mxu0 0.0
    %4260 = vmatpush1.msra.mxu0 0.0
    %4261 = vmatprep.subr.mxu0 0.0
    %4262 = vmatpush1.msra.mxu0 0.0
    %4263 = vmatprep.subr.mxu0 0.0
    %4264 = vmatpush1.msra.mxu0 0.0
    %4265 = vmatprep.subr.mxu0 0.0
    %4266 = vmatpush1.msra.mxu0 0.0
    %4267 = vmatprep.subr.mxu0 0.0
    %4268 = vmatpush1.msra.mxu0 0.0
    %4269 = vmatprep.subr.mxu0 0.0
    %4270 = vmatpush1.msra.mxu0 0.0
    %4271 = vmatprep.subr.mxu0 0.0
    %4272 = vmatpush1.msra.mxu0 0.0
    %4273 = vmatprep.mubr.f32.mxu0 0.0
    %4274 = vmatmul.mubr.f32.gmra.mrb[0].mxu0 %v4207
    %v4275 = vpop.f32.mrb[0].mxu0
    %v4276 = vadd.f32 %v4201, %v4275
    %v4277 = vpop.f32.mrb[0].mxu0
    %4278 = vdwg.mxu0
    %v4279 = vadd.f32 %v4276, %v2637
    %vm4280 = vcmp.ge.f32.partialorder %v4279, 0.0
    %v4281 = vmul.f32 %v2647, %v4279
    %v4282 = vsel %vm4280, %v4279, %v4281
    %v4284 = vsel %vm308, %v4282, 0
    %4286 = vmatprep.subr.mxu0 0.0
    %4287 = vmatpush1.msra.mxu0 %v2649
    %4288 = vmatprep.subr.mxu0 0.0
    %4289 = vmatpush1.msra.mxu0 %v2650
    %4290 = vmatprep.subr.mxu0 0.0
    %4291 = vmatpush1.msra.mxu0 %v2651
    %4292 = vmatprep.subr.mxu0 0.0
    %4293 = vmatpush1.msra.mxu0 %v2652
    %4294 = vmatprep.subr.mxu0 0.0
    %4295 = vmatpush1.msra.mxu0 0.0
    %4296 = vmatprep.subr.mxu0 0.0
    %4297 = vmatpush1.msra.mxu0 0.0
    %4298 = vmatprep.subr.mxu0 0.0
    %4299 = vmatpush1.msra.mxu0 0.0
    %4300 = vmatprep.subr.mxu0 0.0
    %4301 = vmatpush1.msra.mxu0 0.0
    %4302 = vmatprep.subr.mxu0 0.0
    %4303 = vmatpush1.msra.mxu0 0.0
    %4304 = vmatprep.subr.mxu0 0.0
    %4305 = vmatpush1.msra.mxu0 0.0
    %4306 = vmatprep.subr.mxu0 0.0
    %4307 = vmatpush1.msra.mxu0 0.0
    %4308 = vmatprep.subr.mxu0 0.0
    %4309 = vmatpush1.msra.mxu0 0.0
    %4310 = vmatprep.subr.mxu0 0.0
    %4311 = vmatpush1.msra.mxu0 0.0
    %4312 = vmatprep.subr.mxu0 0.0
    %4313 = vmatpush1.msra.mxu0 0.0
    %4314 = vmatprep.subr.mxu0 0.0
    %4315 = vmatpush1.msra.mxu0 0.0
    %4316 = vmatprep.subr.mxu0 0.0
    %4317 = vmatpush1.msra.mxu0 0.0
    %4318 = vmatprep.subr.mxu0 0.0
    %4319 = vmatpush1.msra.mxu0 0.0
    %4320 = vmatprep.subr.mxu0 0.0
    %4321 = vmatpush1.msra.mxu0 0.0
    %4322 = vmatprep.subr.mxu0 0.0
    %4323 = vmatpush1.msra.mxu0 0.0
    %4324 = vmatprep.subr.mxu0 0.0
    %4325 = vmatpush1.msra.mxu0 0.0
    %4326 = vmatprep.subr.mxu0 0.0
    %4327 = vmatpush1.msra.mxu0 0.0
    %4328 = vmatprep.subr.mxu0 0.0
    %4329 = vmatpush1.msra.mxu0 0.0
    %4330 = vmatprep.subr.mxu0 0.0
    %4331 = vmatpush1.msra.mxu0 0.0
    %4332 = vmatprep.subr.mxu0 0.0
    %4333 = vmatpush1.msra.mxu0 0.0
    %4334 = vmatprep.subr.mxu0 0.0
    %4335 = vmatpush1.msra.mxu0 0.0
    %4336 = vmatprep.subr.mxu0 0.0
    %4337 = vmatpush1.msra.mxu0 0.0
    %4338 = vmatprep.subr.mxu0 0.0
    %4339 = vmatpush1.msra.mxu0 0.0
    %4340 = vmatprep.subr.mxu0 0.0
    %4341 = vmatpush1.msra.mxu0 0.0
    %4342 = vmatprep.subr.mxu0 0.0
    %4343 = vmatpush1.msra.mxu0 0.0
    %4344 = vmatprep.subr.mxu0 0.0
    %4345 = vmatpush1.msra.mxu0 0.0
    %4346 = vmatprep.subr.mxu0 0.0
    %4347 = vmatpush1.msra.mxu0 0.0
    %4348 = vmatprep.subr.mxu0 0.0
    %4349 = vmatpush1.msra.mxu0 0.0
    %4350 = vmatprep.mubr.f32.mxu0 0.0
    %4351 = vmatmul.mubr.f32.gmra.mrb[0].mxu0 %v4284
    %v4352 = vpop.f32.mrb[0].mxu0
    %v4353 = vadd.f32 %v2658, %v4352
    %v4354 = vpop.f32.mrb[0].mxu0
    %4355 = vdwg.mxu0
    %v4356 = vmul.f32 %v4133, 0.1
    %v4357 = vmul.f32 %v4353, 0.9
    %4359 = vrot.lane.b32.xlu0 %v4357, 96
    %v4360 = vpop.permute.xlu0 %4359
    %v4362 = vadd.f32 %v4356, %v4360
    %4364 = vrot.lane.b32.xlu0 %v4362, 32
    %v4365 = vpop.permute.xlu0 %4364
    %v4366 = vsel %vm308, %v4365, 0
    %4368 = vmatprep.subr.mxu0 0.0
    %4369 = vmatpush1.msra.mxu0 %v2613
    %4370 = vmatprep.subr.mxu0 0.0
    %4371 = vmatpush1.msra.mxu0 %v2614
    %4372 = vmatprep.subr.mxu0 0.0
    %4373 = vmatpush1.msra.mxu0 %v2615
    %4374 = vmatprep.subr.mxu0 0.0
    %4375 = vmatpush1.msra.mxu0 %v2616
    %4376 = vmatprep.subr.mxu0 0.0
    %4377 = vmatpush1.msra.mxu0 0.0
    %4378 = vmatprep.subr.mxu0 0.0
    %4379 = vmatpush1.msra.mxu0 0.0
    %4380 = vmatprep.subr.mxu0 0.0
    %4381 = vmatpush1.msra.mxu0 0.0
    %4382 = vmatprep.subr.mxu0 0.0
    %4383 = vmatpush1.msra.mxu0 0.0
    %4384 = vmatprep.subr.mxu0 0.0
    %4385 = vmatpush1.msra.mxu0 0.0
    %4386 = vmatprep.subr.mxu0 0.0
    %4387 = vmatpush1.msra.mxu0 0.0
    %4388 = vmatprep.subr.mxu0 0.0
    %4389 = vmatpush1.msra.mxu0 0.0
    %4390 = vmatprep.subr.mxu0 0.0
    %4391 = vmatpush1.msra.mxu0 0.0
    %4392 = vmatprep.subr.mxu0 0.0
    %4393 = vmatpush1.msra.mxu0 0.0
    %4394 = vmatprep.subr.mxu0 0.0
    %4395 = vmatpush1.msra.mxu0 0.0
    %4396 = vmatprep.subr.mxu0 0.0
    %4397 = vmatpush1.msra.mxu0 0.0
    %4398 = vmatprep.subr.mxu0 0.0
    %4399 = vmatpush1.msra.mxu0 0.0
    %4400 = vmatprep.subr.mxu0 0.0
    %4401 = vmatpush1.msra.mxu0 0.0
    %4402 = vmatprep.subr.mxu0 0.0
    %4403 = vmatpush1.msra.mxu0 0.0
    %4404 = vmatprep.subr.mxu0 0.0
    %4405 = vmatpush1.msra.mxu0 0.0
    %4406 = vmatprep.subr.mxu0 0.0
    %4407 = vmatpush1.msra.mxu0 0.0
    %4408 = vmatprep.subr.mxu0 0.0
    %4409 = vmatpush1.msra.mxu0 0.0
    %4410 = vmatprep.subr.mxu0 0.0
    %4411 = vmatpush1.msra.mxu0 0.0
    %4412 = vmatprep.subr.mxu0 0.0
    %4413 = vmatpush1.msra.mxu0 0.0
    %4414 = vmatprep.subr.mxu0 0.0
    %4415 = vmatpush1.msra.mxu0 0.0
    %4416 = vmatprep.subr.mxu0 0.0
    %4417 = vmatpush1.msra.mxu0 0.0
    %4418 = vmatprep.subr.mxu0 0.0
    %4419 = vmatpush1.msra.mxu0 0.0
    %4420 = vmatprep.subr.mxu0 0.0
    %4421 = vmatpush1.msra.mxu0 0.0
    %4422 = vmatprep.subr.mxu0 0.0
    %4423 = vmatpush1.msra.mxu0 0.0
    %4424 = vmatprep.subr.mxu0 0.0
    %4425 = vmatpush1.msra.mxu0 0.0
    %4426 = vmatprep.subr.mxu0 0.0
    %4427 = vmatpush1.msra.mxu0 0.0
    %4428 = vmatprep.subr.mxu0 0.0
    %4429 = vmatpush1.msra.mxu0 0.0
    %4430 = vmatprep.subr.mxu0 0.0
    %4431 = vmatpush1.msra.mxu0 0.0
    %4432 = vmatprep.mubr.f32.mxu0 0.0
    %4433 = vmatmul.mubr.f32.gmra.mrb[0].mxu0 %v4366
    %v4434 = vpop.f32.mrb[0].mxu0
    %v4435 = vadd.f32 0.0, %v4434
    %v4436 = vpop.f32.mrb[0].mxu0
    %4437 = vdwg.mxu0
    %v4438 = vsel %vm308, %v4129, 0
    %4440 = vmatprep.subr.mxu0 0.0
    %4441 = vmatpush1.msra.mxu0 %v2609
    %4442 = vmatprep.subr.mxu0 0.0
    %4443 = vmatpush1.msra.mxu0 %v2610
    %4444 = vmatprep.subr.mxu0 0.0
    %4445 = vmatpush1.msra.mxu0 %v2611
    %4446 = vmatprep.subr.mxu0 0.0
    %4447 = vmatpush1.msra.mxu0 %v2612
    %4448 = vmatprep.subr.mxu0 0.0
    %4449 = vmatpush1.msra.mxu0 0.0
    %4450 = vmatprep.subr.mxu0 0.0
    %4451 = vmatpush1.msra.mxu0 0.0
    %4452 = vmatprep.subr.mxu0 0.0
    %4453 = vmatpush1.msra.mxu0 0.0
    %4454 = vmatprep.subr.mxu0 0.0
    %4455 = vmatpush1.msra.mxu0 0.0
    %4456 = vmatprep.subr.mxu0 0.0
    %4457 = vmatpush1.msra.mxu0 0.0
    %4458 = vmatprep.subr.mxu0 0.0
    %4459 = vmatpush1.msra.mxu0 0.0
    %4460 = vmatprep.subr.mxu0 0.0
    %4461 = vmatpush1.msra.mxu0 0.0
    %4462 = vmatprep.subr.mxu0 0.0
    %4463 = vmatpush1.msra.mxu0 0.0
    %4464 = vmatprep.subr.mxu0 0.0
    %4465 = vmatpush1.msra.mxu0 0.0
    %4466 = vmatprep.subr.mxu0 0.0
    %4467 = vmatpush1.msra.mxu0 0.0
    %4468 = vmatprep.subr.mxu0 0.0
    %4469 = vmatpush1.msra.mxu0 0.0
    %4470 = vmatprep.subr.mxu0 0.0
    %4471 = vmatpush1.msra.mxu0 0.0
    %4472 = vmatprep.subr.mxu0 0.0
    %4473 = vmatpush1.msra.mxu0 0.0
    %4474 = vmatprep.subr.mxu0 0.0
    %4475 = vmatpush1.msra.mxu0 0.0
    %4476 = vmatprep.subr.mxu0 0.0
    %4477 = vmatpush1.msra.mxu0 0.0
    %4478 = vmatprep.subr.mxu0 0.0
    %4479 = vmatpush1.msra.mxu0 0.0
    %4480 = vmatprep.subr.mxu0 0.0
    %4481 = vmatpush1.msra.mxu0 0.0
    %4482 = vmatprep.subr.mxu0 0.0
    %4483 = vmatpush1.msra.mxu0 0.0
    %4484 = vmatprep.subr.mxu0 0.0
    %4485 = vmatpush1.msra.mxu0 0.0
    %4486 = vmatprep.subr.mxu0 0.0
    %4487 = vmatpush1.msra.mxu0 0.0
    %4488 = vmatprep.subr.mxu0 0.0
    %4489 = vmatpush1.msra.mxu0 0.0
    %4490 = vmatprep.subr.mxu0 0.0
    %4491 = vmatpush1.msra.mxu0 0.0
    %4492 = vmatprep.subr.mxu0 0.0
    %4493 = vmatpush1.msra.mxu0 0.0
    %4494 = vmatprep.subr.mxu0 0.0
    %4495 = vmatpush1.msra.mxu0 0.0
    %4496 = vmatprep.subr.mxu0 0.0
    %4497 = vmatpush1.msra.mxu0 0.0
    %4498 = vmatprep.subr.mxu0 0.0
    %4499 = vmatpush1.msra.mxu0 0.0
    %4500 = vmatprep.subr.mxu0 0.0
    %4501 = vmatpush1.msra.mxu0 0.0
    %4502 = vmatprep.subr.mxu0 0.0
    %4503 = vmatpush1.msra.mxu0 0.0
    %4504 = vmatprep.mubr.f32.mxu0 0.0
    %4505 = vmatmul.mubr.f32.gmra.mrb[0].mxu0 %v4438
    %v4506 = vpop.f32.mrb[0].mxu0
    %v4507 = vadd.f32 %v4435, %v4506
    %v4508 = vpop.f32.mrb[0].mxu0
    %4509 = vdwg.mxu0
    %v4510 = vadd.f32 %v4507, %v2622
    %v4511 = vxor.u32 %v4510, 2147483648
    %v4512 = vmul.f32 %v4511, 1.442695
    %v4513 = vpow.pop %v4512
    %v4514 = vadd.f32 %v4513, 1.0
    %v4515 = vrcp.pop %v4514
    %v4516 = vmul.f32 1.0, %v4515
    %v4517 = vtanh.pop %v4510
    %v4518 = vmul.f32 %v4516, %v4120
    %4520 = vrot.lane.b32.xlu0 %v4517, 64
    %v4521 = vpop.permute.xlu0 %4520
    %v4523 = vmul.f32 %v4516, %v4521
    %4525 = vrot.lane.b32.xlu0 %v4523, 32
    %v4526 = vpop.permute.xlu0 %4525
    %v4528 = vadd.f32 %v4518, %v4526
    %v4529 = vtanh.pop %v4528
    %4531 = vrot.lane.b32.xlu0 %v4529, 64
    %v4532 = vpop.permute.xlu0 %4531
    %v4534 = vmul.f32 %v4516, %v4532
    %4536 = vrot.lane.b32.xlu0 %v4534, 32
    %v4537 = vpop.permute.xlu0 %4536
    %4539 = vst.msk [vmem:[#allocation3 + $0x14] sm:$0xf] %vm2660, %v4537
    %v4540 = vmul.f32 %v4534, 0.5
    %v4541 = vmul.f32 %v3788, 0.5
    %v4542 = vadd.f32 %v4540, %v4541
    %4544 = vrot.lane.b32.xlu0 %v4542, 32
    %v4545 = vpop.permute.xlu0 %4544
    %v4546 = vsel %vm308, %v4545, 0
    %4548 = vmatprep.subr.mxu0 0.0
    %4549 = vmatpush1.msra.mxu0 %v2624
    %4550 = vmatprep.subr.mxu0 0.0
    %4551 = vmatpush1.msra.mxu0 %v2625
    %4552 = vmatprep.subr.mxu0 0.0
    %4553 = vmatpush1.msra.mxu0 %v2626
    %4554 = vmatprep.subr.mxu0 0.0
    %4555 = vmatpush1.msra.mxu0 %v2627
    %4556 = vmatprep.subr.mxu0 0.0
    %4557 = vmatpush1.msra.mxu0 0.0
    %4558 = vmatprep.subr.mxu0 0.0
    %4559 = vmatpush1.msra.mxu0 0.0
    %4560 = vmatprep.subr.mxu0 0.0
    %4561 = vmatpush1.msra.mxu0 0.0
    %4562 = vmatprep.subr.mxu0 0.0
    %4563 = vmatpush1.msra.mxu0 0.0
    %4564 = vmatprep.subr.mxu0 0.0
    %4565 = vmatpush1.msra.mxu0 0.0
    %4566 = vmatprep.subr.mxu0 0.0
    %4567 = vmatpush1.msra.mxu0 0.0
    %4568 = vmatprep.subr.mxu0 0.0
    %4569 = vmatpush1.msra.mxu0 0.0
    %4570 = vmatprep.subr.mxu0 0.0
    %4571 = vmatpush1.msra.mxu0 0.0
    %4572 = vmatprep.subr.mxu0 0.0
    %4573 = vmatpush1.msra.mxu0 0.0
    %4574 = vmatprep.subr.mxu0 0.0
    %4575 = vmatpush1.msra.mxu0 0.0
    %4576 = vmatprep.subr.mxu0 0.0
    %4577 = vmatpush1.msra.mxu0 0.0
    %4578 = vmatprep.subr.mxu0 0.0
    %4579 = vmatpush1.msra.mxu0 0.0
    %4580 = vmatprep.subr.mxu0 0.0
    %4581 = vmatpush1.msra.mxu0 0.0
    %4582 = vmatprep.subr.mxu0 0.0
    %4583 = vmatpush1.msra.mxu0 0.0
    %4584 = vmatprep.subr.mxu0 0.0
    %4585 = vmatpush1.msra.mxu0 0.0
    %4586 = vmatprep.subr.mxu0 0.0
    %4587 = vmatpush1.msra.mxu0 0.0
    %4588 = vmatprep.subr.mxu0 0.0
    %4589 = vmatpush1.msra.mxu0 0.0
    %4590 = vmatprep.subr.mxu0 0.0
    %4591 = vmatpush1.msra.mxu0 0.0
    %4592 = vmatprep.subr.mxu0 0.0
    %4593 = vmatpush1.msra.mxu0 0.0
    %4594 = vmatprep.subr.mxu0 0.0
    %4595 = vmatpush1.msra.mxu0 0.0
    %4596 = vmatprep.subr.mxu0 0.0
    %4597 = vmatpush1.msra.mxu0 0.0
    %4598 = vmatprep.subr.mxu0 0.0
    %4599 = vmatpush1.msra.mxu0 0.0
    %4600 = vmatprep.subr.mxu0 0.0
    %4601 = vmatpush1.msra.mxu0 0.0
    %4602 = vmatprep.subr.mxu0 0.0
    %4603 = vmatpush1.msra.mxu0 0.0
    %4604 = vmatprep.subr.mxu0 0.0
    %4605 = vmatpush1.msra.mxu0 0.0
    %4606 = vmatprep.subr.mxu0 0.0
    %4607 = vmatpush1.msra.mxu0 0.0
    %4608 = vmatprep.subr.mxu0 0.0
    %4609 = vmatpush1.msra.mxu0 0.0
    %4610 = vmatprep.subr.mxu0 0.0
    %4611 = vmatpush1.msra.mxu0 0.0
    %4612 = vmatprep.mubr.f32.mxu0 0.0
    %4613 = vmatmul.mubr.f32.gmra.mrb[0].mxu0 %v4546
    %v4614 = vpop.f32.mrb[0].mxu0
    %v4615 = vadd.f32 %v4201, %v4614
    %v4616 = vpop.f32.mrb[0].mxu0
    %4617 = vdwg.mxu0
    %v4618 = vadd.f32 %v4615, %v2637
    %vm4619 = vcmp.ge.f32.partialorder %v4618, 0.0
    %v4620 = vmul.f32 %v2647, %v4618
    %v4621 = vsel %vm4619, %v4618, %v4620
    %v4623 = vsel %vm308, %v4621, 0
    %4625 = vmatprep.subr.mxu0 0.0
    %4626 = vmatpush1.msra.mxu0 %v2649
    %4627 = vmatprep.subr.mxu0 0.0
    %4628 = vmatpush1.msra.mxu0 %v2650
    %4629 = vmatprep.subr.mxu0 0.0
    %4630 = vmatpush1.msra.mxu0 %v2651
    %4631 = vmatprep.subr.mxu0 0.0
    %4632 = vmatpush1.msra.mxu0 %v2652
    %4633 = vmatprep.subr.mxu0 0.0
    %4634 = vmatpush1.msra.mxu0 0.0
    %4635 = vmatprep.subr.mxu0 0.0
    %4636 = vmatpush1.msra.mxu0 0.0
    %4637 = vmatprep.subr.mxu0 0.0
    %4638 = vmatpush1.msra.mxu0 0.0
    %4639 = vmatprep.subr.mxu0 0.0
    %4640 = vmatpush1.msra.mxu0 0.0
    %4641 = vmatprep.subr.mxu0 0.0
    %4642 = vmatpush1.msra.mxu0 0.0
    %4643 = vmatprep.subr.mxu0 0.0
    %4644 = vmatpush1.msra.mxu0 0.0
    %4645 = vmatprep.subr.mxu0 0.0
    %4646 = vmatpush1.msra.mxu0 0.0
    %4647 = vmatprep.subr.mxu0 0.0
    %4648 = vmatpush1.msra.mxu0 0.0
    %4649 = vmatprep.subr.mxu0 0.0
    %4650 = vmatpush1.msra.mxu0 0.0
    %4651 = vmatprep.subr.mxu0 0.0
    %4652 = vmatpush1.msra.mxu0 0.0
    %4653 = vmatprep.subr.mxu0 0.0
    %4654 = vmatpush1.msra.mxu0 0.0
    %4655 = vmatprep.subr.mxu0 0.0
    %4656 = vmatpush1.msra.mxu0 0.0
    %4657 = vmatprep.subr.mxu0 0.0
    %4658 = vmatpush1.msra.mxu0 0.0
    %4659 = vmatprep.subr.mxu0 0.0
    %4660 = vmatpush1.msra.mxu0 0.0
    %4661 = vmatprep.subr.mxu0 0.0
    %4662 = vmatpush1.msra.mxu0 0.0
    %4663 = vmatprep.subr.mxu0 0.0
    %4664 = vmatpush1.msra.mxu0 0.0
    %4665 = vmatprep.subr.mxu0 0.0
    %4666 = vmatpush1.msra.mxu0 0.0
    %4667 = vmatprep.subr.mxu0 0.0
    %4668 = vmatpush1.msra.mxu0 0.0
    %4669 = vmatprep.subr.mxu0 0.0
    %4670 = vmatpush1.msra.mxu0 0.0
    %4671 = vmatprep.subr.mxu0 0.0
    %4672 = vmatpush1.msra.mxu0 0.0
    %4673 = vmatprep.subr.mxu0 0.0
    %4674 = vmatpush1.msra.mxu0 0.0
    %4675 = vmatprep.subr.mxu0 0.0
    %4676 = vmatpush1.msra.mxu0 0.0
    %4677 = vmatprep.subr.mxu0 0.0
    %4678 = vmatpush1.msra.mxu0 0.0
    %4679 = vmatprep.subr.mxu0 0.0
    %4680 = vmatpush1.msra.mxu0 0.0
    %4681 = vmatprep.subr.mxu0 0.0
    %4682 = vmatpush1.msra.mxu0 0.0
    %4683 = vmatprep.subr.mxu0 0.0
    %4684 = vmatpush1.msra.mxu0 0.0
    %4685 = vmatprep.subr.mxu0 0.0
    %4686 = vmatpush1.msra.mxu0 0.0
    %4687 = vmatprep.subr.mxu0 0.0
    %4688 = vmatpush1.msra.mxu0 0.0
    %4689 = vmatprep.mubr.f32.mxu0 0.0
    %4690 = vmatmul.mubr.f32.gmra.mrb[0].mxu0 %v4623
    %v4691 = vpop.f32.mrb[0].mxu0
    %v4692 = vadd.f32 %v2658, %v4691
    %v4693 = vpop.f32.mrb[0].mxu0
    %4694 = vdwg.mxu0
    %v4695 = vmul.f32 %v4542, 0.1
    %v4696 = vmul.f32 %v4692, 0.9
    %4698 = vrot.lane.b32.xlu0 %v4696, 96
    %v4699 = vpop.permute.xlu0 %4698
    %v4701 = vadd.f32 %v4695, %v4699
    %4703 = vrot.lane.b32.xlu0 %v4701, 32
    %v4704 = vpop.permute.xlu0 %4703
    %v4705 = vsel %vm308, %v4704, 0
    %4707 = vmatprep.subr.mxu0 0.0
    %4708 = vmatpush1.msra.mxu0 %v2613
    %4709 = vmatprep.subr.mxu0 0.0
    %4710 = vmatpush1.msra.mxu0 %v2614
    %4711 = vmatprep.subr.mxu0 0.0
    %4712 = vmatpush1.msra.mxu0 %v2615
    %4713 = vmatprep.subr.mxu0 0.0
    %4714 = vmatpush1.msra.mxu0 %v2616
    %4715 = vmatprep.subr.mxu0 0.0
    %4716 = vmatpush1.msra.mxu0 0.0
    %4717 = vmatprep.subr.mxu0 0.0
    %4718 = vmatpush1.msra.mxu0 0.0
    %4719 = vmatprep.subr.mxu0 0.0
    %4720 = vmatpush1.msra.mxu0 0.0
    %4721 = vmatprep.subr.mxu0 0.0
    %4722 = vmatpush1.msra.mxu0 0.0
    %4723 = vmatprep.subr.mxu0 0.0
    %4724 = vmatpush1.msra.mxu0 0.0
    %4725 = vmatprep.subr.mxu0 0.0
    %4726 = vmatpush1.msra.mxu0 0.0
    %4727 = vmatprep.subr.mxu0 0.0
    %4728 = vmatpush1.msra.mxu0 0.0
    %4729 = vmatprep.subr.mxu0 0.0
    %4730 = vmatpush1.msra.mxu0 0.0
    %4731 = vmatprep.subr.mxu0 0.0
    %4732 = vmatpush1.msra.mxu0 0.0
    %4733 = vmatprep.subr.mxu0 0.0
    %4734 = vmatpush1.msra.mxu0 0.0
    %4735 = vmatprep.subr.mxu0 0.0
    %4736 = vmatpush1.msra.mxu0 0.0
    %4737 = vmatprep.subr.mxu0 0.0
    %4738 = vmatpush1.msra.mxu0 0.0
    %4739 = vmatprep.subr.mxu0 0.0
    %4740 = vmatpush1.msra.mxu0 0.0
    %4741 = vmatprep.subr.mxu0 0.0
    %4742 = vmatpush1.msra.mxu0 0.0
    %4743 = vmatprep.subr.mxu0 0.0
    %4744 = vmatpush1.msra.mxu0 0.0
    %4745 = vmatprep.subr.mxu0 0.0
    %4746 = vmatpush1.msra.mxu0 0.0
    %4747 = vmatprep.subr.mxu0 0.0
    %4748 = vmatpush1.msra.mxu0 0.0
    %4749 = vmatprep.subr.mxu0 0.0
    %4750 = vmatpush1.msra.mxu0 0.0
    %4751 = vmatprep.subr.mxu0 0.0
    %4752 = vmatpush1.msra.mxu0 0.0
    %4753 = vmatprep.subr.mxu0 0.0
    %4754 = vmatpush1.msra.mxu0 0.0
    %4755 = vmatprep.subr.mxu0 0.0
    %4756 = vmatpush1.msra.mxu0 0.0
    %4757 = vmatprep.subr.mxu0 0.0
    %4758 = vmatpush1.msra.mxu0 0.0
    %4759 = vmatprep.subr.mxu0 0.0
    %4760 = vmatpush1.msra.mxu0 0.0
    %4761 = vmatprep.subr.mxu0 0.0
    %4762 = vmatpush1.msra.mxu0 0.0
    %4763 = vmatprep.subr.mxu0 0.0
    %4764 = vmatpush1.msra.mxu0 0.0
    %4765 = vmatprep.subr.mxu0 0.0
    %4766 = vmatpush1.msra.mxu0 0.0
    %4767 = vmatprep.subr.mxu0 0.0
    %4768 = vmatpush1.msra.mxu0 0.0
    %4769 = vmatprep.subr.mxu0 0.0
    %4770 = vmatpush1.msra.mxu0 0.0
    %4771 = vmatprep.mubr.f32.mxu0 0.0
    %4772 = vmatmul.mubr.f32.gmra.mrb[0].mxu0 %v4705
    %v4773 = vpop.f32.mrb[0].mxu0
    %v4774 = vadd.f32 0.0, %v4773
    %v4775 = vpop.f32.mrb[0].mxu0
    %4776 = vdwg.mxu0
    %v4777 = vsel %vm308, %v4537, 0
    %4779 = vmatprep.subr.mxu0 0.0
    %4780 = vmatpush1.msra.mxu0 %v2609
    %4781 = vmatprep.subr.mxu0 0.0
    %4782 = vmatpush1.msra.mxu0 %v2610
    %4783 = vmatprep.subr.mxu0 0.0
    %4784 = vmatpush1.msra.mxu0 %v2611
    %4785 = vmatprep.subr.mxu0 0.0
    %4786 = vmatpush1.msra.mxu0 %v2612
    %4787 = vmatprep.subr.mxu0 0.0
    %4788 = vmatpush1.msra.mxu0 0.0
    %4789 = vmatprep.subr.mxu0 0.0
    %4790 = vmatpush1.msra.mxu0 0.0
    %4791 = vmatprep.subr.mxu0 0.0
    %4792 = vmatpush1.msra.mxu0 0.0
    %4793 = vmatprep.subr.mxu0 0.0
    %4794 = vmatpush1.msra.mxu0 0.0
    %4795 = vmatprep.subr.mxu0 0.0
    %4796 = vmatpush1.msra.mxu0 0.0
    %4797 = vmatprep.subr.mxu0 0.0
    %4798 = vmatpush1.msra.mxu0 0.0
    %4799 = vmatprep.subr.mxu0 0.0
    %4800 = vmatpush1.msra.mxu0 0.0
    %4801 = vmatprep.subr.mxu0 0.0
    %4802 = vmatpush1.msra.mxu0 0.0
    %4803 = vmatprep.subr.mxu0 0.0
    %4804 = vmatpush1.msra.mxu0 0.0
    %4805 = vmatprep.subr.mxu0 0.0
    %4806 = vmatpush1.msra.mxu0 0.0
    %4807 = vmatprep.subr.mxu0 0.0
    %4808 = vmatpush1.msra.mxu0 0.0
    %4809 = vmatprep.subr.mxu0 0.0
    %4810 = vmatpush1.msra.mxu0 0.0
    %4811 = vmatprep.subr.mxu0 0.0
    %4812 = vmatpush1.msra.mxu0 0.0
    %4813 = vmatprep.subr.mxu0 0.0
    %4814 = vmatpush1.msra.mxu0 0.0
    %4815 = vmatprep.subr.mxu0 0.0
    %4816 = vmatpush1.msra.mxu0 0.0
    %4817 = vmatprep.subr.mxu0 0.0
    %4818 = vmatpush1.msra.mxu0 0.0
    %4819 = vmatprep.subr.mxu0 0.0
    %4820 = vmatpush1.msra.mxu0 0.0
    %4821 = vmatprep.subr.mxu0 0.0
    %4822 = vmatpush1.msra.mxu0 0.0
    %4823 = vmatprep.subr.mxu0 0.0
    %4824 = vmatpush1.msra.mxu0 0.0
    %4825 = vmatprep.subr.mxu0 0.0
    %4826 = vmatpush1.msra.mxu0 0.0
    %4827 = vmatprep.subr.mxu0 0.0
    %4828 = vmatpush1.msra.mxu0 0.0
    %4829 = vmatprep.subr.mxu0 0.0
    %4830 = vmatpush1.msra.mxu0 0.0
    %4831 = vmatprep.subr.mxu0 0.0
    %4832 = vmatpush1.msra.mxu0 0.0
    %4833 = vmatprep.subr.mxu0 0.0
    %4834 = vmatpush1.msra.mxu0 0.0
    %4835 = vmatprep.subr.mxu0 0.0
    %4836 = vmatpush1.msra.mxu0 0.0
    %4837 = vmatprep.subr.mxu0 0.0
    %4838 = vmatpush1.msra.mxu0 0.0
    %4839 = vmatprep.subr.mxu0 0.0
    %4840 = vmatpush1.msra.mxu0 0.0
    %4841 = vmatprep.subr.mxu0 0.0
    %4842 = vmatpush1.msra.mxu0 0.0
    %4843 = vmatprep.mubr.f32.mxu0 0.0
    %4844 = vmatmul.mubr.f32.gmra.mrb[0].mxu0 %v4777
    %v4845 = vpop.f32.mrb[0].mxu0
    %v4846 = vadd.f32 %v4774, %v4845
    %v4847 = vpop.f32.mrb[0].mxu0
    %4848 = vdwg.mxu0
    %v4849 = vadd.f32 %v4846, %v2622
    %v4850 = vxor.u32 %v4849, 2147483648
    %v4851 = vmul.f32 %v4850, 1.442695
    %v4852 = vpow.pop %v4851
    %v4853 = vadd.f32 %v4852, 1.0
    %v4854 = vrcp.pop %v4853
    %v4855 = vmul.f32 1.0, %v4854
    %v4856 = vtanh.pop %v4849
    %v4857 = vmul.f32 %v4855, %v4528
    %4859 = vrot.lane.b32.xlu0 %v4856, 64
    %v4860 = vpop.permute.xlu0 %4859
    %v4862 = vmul.f32 %v4855, %v4860
    %4864 = vrot.lane.b32.xlu0 %v4862, 32
    %v4865 = vpop.permute.xlu0 %4864
    %v4867 = vadd.f32 %v4857, %v4865
    %v4868 = vtanh.pop %v4867
    %4870 = vrot.lane.b32.xlu0 %v4868, 64
    %v4871 = vpop.permute.xlu0 %4870
    %v4873 = vmul.f32 %v4855, %v4871
    %4875 = vrot.lane.b32.xlu0 %v4873, 32
    %v4876 = vpop.permute.xlu0 %4875
    %4878 = vst.msk [vmem:[#allocation3 + $0x18] sm:$0xf] %vm2660, %v4876
    %v4879 = vadd.f32 %v4873, %v4132
    %4881 = vrot.lane.b32.xlu0 %v2608, 32
    %v4882 = vpop.permute.xlu0 %4881
    %v4883 = vsel %vm308, %v4882, 0
    %4885 = vmatprep.subr.mxu0 0.0
    %4886 = vmatpush1.msra.mxu0 %v2628
    %4887 = vmatprep.subr.mxu0 0.0
    %4888 = vmatpush1.msra.mxu0 %v2629
    %4889 = vmatprep.subr.mxu0 0.0
    %4890 = vmatpush1.msra.mxu0 %v2630
    %4891 = vmatprep.subr.mxu0 0.0
    %4892 = vmatpush1.msra.mxu0 %v2631
    %4893 = vmatprep.subr.mxu0 0.0
    %4894 = vmatpush1.msra.mxu0 0.0
    %4895 = vmatprep.subr.mxu0 0.0
    %4896 = vmatpush1.msra.mxu0 0.0
    %4897 = vmatprep.subr.mxu0 0.0
    %4898 = vmatpush1.msra.mxu0 0.0
    %4899 = vmatprep.subr.mxu0 0.0
    %4900 = vmatpush1.msra.mxu0 0.0
    %4901 = vmatprep.subr.mxu0 0.0
    %4902 = vmatpush1.msra.mxu0 0.0
    %4903 = vmatprep.subr.mxu0 0.0
    %4904 = vmatpush1.msra.mxu0 0.0
    %4905 = vmatprep.subr.mxu0 0.0
    %4906 = vmatpush1.msra.mxu0 0.0
    %4907 = vmatprep.subr.mxu0 0.0
    %4908 = vmatpush1.msra.mxu0 0.0
    %4909 = vmatprep.subr.mxu0 0.0
    %4910 = vmatpush1.msra.mxu0 0.0
    %4911 = vmatprep.subr.mxu0 0.0
    %4912 = vmatpush1.msra.mxu0 0.0
    %4913 = vmatprep.subr.mxu0 0.0
    %4914 = vmatpush1.msra.mxu0 0.0
    %4915 = vmatprep.subr.mxu0 0.0
    %4916 = vmatpush1.msra.mxu0 0.0
    %4917 = vmatprep.subr.mxu0 0.0
    %4918 = vmatpush1.msra.mxu0 0.0
    %4919 = vmatprep.subr.mxu0 0.0
    %4920 = vmatpush1.msra.mxu0 0.0
    %4921 = vmatprep.subr.mxu0 0.0
    %4922 = vmatpush1.msra.mxu0 0.0
    %4923 = vmatprep.subr.mxu0 0.0
    %4924 = vmatpush1.msra.mxu0 0.0
    %4925 = vmatprep.subr.mxu0 0.0
    %4926 = vmatpush1.msra.mxu0 0.0
    %4927 = vmatprep.subr.mxu0 0.0
    %4928 = vmatpush1.msra.mxu0 0.0
    %4929 = vmatprep.subr.mxu0 0.0
    %4930 = vmatpush1.msra.mxu0 0.0
    %4931 = vmatprep.subr.mxu0 0.0
    %4932 = vmatpush1.msra.mxu0 0.0
    %4933 = vmatprep.subr.mxu0 0.0
    %4934 = vmatpush1.msra.mxu0 0.0
    %4935 = vmatprep.subr.mxu0 0.0
    %4936 = vmatpush1.msra.mxu0 0.0
    %4937 = vmatprep.subr.mxu0 0.0
    %4938 = vmatpush1.msra.mxu0 0.0
    %4939 = vmatprep.subr.mxu0 0.0
    %4940 = vmatpush1.msra.mxu0 0.0
    %4941 = vmatprep.subr.mxu0 0.0
    %4942 = vmatpush1.msra.mxu0 0.0
    %4943 = vmatprep.subr.mxu0 0.0
    %4944 = vmatpush1.msra.mxu0 0.0
    %4945 = vmatprep.subr.mxu0 0.0
    %4946 = vmatpush1.msra.mxu0 0.0
    %4947 = vmatprep.subr.mxu0 0.0
    %4948 = vmatpush1.msra.mxu0 0.0
    %4949 = vmatprep.mubr.f32.mxu0 0.0
    %4950 = vmatmul.mubr.f32.gmra.mrb[0].mxu0 %v4883
    %v4951 = vpop.f32.mrb[0].mxu0
    %v4952 = vadd.f32 0.0, %v4951
    %v4953 = vpop.f32.mrb[0].mxu0
    %4954 = vdwg.mxu0
    %4956 = vrot.lane.b32.xlu0 %v4879, 32
    %v4957 = vpop.permute.xlu0 %4956
    %v4958 = vsel %vm308, %v4957, 0
    %4960 = vmatprep.subr.mxu0 0.0
    %4961 = vmatpush1.msra.mxu0 %v2624
    %4962 = vmatprep.subr.mxu0 0.0
    %4963 = vmatpush1.msra.mxu0 %v2625
    %4964 = vmatprep.subr.mxu0 0.0
    %4965 = vmatpush1.msra.mxu0 %v2626
    %4966 = vmatprep.subr.mxu0 0.0
    %4967 = vmatpush1.msra.mxu0 %v2627
    %4968 = vmatprep.subr.mxu0 0.0
    %4969 = vmatpush1.msra.mxu0 0.0
    %4970 = vmatprep.subr.mxu0 0.0
    %4971 = vmatpush1.msra.mxu0 0.0
    %4972 = vmatprep.subr.mxu0 0.0
    %4973 = vmatpush1.msra.mxu0 0.0
    %4974 = vmatprep.subr.mxu0 0.0
    %4975 = vmatpush1.msra.mxu0 0.0
    %4976 = vmatprep.subr.mxu0 0.0
    %4977 = vmatpush1.msra.mxu0 0.0
    %4978 = vmatprep.subr.mxu0 0.0
    %4979 = vmatpush1.msra.mxu0 0.0
    %4980 = vmatprep.subr.mxu0 0.0
    %4981 = vmatpush1.msra.mxu0 0.0
    %4982 = vmatprep.subr.mxu0 0.0
    %4983 = vmatpush1.msra.mxu0 0.0
    %4984 = vmatprep.subr.mxu0 0.0
    %4985 = vmatpush1.msra.mxu0 0.0
    %4986 = vmatprep.subr.mxu0 0.0
    %4987 = vmatpush1.msra.mxu0 0.0
    %4988 = vmatprep.subr.mxu0 0.0
    %4989 = vmatpush1.msra.mxu0 0.0
    %4990 = vmatprep.subr.mxu0 0.0
    %4991 = vmatpush1.msra.mxu0 0.0
    %4992 = vmatprep.subr.mxu0 0.0
    %4993 = vmatpush1.msra.mxu0 0.0
    %4994 = vmatprep.subr.mxu0 0.0
    %4995 = vmatpush1.msra.mxu0 0.0
    %4996 = vmatprep.subr.mxu0 0.0
    %4997 = vmatpush1.msra.mxu0 0.0
    %4998 = vmatprep.subr.mxu0 0.0
    %4999 = vmatpush1.msra.mxu0 0.0
    %5000 = vmatprep.subr.mxu0 0.0
    %5001 = vmatpush1.msra.mxu0 0.0
    %5002 = vmatprep.subr.mxu0 0.0
    %5003 = vmatpush1.msra.mxu0 0.0
    %5004 = vmatprep.subr.mxu0 0.0
    %5005 = vmatpush1.msra.mxu0 0.0
    %5006 = vmatprep.subr.mxu0 0.0
    %5007 = vmatpush1.msra.mxu0 0.0
    %5008 = vmatprep.subr.mxu0 0.0
    %5009 = vmatpush1.msra.mxu0 0.0
    %5010 = vmatprep.subr.mxu0 0.0
    %5011 = vmatpush1.msra.mxu0 0.0
    %5012 = vmatprep.subr.mxu0 0.0
    %5013 = vmatpush1.msra.mxu0 0.0
    %5014 = vmatprep.subr.mxu0 0.0
    %5015 = vmatpush1.msra.mxu0 0.0
    %5016 = vmatprep.subr.mxu0 0.0
    %5017 = vmatpush1.msra.mxu0 0.0
    %5018 = vmatprep.subr.mxu0 0.0
    %5019 = vmatpush1.msra.mxu0 0.0
    %5020 = vmatprep.subr.mxu0 0.0
    %5021 = vmatpush1.msra.mxu0 0.0
    %5022 = vmatprep.subr.mxu0 0.0
    %5023 = vmatpush1.msra.mxu0 0.0
    %5024 = vmatprep.mubr.f32.mxu0 0.0
    %5025 = vmatmul.mubr.f32.gmra.mrb[0].mxu0 %v4958
    %v5026 = vpop.f32.mrb[0].mxu0
    %v5027 = vadd.f32 %v4952, %v5026
    %v5028 = vpop.f32.mrb[0].mxu0
    %5029 = vdwg.mxu0
    %v5030 = vadd.f32 %v5027, %v2637
    %vm5031 = vcmp.ge.f32.partialorder %v5030, 0.0
    %v5032 = vmul.f32 %v2647, %v5030
    %v5033 = vsel %vm5031, %v5030, %v5032
    %v5035 = vsel %vm308, %v5033, 0
    %5037 = vmatprep.subr.mxu0 0.0
    %5038 = vmatpush1.msra.mxu0 %v2649
    %5039 = vmatprep.subr.mxu0 0.0
    %5040 = vmatpush1.msra.mxu0 %v2650
    %5041 = vmatprep.subr.mxu0 0.0
    %5042 = vmatpush1.msra.mxu0 %v2651
    %5043 = vmatprep.subr.mxu0 0.0
    %5044 = vmatpush1.msra.mxu0 %v2652
    %5045 = vmatprep.subr.mxu0 0.0
    %5046 = vmatpush1.msra.mxu0 0.0
    %5047 = vmatprep.subr.mxu0 0.0
    %5048 = vmatpush1.msra.mxu0 0.0
    %5049 = vmatprep.subr.mxu0 0.0
    %5050 = vmatpush1.msra.mxu0 0.0
    %5051 = vmatprep.subr.mxu0 0.0
    %5052 = vmatpush1.msra.mxu0 0.0
    %5053 = vmatprep.subr.mxu0 0.0
    %5054 = vmatpush1.msra.mxu0 0.0
    %5055 = vmatprep.subr.mxu0 0.0
    %5056 = vmatpush1.msra.mxu0 0.0
    %5057 = vmatprep.subr.mxu0 0.0
    %5058 = vmatpush1.msra.mxu0 0.0
    %5059 = vmatprep.subr.mxu0 0.0
    %5060 = vmatpush1.msra.mxu0 0.0
    %5061 = vmatprep.subr.mxu0 0.0
    %5062 = vmatpush1.msra.mxu0 0.0
    %5063 = vmatprep.subr.mxu0 0.0
    %5064 = vmatpush1.msra.mxu0 0.0
    %5065 = vmatprep.subr.mxu0 0.0
    %5066 = vmatpush1.msra.mxu0 0.0
    %5067 = vmatprep.subr.mxu0 0.0
    %5068 = vmatpush1.msra.mxu0 0.0
    %5069 = vmatprep.subr.mxu0 0.0
    %5070 = vmatpush1.msra.mxu0 0.0
    %5071 = vmatprep.subr.mxu0 0.0
    %5072 = vmatpush1.msra.mxu0 0.0
    %5073 = vmatprep.subr.mxu0 0.0
    %5074 = vmatpush1.msra.mxu0 0.0
    %5075 = vmatprep.subr.mxu0 0.0
    %5076 = vmatpush1.msra.mxu0 0.0
    %5077 = vmatprep.subr.mxu0 0.0
    %5078 = vmatpush1.msra.mxu0 0.0
    %5079 = vmatprep.subr.mxu0 0.0
    %5080 = vmatpush1.msra.mxu0 0.0
    %5081 = vmatprep.subr.mxu0 0.0
    %5082 = vmatpush1.msra.mxu0 0.0
    %5083 = vmatprep.subr.mxu0 0.0
    %5084 = vmatpush1.msra.mxu0 0.0
    %5085 = vmatprep.subr.mxu0 0.0
    %5086 = vmatpush1.msra.mxu0 0.0
    %5087 = vmatprep.subr.mxu0 0.0
    %5088 = vmatpush1.msra.mxu0 0.0
    %5089 = vmatprep.subr.mxu0 0.0
    %5090 = vmatpush1.msra.mxu0 0.0
    %5091 = vmatprep.subr.mxu0 0.0
    %5092 = vmatpush1.msra.mxu0 0.0
    %5093 = vmatprep.subr.mxu0 0.0
    %5094 = vmatpush1.msra.mxu0 0.0
    %5095 = vmatprep.subr.mxu0 0.0
    %5096 = vmatpush1.msra.mxu0 0.0
    %5097 = vmatprep.subr.mxu0 0.0
    %5098 = vmatpush1.msra.mxu0 0.0
    %5099 = vmatprep.subr.mxu0 0.0
    %5100 = vmatpush1.msra.mxu0 0.0
    %5101 = vmatprep.mubr.f32.mxu0 0.0
    %5102 = vmatmul.mubr.f32.gmra.mrb[0].mxu0 %v5035
    %v5103 = vpop.f32.mrb[0].mxu0
    %v5104 = vadd.f32 %v2658, %v5103
    %v5105 = vpop.f32.mrb[0].mxu0
    %5106 = vdwg.mxu0
    %v5107 = vmul.f32 %v4879, 0.1
    %v5108 = vmul.f32 %v5104, 0.9
    %5110 = vrot.lane.b32.xlu0 %v5108, 96
    %v5111 = vpop.permute.xlu0 %5110
    %v5113 = vadd.f32 %v5107, %v5111
    %5115 = vrot.lane.b32.xlu0 %v5113, 32
    %v5116 = vpop.permute.xlu0 %5115
    %v5117 = vsel %vm308, %v5116, 0
    %5119 = vmatprep.subr.mxu0 0.0
    %5120 = vmatpush1.msra.mxu0 %v2613
    %5121 = vmatprep.subr.mxu0 0.0
    %5122 = vmatpush1.msra.mxu0 %v2614
    %5123 = vmatprep.subr.mxu0 0.0
    %5124 = vmatpush1.msra.mxu0 %v2615
    %5125 = vmatprep.subr.mxu0 0.0
    %5126 = vmatpush1.msra.mxu0 %v2616
    %5127 = vmatprep.subr.mxu0 0.0
    %5128 = vmatpush1.msra.mxu0 0.0
    %5129 = vmatprep.subr.mxu0 0.0
    %5130 = vmatpush1.msra.mxu0 0.0
    %5131 = vmatprep.subr.mxu0 0.0
    %5132 = vmatpush1.msra.mxu0 0.0
    %5133 = vmatprep.subr.mxu0 0.0
    %5134 = vmatpush1.msra.mxu0 0.0
    %5135 = vmatprep.subr.mxu0 0.0
    %5136 = vmatpush1.msra.mxu0 0.0
    %5137 = vmatprep.subr.mxu0 0.0
    %5138 = vmatpush1.msra.mxu0 0.0
    %5139 = vmatprep.subr.mxu0 0.0
    %5140 = vmatpush1.msra.mxu0 0.0
    %5141 = vmatprep.subr.mxu0 0.0
    %5142 = vmatpush1.msra.mxu0 0.0
    %5143 = vmatprep.subr.mxu0 0.0
    %5144 = vmatpush1.msra.mxu0 0.0
    %5145 = vmatprep.subr.mxu0 0.0
    %5146 = vmatpush1.msra.mxu0 0.0
    %5147 = vmatprep.subr.mxu0 0.0
    %5148 = vmatpush1.msra.mxu0 0.0
    %5149 = vmatprep.subr.mxu0 0.0
    %5150 = vmatpush1.msra.mxu0 0.0
    %5151 = vmatprep.subr.mxu0 0.0
    %5152 = vmatpush1.msra.mxu0 0.0
    %5153 = vmatprep.subr.mxu0 0.0
    %5154 = vmatpush1.msra.mxu0 0.0
    %5155 = vmatprep.subr.mxu0 0.0
    %5156 = vmatpush1.msra.mxu0 0.0
    %5157 = vmatprep.subr.mxu0 0.0
    %5158 = vmatpush1.msra.mxu0 0.0
    %5159 = vmatprep.subr.mxu0 0.0
    %5160 = vmatpush1.msra.mxu0 0.0
    %5161 = vmatprep.subr.mxu0 0.0
    %5162 = vmatpush1.msra.mxu0 0.0
    %5163 = vmatprep.subr.mxu0 0.0
    %5164 = vmatpush1.msra.mxu0 0.0
    %5165 = vmatprep.subr.mxu0 0.0
    %5166 = vmatpush1.msra.mxu0 0.0
    %5167 = vmatprep.subr.mxu0 0.0
    %5168 = vmatpush1.msra.mxu0 0.0
    %5169 = vmatprep.subr.mxu0 0.0
    %5170 = vmatpush1.msra.mxu0 0.0
    %5171 = vmatprep.subr.mxu0 0.0
    %5172 = vmatpush1.msra.mxu0 0.0
    %5173 = vmatprep.subr.mxu0 0.0
    %5174 = vmatpush1.msra.mxu0 0.0
    %5175 = vmatprep.subr.mxu0 0.0
    %5176 = vmatpush1.msra.mxu0 0.0
    %5177 = vmatprep.subr.mxu0 0.0
    %5178 = vmatpush1.msra.mxu0 0.0
    %5179 = vmatprep.subr.mxu0 0.0
    %5180 = vmatpush1.msra.mxu0 0.0
    %5181 = vmatprep.subr.mxu0 0.0
    %5182 = vmatpush1.msra.mxu0 0.0
    %5183 = vmatprep.mubr.f32.mxu0 0.0
    %5184 = vmatmul.mubr.f32.gmra.mrb[0].mxu0 %v5117
    %v5185 = vpop.f32.mrb[0].mxu0
    %v5186 = vadd.f32 0.0, %v5185
    %v5187 = vpop.f32.mrb[0].mxu0
    %5188 = vdwg.mxu0
    %v5189 = vsel %vm308, %v4876, 0
    %5191 = vmatprep.subr.mxu0 0.0
    %5192 = vmatpush1.msra.mxu0 %v2609
    %5193 = vmatprep.subr.mxu0 0.0
    %5194 = vmatpush1.msra.mxu0 %v2610
    %5195 = vmatprep.subr.mxu0 0.0
    %5196 = vmatpush1.msra.mxu0 %v2611
    %5197 = vmatprep.subr.mxu0 0.0
    %5198 = vmatpush1.msra.mxu0 %v2612
    %5199 = vmatprep.subr.mxu0 0.0
    %5200 = vmatpush1.msra.mxu0 0.0
    %5201 = vmatprep.subr.mxu0 0.0
    %5202 = vmatpush1.msra.mxu0 0.0
    %5203 = vmatprep.subr.mxu0 0.0
    %5204 = vmatpush1.msra.mxu0 0.0
    %5205 = vmatprep.subr.mxu0 0.0
    %5206 = vmatpush1.msra.mxu0 0.0
    %5207 = vmatprep.subr.mxu0 0.0
    %5208 = vmatpush1.msra.mxu0 0.0
    %5209 = vmatprep.subr.mxu0 0.0
    %5210 = vmatpush1.msra.mxu0 0.0
    %5211 = vmatprep.subr.mxu0 0.0
    %5212 = vmatpush1.msra.mxu0 0.0
    %5213 = vmatprep.subr.mxu0 0.0
    %5214 = vmatpush1.msra.mxu0 0.0
    %5215 = vmatprep.subr.mxu0 0.0
    %5216 = vmatpush1.msra.mxu0 0.0
    %5217 = vmatprep.subr.mxu0 0.0
    %5218 = vmatpush1.msra.mxu0 0.0
    %5219 = vmatprep.subr.mxu0 0.0
    %5220 = vmatpush1.msra.mxu0 0.0
    %5221 = vmatprep.subr.mxu0 0.0
    %5222 = vmatpush1.msra.mxu0 0.0
    %5223 = vmatprep.subr.mxu0 0.0
    %5224 = vmatpush1.msra.mxu0 0.0
    %5225 = vmatprep.subr.mxu0 0.0
    %5226 = vmatpush1.msra.mxu0 0.0
    %5227 = vmatprep.subr.mxu0 0.0
    %5228 = vmatpush1.msra.mxu0 0.0
    %5229 = vmatprep.subr.mxu0 0.0
    %5230 = vmatpush1.msra.mxu0 0.0
    %5231 = vmatprep.subr.mxu0 0.0
    %5232 = vmatpush1.msra.mxu0 0.0
    %5233 = vmatprep.subr.mxu0 0.0
    %5234 = vmatpush1.msra.mxu0 0.0
    %5235 = vmatprep.subr.mxu0 0.0
    %5236 = vmatpush1.msra.mxu0 0.0
    %5237 = vmatprep.subr.mxu0 0.0
    %5238 = vmatpush1.msra.mxu0 0.0
    %5239 = vmatprep.subr.mxu0 0.0
    %5240 = vmatpush1.msra.mxu0 0.0
    %5241 = vmatprep.subr.mxu0 0.0
    %5242 = vmatpush1.msra.mxu0 0.0
    %5243 = vmatprep.subr.mxu0 0.0
    %5244 = vmatpush1.msra.mxu0 0.0
    %5245 = vmatprep.subr.mxu0 0.0
    %5246 = vmatpush1.msra.mxu0 0.0
    %5247 = vmatprep.subr.mxu0 0.0
    %5248 = vmatpush1.msra.mxu0 0.0
    %5249 = vmatprep.subr.mxu0 0.0
    %5250 = vmatpush1.msra.mxu0 0.0
    %5251 = vmatprep.subr.mxu0 0.0
    %5252 = vmatpush1.msra.mxu0 0.0
    %5253 = vmatprep.subr.mxu0 0.0
    %5254 = vmatpush1.msra.mxu0 0.0
    %5255 = vmatprep.mubr.f32.mxu0 0.0
    %5256 = vmatmul.mubr.f32.gmra.mrb[0].mxu0 %v5189
    %v5257 = vpop.f32.mrb[0].mxu0
    %v5258 = vadd.f32 %v5186, %v5257
    %v5259 = vpop.f32.mrb[0].mxu0
    %5260 = vdwg.mxu0
    %v5261 = vadd.f32 %v5258, %v2622
    %v5262 = vxor.u32 %v5261, 2147483648
    %v5263 = vmul.f32 %v5262, 1.442695
    %v5264 = vpow.pop %v5263
    %v5265 = vadd.f32 %v5264, 1.0
    %v5266 = vrcp.pop %v5265
    %v5267 = vmul.f32 1.0, %v5266
    %v5268 = vtanh.pop %v5261
    %v5269 = vmul.f32 %v5267, %v4867
    %5271 = vrot.lane.b32.xlu0 %v5268, 64
    %v5272 = vpop.permute.xlu0 %5271
    %v5274 = vmul.f32 %v5267, %v5272
    %5276 = vrot.lane.b32.xlu0 %v5274, 32
    %v5277 = vpop.permute.xlu0 %5276
    %v5279 = vadd.f32 %v5269, %v5277
    %v5280 = vtanh.pop %v5279
    %5282 = vrot.lane.b32.xlu0 %v5280, 64
    %v5283 = vpop.permute.xlu0 %5282
    %v5285 = vmul.f32 %v5267, %v5283
    %5287 = vrot.lane.b32.xlu0 %v5285, 32
    %v5288 = vpop.permute.xlu0 %5287
    %5290 = vst.msk [vmem:[#allocation3 + $0x1c] sm:$0xf] %vm2660, %v5288
    %v5291 = vld [vmem:[#allocation3] sm:$0xff]
    %v5292 = vld [vmem:[#allocation3 + $0x8] sm:$0xff]
    %v5293 = vld [vmem:[#allocation3 + $0x10] sm:$0xff]
    %v5294 = vld [vmem:[#allocation3 + $0x18] sm:$0xff]
    %v5295 = vld [vmem:[%s73] sm:$0xff]
    %v5296 = vld [vmem:[%s73 + $0x8] sm:$0xff]
    %v5297 = vld [vmem:[%s73 + $0x10] sm:$0xff]
    %v5298 = vld [vmem:[%s73 + $0x18] sm:$0xff]
    %v5299 = vld [vmem:[%s75] sm:$0x1]
    %v5301 = vlaneseq
    %v5302 = vshrl.u32 %v5301, 7
    %v5303 = vsub.s32 0, %v5302
    %v5304 = vrot.slane %v5299, %v5303
    %v5307 = vsel %vm308, %v5291, 0
    %v5310 = vsel %vm308, %v5292, 0
    %v5313 = vsel %vm308, %v5293, 0
    %v5316 = vsel %vm308, %v5294, 0
    %5318 = vmatprep.subr.mxu0 0.0
    %5319 = vmatpush1.msra.mxu0 %v5295
    %5320 = vmatprep.subr.mxu0 0.0
    %5321 = vmatpush1.msra.mxu0 %v5296
    %5322 = vmatprep.subr.mxu0 0.0
    %5323 = vmatpush1.msra.mxu0 %v5297
    %5324 = vmatprep.subr.mxu0 0.0
    %5325 = vmatpush1.msra.mxu0 %v5298
    %5326 = vmatprep.subr.mxu0 0.0
    %5327 = vmatpush1.msra.mxu0 0.0
    %5328 = vmatprep.subr.mxu0 0.0
    %5329 = vmatpush1.msra.mxu0 0.0
    %5330 = vmatprep.subr.mxu0 0.0
    %5331 = vmatpush1.msra.mxu0 0.0
    %5332 = vmatprep.subr.mxu0 0.0
    %5333 = vmatpush1.msra.mxu0 0.0
    %5334 = vmatprep.subr.mxu0 0.0
    %5335 = vmatpush1.msra.mxu0 0.0
    %5336 = vmatprep.subr.mxu0 0.0
    %5337 = vmatpush1.msra.mxu0 0.0
    %5338 = vmatprep.subr.mxu0 0.0
    %5339 = vmatpush1.msra.mxu0 0.0
    %5340 = vmatprep.subr.mxu0 0.0
    %5341 = vmatpush1.msra.mxu0 0.0
    %5342 = vmatprep.subr.mxu0 0.0
    %5343 = vmatpush1.msra.mxu0 0.0
    %5344 = vmatprep.subr.mxu0 0.0
    %5345 = vmatpush1.msra.mxu0 0.0
    %5346 = vmatprep.subr.mxu0 0.0
    %5347 = vmatpush1.msra.mxu0 0.0
    %5348 = vmatprep.subr.mxu0 0.0
    %5349 = vmatpush1.msra.mxu0 0.0
    %5350 = vmatprep.subr.mxu0 0.0
    %5351 = vmatpush1.msra.mxu0 0.0
    %5352 = vmatprep.subr.mxu0 0.0
    %5353 = vmatpush1.msra.mxu0 0.0
    %5354 = vmatprep.subr.mxu0 0.0
    %5355 = vmatpush1.msra.mxu0 0.0
    %5356 = vmatprep.subr.mxu0 0.0
    %5357 = vmatpush1.msra.mxu0 0.0
    %5358 = vmatprep.subr.mxu0 0.0
    %5359 = vmatpush1.msra.mxu0 0.0
    %5360 = vmatprep.subr.mxu0 0.0
    %5361 = vmatpush1.msra.mxu0 0.0
    %5362 = vmatprep.subr.mxu0 0.0
    %5363 = vmatpush1.msra.mxu0 0.0
    %5364 = vmatprep.subr.mxu0 0.0
    %5365 = vmatpush1.msra.mxu0 0.0
    %5366 = vmatprep.subr.mxu0 0.0
    %5367 = vmatpush1.msra.mxu0 0.0
    %5368 = vmatprep.subr.mxu0 0.0
    %5369 = vmatpush1.msra.mxu0 0.0
    %5370 = vmatprep.subr.mxu0 0.0
    %5371 = vmatpush1.msra.mxu0 0.0
    %5372 = vmatprep.subr.mxu0 0.0
    %5373 = vmatpush1.msra.mxu0 0.0
    %5374 = vmatprep.subr.mxu0 0.0
    %5375 = vmatpush1.msra.mxu0 0.0
    %5376 = vmatprep.subr.mxu0 0.0
    %5377 = vmatpush1.msra.mxu0 0.0
    %5378 = vmatprep.subr.mxu0 0.0
    %5379 = vmatpush1.msra.mxu0 0.0
    %5380 = vmatprep.subr.mxu0 0.0
    %5381 = vmatpush1.msra.mxu0 0.0
    %5382 = vmatprep.mubr.f32.mxu0 0.0
    %5383 = vmatmul.mubr.f32.gmra.mrb[0].mxu0 %v5307
    %v5384 = vpop.f32.mrb[0].mxu0
    %v5385 = vadd.f32 %v5304, %v5384
    %v5386 = vpop.f32.mrb[0].mxu0
    %5387 = vmatprep.mubr.f32.mxu0 0.0
    %5388 = vmatmul.mubr.f32.gmra.mrb[0].mxu0 %v5310
    %v5389 = vpop.f32.mrb[0].mxu0
    %v5390 = vadd.f32 %v5304, %v5389
    %v5391 = vpop.f32.mrb[0].mxu0
    %5392 = vmatprep.mubr.f32.mxu0 0.0
    %5393 = vmatmul.mubr.f32.gmra.mrb[0].mxu0 %v5313
    %v5394 = vpop.f32.mrb[0].mxu0
    %v5395 = vadd.f32 %v5304, %v5394
    %v5396 = vpop.f32.mrb[0].mxu0
    %5397 = vmatprep.mubr.f32.mxu0 0.0
    %5398 = vmatmul.mubr.f32.gmra.mrb[0].mxu0 %v5316
    %v5399 = vpop.f32.mrb[0].mxu0
    %v5400 = vadd.f32 %v5304, %v5399
    %v5401 = vpop.f32.mrb[0].mxu0
    %5402 = vdwg.mxu0
    %5403 = vst.msk [vmem:[%s89] sm:$0xff] %vm206, %v5385
    %5404 = vst.msk [vmem:[%s89 + $0x8] sm:$0xff] %vm206, %v5390
    %5405 = vst.msk [vmem:[%s89 + $0x10] sm:$0xff] %vm206, %v5395
    %5406 = vst.msk [vmem:[%s89 + $0x18] sm:$0xff] %vm206, %v5400
    %v5407 = vld [vmem:[%s87] sm:$0xff]
    %v5408 = vld [vmem:[%s87 + $0x8] sm:$0xff]
    %v5409 = vld [vmem:[%s87 + $0x10] sm:$0xff]
    %v5410 = vld [vmem:[%s87 + $0x18] sm:$0xff]
    %v5411 = vsub.f32 %v5385, %v5407
    %v5412 = vsub.f32 %v5390, %v5408
    %v5413 = vsub.f32 %v5395, %v5409
    %v5414 = vsub.f32 %v5400, %v5410
    %5415 = vst.msk [vmem:[%s91] sm:$0xff] %vm206, %v5411
    %5416 = vst.msk [vmem:[%s91 + $0x8] sm:$0xff] %vm206, %v5412
    %5417 = vst.msk [vmem:[%s91 + $0x10] sm:$0xff] %vm206, %v5413
    %5418 = vst.msk [vmem:[%s91 + $0x18] sm:$0xff] %vm206, %v5414
    %v5419 = vmul.f32 %v5411, %v5411
    %v5420 = vmul.f32 %v5412, %v5412
    %v5421 = vmul.f32 %v5413, %v5413
    %v5422 = vmul.f32 %v5414, %v5414
    %v5423 = vsel %vm206, %v5419, 0.0
    %5424 = vadd.xlane.f32.xlu0 %v5423
    %v5425 = vpop.xlane.xlu0 %5424
    %v5426 = vsel %vm206, %v5420, 0.0
    %5427 = vadd.xlane.f32.xlu0 %v5426
    %v5428 = vpop.xlane.xlu0 %5427
    %v5429 = vsel %vm206, %v5421, 0.0
    %5430 = vadd.xlane.f32.xlu0 %v5429
    %v5431 = vpop.xlane.xlu0 %5430
    %v5432 = vsel %vm206, %v5422, 0.0
    %5433 = vadd.xlane.f32.xlu0 %v5432
    %v5434 = vpop.xlane.xlu0 %5433
    %v5435 = vadd.f32 %v5425, %v5428
    %v5436 = vadd.f32 %v5435, %v5431
    %v5437 = vadd.f32 %v5436, %v5434
    %v5438 = vrot.slane %v5437, 4
    %v5439 = vadd.f32 %v5437, %v5438
    %v5440 = vrot.slane %v5439, 2
    %v5441 = vadd.f32 %v5439, %v5440
    %v5442 = vrot.slane %v5441, 1
    %v5443 = vadd.f32 %v5441, %v5442
    %v5444 = vmul.f32 %v5443, 0.00390625
    %vm5445 = vcmask 0
    %5446 = vst.msk [vmem:[#allocation6] sm:$0x1] %vm5445, %v5444
    %5447 = vst.msk [vmem:[#allocation8] sm:$0xf] %vm2660, %v2881
    %5448 = vst.msk [vmem:[#allocation10] sm:$0xf] %vm2660, %v2205
    %v5449 = vld [vmem:[%s17] sm:$0xff]
    %v5450 = vld [vmem:[%s17 + $0x8] sm:$0xff]
    %v5451 = vld [vmem:[%s17 + $0x10] sm:$0xff]
    %v5452 = vld [vmem:[%s17 + $0x18] sm:$0xff]
    %v5453 = vld [vmem:[%s77] sm:$0xff]
    %v5454 = vld [vmem:[%s81] sm:$0x1]
    %v5456 = vlaneseq
    %v5457 = vshrl.u32 %v5456, 7
    %v5458 = vsub.s32 0, %v5457
    %v5459 = vrot.slane %v5454, %v5458
    %v5462 = vsel %vm206, %v5449, 0
    %v5465 = vsel %vm206, %v5450, 0
    %v5468 = vsel %vm206, %v5451, 0
    %v5471 = vsel %vm206, %v5452, 0
    %5473 = vmatprep.subr.mxu0 0.0
    %5474 = vmatpush1.msra.mxu0 %v5453
    %5475 = vmatprep.subr.mxu0 0.0
    %5476 = vmatpush1.msra.mxu0 0.0
    %5477 = vmatprep.subr.mxu0 0.0
    %5478 = vmatpush1.msra.mxu0 0.0
    %5479 = vmatprep.subr.mxu0 0.0
    %5480 = vmatpush1.msra.mxu0 0.0
    %5481 = vmatprep.subr.mxu0 0.0
    %5482 = vmatpush1.msra.mxu0 0.0
    %5483 = vmatprep.subr.mxu0 0.0
    %5484 = vmatpush1.msra.mxu0 0.0
    %5485 = vmatprep.subr.mxu0 0.0
    %5486 = vmatpush1.msra.mxu0 0.0
    %5487 = vmatprep.subr.mxu0 0.0
    %5488 = vmatpush1.msra.mxu0 0.0
    %5489 = vmatprep.subr.mxu0 0.0
    %5490 = vmatpush1.msra.mxu0 0.0
    %5491 = vmatprep.subr.mxu0 0.0
    %5492 = vmatpush1.msra.mxu0 0.0
    %5493 = vmatprep.subr.mxu0 0.0
    %5494 = vmatpush1.msra.mxu0 0.0
    %5495 = vmatprep.subr.mxu0 0.0
    %5496 = vmatpush1.msra.mxu0 0.0
    %5497 = vmatprep.subr.mxu0 0.0
    %5498 = vmatpush1.msra.mxu0 0.0
    %5499 = vmatprep.subr.mxu0 0.0
    %5500 = vmatpush1.msra.mxu0 0.0
    %5501 = vmatprep.subr.mxu0 0.0
    %5502 = vmatpush1.msra.mxu0 0.0
    %5503 = vmatprep.subr.mxu0 0.0
    %5504 = vmatpush1.msra.mxu0 0.0
    %5505 = vmatprep.subr.mxu0 0.0
    %5506 = vmatpush1.msra.mxu0 0.0
    %5507 = vmatprep.subr.mxu0 0.0
    %5508 = vmatpush1.msra.mxu0 0.0
    %5509 = vmatprep.subr.mxu0 0.0
    %5510 = vmatpush1.msra.mxu0 0.0
    %5511 = vmatprep.subr.mxu0 0.0
    %5512 = vmatpush1.msra.mxu0 0.0
    %5513 = vmatprep.subr.mxu0 0.0
    %5514 = vmatpush1.msra.mxu0 0.0
    %5515 = vmatprep.subr.mxu0 0.0
    %5516 = vmatpush1.msra.mxu0 0.0
    %5517 = vmatprep.subr.mxu0 0.0
    %5518 = vmatpush1.msra.mxu0 0.0
    %5519 = vmatprep.subr.mxu0 0.0
    %5520 = vmatpush1.msra.mxu0 0.0
    %5521 = vmatprep.subr.mxu0 0.0
    %5522 = vmatpush1.msra.mxu0 0.0
    %5523 = vmatprep.subr.mxu0 0.0
    %5524 = vmatpush1.msra.mxu0 0.0
    %5525 = vmatprep.subr.mxu0 0.0
    %5526 = vmatpush1.msra.mxu0 0.0
    %5527 = vmatprep.subr.mxu0 0.0
    %5528 = vmatpush1.msra.mxu0 0.0
    %5529 = vmatprep.subr.mxu0 0.0
    %5530 = vmatpush1.msra.mxu0 0.0
    %5531 = vmatprep.subr.mxu0 0.0
    %5532 = vmatpush1.msra.mxu0 0.0
    %5533 = vmatprep.subr.mxu0 0.0
    %5534 = vmatpush1.msra.mxu0 0.0
    %5535 = vmatprep.subr.mxu0 0.0
    %5536 = vmatpush1.msra.mxu0 0.0
    %5537 = vmatprep.mubr.f32.mxu0 0.0
    %5538 = vmatmul.mubr.f32.gmra.mrb[0].mxu0 %v5462
    %v5539 = vpop.f32.mrb[0].mxu0
    %v5540 = vadd.f32 %v5459, %v5539
    %v5541 = vpop.f32.mrb[0].mxu0
    %5542 = vmatprep.mubr.f32.mxu0 0.0
    %5543 = vmatmul.mubr.f32.gmra.mrb[0].mxu0 %v5465
    %v5544 = vpop.f32.mrb[0].mxu0
    %v5545 = vadd.f32 %v5459, %v5544
    %v5546 = vpop.f32.mrb[0].mxu0
    %5547 = vmatprep.mubr.f32.mxu0 0.0
    %5548 = vmatmul.mubr.f32.gmra.mrb[0].mxu0 %v5468
    %v5549 = vpop.f32.mrb[0].mxu0
    %v5550 = vadd.f32 %v5459, %v5549
    %v5551 = vpop.f32.mrb[0].mxu0
    %5552 = vmatprep.mubr.f32.mxu0 0.0
    %5553 = vmatmul.mubr.f32.gmra.mrb[0].mxu0 %v5471
    %v5554 = vpop.f32.mrb[0].mxu0
    %v5555 = vadd.f32 %v5459, %v5554
    %v5556 = vpop.f32.mrb[0].mxu0
    %5557 = vdwg.mxu0
    %5558 = vst [vmem:[#allocation2] sm:$0xff] %v5540
    %5559 = vst [vmem:[#allocation2 + $0x8] sm:$0xff] %v5545
    %5560 = vst [vmem:[#allocation2 + $0x10] sm:$0xff] %v5550
    %5561 = vst [vmem:[#allocation2 + $0x18] sm:$0xff] %v5555
    %v5562 = vld [vmem:[%s79] sm:$0xff]
    %v5563 = vld [vmem:[%s79 + $0x8] sm:$0xff]
    %v5564 = vld [vmem:[%s79 + $0x10] sm:$0xff]
    %v5565 = vld [vmem:[%s79 + $0x18] sm:$0xff]
    %v5566 = vld [vmem:[#allocation2] sm:$0xf]
    %5567 = vmatprep.subr.mxu0 0.0
    %5568 = vmatpush1.msra.mxu0 %v5562
    %5569 = vmatprep.subr.mxu0 0.0
    %5570 = vmatpush1.msra.mxu0 %v5563
    %5571 = vmatprep.subr.mxu0 0.0
    %5572 = vmatpush1.msra.mxu0 %v5564
    %5573 = vmatprep.subr.mxu0 0.0
    %5574 = vmatpush1.msra.mxu0 %v5565
    %5575 = vmatprep.subr.mxu0 0.0
    %5576 = vmatpush1.msra.mxu0 0.0
    %5577 = vmatprep.subr.mxu0 0.0
    %5578 = vmatpush1.msra.mxu0 0.0
    %5579 = vmatprep.subr.mxu0 0.0
    %5580 = vmatpush1.msra.mxu0 0.0
    %5581 = vmatprep.subr.mxu0 0.0
    %5582 = vmatpush1.msra.mxu0 0.0
    %5583 = vmatprep.subr.mxu0 0.0
    %5584 = vmatpush1.msra.mxu0 0.0
    %5585 = vmatprep.subr.mxu0 0.0
    %5586 = vmatpush1.msra.mxu0 0.0
    %5587 = vmatprep.subr.mxu0 0.0
    %5588 = vmatpush1.msra.mxu0 0.0
    %5589 = vmatprep.subr.mxu0 0.0
    %5590 = vmatpush1.msra.mxu0 0.0
    %5591 = vmatprep.subr.mxu0 0.0
    %5592 = vmatpush1.msra.mxu0 0.0
    %5593 = vmatprep.subr.mxu0 0.0
    %5594 = vmatpush1.msra.mxu0 0.0
    %5595 = vmatprep.subr.mxu0 0.0
    %5596 = vmatpush1.msra.mxu0 0.0
    %5597 = vmatprep.subr.mxu0 0.0
    %5598 = vmatpush1.msra.mxu0 0.0
    %5599 = vmatprep.subr.mxu0 0.0
    %5600 = vmatpush1.msra.mxu0 0.0
    %5601 = vmatprep.subr.mxu0 0.0
    %5602 = vmatpush1.msra.mxu0 0.0
    %5603 = vmatprep.subr.mxu0 0.0
    %5604 = vmatpush1.msra.mxu0 0.0
    %5605 = vmatprep.subr.mxu0 0.0
    %5606 = vmatpush1.msra.mxu0 0.0
    %5607 = vmatprep.subr.mxu0 0.0
    %5608 = vmatpush1.msra.mxu0 0.0
    %5609 = vmatprep.subr.mxu0 0.0
    %5610 = vmatpush1.msra.mxu0 0.0
    %5611 = vmatprep.subr.mxu0 0.0
    %5612 = vmatpush1.msra.mxu0 0.0
    %5613 = vmatprep.subr.mxu0 0.0
    %5614 = vmatpush1.msra.mxu0 0.0
    %5615 = vmatprep.subr.mxu0 0.0
    %5616 = vmatpush1.msra.mxu0 0.0
    %5617 = vmatprep.subr.mxu0 0.0
    %5618 = vmatpush1.msra.mxu0 0.0
    %5619 = vmatprep.subr.mxu0 0.0
    %5620 = vmatpush1.msra.mxu0 0.0
    %5621 = vmatprep.subr.mxu0 0.0
    %5622 = vmatpush1.msra.mxu0 0.0
    %5623 = vmatprep.subr.mxu0 0.0
    %5624 = vmatpush1.msra.mxu0 0.0
    %5625 = vmatprep.subr.mxu0 0.0
    %5626 = vmatpush1.msra.mxu0 0.0
    %5627 = vmatprep.subr.mxu0 0.0
    %5628 = vmatpush1.msra.mxu0 0.0
    %5629 = vmatprep.subr.mxu0 0.0
    %5630 = vmatpush1.msra.mxu0 0.0
    %5631 = vmatprep.mubr.f32.mxu0 0.0
    %5632 = vmatmul.mubr.f32.gmra.mrb[0].mxu0 %v2883
    %v5633 = vpop.f32.mrb[0].mxu0
    %v5634 = vadd.f32 0.0, %v5633
    %v5635 = vpop.f32.mrb[0].mxu0
    %5636 = vdwg.mxu0
    %v5637 = vadd.f32 %v5566, %v5634
    %v5638 = vxor.u32 %v5637, 2147483648
    %v5639 = vmul.f32 %v5638, 1.442695
    %v5640 = vpow.pop %v5639
    %v5641 = vadd.f32 %v5640, 1.0
    %v5642 = vrcp.pop %v5641
    %v5643 = vmul.f32 1.0, %v5642
    %v5644 = vtanh.pop %v5637
    %v5645 = vmul.f32 %v5643, %v2309
    %5647 = vrot.lane.b32.xlu0 %v5644, 64
    %v5648 = vpop.permute.xlu0 %5647
    %v5650 = vmul.f32 %v5643, %v5648
    %5652 = vrot.lane.b32.xlu0 %v5650, 32
    %v5653 = vpop.permute.xlu0 %5652
    %v5655 = vadd.f32 %v5645, %v5653
    %v5656 = vtanh.pop %v5655
    %5658 = vrot.lane.b32.xlu0 %v5656, 64
    %v5659 = vpop.permute.xlu0 %5658
    %v5661 = vmul.f32 %v5643, %v5659
    %5663 = vrot.lane.b32.xlu0 %v5661, 32
    %v5664 = vpop.permute.xlu0 %5663
    %5666 = vst.msk [vmem:[#allocation4] sm:$0xf] %vm2660, %v5664
    %v5667 = vld [vmem:[#allocation2 + $0x4] sm:$0xf]
    %v5668 = vsel %vm308, %v5664, 0
    %5670 = vmatprep.subr.mxu0 0.0
    %5671 = vmatpush1.msra.mxu0 %v5562
    %5672 = vmatprep.subr.mxu0 0.0
    %5673 = vmatpush1.msra.mxu0 %v5563
    %5674 = vmatprep.subr.mxu0 0.0
    %5675 = vmatpush1.msra.mxu0 %v5564
    %5676 = vmatprep.subr.mxu0 0.0
    %5677 = vmatpush1.msra.mxu0 %v5565
    %5678 = vmatprep.subr.mxu0 0.0
    %5679 = vmatpush1.msra.mxu0 0.0
    %5680 = vmatprep.subr.mxu0 0.0
    %5681 = vmatpush1.msra.mxu0 0.0
    %5682 = vmatprep.subr.mxu0 0.0
    %5683 = vmatpush1.msra.mxu0 0.0
    %5684 = vmatprep.subr.mxu0 0.0
    %5685 = vmatpush1.msra.mxu0 0.0
    %5686 = vmatprep.subr.mxu0 0.0
    %5687 = vmatpush1.msra.mxu0 0.0
    %5688 = vmatprep.subr.mxu0 0.0
    %5689 = vmatpush1.msra.mxu0 0.0
    %5690 = vmatprep.subr.mxu0 0.0
    %5691 = vmatpush1.msra.mxu0 0.0
    %5692 = vmatprep.subr.mxu0 0.0
    %5693 = vmatpush1.msra.mxu0 0.0
    %5694 = vmatprep.subr.mxu0 0.0
    %5695 = vmatpush1.msra.mxu0 0.0
    %5696 = vmatprep.subr.mxu0 0.0
    %5697 = vmatpush1.msra.mxu0 0.0
    %5698 = vmatprep.subr.mxu0 0.0
    %5699 = vmatpush1.msra.mxu0 0.0
    %5700 = vmatprep.subr.mxu0 0.0
    %5701 = vmatpush1.msra.mxu0 0.0
    %5702 = vmatprep.subr.mxu0 0.0
    %5703 = vmatpush1.msra.mxu0 0.0
    %5704 = vmatprep.subr.mxu0 0.0
    %5705 = vmatpush1.msra.mxu0 0.0
    %5706 = vmatprep.subr.mxu0 0.0
    %5707 = vmatpush1.msra.mxu0 0.0
    %5708 = vmatprep.subr.mxu0 0.0
    %5709 = vmatpush1.msra.mxu0 0.0
    %5710 = vmatprep.subr.mxu0 0.0
    %5711 = vmatpush1.msra.mxu0 0.0
    %5712 = vmatprep.subr.mxu0 0.0
    %5713 = vmatpush1.msra.mxu0 0.0
    %5714 = vmatprep.subr.mxu0 0.0
    %5715 = vmatpush1.msra.mxu0 0.0
    %5716 = vmatprep.subr.mxu0 0.0
    %5717 = vmatpush1.msra.mxu0 0.0
    %5718 = vmatprep.subr.mxu0 0.0
    %5719 = vmatpush1.msra.mxu0 0.0
    %5720 = vmatprep.subr.mxu0 0.0
    %5721 = vmatpush1.msra.mxu0 0.0
    %5722 = vmatprep.subr.mxu0 0.0
    %5723 = vmatpush1.msra.mxu0 0.0
    %5724 = vmatprep.subr.mxu0 0.0
    %5725 = vmatpush1.msra.mxu0 0.0
    %5726 = vmatprep.subr.mxu0 0.0
    %5727 = vmatpush1.msra.mxu0 0.0
    %5728 = vmatprep.subr.mxu0 0.0
    %5729 = vmatpush1.msra.mxu0 0.0
    %5730 = vmatprep.subr.mxu0 0.0
    %5731 = vmatpush1.msra.mxu0 0.0
    %5732 = vmatprep.subr.mxu0 0.0
    %5733 = vmatpush1.msra.mxu0 0.0
    %5734 = vmatprep.mubr.f32.mxu0 0.0
    %5735 = vmatmul.mubr.f32.gmra.mrb[0].mxu0 %v5668
    %v5736 = vpop.f32.mrb[0].mxu0
    %v5737 = vadd.f32 0.0, %v5736
    %v5738 = vpop.f32.mrb[0].mxu0
    %5739 = vdwg.mxu0
    %v5740 = vadd.f32 %v5667, %v5737
    %v5741 = vxor.u32 %v5740, 2147483648
    %v5742 = vmul.f32 %v5741, 1.442695
    %v5743 = vpow.pop %v5742
    %v5744 = vadd.f32 %v5743, 1.0
    %v5745 = vrcp.pop %v5744
    %v5746 = vmul.f32 1.0, %v5745
    %v5747 = vtanh.pop %v5740
    %v5748 = vmul.f32 %v5746, %v5655
    %5750 = vrot.lane.b32.xlu0 %v5747, 64
    %v5751 = vpop.permute.xlu0 %5750
    %v5753 = vmul.f32 %v5746, %v5751
    %5755 = vrot.lane.b32.xlu0 %v5753, 32
    %v5756 = vpop.permute.xlu0 %5755
    %v5758 = vadd.f32 %v5748, %v5756
    %v5759 = vtanh.pop %v5758
    %5761 = vrot.lane.b32.xlu0 %v5759, 64
    %v5762 = vpop.permute.xlu0 %5761
    %v5764 = vmul.f32 %v5746, %v5762
    %5766 = vrot.lane.b32.xlu0 %v5764, 32
    %v5767 = vpop.permute.xlu0 %5766
    %5769 = vst.msk [vmem:[#allocation4 + $0x4] sm:$0xf] %vm2660, %v5767
    %v5770 = vld [vmem:[#allocation2 + $0x8] sm:$0xf]
    %v5771 = vsel %vm308, %v5767, 0
    %5773 = vmatprep.subr.mxu0 0.0
    %5774 = vmatpush1.msra.mxu0 %v5562
    %5775 = vmatprep.subr.mxu0 0.0
    %5776 = vmatpush1.msra.mxu0 %v5563
    %5777 = vmatprep.subr.mxu0 0.0
    %5778 = vmatpush1.msra.mxu0 %v5564
    %5779 = vmatprep.subr.mxu0 0.0
    %5780 = vmatpush1.msra.mxu0 %v5565
    %5781 = vmatprep.subr.mxu0 0.0
    %5782 = vmatpush1.msra.mxu0 0.0
    %5783 = vmatprep.subr.mxu0 0.0
    %5784 = vmatpush1.msra.mxu0 0.0
    %5785 = vmatprep.subr.mxu0 0.0
    %5786 = vmatpush1.msra.mxu0 0.0
    %5787 = vmatprep.subr.mxu0 0.0
    %5788 = vmatpush1.msra.mxu0 0.0
    %5789 = vmatprep.subr.mxu0 0.0
    %5790 = vmatpush1.msra.mxu0 0.0
    %5791 = vmatprep.subr.mxu0 0.0
    %5792 = vmatpush1.msra.mxu0 0.0
    %5793 = vmatprep.subr.mxu0 0.0
    %5794 = vmatpush1.msra.mxu0 0.0
    %5795 = vmatprep.subr.mxu0 0.0
    %5796 = vmatpush1.msra.mxu0 0.0
    %5797 = vmatprep.subr.mxu0 0.0
    %5798 = vmatpush1.msra.mxu0 0.0
    %5799 = vmatprep.subr.mxu0 0.0
    %5800 = vmatpush1.msra.mxu0 0.0
    %5801 = vmatprep.subr.mxu0 0.0
    %5802 = vmatpush1.msra.mxu0 0.0
    %5803 = vmatprep.subr.mxu0 0.0
    %5804 = vmatpush1.msra.mxu0 0.0
    %5805 = vmatprep.subr.mxu0 0.0
    %5806 = vmatpush1.msra.mxu0 0.0
    %5807 = vmatprep.subr.mxu0 0.0
    %5808 = vmatpush1.msra.mxu0 0.0
    %5809 = vmatprep.subr.mxu0 0.0
    %5810 = vmatpush1.msra.mxu0 0.0
    %5811 = vmatprep.subr.mxu0 0.0
    %5812 = vmatpush1.msra.mxu0 0.0
    %5813 = vmatprep.subr.mxu0 0.0
    %5814 = vmatpush1.msra.mxu0 0.0
    %5815 = vmatprep.subr.mxu0 0.0
    %5816 = vmatpush1.msra.mxu0 0.0
    %5817 = vmatprep.subr.mxu0 0.0
    %5818 = vmatpush1.msra.mxu0 0.0
    %5819 = vmatprep.subr.mxu0 0.0
    %5820 = vmatpush1.msra.mxu0 0.0
    %5821 = vmatprep.subr.mxu0 0.0
    %5822 = vmatpush1.msra.mxu0 0.0
    %5823 = vmatprep.subr.mxu0 0.0
    %5824 = vmatpush1.msra.mxu0 0.0
    %5825 = vmatprep.subr.mxu0 0.0
    %5826 = vmatpush1.msra.mxu0 0.0
    %5827 = vmatprep.subr.mxu0 0.0
    %5828 = vmatpush1.msra.mxu0 0.0
    %5829 = vmatprep.subr.mxu0 0.0
    %5830 = vmatpush1.msra.mxu0 0.0
    %5831 = vmatprep.subr.mxu0 0.0
    %5832 = vmatpush1.msra.mxu0 0.0
    %5833 = vmatprep.subr.mxu0 0.0
    %5834 = vmatpush1.msra.mxu0 0.0
    %5835 = vmatprep.subr.mxu0 0.0
    %5836 = vmatpush1.msra.mxu0 0.0
    %5837 = vmatprep.mubr.f32.mxu0 0.0
    %5838 = vmatmul.mubr.f32.gmra.mrb[0].mxu0 %v5771
    %v5839 = vpop.f32.mrb[0].mxu0
    %v5840 = vadd.f32 0.0, %v5839
    %v5841 = vpop.f32.mrb[0].mxu0
    %5842 = vdwg.mxu0
    %v5843 = vadd.f32 %v5770, %v5840
    %v5844 = vxor.u32 %v5843, 2147483648
    %v5845 = vmul.f32 %v5844, 1.442695
    %v5846 = vpow.pop %v5845
    %v5847 = vadd.f32 %v5846, 1.0
    %v5848 = vrcp.pop %v5847
    %v5849 = vmul.f32 1.0, %v5848
    %v5850 = vtanh.pop %v5843
    %v5851 = vmul.f32 %v5849, %v5758
    %5853 = vrot.lane.b32.xlu0 %v5850, 64
    %v5854 = vpop.permute.xlu0 %5853
    %v5856 = vmul.f32 %v5849, %v5854
    %5858 = vrot.lane.b32.xlu0 %v5856, 32
    %v5859 = vpop.permute.xlu0 %5858
    %v5861 = vadd.f32 %v5851, %v5859
    %v5862 = vtanh.pop %v5861
    %5864 = vrot.lane.b32.xlu0 %v5862, 64
    %v5865 = vpop.permute.xlu0 %5864
    %v5867 = vmul.f32 %v5849, %v5865
    %5869 = vrot.lane.b32.xlu0 %v5867, 32
    %v5870 = vpop.permute.xlu0 %5869
    %5872 = vst.msk [vmem:[#allocation4 + $0x8] sm:$0xf] %vm2660, %v5870
    %v5873 = vld [vmem:[#allocation2 + $0xc] sm:$0xf]
    %v5874 = vsel %vm308, %v5870, 0
    %5876 = vmatprep.subr.mxu0 0.0
    %5877 = vmatpush1.msra.mxu0 %v5562
    %5878 = vmatprep.subr.mxu0 0.0
    %5879 = vmatpush1.msra.mxu0 %v5563
    %5880 = vmatprep.subr.mxu0 0.0
    %5881 = vmatpush1.msra.mxu0 %v5564
    %5882 = vmatprep.subr.mxu0 0.0
    %5883 = vmatpush1.msra.mxu0 %v5565
    %5884 = vmatprep.subr.mxu0 0.0
    %5885 = vmatpush1.msra.mxu0 0.0
    %5886 = vmatprep.subr.mxu0 0.0
    %5887 = vmatpush1.msra.mxu0 0.0
    %5888 = vmatprep.subr.mxu0 0.0
    %5889 = vmatpush1.msra.mxu0 0.0
    %5890 = vmatprep.subr.mxu0 0.0
    %5891 = vmatpush1.msra.mxu0 0.0
    %5892 = vmatprep.subr.mxu0 0.0
    %5893 = vmatpush1.msra.mxu0 0.0
    %5894 = vmatprep.subr.mxu0 0.0
    %5895 = vmatpush1.msra.mxu0 0.0
    %5896 = vmatprep.subr.mxu0 0.0
    %5897 = vmatpush1.msra.mxu0 0.0
    %5898 = vmatprep.subr.mxu0 0.0
    %5899 = vmatpush1.msra.mxu0 0.0
    %5900 = vmatprep.subr.mxu0 0.0
    %5901 = vmatpush1.msra.mxu0 0.0
    %5902 = vmatprep.subr.mxu0 0.0
    %5903 = vmatpush1.msra.mxu0 0.0
    %5904 = vmatprep.subr.mxu0 0.0
    %5905 = vmatpush1.msra.mxu0 0.0
    %5906 = vmatprep.subr.mxu0 0.0
    %5907 = vmatpush1.msra.mxu0 0.0
    %5908 = vmatprep.subr.mxu0 0.0
    %5909 = vmatpush1.msra.mxu0 0.0
    %5910 = vmatprep.subr.mxu0 0.0
    %5911 = vmatpush1.msra.mxu0 0.0
    %5912 = vmatprep.subr.mxu0 0.0
    %5913 = vmatpush1.msra.mxu0 0.0
    %5914 = vmatprep.subr.mxu0 0.0
    %5915 = vmatpush1.msra.mxu0 0.0
    %5916 = vmatprep.subr.mxu0 0.0
    %5917 = vmatpush1.msra.mxu0 0.0
    %5918 = vmatprep.subr.mxu0 0.0
    %5919 = vmatpush1.msra.mxu0 0.0
    %5920 = vmatprep.subr.mxu0 0.0
    %5921 = vmatpush1.msra.mxu0 0.0
    %5922 = vmatprep.subr.mxu0 0.0
    %5923 = vmatpush1.msra.mxu0 0.0
    %5924 = vmatprep.subr.mxu0 0.0
    %5925 = vmatpush1.msra.mxu0 0.0
    %5926 = vmatprep.subr.mxu0 0.0
    %5927 = vmatpush1.msra.mxu0 0.0
    %5928 = vmatprep.subr.mxu0 0.0
    %5929 = vmatpush1.msra.mxu0 0.0
    %5930 = vmatprep.subr.mxu0 0.0
    %5931 = vmatpush1.msra.mxu0 0.0
    %5932 = vmatprep.subr.mxu0 0.0
    %5933 = vmatpush1.msra.mxu0 0.0
    %5934 = vmatprep.subr.mxu0 0.0
    %5935 = vmatpush1.msra.mxu0 0.0
    %5936 = vmatprep.subr.mxu0 0.0
    %5937 = vmatpush1.msra.mxu0 0.0
    %5938 = vmatprep.subr.mxu0 0.0
    %5939 = vmatpush1.msra.mxu0 0.0
    %5940 = vmatprep.mubr.f32.mxu0 0.0
    %5941 = vmatmul.mubr.f32.gmra.mrb[0].mxu0 %v5874
    %v5942 = vpop.f32.mrb[0].mxu0
    %v5943 = vadd.f32 0.0, %v5942
    %v5944 = vpop.f32.mrb[0].mxu0
    %5945 = vdwg.mxu0
    %v5946 = vadd.f32 %v5873, %v5943
    %v5947 = vxor.u32 %v5946, 2147483648
    %v5948 = vmul.f32 %v5947, 1.442695
    %v5949 = vpow.pop %v5948
    %v5950 = vadd.f32 %v5949, 1.0
    %v5951 = vrcp.pop %v5950
    %v5952 = vmul.f32 1.0, %v5951
    %v5953 = vtanh.pop %v5946
    %v5954 = vmul.f32 %v5952, %v5861
    %5956 = vrot.lane.b32.xlu0 %v5953, 64
    %v5957 = vpop.permute.xlu0 %5956
    %v5959 = vmul.f32 %v5952, %v5957
    %5961 = vrot.lane.b32.xlu0 %v5959, 32
    %v5962 = vpop.permute.xlu0 %5961
    %v5964 = vadd.f32 %v5954, %v5962
    %v5965 = vtanh.pop %v5964
    %5967 = vrot.lane.b32.xlu0 %v5965, 64
    %v5968 = vpop.permute.xlu0 %5967
    %v5970 = vmul.f32 %v5952, %v5968
    %5972 = vrot.lane.b32.xlu0 %v5970, 32
    %v5973 = vpop.permute.xlu0 %5972
    %5975 = vst.msk [vmem:[#allocation4 + $0xc] sm:$0xf] %vm2660, %v5973
    %v5976 = vld [vmem:[#allocation2 + $0x10] sm:$0xf]
    %v5977 = vsel %vm308, %v5973, 0
    %5979 = vmatprep.subr.mxu0 0.0
    %5980 = vmatpush1.msra.mxu0 %v5562
    %5981 = vmatprep.subr.mxu0 0.0
    %5982 = vmatpush1.msra.mxu0 %v5563
    %5983 = vmatprep.subr.mxu0 0.0
    %5984 = vmatpush1.msra.mxu0 %v5564
    %5985 = vmatprep.subr.mxu0 0.0
    %5986 = vmatpush1.msra.mxu0 %v5565
    %5987 = vmatprep.subr.mxu0 0.0
    %5988 = vmatpush1.msra.mxu0 0.0
    %5989 = vmatprep.subr.mxu0 0.0
    %5990 = vmatpush1.msra.mxu0 0.0
    %5991 = vmatprep.subr.mxu0 0.0
    %5992 = vmatpush1.msra.mxu0 0.0
    %5993 = vmatprep.subr.mxu0 0.0
    %5994 = vmatpush1.msra.mxu0 0.0
    %5995 = vmatprep.subr.mxu0 0.0
    %5996 = vmatpush1.msra.mxu0 0.0
    %5997 = vmatprep.subr.mxu0 0.0
    %5998 = vmatpush1.msra.mxu0 0.0
    %5999 = vmatprep.subr.mxu0 0.0
    %6000 = vmatpush1.msra.mxu0 0.0
    %6001 = vmatprep.subr.mxu0 0.0
    %6002 = vmatpush1.msra.mxu0 0.0
    %6003 = vmatprep.subr.mxu0 0.0
    %6004 = vmatpush1.msra.mxu0 0.0
    %6005 = vmatprep.subr.mxu0 0.0
    %6006 = vmatpush1.msra.mxu0 0.0
    %6007 = vmatprep.subr.mxu0 0.0
    %6008 = vmatpush1.msra.mxu0 0.0
    %6009 = vmatprep.subr.mxu0 0.0
    %6010 = vmatpush1.msra.mxu0 0.0
    %6011 = vmatprep.subr.mxu0 0.0
    %6012 = vmatpush1.msra.mxu0 0.0
    %6013 = vmatprep.subr.mxu0 0.0
    %6014 = vmatpush1.msra.mxu0 0.0
    %6015 = vmatprep.subr.mxu0 0.0
    %6016 = vmatpush1.msra.mxu0 0.0
    %6017 = vmatprep.subr.mxu0 0.0
    %6018 = vmatpush1.msra.mxu0 0.0
    %6019 = vmatprep.subr.mxu0 0.0
    %6020 = vmatpush1.msra.mxu0 0.0
    %6021 = vmatprep.subr.mxu0 0.0
    %6022 = vmatpush1.msra.mxu0 0.0
    %6023 = vmatprep.subr.mxu0 0.0
    %6024 = vmatpush1.msra.mxu0 0.0
    %6025 = vmatprep.subr.mxu0 0.0
    %6026 = vmatpush1.msra.mxu0 0.0
    %6027 = vmatprep.subr.mxu0 0.0
    %6028 = vmatpush1.msra.mxu0 0.0
    %6029 = vmatprep.subr.mxu0 0.0
    %6030 = vmatpush1.msra.mxu0 0.0
    %6031 = vmatprep.subr.mxu0 0.0
    %6032 = vmatpush1.msra.mxu0 0.0
    %6033 = vmatprep.subr.mxu0 0.0
    %6034 = vmatpush1.msra.mxu0 0.0
    %6035 = vmatprep.subr.mxu0 0.0
    %6036 = vmatpush1.msra.mxu0 0.0
    %6037 = vmatprep.subr.mxu0 0.0
    %6038 = vmatpush1.msra.mxu0 0.0
    %6039 = vmatprep.subr.mxu0 0.0
    %6040 = vmatpush1.msra.mxu0 0.0
    %6041 = vmatprep.subr.mxu0 0.0
    %6042 = vmatpush1.msra.mxu0 0.0
    %6043 = vmatprep.mubr.f32.mxu0 0.0
    %6044 = vmatmul.mubr.f32.gmra.mrb[0].mxu0 %v5977
    %v6045 = vpop.f32.mrb[0].mxu0
    %v6046 = vadd.f32 0.0, %v6045
    %v6047 = vpop.f32.mrb[0].mxu0
    %6048 = vdwg.mxu0
    %v6049 = vadd.f32 %v5976, %v6046
    %v6050 = vxor.u32 %v6049, 2147483648
    %v6051 = vmul.f32 %v6050, 1.442695
    %v6052 = vpow.pop %v6051
    %v6053 = vadd.f32 %v6052, 1.0
    %v6054 = vrcp.pop %v6053
    %v6055 = vmul.f32 1.0, %v6054
    %v6056 = vtanh.pop %v6049
    %v6057 = vmul.f32 %v6055, %v5964
    %6059 = vrot.lane.b32.xlu0 %v6056, 64
    %v6060 = vpop.permute.xlu0 %6059
    %v6062 = vmul.f32 %v6055, %v6060
    %6064 = vrot.lane.b32.xlu0 %v6062, 32
    %v6065 = vpop.permute.xlu0 %6064
    %v6067 = vadd.f32 %v6057, %v6065
    %v6068 = vtanh.pop %v6067
    %6070 = vrot.lane.b32.xlu0 %v6068, 64
    %v6071 = vpop.permute.xlu0 %6070
    %v6073 = vmul.f32 %v6055, %v6071
    %6075 = vrot.lane.b32.xlu0 %v6073, 32
    %v6076 = vpop.permute.xlu0 %6075
    %6078 = vst.msk [vmem:[#allocation4 + $0x10] sm:$0xf] %vm2660, %v6076
    %v6079 = vld [vmem:[#allocation2 + $0x14] sm:$0xf]
    %v6080 = vsel %vm308, %v6076, 0
    %6082 = vmatprep.subr.mxu0 0.0
    %6083 = vmatpush1.msra.mxu0 %v5562
    %6084 = vmatprep.subr.mxu0 0.0
    %6085 = vmatpush1.msra.mxu0 %v5563
    %6086 = vmatprep.subr.mxu0 0.0
    %6087 = vmatpush1.msra.mxu0 %v5564
    %6088 = vmatprep.subr.mxu0 0.0
    %6089 = vmatpush1.msra.mxu0 %v5565
    %6090 = vmatprep.subr.mxu0 0.0
    %6091 = vmatpush1.msra.mxu0 0.0
    %6092 = vmatprep.subr.mxu0 0.0
    %6093 = vmatpush1.msra.mxu0 0.0
    %6094 = vmatprep.subr.mxu0 0.0
    %6095 = vmatpush1.msra.mxu0 0.0
    %6096 = vmatprep.subr.mxu0 0.0
    %6097 = vmatpush1.msra.mxu0 0.0
    %6098 = vmatprep.subr.mxu0 0.0
    %6099 = vmatpush1.msra.mxu0 0.0
    %6100 = vmatprep.subr.mxu0 0.0
    %6101 = vmatpush1.msra.mxu0 0.0
    %6102 = vmatprep.subr.mxu0 0.0
    %6103 = vmatpush1.msra.mxu0 0.0
    %6104 = vmatprep.subr.mxu0 0.0
    %6105 = vmatpush1.msra.mxu0 0.0
    %6106 = vmatprep.subr.mxu0 0.0
    %6107 = vmatpush1.msra.mxu0 0.0
    %6108 = vmatprep.subr.mxu0 0.0
    %6109 = vmatpush1.msra.mxu0 0.0
    %6110 = vmatprep.subr.mxu0 0.0
    %6111 = vmatpush1.msra.mxu0 0.0
    %6112 = vmatprep.subr.mxu0 0.0
    %6113 = vmatpush1.msra.mxu0 0.0
    %6114 = vmatprep.subr.mxu0 0.0
    %6115 = vmatpush1.msra.mxu0 0.0
    %6116 = vmatprep.subr.mxu0 0.0
    %6117 = vmatpush1.msra.mxu0 0.0
    %6118 = vmatprep.subr.mxu0 0.0
    %6119 = vmatpush1.msra.mxu0 0.0
    %6120 = vmatprep.subr.mxu0 0.0
    %6121 = vmatpush1.msra.mxu0 0.0
    %6122 = vmatprep.subr.mxu0 0.0
    %6123 = vmatpush1.msra.mxu0 0.0
    %6124 = vmatprep.subr.mxu0 0.0
    %6125 = vmatpush1.msra.mxu0 0.0
    %6126 = vmatprep.subr.mxu0 0.0
    %6127 = vmatpush1.msra.mxu0 0.0
    %6128 = vmatprep.subr.mxu0 0.0
    %6129 = vmatpush1.msra.mxu0 0.0
    %6130 = vmatprep.subr.mxu0 0.0
    %6131 = vmatpush1.msra.mxu0 0.0
    %6132 = vmatprep.subr.mxu0 0.0
    %6133 = vmatpush1.msra.mxu0 0.0
    %6134 = vmatprep.subr.mxu0 0.0
    %6135 = vmatpush1.msra.mxu0 0.0
    %6136 = vmatprep.subr.mxu0 0.0
    %6137 = vmatpush1.msra.mxu0 0.0
    %6138 = vmatprep.subr.mxu0 0.0
    %6139 = vmatpush1.msra.mxu0 0.0
    %6140 = vmatprep.subr.mxu0 0.0
    %6141 = vmatpush1.msra.mxu0 0.0
    %6142 = vmatprep.subr.mxu0 0.0
    %6143 = vmatpush1.msra.mxu0 0.0
    %6144 = vmatprep.subr.mxu0 0.0
    %6145 = vmatpush1.msra.mxu0 0.0
    %6146 = vmatprep.mubr.f32.mxu0 0.0
    %6147 = vmatmul.mubr.f32.gmra.mrb[0].mxu0 %v6080
    %v6148 = vpop.f32.mrb[0].mxu0
    %v6149 = vadd.f32 0.0, %v6148
    %v6150 = vpop.f32.mrb[0].mxu0
    %6151 = vdwg.mxu0
    %v6152 = vadd.f32 %v6079, %v6149
    %v6153 = vxor.u32 %v6152, 2147483648
    %v6154 = vmul.f32 %v6153, 1.442695
    %v6155 = vpow.pop %v6154
    %v6156 = vadd.f32 %v6155, 1.0
    %v6157 = vrcp.pop %v6156
    %v6158 = vmul.f32 1.0, %v6157
    %v6159 = vtanh.pop %v6152
    %v6160 = vmul.f32 %v6158, %v6067
    %6162 = vrot.lane.b32.xlu0 %v6159, 64
    %v6163 = vpop.permute.xlu0 %6162
    %v6165 = vmul.f32 %v6158, %v6163
    %6167 = vrot.lane.b32.xlu0 %v6165, 32
    %v6168 = vpop.permute.xlu0 %6167
    %v6170 = vadd.f32 %v6160, %v6168
    %v6171 = vtanh.pop %v6170
    %6173 = vrot.lane.b32.xlu0 %v6171, 64
    %v6174 = vpop.permute.xlu0 %6173
    %v6176 = vmul.f32 %v6158, %v6174
    %6178 = vrot.lane.b32.xlu0 %v6176, 32
    %v6179 = vpop.permute.xlu0 %6178
    %6181 = vst.msk [vmem:[#allocation4 + $0x14] sm:$0xf] %vm2660, %v6179
    %v6182 = vld [vmem:[#allocation2 + $0x18] sm:$0xf]
    %v6183 = vsel %vm308, %v6179, 0
    %6185 = vmatprep.subr.mxu0 0.0
    %6186 = vmatpush1.msra.mxu0 %v5562
    %6187 = vmatprep.subr.mxu0 0.0
    %6188 = vmatpush1.msra.mxu0 %v5563
    %6189 = vmatprep.subr.mxu0 0.0
    %6190 = vmatpush1.msra.mxu0 %v5564
    %6191 = vmatprep.subr.mxu0 0.0
    %6192 = vmatpush1.msra.mxu0 %v5565
    %6193 = vmatprep.subr.mxu0 0.0
    %6194 = vmatpush1.msra.mxu0 0.0
    %6195 = vmatprep.subr.mxu0 0.0
    %6196 = vmatpush1.msra.mxu0 0.0
    %6197 = vmatprep.subr.mxu0 0.0
    %6198 = vmatpush1.msra.mxu0 0.0
    %6199 = vmatprep.subr.mxu0 0.0
    %6200 = vmatpush1.msra.mxu0 0.0
    %6201 = vmatprep.subr.mxu0 0.0
    %6202 = vmatpush1.msra.mxu0 0.0
    %6203 = vmatprep.subr.mxu0 0.0
    %6204 = vmatpush1.msra.mxu0 0.0
    %6205 = vmatprep.subr.mxu0 0.0
    %6206 = vmatpush1.msra.mxu0 0.0
    %6207 = vmatprep.subr.mxu0 0.0
    %6208 = vmatpush1.msra.mxu0 0.0
    %6209 = vmatprep.subr.mxu0 0.0
    %6210 = vmatpush1.msra.mxu0 0.0
    %6211 = vmatprep.subr.mxu0 0.0
    %6212 = vmatpush1.msra.mxu0 0.0
    %6213 = vmatprep.subr.mxu0 0.0
    %6214 = vmatpush1.msra.mxu0 0.0
    %6215 = vmatprep.subr.mxu0 0.0
    %6216 = vmatpush1.msra.mxu0 0.0
    %6217 = vmatprep.subr.mxu0 0.0
    %6218 = vmatpush1.msra.mxu0 0.0
    %6219 = vmatprep.subr.mxu0 0.0
    %6220 = vmatpush1.msra.mxu0 0.0
    %6221 = vmatprep.subr.mxu0 0.0
    %6222 = vmatpush1.msra.mxu0 0.0
    %6223 = vmatprep.subr.mxu0 0.0
    %6224 = vmatpush1.msra.mxu0 0.0
    %6225 = vmatprep.subr.mxu0 0.0
    %6226 = vmatpush1.msra.mxu0 0.0
    %6227 = vmatprep.subr.mxu0 0.0
    %6228 = vmatpush1.msra.mxu0 0.0
    %6229 = vmatprep.subr.mxu0 0.0
    %6230 = vmatpush1.msra.mxu0 0.0
    %6231 = vmatprep.subr.mxu0 0.0
    %6232 = vmatpush1.msra.mxu0 0.0
    %6233 = vmatprep.subr.mxu0 0.0
    %6234 = vmatpush1.msra.mxu0 0.0
    %6235 = vmatprep.subr.mxu0 0.0
    %6236 = vmatpush1.msra.mxu0 0.0
    %6237 = vmatprep.subr.mxu0 0.0
    %6238 = vmatpush1.msra.mxu0 0.0
    %6239 = vmatprep.subr.mxu0 0.0
    %6240 = vmatpush1.msra.mxu0 0.0
    %6241 = vmatprep.subr.mxu0 0.0
    %6242 = vmatpush1.msra.mxu0 0.0
    %6243 = vmatprep.subr.mxu0 0.0
    %6244 = vmatpush1.msra.mxu0 0.0
    %6245 = vmatprep.subr.mxu0 0.0
    %6246 = vmatpush1.msra.mxu0 0.0
    %6247 = vmatprep.subr.mxu0 0.0
    %6248 = vmatpush1.msra.mxu0 0.0
    %6249 = vmatprep.mubr.f32.mxu0 0.0
    %6250 = vmatmul.mubr.f32.gmra.mrb[0].mxu0 %v6183
    %v6251 = vpop.f32.mrb[0].mxu0
    %v6252 = vadd.f32 0.0, %v6251
    %v6253 = vpop.f32.mrb[0].mxu0
    %6254 = vdwg.mxu0
    %v6255 = vadd.f32 %v6182, %v6252
    %v6256 = vxor.u32 %v6255, 2147483648
    %v6257 = vmul.f32 %v6256, 1.442695
    %v6258 = vpow.pop %v6257
    %v6259 = vadd.f32 %v6258, 1.0
    %v6260 = vrcp.pop %v6259
    %v6261 = vmul.f32 1.0, %v6260
    %v6262 = vtanh.pop %v6255
    %v6263 = vmul.f32 %v6261, %v6170
    %6265 = vrot.lane.b32.xlu0 %v6262, 64
    %v6266 = vpop.permute.xlu0 %6265
    %v6268 = vmul.f32 %v6261, %v6266
    %6270 = vrot.lane.b32.xlu0 %v6268, 32
    %v6271 = vpop.permute.xlu0 %6270
    %v6273 = vadd.f32 %v6263, %v6271
    %v6274 = vtanh.pop %v6273
    %6276 = vrot.lane.b32.xlu0 %v6274, 64
    %v6277 = vpop.permute.xlu0 %6276
    %v6279 = vmul.f32 %v6261, %v6277
    %6281 = vrot.lane.b32.xlu0 %v6279, 32
    %v6282 = vpop.permute.xlu0 %6281
    %6284 = vst.msk [vmem:[#allocation4 + $0x18] sm:$0xf] %vm2660, %v6282
    %v6285 = vld [vmem:[#allocation2 + $0x1c] sm:$0xf]
    %v6286 = vsel %vm308, %v6282, 0
    %6288 = vmatprep.subr.mxu0 0.0
    %6289 = vmatpush1.msra.mxu0 %v5562
    %6290 = vmatprep.subr.mxu0 0.0
    %6291 = vmatpush1.msra.mxu0 %v5563
    %6292 = vmatprep.subr.mxu0 0.0
    %6293 = vmatpush1.msra.mxu0 %v5564
    %6294 = vmatprep.subr.mxu0 0.0
    %6295 = vmatpush1.msra.mxu0 %v5565
    %6296 = vmatprep.subr.mxu0 0.0
    %6297 = vmatpush1.msra.mxu0 0.0
    %6298 = vmatprep.subr.mxu0 0.0
    %6299 = vmatpush1.msra.mxu0 0.0
    %6300 = vmatprep.subr.mxu0 0.0
    %6301 = vmatpush1.msra.mxu0 0.0
    %6302 = vmatprep.subr.mxu0 0.0
    %6303 = vmatpush1.msra.mxu0 0.0
    %6304 = vmatprep.subr.mxu0 0.0
    %6305 = vmatpush1.msra.mxu0 0.0
    %6306 = vmatprep.subr.mxu0 0.0
    %6307 = vmatpush1.msra.mxu0 0.0
    %6308 = vmatprep.subr.mxu0 0.0
    %6309 = vmatpush1.msra.mxu0 0.0
    %6310 = vmatprep.subr.mxu0 0.0
    %6311 = vmatpush1.msra.mxu0 0.0
    %6312 = vmatprep.subr.mxu0 0.0
    %6313 = vmatpush1.msra.mxu0 0.0
    %6314 = vmatprep.subr.mxu0 0.0
    %6315 = vmatpush1.msra.mxu0 0.0
    %6316 = vmatprep.subr.mxu0 0.0
    %6317 = vmatpush1.msra.mxu0 0.0
    %6318 = vmatprep.subr.mxu0 0.0
    %6319 = vmatpush1.msra.mxu0 0.0
    %6320 = vmatprep.subr.mxu0 0.0
    %6321 = vmatpush1.msra.mxu0 0.0
    %6322 = vmatprep.subr.mxu0 0.0
    %6323 = vmatpush1.msra.mxu0 0.0
    %6324 = vmatprep.subr.mxu0 0.0
    %6325 = vmatpush1.msra.mxu0 0.0
    %6326 = vmatprep.subr.mxu0 0.0
    %6327 = vmatpush1.msra.mxu0 0.0
    %6328 = vmatprep.subr.mxu0 0.0
    %6329 = vmatpush1.msra.mxu0 0.0
    %6330 = vmatprep.subr.mxu0 0.0
    %6331 = vmatpush1.msra.mxu0 0.0
    %6332 = vmatprep.subr.mxu0 0.0
    %6333 = vmatpush1.msra.mxu0 0.0
    %6334 = vmatprep.subr.mxu0 0.0
    %6335 = vmatpush1.msra.mxu0 0.0
    %6336 = vmatprep.subr.mxu0 0.0
    %6337 = vmatpush1.msra.mxu0 0.0
    %6338 = vmatprep.subr.mxu0 0.0
    %6339 = vmatpush1.msra.mxu0 0.0
    %6340 = vmatprep.subr.mxu0 0.0
    %6341 = vmatpush1.msra.mxu0 0.0
    %6342 = vmatprep.subr.mxu0 0.0
    %6343 = vmatpush1.msra.mxu0 0.0
    %6344 = vmatprep.subr.mxu0 0.0
    %6345 = vmatpush1.msra.mxu0 0.0
    %6346 = vmatprep.subr.mxu0 0.0
    %6347 = vmatpush1.msra.mxu0 0.0
    %6348 = vmatprep.subr.mxu0 0.0
    %6349 = vmatpush1.msra.mxu0 0.0
    %6350 = vmatprep.subr.mxu0 0.0
    %6351 = vmatpush1.msra.mxu0 0.0
    %6352 = vmatprep.mubr.f32.mxu0 0.0
    %6353 = vmatmul.mubr.f32.gmra.mrb[0].mxu0 %v6286
    %v6354 = vpop.f32.mrb[0].mxu0
    %v6355 = vadd.f32 0.0, %v6354
    %v6356 = vpop.f32.mrb[0].mxu0
    %6357 = vdwg.mxu0
    %v6358 = vadd.f32 %v6285, %v6355
    %v6359 = vxor.u32 %v6358, 2147483648
    %v6360 = vmul.f32 %v6359, 1.442695
    %v6361 = vpow.pop %v6360
    %v6362 = vadd.f32 %v6361, 1.0
    %v6363 = vrcp.pop %v6362
    %v6364 = vmul.f32 1.0, %v6363
    %v6365 = vtanh.pop %v6358
    %v6366 = vmul.f32 %v6364, %v6273
    %6368 = vrot.lane.b32.xlu0 %v6365, 64
    %v6369 = vpop.permute.xlu0 %6368
    %v6371 = vmul.f32 %v6364, %v6369
    %6373 = vrot.lane.b32.xlu0 %v6371, 32
    %v6374 = vpop.permute.xlu0 %6373
    %v6376 = vadd.f32 %v6366, %v6374
    %v6377 = vtanh.pop %v6376
    %6379 = vrot.lane.b32.xlu0 %v6377, 64
    %v6380 = vpop.permute.xlu0 %6379
    %v6382 = vmul.f32 %v6364, %v6380
    %6384 = vrot.lane.b32.xlu0 %v6382, 32
    %v6385 = vpop.permute.xlu0 %6384
    %6387 = vst.msk [vmem:[#allocation4 + $0x1c] sm:$0xf] %vm2660, %v6385
    %v6388 = vld [vmem:[#allocation4] sm:$0xff]
    %v6389 = vld [vmem:[#allocation4 + $0x8] sm:$0xff]
    %v6390 = vld [vmem:[#allocation4 + $0x10] sm:$0xff]
    %v6391 = vld [vmem:[#allocation4 + $0x18] sm:$0xff]
    %v6392 = vld [vmem:[%s83] sm:$0xff]
    %v6393 = vld [vmem:[%s83 + $0x8] sm:$0xff]
    %v6394 = vld [vmem:[%s83 + $0x10] sm:$0xff]
    %v6395 = vld [vmem:[%s83 + $0x18] sm:$0xff]
    %v6396 = vld [vmem:[%s85] sm:$0x1]
    %v6398 = vlaneseq
    %v6399 = vshrl.u32 %v6398, 7
    %v6400 = vsub.s32 0, %v6399
    %v6401 = vrot.slane %v6396, %v6400
    %v6404 = vsel %vm308, %v6388, 0
    %v6407 = vsel %vm308, %v6389, 0
    %v6410 = vsel %vm308, %v6390, 0
    %v6413 = vsel %vm308, %v6391, 0
    %6415 = vmatprep.subr.mxu0 0.0
    %6416 = vmatpush1.msra.mxu0 %v6392
    %6417 = vmatprep.subr.mxu0 0.0
    %6418 = vmatpush1.msra.mxu0 %v6393
    %6419 = vmatprep.subr.mxu0 0.0
    %6420 = vmatpush1.msra.mxu0 %v6394
    %6421 = vmatprep.subr.mxu0 0.0
    %6422 = vmatpush1.msra.mxu0 %v6395
    %6423 = vmatprep.subr.mxu0 0.0
    %6424 = vmatpush1.msra.mxu0 0.0
    %6425 = vmatprep.subr.mxu0 0.0
    %6426 = vmatpush1.msra.mxu0 0.0
    %6427 = vmatprep.subr.mxu0 0.0
    %6428 = vmatpush1.msra.mxu0 0.0
    %6429 = vmatprep.subr.mxu0 0.0
    %6430 = vmatpush1.msra.mxu0 0.0
    %6431 = vmatprep.subr.mxu0 0.0
    %6432 = vmatpush1.msra.mxu0 0.0
    %6433 = vmatprep.subr.mxu0 0.0
    %6434 = vmatpush1.msra.mxu0 0.0
    %6435 = vmatprep.subr.mxu0 0.0
    %6436 = vmatpush1.msra.mxu0 0.0
    %6437 = vmatprep.subr.mxu0 0.0
    %6438 = vmatpush1.msra.mxu0 0.0
    %6439 = vmatprep.subr.mxu0 0.0
    %6440 = vmatpush1.msra.mxu0 0.0
    %6441 = vmatprep.subr.mxu0 0.0
    %6442 = vmatpush1.msra.mxu0 0.0
    %6443 = vmatprep.subr.mxu0 0.0
    %6444 = vmatpush1.msra.mxu0 0.0
    %6445 = vmatprep.subr.mxu0 0.0
    %6446 = vmatpush1.msra.mxu0 0.0
    %6447 = vmatprep.subr.mxu0 0.0
    %6448 = vmatpush1.msra.mxu0 0.0
    %6449 = vmatprep.subr.mxu0 0.0
    %6450 = vmatpush1.msra.mxu0 0.0
    %6451 = vmatprep.subr.mxu0 0.0
    %6452 = vmatpush1.msra.mxu0 0.0
    %6453 = vmatprep.subr.mxu0 0.0
    %6454 = vmatpush1.msra.mxu0 0.0
    %6455 = vmatprep.subr.mxu0 0.0
    %6456 = vmatpush1.msra.mxu0 0.0
    %6457 = vmatprep.subr.mxu0 0.0
    %6458 = vmatpush1.msra.mxu0 0.0
    %6459 = vmatprep.subr.mxu0 0.0
    %6460 = vmatpush1.msra.mxu0 0.0
    %6461 = vmatprep.subr.mxu0 0.0
    %6462 = vmatpush1.msra.mxu0 0.0
    %6463 = vmatprep.subr.mxu0 0.0
    %6464 = vmatpush1.msra.mxu0 0.0
    %6465 = vmatprep.subr.mxu0 0.0
    %6466 = vmatpush1.msra.mxu0 0.0
    %6467 = vmatprep.subr.mxu0 0.0
    %6468 = vmatpush1.msra.mxu0 0.0
    %6469 = vmatprep.subr.mxu0 0.0
    %6470 = vmatpush1.msra.mxu0 0.0
    %6471 = vmatprep.subr.mxu0 0.0
    %6472 = vmatpush1.msra.mxu0 0.0
    %6473 = vmatprep.subr.mxu0 0.0
    %6474 = vmatpush1.msra.mxu0 0.0
    %6475 = vmatprep.subr.mxu0 0.0
    %6476 = vmatpush1.msra.mxu0 0.0
    %6477 = vmatprep.subr.mxu0 0.0
    %6478 = vmatpush1.msra.mxu0 0.0
    %6479 = vmatprep.mubr.f32.mxu0 0.0
    %6480 = vmatmul.mubr.f32.gmra.mrb[0].mxu0 %v6404
    %v6481 = vpop.f32.mrb[0].mxu0
    %v6482 = vadd.f32 %v6401, %v6481
    %v6483 = vpop.f32.mrb[0].mxu0
    %6484 = vmatprep.mubr.f32.mxu0 0.0
    %6485 = vmatmul.mubr.f32.gmra.mrb[0].mxu0 %v6407
    %v6486 = vpop.f32.mrb[0].mxu0
    %v6487 = vadd.f32 %v6401, %v6486
    %v6488 = vpop.f32.mrb[0].mxu0
    %6489 = vmatprep.mubr.f32.mxu0 0.0
    %6490 = vmatmul.mubr.f32.gmra.mrb[0].mxu0 %v6410
    %v6491 = vpop.f32.mrb[0].mxu0
    %v6492 = vadd.f32 %v6401, %v6491
    %v6493 = vpop.f32.mrb[0].mxu0
    %6494 = vmatprep.mubr.f32.mxu0 0.0
    %6495 = vmatmul.mubr.f32.gmra.mrb[0].mxu0 %v6413
    %v6496 = vpop.f32.mrb[0].mxu0
    %v6497 = vadd.f32 %v6401, %v6496
    %v6498 = vpop.f32.mrb[0].mxu0
    %6499 = vdwg.mxu0
    %6500 = vst.msk [vmem:[%s99] sm:$0xff] %vm206, %v6482
    %6501 = vst.msk [vmem:[%s99 + $0x8] sm:$0xff] %vm206, %v6487
    %6502 = vst.msk [vmem:[%s99 + $0x10] sm:$0xff] %vm206, %v6492
    %6503 = vst.msk [vmem:[%s99 + $0x18] sm:$0xff] %vm206, %v6497
    // Predicated region
    $region178: #{forward.1} parent=1 // pred_check
      _
    $region179: #{forward.1} parent=1 // pred_check_branch
      %6505 = sbr.rel (0) target = $region181
    $region180: #{forward.1} parent=1 // pred_region
      _
    $region181: #{forward.1} parent=1 // pred_fallthru
      _
    // Predicated region
    $region182: #{forward.1} parent=1 // pred_check
      _
    $region183: #{forward.1} parent=1 // pred_check_branch
      %6507 = sbr.rel (0) target = $region185
    $region184: #{forward.1} parent=1 // pred_region
      _
    $region185: #{forward.1} parent=1 // pred_fallthru
      _
    // Predicated region
    $region186: #{forward.1} parent=1 // pred_check
      _
    $region187: #{forward.1} parent=1 // pred_check_branch
      %6509 = sbr.rel (0) target = $region189
    $region188: #{forward.1} parent=1 // pred_region
      %s6511 = ssub.s32 16, 16
      %6512 = vsyncadd [#allocation7], %s6511
      %s6514 = sshll.u32 [#allocation6], 4
      %s6515 = int_to_ptr.vmem [resolvable:$true] %s6514
      %6517 = dma.vmem_to_hbm [thread:$0]  %s6515, 16, %s93, [#allocation7]
    $region189: #{forward.1} parent=1 // pred_fallthru
      _
    // Predicated region
    $region190: #{forward.1} parent=1 // pred_check
      _
    $region191: #{forward.1} parent=1 // pred_check_branch
      %6519 = sbr.rel (0) target = $region193
    $region192: #{forward.1} parent=1 // pred_region
      %s6521 = ssub.s32 64, 64
      %6522 = vsyncadd [#allocation9], %s6521
      %s6524 = sshll.u32 [#allocation8], 4
      %s6525 = int_to_ptr.vmem [resolvable:$true] %s6524
      %6527 = dma.vmem_to_hbm [thread:$0]  %s6525, 64, %s95, [#allocation9]
    $region193: #{forward.1} parent=1 // pred_fallthru
      _
    // Predicated region
    $region194: #{forward.1} parent=1 // pred_check
      _
    $region195: #{forward.1} parent=1 // pred_check_branch
      %6529 = sbr.rel (0) target = $region197
    $region196: #{forward.1} parent=1 // pred_region
      %s6531 = ssub.s32 64, 64
      %6532 = vsyncadd [#allocation9], %s6531
      %s6534 = sshll.u32 [#allocation10], 4
      %s6535 = int_to_ptr.vmem [resolvable:$true] %s6534
      %6537 = dma.vmem_to_hbm [thread:$0]  %s6535, 64, %s97, [#allocation9]
    $region197: #{forward.1} parent=1 // pred_fallthru
      _
    // Predicated region
    $region198: #{forward.1} parent=1 // pred_check
      _
    $region199: #{forward.1} parent=1 // pred_check_branch
      %6539 = sbr.rel (0) target = $region201
    $region200: #{forward.1} parent=1 // pred_region
      _
    $region201: #{forward.1} parent=1 // pred_fallthru
      _
    // Predicated region
    $region202: #{forward.1} parent=1 // pred_check
      _
    $region203: #{forward.1} parent=1 // pred_check_branch
      %6541 = sbr.rel (0) target = $region205
    $region204: #{forward.1} parent=1 // pred_region
      _
    $region205: #{forward.1} parent=1 // pred_fallthru
      _
    // Predicated region
    $region206: #{forward.1} parent=1 // pred_check
      _
    $region207: #{forward.1} parent=1 // pred_check_branch
      %6543 = sbr.rel (0) target = $region209
    $region208: #{forward.1} parent=1 // pred_region
      _
    $region209: #{forward.1} parent=1 // pred_fallthru
      _
    // Predicated region
    $region210: #{forward.1} parent=1 // pred_check
      _
    $region211: #{forward.1} parent=1 // pred_check_branch
      %6545 = sbr.rel (0) target = $region213
    $region212: #{forward.1} parent=1 // pred_region
      %6546 = dma.done [#allocation7], 16
    $region213: #{forward.1} parent=1 // pred_fallthru
      _
    // Predicated region
    $region214: #{forward.1} parent=1 // pred_check
      _
    $region215: #{forward.1} parent=1 // pred_check_branch
      %6548 = sbr.rel (0) target = $region217
    $region216: #{forward.1} parent=1 // pred_region
      %6549 = dma.done [#allocation9], 64
    $region217: #{forward.1} parent=1 // pred_fallthru
      _
    // Predicated region
    $region218: #{forward.1} parent=1 // pred_check
      _
    $region219: #{forward.1} parent=1 // pred_check_branch
      %6551 = sbr.rel (0) target = $region221
    $region220: #{forward.1} parent=1 // pred_region
      %6552 = dma.done [#allocation9], 64
    $region221: #{forward.1} parent=1 // pred_fallthru
      _
    // Predicated region
    $region222: #{forward.1} parent=1 // pred_check
      _
    $region223: #{forward.1} parent=1 // pred_check_branch
      %6554 = sbr.rel (0) target = $region225
    $region224: #{forward.1} parent=1 // pred_region
      _
    $region225: #{forward.1} parent=1 // pred_fallthru
      _
    %6555 = vsyncpa [#allocation7], 1
    %6556 = vsyncpa [#allocation9], 1

</llo_original>
